<compile_context>
chip_gen: v5e
topology: v5e:2x2
jax: 0.10.0
libtpu: 0.0.40
codegen_flags: <defaults>
</compile_context>

<pallas_src>
import jax
import jax.numpy as jnp
from jax.experimental import pallas as pl
from jax.experimental.pallas import tpu as pltpu

BN_EPS = 1e-5
NUM_CLASSES = 10
FC_PAD = 128                      # pad fc output lanes 10 -> 128 (lane-dense store)
VMEM_LIMIT = 32 * 1024 * 1024     # explicit scoped-VMEM budget (fits v7x's 64 MiB)


# ----------------------------------------------------------------------------- kernels
def conv_bn_relu_pool_kernel(p_ref, w_ref, g_ref, b_ref, o_ref, y_sc):
    """Fused conv (im2col matmul) + training BatchNorm + ReLU + 2x2 max-pool.

    p_ref : [4, mt, K] bf16  im2col patch tile; leading axis = 2x2 pool member
                             (ph*2+pw), rows ordered (b, ho, wo).
    w_ref : [K, C]     bf16  flattened conv weight, rows ordered (kh, kw, cin).
    g_ref : [1, C]     f32   BN weight (gamma).
    b_ref : [1, C]     f32   BN bias (beta).
    o_ref : [Mp, C]    bf16  pooled output, rows ordered (b, ho, wo).
    y_sc  : [4, Mp, C] f32   VMEM-resident pre-BN conv output (filled over the grid).
    """
    j = pl.program_id(0)
    nj = pl.num_programs(0)
    mt = p_ref.shape[1]

    off = j * mt
    if mt % 8 == 0:
        off = pl.multiple_of(off, 8)

    # MXU: bf16 operands, f32 accumulation.  One small matmul per pool member; the
    # result stays resident in VMEM (conv output is much smaller than the patches).
    for p in range(4):
        y = jnp.dot(p_ref[p], w_ref[...], preferred_element_type=jnp.float32)
        y_sc[p, pl.ds(off, mt), :] = y

    # Last grid step: whole conv output is resident -> exact two-pass batch stats
    # (mean / *biased* var over B*H*W), normalize, ReLU, 2x2 max-pool, single store.
    @pl.when(j == nj - 1)
    def _():
        mp = y_sc.shape[1]
        c = y_sc.shape[2]
        inv_n = 1.0 / (4 * mp)

        s = jnp.zeros((1, c), jnp.float32)
        for p in range(4):
            s = s + jnp.sum(y_sc[p], axis=0, keepdims=True)
        mean = s * inv_n

        v = jnp.zeros((1, c), jnp.float32)
        for p in range(4):
            d = y_sc[p] - mean
            v = v + jnp.sum(d * d, axis=0, keepdims=True)
        var = v * inv_n

        scale = g_ref[...] * jax.lax.rsqrt(var + BN_EPS)    # [1, C]
        shift = b_ref[...] - mean * scale                   # [1, C]

        out = y_sc[0] * scale + shift
        for p in range(1, 4):
            out = jnp.maximum(out, y_sc[p] * scale + shift)  # max-pool over 2x2
        o_ref[...] = jnp.maximum(out, 0.0).astype(o_ref.dtype)   # ReLU


def fc_kernel(x_ref, w_ref, b_ref, o_ref):
    """Linear layer: bf16 [B, F] @ bf16 [F, 128] (f32 accumulate) + f32 bias."""
    o_ref[...] = (
        jnp.dot(x_ref[...], w_ref[...], preferred_element_type=jnp.float32)
        + b_ref[...]
    )


# ----------------------------------------------------------------------------- wrappers
def _pick_tile_rows(m, max_rows):
    """Largest multiple-of-8 divisor of m that is <= max_rows (fallback: full m)."""
    best = m
    for t in range(8, min(m, max_rows) + 1, 8):
        if m % t == 0:
            best = t
    return best


def conv_bn_relu_pool(patches, w, gamma, beta, *, max_tile_rows=256,
                      out_dtype=jnp.bfloat16):
    """patches: [4, Mp, K] -> pooled activation [Mp, C] (rows ordered (b, ho, wo))."""
    four, mp, k = patches.shape
    assert four == 4
    kk, c = w.shape
    assert kk == k
    mt = _pick_tile_rows(mp, max_tile_rows)
    nj = mp // mt

    return pl.pallas_call(
        conv_bn_relu_pool_kernel,
        out_shape=jax.ShapeDtypeStruct((mp, c), out_dtype),
        grid=(nj,),
        in_specs=[
            pl.BlockSpec((4, mt, k), lambda j: (0, j, 0)),   # pipelined patch tiles
            pl.BlockSpec((k, c), lambda j: (0, 0)),          # weight stays resident
            pl.BlockSpec((1, c), lambda j: (0, 0)),          # gamma
            pl.BlockSpec((1, c), lambda j: (0, 0)),          # beta
        ],
        out_specs=pl.BlockSpec((mp, c), lambda j: (0, 0)),   # written on last step
        scratch_shapes=[pltpu.VMEM((4, mp, c), jnp.float32)],
        compiler_params=pltpu.CompilerParams(
            dimension_semantics=("arbitrary",),   # grid axis is a BN reduction
            vmem_limit_bytes=VMEM_LIMIT,
        ),
    )(patches.astype(jnp.bfloat16), w.astype(jnp.bfloat16),
      gamma.reshape(1, c).astype(jnp.float32),
      beta.reshape(1, c).astype(jnp.float32))


def linear(x, w, b):
    bsz, f = x.shape
    _, n = w.shape
    return pl.pallas_call(
        fc_kernel,
        out_shape=jax.ShapeDtypeStruct((bsz, n), jnp.float32),
        grid=(1,),
        in_specs=[
            pl.BlockSpec((bsz, f), lambda i: (0, 0)),
            pl.BlockSpec((f, n), lambda i: (0, 0)),
            pl.BlockSpec((1, n), lambda i: (0, 0)),
        ],
        out_specs=pl.BlockSpec((bsz, n), lambda i: (0, 0)),
        compiler_params=pltpu.CompilerParams(vmem_limit_bytes=VMEM_LIMIT),
    )(x.astype(jnp.bfloat16), w.astype(jnp.bfloat16),
      b.reshape(1, n).astype(jnp.float32))


def im2col_pooled(x, k=5, pad=2):
    """x: [B, H, W, C] NHWC -> im2col patches grouped by 2x2 pool member.

    Returns [4, B*(H//2)*(W//2), k*k*C]; leading axis = pool member (ph*2+pw),
    rows ordered (b, ho, wo), columns ordered (kh, kw, cin).
    """
    b, h, w, c = x.shape
    ho, wo = h // 2, w // 2
    xp = jnp.pad(x, ((0, 0), (pad, pad), (pad, pad), (0, 0)))
    cols = []
    for kh in range(k):
        for kw in range(k):
            cols.append(xp[:, kh:kh + h, kw:kw + w, :])
    p = jnp.stack(cols, axis=3).reshape(b, h, w, k * k * c)
    p = p.reshape(b, ho, 2, wo, 2, k * k * c).transpose(2, 4, 0, 1, 3, 5)
    return p.reshape(4, b * ho * wo, k * k * c)


def init_params(key):
    ks = jax.random.split(key, 8)
    # Conv weights stored as [kh, kw, Cin, Cout] flattened to [kh*kw*Cin, Cout]
    # (= torch weight [Cout,Cin,kh,kw].transpose(2,3,1,0).reshape(-1, Cout)).
    # Conv biases are omitted: training-mode BatchNorm subtracts the batch mean,
    # so a per-channel pre-BN constant is an exact no-op.
    w1 = (0.10 * jax.random.normal(ks[0], (5, 5, 1, 16), jnp.float32)).reshape(25, 16)
    g1 = 1.0 + 0.10 * jax.random.normal(ks[1], (16,), jnp.float32)
    be1 = 0.10 * jax.random.normal(ks[2], (16,), jnp.float32)

    w2 = (0.05 * jax.random.normal(ks[3], (5, 5, 16, 32), jnp.float32)).reshape(400, 32)
    g2 = 1.0 + 0.10 * jax.random.normal(ks[4], (32,), jnp.float32)
    be2 = 0.10 * jax.random.normal(ks[5], (32,), jnp.float32)

    # fc weight rows ordered (h, w, c) so the NHWC pooled output flattens with a pure
    # reshape (= torch weight [10, 32*7*7] -> reshape(10,32,7,7).transpose(2,3,1,0)
    # .reshape(1568, 10)); output lanes padded 10 -> 128 for a lane-dense store.
    wfc = 0.05 * jax.random.normal(ks[6], (7 * 7 * 32, NUM_CLASSES), jnp.float32)
    bfc = 0.10 * jax.random.normal(ks[7], (NUM_CLASSES,), jnp.float32)
    wfc = jnp.pad(wfc, ((0, 0), (0, FC_PAD - NUM_CLASSES)))
    bfc = jnp.pad(bfc, (0, FC_PAD - NUM_CLASSES))

    return dict(w1=w1, g1=g1, be1=be1, w2=w2, g2=g2, be2=be2, wfc=wfc, bfc=bfc)


@jax.jit
def convnet_forward(x_nchw, params):
    """x_nchw: [B, 1, 28, 28] (PyTorch layout) -> logits [B, 10]."""
    x = jnp.transpose(x_nchw, (0, 2, 3, 1)).astype(jnp.bfloat16)   # NHWC, bf16
    bsz = x.shape[0]

    # layer1: conv(1->16, 5x5, pad 2) + BN + ReLU + maxpool 2x2, fully fused
    p1 = im2col_pooled(x)                                          # [4, B*196, 25]
    y1 = conv_bn_relu_pool(p1, params["w1"], params["g1"], params["be1"])
    x2 = y1.reshape(bsz, 14, 14, 16)                               # NHWC, bf16

    # layer2: conv(16->32, 5x5, pad 2) + BN + ReLU + maxpool 2x2, fully fused
    # TODO(synk): build the layer-2 patches inside the kernel from a VMEM-resident
    # padded activation tile (25 shifted static slices + accumulated matmuls) to
    # avoid materializing the 25x im2col blow-up in HBM.
    p2 = im2col_pooled(x2)                                         # [4, B*49, 400]
    y2 = conv_bn_relu_pool(p2, params["w2"], params["g2"], params["be2"])

    # fc: pooled rows are already (b, ho, wo) x channels, and wfc rows are stored in
    # (h, w, c) order -> the flatten is a pure reshape (no transpose).
    flat = y2.reshape(bsz, 7 * 7 * 32)
    logits = linear(flat, params["wfc"], params["bfc"])            # [B, 128] f32
    return logits[:, :NUM_CLASSES]


if __name__ == "__main__":
    key = jax.random.PRNGKey(0)
    kx, kp = jax.random.split(key)
    # MNIST-shaped input (the fc layer requires 28x28x1): small batch of 2.
    x = jax.random.normal(kx, (2, 1, 28, 28), jnp.float32)
    params = init_params(kp)

    logits = convnet_forward(x, params)
    logits = jax.block_until_ready(logits)

    assert logits.shape == (2, 10), logits.shape
    assert bool(jnp.all(jnp.isfinite(logits)))
    print("KERNEL_OK")
</pallas_src>

<mosaic_0001>
module attributes {stable_mosaic.version = 11 : i64} {
  func.func @conv_bn_relu_pool_kernel(%arg0: i32, %arg1: memref<4x56x25xbf16, #tpu.memory_space<vmem>>, %arg2: memref<25x16xbf16, #tpu.memory_space<vmem>>, %arg3: memref<1x16xf32, #tpu.memory_space<vmem>>, %arg4: memref<1x16xf32, #tpu.memory_space<vmem>>, %arg5: memref<392x16xbf16, #tpu.memory_space<vmem>>, %arg6: memref<4x392x16xf32, #tpu.memory_space<vmem>>) attributes {dimension_semantics = [#tpu.dimension_semantics<arbitrary>], iteration_bounds = array<i64: 7>, scalar_prefetch = 0 : i64, scratch_operands = 1 : i64, tpu.core_type = #tpu.core_type<tc>, window_params = [{transform_indices = @transform_0, window_bounds = array<i64: 4, 56, 25>}, {pipeline_mode = #tpu.pipeline_mode<synchronous>, transform_indices = @transform_1, window_bounds = array<i64: 25, 16>}, {pipeline_mode = #tpu.pipeline_mode<synchronous>, transform_indices = @transform_2, window_bounds = array<i64: 1, 16>}, {pipeline_mode = #tpu.pipeline_mode<synchronous>, transform_indices = @transform_3, window_bounds = array<i64: 1, 16>}, {pipeline_mode = #tpu.pipeline_mode<synchronous>, transform_indices = @transform_4, window_bounds = array<i64: 392, 16>}]} {
    %c56_i32 = arith.constant 56 : i32
    %0 = arith.muli %arg0, %c56_i32 : i32
    %1 = tpu.assume_multiple %0, 8 : i32
    %c0 = arith.constant 0 : index
    %c0_0 = arith.constant 0 : index
    %c0_1 = arith.constant 0 : index
    %2 = vector.load %arg1[%c0, %c0_0, %c0_1] : memref<4x56x25xbf16, #tpu.memory_space<vmem>>, vector<1x56x25xbf16>
    %3 = vector.shape_cast %2 : vector<1x56x25xbf16> to vector<56x25xbf16>
    %c0_2 = arith.constant 0 : index
    %c0_3 = arith.constant 0 : index
    %4 = vector.load %arg2[%c0_2, %c0_3] : memref<25x16xbf16, #tpu.memory_space<vmem>>, vector<25x16xbf16>
    %cst = arith.constant dense<0.000000e+00> : vector<56x16xf32>
    %5 = tpu.matmul %3, %4, %cst {dimension_numbers = #tpu.dot_dimension_numbers<[1], [0], [0], [1], [0, 0, 1, 1], [], []>} : vector<56x25xbf16>, vector<25x16xbf16>, vector<56x16xf32> -> vector<56x16xf32>
    %c0_4 = arith.constant 0 : index
    %6 = arith.index_cast %1 : i32 to index
    %c0_5 = arith.constant 0 : index
    %7 = vector.load %arg6[%c0_4, %6, %c0_5] : memref<4x392x16xf32, #tpu.memory_space<vmem>>, vector<1x56x16xf32>
    %8 = vector.shape_cast %7 : vector<1x56x16xf32> to vector<56x16xf32>
    %9 = vector.shape_cast %5 : vector<56x16xf32> to vector<1x56x16xf32>
    tpu.vector_store %arg6[%c0_4, %6, %c0_5], %9 {strides = array<i32>} : memref<4x392x16xf32, #tpu.memory_space<vmem>>, vector<1x56x16xf32>,
    %c1 = arith.constant 1 : index
    %c0_6 = arith.constant 0 : index
    %c0_7 = arith.constant 0 : index
    %10 = vector.load %arg1[%c1, %c0_6, %c0_7] : memref<4x56x25xbf16, #tpu.memory_space<vmem>>, vector<1x56x25xbf16>
    %11 = vector.shape_cast %10 : vector<1x56x25xbf16> to vector<56x25xbf16>
    %c0_8 = arith.constant 0 : index
    %c0_9 = arith.constant 0 : index
    %12 = vector.load %arg2[%c0_8, %c0_9] : memref<25x16xbf16, #tpu.memory_space<vmem>>, vector<25x16xbf16>
    %cst_10 = arith.constant dense<0.000000e+00> : vector<56x16xf32>
    %13 = tpu.matmul %11, %12, %cst_10 {dimension_numbers = #tpu.dot_dimension_numbers<[1], [0], [0], [1], [0, 0, 1, 1], [], []>} : vector<56x25xbf16>, vector<25x16xbf16>, vector<56x16xf32> -> vector<56x16xf32>
    %c1_11 = arith.constant 1 : index
    %14 = arith.index_cast %1 : i32 to index
    %c0_12 = arith.constant 0 : index
    %15 = vector.load %arg6[%c1_11, %14, %c0_12] : memref<4x392x16xf32, #tpu.memory_space<vmem>>, vector<1x56x16xf32>
    %16 = vector.shape_cast %15 : vector<1x56x16xf32> to vector<56x16xf32>
    %17 = vector.shape_cast %13 : vector<56x16xf32> to vector<1x56x16xf32>
    tpu.vector_store %arg6[%c1_11, %14, %c0_12], %17 {strides = array<i32>} : memref<4x392x16xf32, #tpu.memory_space<vmem>>, vector<1x56x16xf32>,
    %c2 = arith.constant 2 : index
    %c0_13 = arith.constant 0 : index
    %c0_14 = arith.constant 0 : index
    %18 = vector.load %arg1[%c2, %c0_13, %c0_14] : memref<4x56x25xbf16, #tpu.memory_space<vmem>>, vector<1x56x25xbf16>
    %19 = vector.shape_cast %18 : vector<1x56x25xbf16> to vector<56x25xbf16>
    %c0_15 = arith.constant 0 : index
    %c0_16 = arith.constant 0 : index
    %20 = vector.load %arg2[%c0_15, %c0_16] : memref<25x16xbf16, #tpu.memory_space<vmem>>, vector<25x16xbf16>
    %cst_17 = arith.constant dense<0.000000e+00> : vector<56x16xf32>
    %21 = tpu.matmul %19, %20, %cst_17 {dimension_numbers = #tpu.dot_dimension_numbers<[1], [0], [0], [1], [0, 0, 1, 1], [], []>} : vector<56x25xbf16>, vector<25x16xbf16>, vector<56x16xf32> -> vector<56x16xf32>
    %c2_18 = arith.constant 2 : index
    %22 = arith.index_cast %1 : i32 to index
    %c0_19 = arith.constant 0 : index
    %23 = vector.load %arg6[%c2_18, %22, %c0_19] : memref<4x392x16xf32, #tpu.memory_space<vmem>>, vector<1x56x16xf32>
    %24 = vector.shape_cast %23 : vector<1x56x16xf32> to vector<56x16xf32>
    %25 = vector.shape_cast %21 : vector<56x16xf32> to vector<1x56x16xf32>
    tpu.vector_store %arg6[%c2_18, %22, %c0_19], %25 {strides = array<i32>} : memref<4x392x16xf32, #tpu.memory_space<vmem>>, vector<1x56x16xf32>,
    %c3 = arith.constant 3 : index
    %c0_20 = arith.constant 0 : index
    %c0_21 = arith.constant 0 : index
    %26 = vector.load %arg1[%c3, %c0_20, %c0_21] : memref<4x56x25xbf16, #tpu.memory_space<vmem>>, vector<1x56x25xbf16>
    %27 = vector.shape_cast %26 : vector<1x56x25xbf16> to vector<56x25xbf16>
    %c0_22 = arith.constant 0 : index
    %c0_23 = arith.constant 0 : index
    %28 = vector.load %arg2[%c0_22, %c0_23] : memref<25x16xbf16, #tpu.memory_space<vmem>>, vector<25x16xbf16>
    %cst_24 = arith.constant dense<0.000000e+00> : vector<56x16xf32>
    %29 = tpu.matmul %27, %28, %cst_24 {dimension_numbers = #tpu.dot_dimension_numbers<[1], [0], [0], [1], [0, 0, 1, 1], [], []>} : vector<56x25xbf16>, vector<25x16xbf16>, vector<56x16xf32> -> vector<56x16xf32>
    %c3_25 = arith.constant 3 : index
    %30 = arith.index_cast %1 : i32 to index
    %c0_26 = arith.constant 0 : index
    %31 = vector.load %arg6[%c3_25, %30, %c0_26] : memref<4x392x16xf32, #tpu.memory_space<vmem>>, vector<1x56x16xf32>
    %32 = vector.shape_cast %31 : vector<1x56x16xf32> to vector<56x16xf32>
    %33 = vector.shape_cast %29 : vector<56x16xf32> to vector<1x56x16xf32>
    tpu.vector_store %arg6[%c3_25, %30, %c0_26], %33 {strides = array<i32>} : memref<4x392x16xf32, #tpu.memory_space<vmem>>, vector<1x56x16xf32>,
    %c6_i32 = arith.constant 6 : i32
    %34 = arith.cmpi eq, %arg0, %c6_i32 : i32
    %35 = arith.extui %34 : i1 to i32
    %c0_i32 = arith.constant 0 : i32
    %36 = arith.cmpi ne, %35, %c0_i32 : i32
    scf.if %36 {
      %cst_27 = arith.constant 0.000000e+00 : f32
      %37 = vector.broadcast %cst_27 : f32 to vector<1x16xf32>
      %c0_28 = arith.constant 0 : index
      %c0_29 = arith.constant 0 : index
      %c0_30 = arith.constant 0 : index
      %38 = vector.load %arg6[%c0_28, %c0_29, %c0_30] : memref<4x392x16xf32, #tpu.memory_space<vmem>>, vector<1x392x16xf32>
      %39 = vector.shape_cast %38 : vector<1x392x16xf32> to vector<392x16xf32>
      %cst_31 = arith.constant dense<0.000000e+00> : vector<16xf32>
      %40 = vector.multi_reduction <add>, %39, %cst_31 [0] : vector<392x16xf32> to vector<16xf32>
      %41 = vector.shape_cast %40 : vector<16xf32> to vector<1x16xf32>
      %42 = arith.addf %37, %41 : vector<1x16xf32>
      %c1_32 = arith.constant 1 : index
      %c0_33 = arith.constant 0 : index
      %c0_34 = arith.constant 0 : index
      %43 = vector.load %arg6[%c1_32, %c0_33, %c0_34] : memref<4x392x16xf32, #tpu.memory_space<vmem>>, vector<1x392x16xf32>
      %44 = vector.shape_cast %43 : vector<1x392x16xf32> to vector<392x16xf32>
      %cst_35 = arith.constant dense<0.000000e+00> : vector<16xf32>
      %45 = vector.multi_reduction <add>, %44, %cst_35 [0] : vector<392x16xf32> to vector<16xf32>
      %46 = vector.shape_cast %45 : vector<16xf32> to vector<1x16xf32>
      %47 = arith.addf %42, %46 : vector<1x16xf32>
      %c2_36 = arith.constant 2 : index
      %c0_37 = arith.constant 0 : index
      %c0_38 = arith.constant 0 : index
      %48 = vector.load %arg6[%c2_36, %c0_37, %c0_38] : memref<4x392x16xf32, #tpu.memory_space<vmem>>, vector<1x392x16xf32>
      %49 = vector.shape_cast %48 : vector<1x392x16xf32> to vector<392x16xf32>
      %cst_39 = arith.constant dense<0.000000e+00> : vector<16xf32>
      %50 = vector.multi_reduction <add>, %49, %cst_39 [0] : vector<392x16xf32> to vector<16xf32>
      %51 = vector.shape_cast %50 : vector<16xf32> to vector<1x16xf32>
      %52 = arith.addf %47, %51 : vector<1x16xf32>
      %c3_40 = arith.constant 3 : index
      %c0_41 = arith.constant 0 : index
      %c0_42 = arith.constant 0 : index
      %53 = vector.load %arg6[%c3_40, %c0_41, %c0_42] : memref<4x392x16xf32, #tpu.memory_space<vmem>>, vector<1x392x16xf32>
      %54 = vector.shape_cast %53 : vector<1x392x16xf32> to vector<392x16xf32>
      %cst_43 = arith.constant dense<0.000000e+00> : vector<16xf32>
      %55 = vector.multi_reduction <add>, %54, %cst_43 [0] : vector<392x16xf32> to vector<16xf32>
      %56 = vector.shape_cast %55 : vector<16xf32> to vector<1x16xf32>
      %57 = arith.addf %52, %56 : vector<1x16xf32>
      %cst_44 = arith.constant 6.37755089E-4 : f32
      %58 = vector.broadcast %cst_44 : f32 to vector<1x16xf32>
      %59 = arith.mulf %57, %58 : vector<1x16xf32>
      %cst_45 = arith.constant 0.000000e+00 : f32
      %60 = vector.broadcast %cst_45 : f32 to vector<1x16xf32>
      %c0_46 = arith.constant 0 : index
      %c0_47 = arith.constant 0 : index
      %c0_48 = arith.constant 0 : index
      %61 = vector.load %arg6[%c0_46, %c0_47, %c0_48] : memref<4x392x16xf32, #tpu.memory_space<vmem>>, vector<1x392x16xf32>
      %62 = vector.shape_cast %61 : vector<1x392x16xf32> to vector<392x16xf32>
      %63 = vector.broadcast %59 : vector<1x16xf32> to vector<392x16xf32>
      %64 = arith.subf %62, %63 : vector<392x16xf32>
      %65 = arith.mulf %64, %64 : vector<392x16xf32>
      %cst_49 = arith.constant dense<0.000000e+00> : vector<16xf32>
      %66 = vector.multi_reduction <add>, %65, %cst_49 [0] : vector<392x16xf32> to vector<16xf32>
      %67 = vector.shape_cast %66 : vector<16xf32> to vector<1x16xf32>
      %68 = arith.addf %60, %67 : vector<1x16xf32>
      %c1_50 = arith.constant 1 : index
      %c0_51 = arith.constant 0 : index
      %c0_52 = arith.constant 0 : index
      %69 = vector.load %arg6[%c1_50, %c0_51, %c0_52] : memref<4x392x16xf32, #tpu.memory_space<vmem>>, vector<1x392x16xf32>
      %70 = vector.shape_cast %69 : vector<1x392x16xf32> to vector<392x16xf32>
      %71 = vector.broadcast %59 : vector<1x16xf32> to vector<392x16xf32>
      %72 = arith.subf %70, %71 : vector<392x16xf32>
      %73 = arith.mulf %72, %72 : vector<392x16xf32>
      %cst_53 = arith.constant dense<0.000000e+00> : vector<16xf32>
      %74 = vector.multi_reduction <add>, %73, %cst_53 [0] : vector<392x16xf32> to vector<16xf32>
      %75 = vector.shape_cast %74 : vector<16xf32> to vector<1x16xf32>
      %76 = arith.addf %68, %75 : vector<1x16xf32>
      %c2_54 = arith.constant 2 : index
      %c0_55 = arith.constant 0 : index
      %c0_56 = arith.constant 0 : index
      %77 = vector.load %arg6[%c2_54, %c0_55, %c0_56] : memref<4x392x16xf32, #tpu.memory_space<vmem>>, vector<1x392x16xf32>
      %78 = vector.shape_cast %77 : vector<1x392x16xf32> to vector<392x16xf32>
      %79 = vector.broadcast %59 : vector<1x16xf32> to vector<392x16xf32>
      %80 = arith.subf %78, %79 : vector<392x16xf32>
      %81 = arith.mulf %80, %80 : vector<392x16xf32>
      %cst_57 = arith.constant dense<0.000000e+00> : vector<16xf32>
      %82 = vector.multi_reduction <add>, %81, %cst_57 [0] : vector<392x16xf32> to vector<16xf32>
      %83 = vector.shape_cast %82 : vector<16xf32> to vector<1x16xf32>
      %84 = arith.addf %76, %83 : vector<1x16xf32>
      %c3_58 = arith.constant 3 : index
      %c0_59 = arith.constant 0 : index
      %c0_60 = arith.constant 0 : index
      %85 = vector.load %arg6[%c3_58, %c0_59, %c0_60] : memref<4x392x16xf32, #tpu.memory_space<vmem>>, vector<1x392x16xf32>
      %86 = vector.shape_cast %85 : vector<1x392x16xf32> to vector<392x16xf32>
      %87 = vector.broadcast %59 : vector<1x16xf32> to vector<392x16xf32>
      %88 = arith.subf %86, %87 : vector<392x16xf32>
      %89 = arith.mulf %88, %88 : vector<392x16xf32>
      %cst_61 = arith.constant dense<0.000000e+00> : vector<16xf32>
      %90 = vector.multi_reduction <add>, %89, %cst_61 [0] : vector<392x16xf32> to vector<16xf32>
      %91 = vector.shape_cast %90 : vector<16xf32> to vector<1x16xf32>
      %92 = arith.addf %84, %91 : vector<1x16xf32>
      %cst_62 = arith.constant 6.37755089E-4 : f32
      %93 = vector.broadcast %cst_62 : f32 to vector<1x16xf32>
      %94 = arith.mulf %92, %93 : vector<1x16xf32>
      %c0_63 = arith.constant 0 : index
      %c0_64 = arith.constant 0 : index
      %95 = vector.load %arg3[%c0_63, %c0_64] : memref<1x16xf32, #tpu.memory_space<vmem>>, vector<1x16xf32>
      %cst_65 = arith.constant 9.99999974E-6 : f32
      %96 = vector.broadcast %cst_65 : f32 to vector<1x16xf32>
      %97 = arith.addf %94, %96 : vector<1x16xf32>
      %98 = math.rsqrt %97 : vector<1x16xf32>
      %99 = arith.mulf %95, %98 : vector<1x16xf32>
      %c0_66 = arith.constant 0 : index
      %c0_67 = arith.constant 0 : index
      %100 = vector.load %arg4[%c0_66, %c0_67] : memref<1x16xf32, #tpu.memory_space<vmem>>, vector<1x16xf32>
      %101 = arith.mulf %59, %99 : vector<1x16xf32>
      %102 = arith.subf %100, %101 : vector<1x16xf32>
      %c0_68 = arith.constant 0 : index
      %c0_69 = arith.constant 0 : index
      %c0_70 = arith.constant 0 : index
      %103 = vector.load %arg6[%c0_68, %c0_69, %c0_70] : memref<4x392x16xf32, #tpu.memory_space<vmem>>, vector<1x392x16xf32>
      %104 = vector.shape_cast %103 : vector<1x392x16xf32> to vector<392x16xf32>
      %105 = vector.broadcast %99 : vector<1x16xf32> to vector<392x16xf32>
      %106 = arith.mulf %104, %105 : vector<392x16xf32>
      %107 = vector.broadcast %102 : vector<1x16xf32> to vector<392x16xf32>
      %108 = arith.addf %106, %107 : vector<392x16xf32>
      %c1_71 = arith.constant 1 : index
      %c0_72 = arith.constant 0 : index
      %c0_73 = arith.constant 0 : index
      %109 = vector.load %arg6[%c1_71, %c0_72, %c0_73] : memref<4x392x16xf32, #tpu.memory_space<vmem>>, vector<1x392x16xf32>
      %110 = vector.shape_cast %109 : vector<1x392x16xf32> to vector<392x16xf32>
      %111 = vector.broadcast %99 : vector<1x16xf32> to vector<392x16xf32>
      %112 = arith.mulf %110, %111 : vector<392x16xf32>
      %113 = vector.broadcast %102 : vector<1x16xf32> to vector<392x16xf32>
      %114 = arith.addf %112, %113 : vector<392x16xf32>
      %115 = arith.maximumf %108, %114 : vector<392x16xf32>
      %c2_74 = arith.constant 2 : index
      %c0_75 = arith.constant 0 : index
      %c0_76 = arith.constant 0 : index
      %116 = vector.load %arg6[%c2_74, %c0_75, %c0_76] : memref<4x392x16xf32, #tpu.memory_space<vmem>>, vector<1x392x16xf32>
      %117 = vector.shape_cast %116 : vector<1x392x16xf32> to vector<392x16xf32>
      %118 = vector.broadcast %99 : vector<1x16xf32> to vector<392x16xf32>
      %119 = arith.mulf %117, %118 : vector<392x16xf32>
      %120 = vector.broadcast %102 : vector<1x16xf32> to vector<392x16xf32>
      %121 = arith.addf %119, %120 : vector<392x16xf32>
      %122 = arith.maximumf %115, %121 : vector<392x16xf32>
      %c3_77 = arith.constant 3 : index
      %c0_78 = arith.constant 0 : index
      %c0_79 = arith.constant 0 : index
      %123 = vector.load %arg6[%c3_77, %c0_78, %c0_79] : memref<4x392x16xf32, #tpu.memory_space<vmem>>, vector<1x392x16xf32>
      %124 = vector.shape_cast %123 : vector<1x392x16xf32> to vector<392x16xf32>
      %125 = vector.broadcast %99 : vector<1x16xf32> to vector<392x16xf32>
      %126 = arith.mulf %124, %125 : vector<392x16xf32>
      %127 = vector.broadcast %102 : vector<1x16xf32> to vector<392x16xf32>
      %128 = arith.addf %126, %127 : vector<392x16xf32>
      %129 = arith.maximumf %122, %128 : vector<392x16xf32>
      %cst_80 = arith.constant 0.000000e+00 : f32
      %130 = vector.broadcast %cst_80 : f32 to vector<392x16xf32>
      %131 = arith.maximumf %129, %130 : vector<392x16xf32>
      %132 = arith.truncf %131 : vector<392x16xf32> to vector<392x16xbf16>
      %c0_81 = arith.constant 0 : index
      %c0_82 = arith.constant 0 : index
      %133 = vector.load %arg5[%c0_81, %c0_82] : memref<392x16xbf16, #tpu.memory_space<vmem>>, vector<392x16xbf16>
      tpu.vector_store %arg5[%c0_81, %c0_82], %132 {strides = array<i32>} : memref<392x16xbf16, #tpu.memory_space<vmem>>, vector<392x16xbf16>,
    } else {
    }
    return
  }
  func.func @transform_0(%arg0: i32) -> (i32, i32, i32) {
    %c0_i32 = arith.constant 0 : i32
    %c0_i32_0 = arith.constant 0 : i32
    %c0_i32_1 = arith.constant 0 : i32
    return %c0_i32, %arg0, %c0_i32_0 : i32, i32, i32
  }
  func.func @transform_1(%arg0: i32) -> (i32, i32) {
    %c0_i32 = arith.constant 0 : i32
    %c0_i32_0 = arith.constant 0 : i32
    %c0_i32_1 = arith.constant 0 : i32
    return %c0_i32, %c0_i32_0 : i32, i32
  }
  func.func @transform_2(%arg0: i32) -> (i32, i32) {
    %c0_i32 = arith.constant 0 : i32
    %c0_i32_0 = arith.constant 0 : i32
    %c0_i32_1 = arith.constant 0 : i32
    return %c0_i32, %c0_i32_0 : i32, i32
  }
  func.func @transform_3(%arg0: i32) -> (i32, i32) {
    %c0_i32 = arith.constant 0 : i32
    %c0_i32_0 = arith.constant 0 : i32
    %c0_i32_1 = arith.constant 0 : i32
    return %c0_i32, %c0_i32_0 : i32, i32
  }
  func.func @transform_4(%arg0: i32) -> (i32, i32) {
    %c0_i32 = arith.constant 0 : i32
    %c0_i32_0 = arith.constant 0 : i32
    %c0_i32_1 = arith.constant 0 : i32
    return %c0_i32, %c0_i32_0 : i32, i32
  }
}

module attributes {stable_mosaic.version = 11 : i64} {
  func.func @conv_bn_relu_pool_kernel(%arg0: i32, %arg1: memref<4x98x400xbf16, #tpu.memory_space<vmem>>, %arg2: memref<400x32xbf16, #tpu.memory_space<vmem>>, %arg3: memref<1x32xf32, #tpu.memory_space<vmem>>, %arg4: memref<1x32xf32, #tpu.memory_space<vmem>>, %arg5: memref<98x32xbf16, #tpu.memory_space<vmem>>, %arg6: memref<4x98x32xf32, #tpu.memory_space<vmem>>) attributes {dimension_semantics = [#tpu.dimension_semantics<arbitrary>], iteration_bounds = array<i64: 1>, scalar_prefetch = 0 : i64, scratch_operands = 1 : i64, tpu.core_type = #tpu.core_type<tc>, window_params = [{transform_indices = @transform_0, window_bounds = array<i64: 4, 98, 400>}, {pipeline_mode = #tpu.pipeline_mode<synchronous>, transform_indices = @transform_1, window_bounds = array<i64: 400, 32>}, {pipeline_mode = #tpu.pipeline_mode<synchronous>, transform_indices = @transform_2, window_bounds = array<i64: 1, 32>}, {pipeline_mode = #tpu.pipeline_mode<synchronous>, transform_indices = @transform_3, window_bounds = array<i64: 1, 32>}, {pipeline_mode = #tpu.pipeline_mode<synchronous>, transform_indices = @transform_4, window_bounds = array<i64: 98, 32>}]} {
    %c98_i32 = arith.constant 98 : i32
    %0 = arith.muli %arg0, %c98_i32 : i32
    %c0 = arith.constant 0 : index
    %c0_0 = arith.constant 0 : index
    %c0_1 = arith.constant 0 : index
    %1 = vector.load %arg1[%c0, %c0_0, %c0_1] : memref<4x98x400xbf16, #tpu.memory_space<vmem>>, vector<1x98x400xbf16>
    %2 = vector.shape_cast %1 : vector<1x98x400xbf16> to vector<98x400xbf16>
    %c0_2 = arith.constant 0 : index
    %c0_3 = arith.constant 0 : index
    %3 = vector.load %arg2[%c0_2, %c0_3] : memref<400x32xbf16, #tpu.memory_space<vmem>>, vector<400x32xbf16>
    %cst = arith.constant dense<0.000000e+00> : vector<98x32xf32>
    %4 = tpu.matmul %2, %3, %cst {dimension_numbers = #tpu.dot_dimension_numbers<[1], [0], [0], [1], [0, 0, 1, 1], [], []>} : vector<98x400xbf16>, vector<400x32xbf16>, vector<98x32xf32> -> vector<98x32xf32>
    %c0_4 = arith.constant 0 : index
    %5 = arith.index_cast %0 : i32 to index
    %c0_5 = arith.constant 0 : index
    %6 = vector.load %arg6[%c0_4, %5, %c0_5] : memref<4x98x32xf32, #tpu.memory_space<vmem>>, vector<1x98x32xf32>
    %7 = vector.shape_cast %6 : vector<1x98x32xf32> to vector<98x32xf32>
    %8 = vector.shape_cast %4 : vector<98x32xf32> to vector<1x98x32xf32>
    tpu.vector_store %arg6[%c0_4, %5, %c0_5], %8 {strides = array<i32>} : memref<4x98x32xf32, #tpu.memory_space<vmem>>, vector<1x98x32xf32>,
    %c1 = arith.constant 1 : index
    %c0_6 = arith.constant 0 : index
    %c0_7 = arith.constant 0 : index
    %9 = vector.load %arg1[%c1, %c0_6, %c0_7] : memref<4x98x400xbf16, #tpu.memory_space<vmem>>, vector<1x98x400xbf16>
    %10 = vector.shape_cast %9 : vector<1x98x400xbf16> to vector<98x400xbf16>
    %c0_8 = arith.constant 0 : index
    %c0_9 = arith.constant 0 : index
    %11 = vector.load %arg2[%c0_8, %c0_9] : memref<400x32xbf16, #tpu.memory_space<vmem>>, vector<400x32xbf16>
    %cst_10 = arith.constant dense<0.000000e+00> : vector<98x32xf32>
    %12 = tpu.matmul %10, %11, %cst_10 {dimension_numbers = #tpu.dot_dimension_numbers<[1], [0], [0], [1], [0, 0, 1, 1], [], []>} : vector<98x400xbf16>, vector<400x32xbf16>, vector<98x32xf32> -> vector<98x32xf32>
    %c1_11 = arith.constant 1 : index
    %13 = arith.index_cast %0 : i32 to index
    %c0_12 = arith.constant 0 : index
    %14 = vector.load %arg6[%c1_11, %13, %c0_12] : memref<4x98x32xf32, #tpu.memory_space<vmem>>, vector<1x98x32xf32>
    %15 = vector.shape_cast %14 : vector<1x98x32xf32> to vector<98x32xf32>
    %16 = vector.shape_cast %12 : vector<98x32xf32> to vector<1x98x32xf32>
    tpu.vector_store %arg6[%c1_11, %13, %c0_12], %16 {strides = array<i32>} : memref<4x98x32xf32, #tpu.memory_space<vmem>>, vector<1x98x32xf32>,
    %c2 = arith.constant 2 : index
    %c0_13 = arith.constant 0 : index
    %c0_14 = arith.constant 0 : index
    %17 = vector.load %arg1[%c2, %c0_13, %c0_14] : memref<4x98x400xbf16, #tpu.memory_space<vmem>>, vector<1x98x400xbf16>
    %18 = vector.shape_cast %17 : vector<1x98x400xbf16> to vector<98x400xbf16>
    %c0_15 = arith.constant 0 : index
    %c0_16 = arith.constant 0 : index
    %19 = vector.load %arg2[%c0_15, %c0_16] : memref<400x32xbf16, #tpu.memory_space<vmem>>, vector<400x32xbf16>
    %cst_17 = arith.constant dense<0.000000e+00> : vector<98x32xf32>
    %20 = tpu.matmul %18, %19, %cst_17 {dimension_numbers = #tpu.dot_dimension_numbers<[1], [0], [0], [1], [0, 0, 1, 1], [], []>} : vector<98x400xbf16>, vector<400x32xbf16>, vector<98x32xf32> -> vector<98x32xf32>
    %c2_18 = arith.constant 2 : index
    %21 = arith.index_cast %0 : i32 to index
    %c0_19 = arith.constant 0 : index
    %22 = vector.load %arg6[%c2_18, %21, %c0_19] : memref<4x98x32xf32, #tpu.memory_space<vmem>>, vector<1x98x32xf32>
    %23 = vector.shape_cast %22 : vector<1x98x32xf32> to vector<98x32xf32>
    %24 = vector.shape_cast %20 : vector<98x32xf32> to vector<1x98x32xf32>
    tpu.vector_store %arg6[%c2_18, %21, %c0_19], %24 {strides = array<i32>} : memref<4x98x32xf32, #tpu.memory_space<vmem>>, vector<1x98x32xf32>,
    %c3 = arith.constant 3 : index
    %c0_20 = arith.constant 0 : index
    %c0_21 = arith.constant 0 : index
    %25 = vector.load %arg1[%c3, %c0_20, %c0_21] : memref<4x98x400xbf16, #tpu.memory_space<vmem>>, vector<1x98x400xbf16>
    %26 = vector.shape_cast %25 : vector<1x98x400xbf16> to vector<98x400xbf16>
    %c0_22 = arith.constant 0 : index
    %c0_23 = arith.constant 0 : index
    %27 = vector.load %arg2[%c0_22, %c0_23] : memref<400x32xbf16, #tpu.memory_space<vmem>>, vector<400x32xbf16>
    %cst_24 = arith.constant dense<0.000000e+00> : vector<98x32xf32>
    %28 = tpu.matmul %26, %27, %cst_24 {dimension_numbers = #tpu.dot_dimension_numbers<[1], [0], [0], [1], [0, 0, 1, 1], [], []>} : vector<98x400xbf16>, vector<400x32xbf16>, vector<98x32xf32> -> vector<98x32xf32>
    %c3_25 = arith.constant 3 : index
    %29 = arith.index_cast %0 : i32 to index
    %c0_26 = arith.constant 0 : index
    %30 = vector.load %arg6[%c3_25, %29, %c0_26] : memref<4x98x32xf32, #tpu.memory_space<vmem>>, vector<1x98x32xf32>
    %31 = vector.shape_cast %30 : vector<1x98x32xf32> to vector<98x32xf32>
    %32 = vector.shape_cast %28 : vector<98x32xf32> to vector<1x98x32xf32>
    tpu.vector_store %arg6[%c3_25, %29, %c0_26], %32 {strides = array<i32>} : memref<4x98x32xf32, #tpu.memory_space<vmem>>, vector<1x98x32xf32>,
    %c0_i32 = arith.constant 0 : i32
    %33 = arith.cmpi eq, %arg0, %c0_i32 : i32
    %34 = arith.extui %33 : i1 to i32
    %c0_i32_27 = arith.constant 0 : i32
    %35 = arith.cmpi ne, %34, %c0_i32_27 : i32
    scf.if %35 {
      %cst_28 = arith.constant 0.000000e+00 : f32
      %36 = vector.broadcast %cst_28 : f32 to vector<1x32xf32>
      %c0_29 = arith.constant 0 : index
      %c0_30 = arith.constant 0 : index
      %c0_31 = arith.constant 0 : index
      %37 = vector.load %arg6[%c0_29, %c0_30, %c0_31] : memref<4x98x32xf32, #tpu.memory_space<vmem>>, vector<1x98x32xf32>
      %38 = vector.shape_cast %37 : vector<1x98x32xf32> to vector<98x32xf32>
      %cst_32 = arith.constant dense<0.000000e+00> : vector<32xf32>
      %39 = vector.multi_reduction <add>, %38, %cst_32 [0] : vector<98x32xf32> to vector<32xf32>
      %40 = vector.shape_cast %39 : vector<32xf32> to vector<1x32xf32>
      %41 = arith.addf %36, %40 : vector<1x32xf32>
      %c1_33 = arith.constant 1 : index
      %c0_34 = arith.constant 0 : index
      %c0_35 = arith.constant 0 : index
      %42 = vector.load %arg6[%c1_33, %c0_34, %c0_35] : memref<4x98x32xf32, #tpu.memory_space<vmem>>, vector<1x98x32xf32>
      %43 = vector.shape_cast %42 : vector<1x98x32xf32> to vector<98x32xf32>
      %cst_36 = arith.constant dense<0.000000e+00> : vector<32xf32>
      %44 = vector.multi_reduction <add>, %43, %cst_36 [0] : vector<98x32xf32> to vector<32xf32>
      %45 = vector.shape_cast %44 : vector<32xf32> to vector<1x32xf32>
      %46 = arith.addf %41, %45 : vector<1x32xf32>
      %c2_37 = arith.constant 2 : index
      %c0_38 = arith.constant 0 : index
      %c0_39 = arith.constant 0 : index
      %47 = vector.load %arg6[%c2_37, %c0_38, %c0_39] : memref<4x98x32xf32, #tpu.memory_space<vmem>>, vector<1x98x32xf32>
      %48 = vector.shape_cast %47 : vector<1x98x32xf32> to vector<98x32xf32>
      %cst_40 = arith.constant dense<0.000000e+00> : vector<32xf32>
      %49 = vector.multi_reduction <add>, %48, %cst_40 [0] : vector<98x32xf32> to vector<32xf32>
      %50 = vector.shape_cast %49 : vector<32xf32> to vector<1x32xf32>
      %51 = arith.addf %46, %50 : vector<1x32xf32>
      %c3_41 = arith.constant 3 : index
      %c0_42 = arith.constant 0 : index
      %c0_43 = arith.constant 0 : index
      %52 = vector.load %arg6[%c3_41, %c0_42, %c0_43] : memref<4x98x32xf32, #tpu.memory_space<vmem>>, vector<1x98x32xf32>
      %53 = vector.shape_cast %52 : vector<1x98x32xf32> to vector<98x32xf32>
      %cst_44 = arith.constant dense<0.000000e+00> : vector<32xf32>
      %54 = vector.multi_reduction <add>, %53, %cst_44 [0] : vector<98x32xf32> to vector<32xf32>
      %55 = vector.shape_cast %54 : vector<32xf32> to vector<1x32xf32>
      %56 = arith.addf %51, %55 : vector<1x32xf32>
      %cst_45 = arith.constant 0.00255102036 : f32
      %57 = vector.broadcast %cst_45 : f32 to vector<1x32xf32>
      %58 = arith.mulf %56, %57 : vector<1x32xf32>
      %cst_46 = arith.constant 0.000000e+00 : f32
      %59 = vector.broadcast %cst_46 : f32 to vector<1x32xf32>
      %c0_47 = arith.constant 0 : index
      %c0_48 = arith.constant 0 : index
      %c0_49 = arith.constant 0 : index
      %60 = vector.load %arg6[%c0_47, %c0_48, %c0_49] : memref<4x98x32xf32, #tpu.memory_space<vmem>>, vector<1x98x32xf32>
      %61 = vector.shape_cast %60 : vector<1x98x32xf32> to vector<98x32xf32>
      %62 = vector.broadcast %58 : vector<1x32xf32> to vector<98x32xf32>
      %63 = arith.subf %61, %62 : vector<98x32xf32>
      %64 = arith.mulf %63, %63 : vector<98x32xf32>
      %cst_50 = arith.constant dense<0.000000e+00> : vector<32xf32>
      %65 = vector.multi_reduction <add>, %64, %cst_50 [0] : vector<98x32xf32> to vector<32xf32>
      %66 = vector.shape_cast %65 : vector<32xf32> to vector<1x32xf32>
      %67 = arith.addf %59, %66 : vector<1x32xf32>
      %c1_51 = arith.constant 1 : index
      %c0_52 = arith.constant 0 : index
      %c0_53 = arith.constant 0 : index
      %68 = vector.load %arg6[%c1_51, %c0_52, %c0_53] : memref<4x98x32xf32, #tpu.memory_space<vmem>>, vector<1x98x32xf32>
      %69 = vector.shape_cast %68 : vector<1x98x32xf32> to vector<98x32xf32>
      %70 = vector.broadcast %58 : vector<1x32xf32> to vector<98x32xf32>
      %71 = arith.subf %69, %70 : vector<98x32xf32>
      %72 = arith.mulf %71, %71 : vector<98x32xf32>
      %cst_54 = arith.constant dense<0.000000e+00> : vector<32xf32>
      %73 = vector.multi_reduction <add>, %72, %cst_54 [0] : vector<98x32xf32> to vector<32xf32>
      %74 = vector.shape_cast %73 : vector<32xf32> to vector<1x32xf32>
      %75 = arith.addf %67, %74 : vector<1x32xf32>
      %c2_55 = arith.constant 2 : index
      %c0_56 = arith.constant 0 : index
      %c0_57 = arith.constant 0 : index
      %76 = vector.load %arg6[%c2_55, %c0_56, %c0_57] : memref<4x98x32xf32, #tpu.memory_space<vmem>>, vector<1x98x32xf32>
      %77 = vector.shape_cast %76 : vector<1x98x32xf32> to vector<98x32xf32>
      %78 = vector.broadcast %58 : vector<1x32xf32> to vector<98x32xf32>
      %79 = arith.subf %77, %78 : vector<98x32xf32>
      %80 = arith.mulf %79, %79 : vector<98x32xf32>
      %cst_58 = arith.constant dense<0.000000e+00> : vector<32xf32>
      %81 = vector.multi_reduction <add>, %80, %cst_58 [0] : vector<98x32xf32> to vector<32xf32>
      %82 = vector.shape_cast %81 : vector<32xf32> to vector<1x32xf32>
      %83 = arith.addf %75, %82 : vector<1x32xf32>
      %c3_59 = arith.constant 3 : index
      %c0_60 = arith.constant 0 : index
      %c0_61 = arith.constant 0 : index
      %84 = vector.load %arg6[%c3_59, %c0_60, %c0_61] : memref<4x98x32xf32, #tpu.memory_space<vmem>>, vector<1x98x32xf32>
      %85 = vector.shape_cast %84 : vector<1x98x32xf32> to vector<98x32xf32>
      %86 = vector.broadcast %58 : vector<1x32xf32> to vector<98x32xf32>
      %87 = arith.subf %85, %86 : vector<98x32xf32>
      %88 = arith.mulf %87, %87 : vector<98x32xf32>
      %cst_62 = arith.constant dense<0.000000e+00> : vector<32xf32>
      %89 = vector.multi_reduction <add>, %88, %cst_62 [0] : vector<98x32xf32> to vector<32xf32>
      %90 = vector.shape_cast %89 : vector<32xf32> to vector<1x32xf32>
      %91 = arith.addf %83, %90 : vector<1x32xf32>
      %cst_63 = arith.constant 0.00255102036 : f32
      %92 = vector.broadcast %cst_63 : f32 to vector<1x32xf32>
      %93 = arith.mulf %91, %92 : vector<1x32xf32>
      %c0_64 = arith.constant 0 : index
      %c0_65 = arith.constant 0 : index
      %94 = vector.load %arg3[%c0_64, %c0_65] : memref<1x32xf32, #tpu.memory_space<vmem>>, vector<1x32xf32>
      %cst_66 = arith.constant 9.99999974E-6 : f32
      %95 = vector.broadcast %cst_66 : f32 to vector<1x32xf32>
      %96 = arith.addf %93, %95 : vector<1x32xf32>
      %97 = math.rsqrt %96 : vector<1x32xf32>
      %98 = arith.mulf %94, %97 : vector<1x32xf32>
      %c0_67 = arith.constant 0 : index
      %c0_68 = arith.constant 0 : index
      %99 = vector.load %arg4[%c0_67, %c0_68] : memref<1x32xf32, #tpu.memory_space<vmem>>, vector<1x32xf32>
      %100 = arith.mulf %58, %98 : vector<1x32xf32>
      %101 = arith.subf %99, %100 : vector<1x32xf32>
      %c0_69 = arith.constant 0 : index
      %c0_70 = arith.constant 0 : index
      %c0_71 = arith.constant 0 : index
      %102 = vector.load %arg6[%c0_69, %c0_70, %c0_71] : memref<4x98x32xf32, #tpu.memory_space<vmem>>, vector<1x98x32xf32>
      %103 = vector.shape_cast %102 : vector<1x98x32xf32> to vector<98x32xf32>
      %104 = vector.broadcast %98 : vector<1x32xf32> to vector<98x32xf32>
      %105 = arith.mulf %103, %104 : vector<98x32xf32>
      %106 = vector.broadcast %101 : vector<1x32xf32> to vector<98x32xf32>
      %107 = arith.addf %105, %106 : vector<98x32xf32>
      %c1_72 = arith.constant 1 : index
      %c0_73 = arith.constant 0 : index
      %c0_74 = arith.constant 0 : index
      %108 = vector.load %arg6[%c1_72, %c0_73, %c0_74] : memref<4x98x32xf32, #tpu.memory_space<vmem>>, vector<1x98x32xf32>
      %109 = vector.shape_cast %108 : vector<1x98x32xf32> to vector<98x32xf32>
      %110 = vector.broadcast %98 : vector<1x32xf32> to vector<98x32xf32>
      %111 = arith.mulf %109, %110 : vector<98x32xf32>
      %112 = vector.broadcast %101 : vector<1x32xf32> to vector<98x32xf32>
      %113 = arith.addf %111, %112 : vector<98x32xf32>
      %114 = arith.maximumf %107, %113 : vector<98x32xf32>
      %c2_75 = arith.constant 2 : index
      %c0_76 = arith.constant 0 : index
      %c0_77 = arith.constant 0 : index
      %115 = vector.load %arg6[%c2_75, %c0_76, %c0_77] : memref<4x98x32xf32, #tpu.memory_space<vmem>>, vector<1x98x32xf32>
      %116 = vector.shape_cast %115 : vector<1x98x32xf32> to vector<98x32xf32>
      %117 = vector.broadcast %98 : vector<1x32xf32> to vector<98x32xf32>
      %118 = arith.mulf %116, %117 : vector<98x32xf32>
      %119 = vector.broadcast %101 : vector<1x32xf32> to vector<98x32xf32>
      %120 = arith.addf %118, %119 : vector<98x32xf32>
      %121 = arith.maximumf %114, %120 : vector<98x32xf32>
      %c3_78 = arith.constant 3 : index
      %c0_79 = arith.constant 0 : index
      %c0_80 = arith.constant 0 : index
      %122 = vector.load %arg6[%c3_78, %c0_79, %c0_80] : memref<4x98x32xf32, #tpu.memory_space<vmem>>, vector<1x98x32xf32>
      %123 = vector.shape_cast %122 : vector<1x98x32xf32> to vector<98x32xf32>
      %124 = vector.broadcast %98 : vector<1x32xf32> to vector<98x32xf32>
      %125 = arith.mulf %123, %124 : vector<98x32xf32>
      %126 = vector.broadcast %101 : vector<1x32xf32> to vector<98x32xf32>
      %127 = arith.addf %125, %126 : vector<98x32xf32>
      %128 = arith.maximumf %121, %127 : vector<98x32xf32>
      %cst_81 = arith.constant 0.000000e+00 : f32
      %129 = vector.broadcast %cst_81 : f32 to vector<98x32xf32>
      %130 = arith.maximumf %128, %129 : vector<98x32xf32>
      %131 = arith.truncf %130 : vector<98x32xf32> to vector<98x32xbf16>
      %c0_82 = arith.constant 0 : index
      %c0_83 = arith.constant 0 : index
      %132 = vector.load %arg5[%c0_82, %c0_83] : memref<98x32xbf16, #tpu.memory_space<vmem>>, vector<98x32xbf16>
      tpu.vector_store %arg5[%c0_82, %c0_83], %131 {strides = array<i32>} : memref<98x32xbf16, #tpu.memory_space<vmem>>, vector<98x32xbf16>,
    } else {
    }
    return
  }
  func.func @transform_0(%arg0: i32) -> (i32, i32, i32) {
    %c0_i32 = arith.constant 0 : i32
    %c0_i32_0 = arith.constant 0 : i32
    %c0_i32_1 = arith.constant 0 : i32
    return %c0_i32, %arg0, %c0_i32_0 : i32, i32, i32
  }
  func.func @transform_1(%arg0: i32) -> (i32, i32) {
    %c0_i32 = arith.constant 0 : i32
    %c0_i32_0 = arith.constant 0 : i32
    %c0_i32_1 = arith.constant 0 : i32
    return %c0_i32, %c0_i32_0 : i32, i32
  }
  func.func @transform_2(%arg0: i32) -> (i32, i32) {
    %c0_i32 = arith.constant 0 : i32
    %c0_i32_0 = arith.constant 0 : i32
    %c0_i32_1 = arith.constant 0 : i32
    return %c0_i32, %c0_i32_0 : i32, i32
  }
  func.func @transform_3(%arg0: i32) -> (i32, i32) {
    %c0_i32 = arith.constant 0 : i32
    %c0_i32_0 = arith.constant 0 : i32
    %c0_i32_1 = arith.constant 0 : i32
    return %c0_i32, %c0_i32_0 : i32, i32
  }
  func.func @transform_4(%arg0: i32) -> (i32, i32) {
    %c0_i32 = arith.constant 0 : i32
    %c0_i32_0 = arith.constant 0 : i32
    %c0_i32_1 = arith.constant 0 : i32
    return %c0_i32, %c0_i32_0 : i32, i32
  }
}

module attributes {stable_mosaic.version = 11 : i64} {
  func.func @fc_kernel(%arg0: i32, %arg1: memref<2x1568xbf16, #tpu.memory_space<vmem>>, %arg2: memref<1568x128xbf16, #tpu.memory_space<vmem>>, %arg3: memref<1x128xf32, #tpu.memory_space<vmem>>, %arg4: memref<2x128xf32, #tpu.memory_space<vmem>>) attributes {dimension_semantics = [#tpu.dimension_semantics<arbitrary>], iteration_bounds = array<i64: 1>, scalar_prefetch = 0 : i64, scratch_operands = 0 : i64, tpu.core_type = #tpu.core_type<tc>, window_params = [{pipeline_mode = #tpu.pipeline_mode<synchronous>, transform_indices = @transform_0, window_bounds = array<i64: 2, 1568>}, {pipeline_mode = #tpu.pipeline_mode<synchronous>, transform_indices = @transform_1, window_bounds = array<i64: 1568, 128>}, {pipeline_mode = #tpu.pipeline_mode<synchronous>, transform_indices = @transform_2, window_bounds = array<i64: 1, 128>}, {pipeline_mode = #tpu.pipeline_mode<synchronous>, transform_indices = @transform_3, window_bounds = array<i64: 2, 128>}]} {
    %c0 = arith.constant 0 : index
    %c0_0 = arith.constant 0 : index
    %0 = vector.load %arg1[%c0, %c0_0] : memref<2x1568xbf16, #tpu.memory_space<vmem>>, vector<2x1568xbf16>
    %c0_1 = arith.constant 0 : index
    %c0_2 = arith.constant 0 : index
    %1 = vector.load %arg2[%c0_1, %c0_2] : memref<1568x128xbf16, #tpu.memory_space<vmem>>, vector<1568x128xbf16>
    %cst = arith.constant dense<0.000000e+00> : vector<2x128xf32>
    %2 = tpu.matmul %0, %1, %cst {dimension_numbers = #tpu.dot_dimension_numbers<[1], [0], [0], [1], [0, 0, 1, 1], [], []>} : vector<2x1568xbf16>, vector<1568x128xbf16>, vector<2x128xf32> -> vector<2x128xf32>
    %c0_3 = arith.constant 0 : index
    %c0_4 = arith.constant 0 : index
    %3 = vector.load %arg3[%c0_3, %c0_4] : memref<1x128xf32, #tpu.memory_space<vmem>>, vector<1x128xf32>
    %4 = vector.broadcast %3 : vector<1x128xf32> to vector<2x128xf32>
    %5 = arith.addf %2, %4 : vector<2x128xf32>
    %c0_5 = arith.constant 0 : index
    %c0_6 = arith.constant 0 : index
    %6 = vector.load %arg4[%c0_5, %c0_6] : memref<2x128xf32, #tpu.memory_space<vmem>>, vector<2x128xf32>
    tpu.vector_store %arg4[%c0_5, %c0_6], %5 {strides = array<i32>} : memref<2x128xf32, #tpu.memory_space<vmem>>, vector<2x128xf32>,
    return
  }
  func.func @transform_0(%arg0: i32) -> (i32, i32) {
    %c0_i32 = arith.constant 0 : i32
    %c0_i32_0 = arith.constant 0 : i32
    %c0_i32_1 = arith.constant 0 : i32
    return %c0_i32, %c0_i32_0 : i32, i32
  }
  func.func @transform_1(%arg0: i32) -> (i32, i32) {
    %c0_i32 = arith.constant 0 : i32
    %c0_i32_0 = arith.constant 0 : i32
    %c0_i32_1 = arith.constant 0 : i32
    return %c0_i32, %c0_i32_0 : i32, i32
  }
  func.func @transform_2(%arg0: i32) -> (i32, i32) {
    %c0_i32 = arith.constant 0 : i32
    %c0_i32_0 = arith.constant 0 : i32
    %c0_i32_1 = arith.constant 0 : i32
    return %c0_i32, %c0_i32_0 : i32, i32
  }
  func.func @transform_3(%arg0: i32) -> (i32, i32) {
    %c0_i32 = arith.constant 0 : i32
    %c0_i32_0 = arith.constant 0 : i32
    %c0_i32_1 = arith.constant 0 : i32
    return %c0_i32, %c0_i32_0 : i32, i32
  }
}

</mosaic_0001>

<llo_original>
// kernel: convnet_forward.3
$region0: #{convnet_forward.3}
  #allocation0 [shape = 'u32[]', space=smem, size = 0x4, offset = 0x4, fixed_abs, tag = 'smem constant byte address 0x4 - core index']
  #allocation1 [shape = 'u32[72,128]{1,0:T(1,128)}', space=vmem, size = 0x9000, scoped, tag = 'internal scratch']
  #allocation2 [shape = 'f32[4,392,16]{2,1,0:T(8,128)}', space=vmem, size = 0xc4000, scoped, tag = 'scratch operand']
  %s0 = inlined_call_operand.vmem [shape: bf16[4,392,25], index: 0, kind: input, shape index: {}]
  %s1 = inlined_call_operand.vmem [shape: bf16[25,16], index: 1, kind: input, shape index: {}]
  %s2 = inlined_call_operand.vmem [shape: f32[1,16], index: 2, kind: input, shape index: {}]
  %s3 = inlined_call_operand.vmem [shape: f32[1,16], index: 3, kind: input, shape index: {}]
  %s4 = inlined_call_operand.vmem [shape: bf16[392,16], index: 4, kind: output, shape index: {}]
  %s5 = sld [smem:[#allocation0]]
  $region94: #{convnet_forward.3} parent=0
    _
  %s7 = ssub.s32 1, %s5
  %s8 = scalar_select 0, %s7, %s5
  $region1: #{convnet_forward.3} parent=0
    #allocation3 [shape = 'u8[114688]{0}', space=vmem, size = 0x1c000, scoped, tag = 'input window, operand 0']
    loop: start=0, step=1, limit=9
    $region2: #{convnet_forward.3} parent=1 // loop_pre_header
      _
    $region3: #{convnet_forward.3} parent=1 // loop_header
      %s10 = sphi 0, %s14
      %p11 = scmp.ge.s32.totalorder %s10, 9
      %s20 = sphi 0, %s22
      %s23 = sphi 0, %s20
      %s24 = sphi 0, %s23
      %s40 = sphi 0, %s24
      %s44 = sphi 0, %s44
      %s46 = sphi 0, %s44
      %s47 = sphi 0, %s46
      %s61 = sphi 0, %s47
      %s65 = sphi 0, %s65
      %s67 = sphi 0, %s65
      %s68 = sphi 0, %s67
      %s82 = sphi 0, %s68
      %s86 = sphi 0, %s86
      %s88 = sphi 0, %s86
      %s89 = sphi 0, %s88
      %s103 = sphi 0, %s89
      %s107 = sphi 0, %s107
      %s109 = sphi 0, %s107
      %s110 = sphi 0, %s109
      %s124 = sphi 0, %s110
    $region4: #{convnet_forward.3} parent=1 // loop_header_branch
      %13 = sbr.rel (%p11) target = $region8
    $region5: #{convnet_forward.3} parent=1 // loop_body
      %s15 = ssub.s32 %s10, 1
      %s16 = ssub.s32 %s10, 2
      %s17 = sadd.s32 %s10, 1
      %s18 = ssub.s32 %s10, %s17
      %p19 = scmp.eq.s32.totalorder %s18, 0
      %s21 = sadd.s32 %s20, 1
      %s22 = scalar_select %p19, %s20, %s21
      %p25 = pneg %p19
      %p26 = scmp.eq.s32.totalorder %s10, 6
      %p27 = por %p25, %p26
      %p28 = scmp.ne.s32.totalorder %s20, %s23
      %p29 = scmp.eq.s32.totalorder %s10, 0
      %p30 = por %p28, %p29
      %p31 = scmp.ne.s32.totalorder %s20, %s23
      %p32 = scmp.eq.s32.totalorder %s15, 6
      %p33 = por %p31, %p32
      %p34 = scmp.ne.s32.totalorder %s23, %s24
      %p35 = scmp.eq.s32.totalorder %s15, 0
      %p36 = por %p34, %p35
      %p37 = scmp.ne.s32.totalorder %s23, %s24
      %p38 = scmp.eq.s32.totalorder %s16, 6
      %p39 = por %p37, %p38
      %p41 = scmp.ne.s32.totalorder %s24, %s40
      %p42 = scmp.eq.s32.totalorder %s16, 0
      %p43 = por %p41, %p42
      %s45 = sadd.s32 %s44, 1
      %p48 = scmp.eq.s32.totalorder %s10, 6
      %p49 = scmp.ne.s32.totalorder %s44, %s46
      %p50 = scmp.eq.s32.totalorder %s10, 0
      %p51 = por %p49, %p50
      %p52 = scmp.ne.s32.totalorder %s44, %s46
      %p53 = scmp.eq.s32.totalorder %s15, 6
      %p54 = por %p52, %p53
      %p55 = scmp.ne.s32.totalorder %s46, %s47
      %p56 = scmp.eq.s32.totalorder %s15, 0
      %p57 = por %p55, %p56
      %p58 = scmp.ne.s32.totalorder %s46, %s47
      %p59 = scmp.eq.s32.totalorder %s16, 6
      %p60 = por %p58, %p59
      %p62 = scmp.ne.s32.totalorder %s47, %s61
      %p63 = scmp.eq.s32.totalorder %s16, 0
      %p64 = por %p62, %p63
      %s66 = sadd.s32 %s65, 1
      %p69 = scmp.eq.s32.totalorder %s10, 6
      %p70 = scmp.ne.s32.totalorder %s65, %s67
      %p71 = scmp.eq.s32.totalorder %s10, 0
      %p72 = por %p70, %p71
      %p73 = scmp.ne.s32.totalorder %s65, %s67
      %p74 = scmp.eq.s32.totalorder %s15, 6
      %p75 = por %p73, %p74
      %p76 = scmp.ne.s32.totalorder %s67, %s68
      %p77 = scmp.eq.s32.totalorder %s15, 0
      %p78 = por %p76, %p77
      %p79 = scmp.ne.s32.totalorder %s67, %s68
      %p80 = scmp.eq.s32.totalorder %s16, 6
      %p81 = por %p79, %p80
      %p83 = scmp.ne.s32.totalorder %s68, %s82
      %p84 = scmp.eq.s32.totalorder %s16, 0
      %p85 = por %p83, %p84
      %s87 = sadd.s32 %s86, 1
      %p90 = scmp.eq.s32.totalorder %s10, 6
      %p91 = scmp.ne.s32.totalorder %s86, %s88
      %p92 = scmp.eq.s32.totalorder %s10, 0
      %p93 = por %p91, %p92
      %p94 = scmp.ne.s32.totalorder %s86, %s88
      %p95 = scmp.eq.s32.totalorder %s15, 6
      %p96 = por %p94, %p95
      %p97 = scmp.ne.s32.totalorder %s88, %s89
      %p98 = scmp.eq.s32.totalorder %s15, 0
      %p99 = por %p97, %p98
      %p100 = scmp.ne.s32.totalorder %s88, %s89
      %p101 = scmp.eq.s32.totalorder %s16, 6
      %p102 = por %p100, %p101
      %p104 = scmp.ne.s32.totalorder %s89, %s103
      %p105 = scmp.eq.s32.totalorder %s16, 0
      %p106 = por %p104, %p105
      %s108 = sadd.s32 %s107, 1
      %p111 = scmp.eq.s32.totalorder %s10, 6
      %p112 = scmp.ne.s32.totalorder %s107, %s109
      %p113 = scmp.eq.s32.totalorder %s10, 0
      %p114 = por %p112, %p113
      %p115 = scmp.ne.s32.totalorder %s107, %s109
      %p116 = scmp.eq.s32.totalorder %s15, 6
      %p117 = por %p115, %p116
      %p118 = scmp.ne.s32.totalorder %s109, %s110
      %p119 = scmp.eq.s32.totalorder %s15, 0
      %p120 = por %p118, %p119
      %p121 = scmp.ne.s32.totalorder %s109, %s110
      %p122 = scmp.eq.s32.totalorder %s16, 6
      %p123 = por %p121, %p122
      %p125 = scmp.ne.s32.totalorder %s110, %s124
      %p126 = scmp.eq.s32.totalorder %s16, 0
      %p127 = por %p125, %p126
      %p128 = scmp.le.s32.totalorder 1, %s10
      %p129 = scmp.lt.s32.totalorder %s10, 8
      %p130 = pnand %p128, %p129
      %p131 = pneg %p130
      // Predicated region
      $region9: #{convnet_forward.3} parent=5 // pred_check
        _
      $region10: #{convnet_forward.3} parent=5 // pred_check_branch
        %133 = sbr.rel (%p130) target = $region12
      $region11: #{convnet_forward.3} parent=5 // pred_region
        %s134 = ssub.s32 %s10, 1
        // Predicated region
        $region13: #{convnet_forward.3} parent=11 // pred_check
          %p135 = pneg %p57
        $region14: #{convnet_forward.3} parent=11 // pred_check_branch
          %137 = sbr.rel (%p135) target = $region16
        $region15: #{convnet_forward.3} parent=11 // pred_region
          _
        $region16: #{convnet_forward.3} parent=11 // pred_fallthru
          _
        // Predicated region
        $region17: #{convnet_forward.3} parent=11 // pred_check
          %p138 = pneg %p78
        $region18: #{convnet_forward.3} parent=11 // pred_check_branch
          %140 = sbr.rel (%p138) target = $region20
        $region19: #{convnet_forward.3} parent=11 // pred_region
          _
        $region20: #{convnet_forward.3} parent=11 // pred_fallthru
          _
        // Predicated region
        $region21: #{convnet_forward.3} parent=11 // pred_check
          %p141 = pneg %p99
        $region22: #{convnet_forward.3} parent=11 // pred_check_branch
          %143 = sbr.rel (%p141) target = $region24
        $region23: #{convnet_forward.3} parent=11 // pred_region
          _
        $region24: #{convnet_forward.3} parent=11 // pred_fallthru
          _
      $region12: #{convnet_forward.3} parent=5 // pred_fallthru
        _
      %p144 = scmp.lt.s32.totalorder %s10, 7
      // Predicated region
      $region25: #{convnet_forward.3} parent=5 // pred_check
        %p145 = pneg %p144
      $region26: #{convnet_forward.3} parent=5 // pred_check_branch
        %147 = sbr.rel (%p145) target = $region28
      $region27: #{convnet_forward.3} parent=5 // pred_region
        // Predicated region
        $region29: #{convnet_forward.3} parent=27 // pred_check
          %p148 = pneg %p30
        $region30: #{convnet_forward.3} parent=27 // pred_check_branch
          %150 = sbr.rel (%p148) target = $region32
        $region31: #{convnet_forward.3} parent=27 // pred_region
          %s151 = sand.u32 %s20, 1
          %s152 = sand.u32 %s20, 1
          %s153 = smul.addr %s152, 112
          %s154 = scalar_lea.vmem [#allocation3], %s153
          %s155 = smul.u32 7, %s10
          %s156 = smul.addr %s155, 4
          %s157 = scalar_lea.vmem %s0, %s156
          // Predicated region
          $region33: #{convnet_forward.3} parent=31 // pred_check
            _
          $region34: #{convnet_forward.3} parent=31 // pred_check_branch
            %159 = sbr.rel (0) target = $region36
          $region35: #{convnet_forward.3} parent=31 // pred_region
            // Predicated region
            $region37: #{convnet_forward.3} parent=35 // pred_check
              _
            $region38: #{convnet_forward.3} parent=35 // pred_check_branch
              %161 = sbr.rel target = $region40
            $region39: #{convnet_forward.3} parent=35 // pred_region
              // Predicated region
              $region52: #{convnet_forward.3} parent=39 // pred_check
                _
              $region53: #{convnet_forward.3} parent=39 // pred_check_branch
                %231 = sbr.rel (0) target = $region55
              $region54: #{convnet_forward.3} parent=39 // pred_region
                loop: start=0, step=1, limit=1
                $region56: #{convnet_forward.3} parent=54 // loop_pre_header
                  _
                $region57: #{convnet_forward.3} parent=54 // loop_header
                  %s233 = sphi 0, %s237
                  %p234 = scmp.ge.s32.totalorder %s233, 1
                  %s238 = sphi %s157, %s157
                  %s239 = sphi %s154, %s154
                $region58: #{convnet_forward.3} parent=54 // loop_header_branch
                  %236 = sbr.rel (%p234) target = $region62
                $region59: #{convnet_forward.3} parent=54 // loop_body
                  _
                $region60: #{convnet_forward.3} parent=54 // loop_footer
                  %s237 = sadd.s32 1, %s233
                $region61: #{convnet_forward.3} parent=54 // loop_footer_branch
                  %232 = sbr.rel target = $region57
                $region62: #{convnet_forward.3} parent=54 // loop_exit
                  _
                %s241 = ssub.s32 16, 1
                loop: start=0, step=1, limit=1
                $region63: #{convnet_forward.3} parent=54 // loop_pre_header
                  _
                $region64: #{convnet_forward.3} parent=54 // loop_header
                  %s243 = sphi 0, %s247
                  %p244 = scmp.ge.s32.totalorder %s243, 1
                  %s248 = sphi %s157, %s157
                  %s249 = sphi %s154, %s154
                $region65: #{convnet_forward.3} parent=54 // loop_header_branch
                  %246 = sbr.rel (%p244) target = $region69
                $region66: #{convnet_forward.3} parent=54 // loop_body
                  %v250 = vld [vmem:[%s248] sm:%s241]
                  %251 = vst [vmem:[%s249] sm:%s241] %v250
                  %v252 = vld [vmem:[%s248 + $0x4] sm:%s241]
                  %253 = vst [vmem:[%s249 + $0x4] sm:%s241] %v252
                  %v254 = vld [vmem:[%s248 + $0x8] sm:%s241]
                  %255 = vst [vmem:[%s249 + $0x8] sm:%s241] %v254
                  %v256 = vld [vmem:[%s248 + $0xc] sm:%s241]
                  %257 = vst [vmem:[%s249 + $0xc] sm:%s241] %v256
                  %v258 = vld [vmem:[%s248 + $0x10] sm:%s241]
                  %259 = vst [vmem:[%s249 + $0x10] sm:%s241] %v258
                  %v260 = vld [vmem:[%s248 + $0x14] sm:%s241]
                  %261 = vst [vmem:[%s249 + $0x14] sm:%s241] %v260
                  %v262 = vld [vmem:[%s248 + $0x18] sm:%s241]
                  %263 = vst [vmem:[%s249 + $0x18] sm:%s241] %v262
                  %v264 = vld [vmem:[%s248 + $0xc4] sm:%s241]
                  %265 = vst [vmem:[%s249 + $0x1c] sm:%s241] %v264
                  %v266 = vld [vmem:[%s248 + $0xc8] sm:%s241]
                  %267 = vst [vmem:[%s249 + $0x20] sm:%s241] %v266
                  %v268 = vld [vmem:[%s248 + $0xcc] sm:%s241]
                  %269 = vst [vmem:[%s249 + $0x24] sm:%s241] %v268
                  %v270 = vld [vmem:[%s248 + $0xd0] sm:%s241]
                  %271 = vst [vmem:[%s249 + $0x28] sm:%s241] %v270
                  %v272 = vld [vmem:[%s248 + $0xd4] sm:%s241]
                  %273 = vst [vmem:[%s249 + $0x2c] sm:%s241] %v272
                  %v274 = vld [vmem:[%s248 + $0xd8] sm:%s241]
                  %275 = vst [vmem:[%s249 + $0x30] sm:%s241] %v274
                  %v276 = vld [vmem:[%s248 + $0xdc] sm:%s241]
                  %277 = vst [vmem:[%s249 + $0x34] sm:%s241] %v276
                  %v278 = vld [vmem:[%s248 + $0x188] sm:%s241]
                  %279 = vst [vmem:[%s249 + $0x38] sm:%s241] %v278
                  %v280 = vld [vmem:[%s248 + $0x18c] sm:%s241]
                  %281 = vst [vmem:[%s249 + $0x3c] sm:%s241] %v280
                  %v282 = vld [vmem:[%s248 + $0x190] sm:%s241]
                  %283 = vst [vmem:[%s249 + $0x40] sm:%s241] %v282
                  %v284 = vld [vmem:[%s248 + $0x194] sm:%s241]
                  %285 = vst [vmem:[%s249 + $0x44] sm:%s241] %v284
                  %v286 = vld [vmem:[%s248 + $0x198] sm:%s241]
                  %287 = vst [vmem:[%s249 + $0x48] sm:%s241] %v286
                  %v288 = vld [vmem:[%s248 + $0x19c] sm:%s241]
                  %289 = vst [vmem:[%s249 + $0x4c] sm:%s241] %v288
                  %v290 = vld [vmem:[%s248 + $0x1a0] sm:%s241]
                  %291 = vst [vmem:[%s249 + $0x50] sm:%s241] %v290
                  %v292 = vld [vmem:[%s248 + $0x24c] sm:%s241]
                  %293 = vst [vmem:[%s249 + $0x54] sm:%s241] %v292
                  %v294 = vld [vmem:[%s248 + $0x250] sm:%s241]
                  %295 = vst [vmem:[%s249 + $0x58] sm:%s241] %v294
                  %v296 = vld [vmem:[%s248 + $0x254] sm:%s241]
                  %297 = vst [vmem:[%s249 + $0x5c] sm:%s241] %v296
                  %v298 = vld [vmem:[%s248 + $0x258] sm:%s241]
                  %299 = vst [vmem:[%s249 + $0x60] sm:%s241] %v298
                  %v300 = vld [vmem:[%s248 + $0x25c] sm:%s241]
                  %301 = vst [vmem:[%s249 + $0x64] sm:%s241] %v300
                  %v302 = vld [vmem:[%s248 + $0x260] sm:%s241]
                  %303 = vst [vmem:[%s249 + $0x68] sm:%s241] %v302
                  %v304 = vld [vmem:[%s248 + $0x264] sm:%s241]
                  %305 = vst [vmem:[%s249 + $0x6c] sm:%s241] %v304
                $region67: #{convnet_forward.3} parent=54 // loop_footer
                  %s247 = sadd.s32 1, %s243
                $region68: #{convnet_forward.3} parent=54 // loop_footer_branch
                  %242 = sbr.rel target = $region64
                $region69: #{convnet_forward.3} parent=54 // loop_exit
                  _
              $region55: #{convnet_forward.3} parent=39 // pred_fallthru
                _
            $region40: #{convnet_forward.3} parent=35 // pred_fallthru
              _
            // Predicated region
            $region41: #{convnet_forward.3} parent=35 // pred_check
              _
            $region42: #{convnet_forward.3} parent=35 // pred_check_branch
              %163 = sbr.rel (0) target = $region44
            $region43: #{convnet_forward.3} parent=35 // pred_region
              %s165 = ssub.s32 16, 1
              loop: start=0, step=1, limit=1
              $region45: #{convnet_forward.3} parent=43 // loop_pre_header
                _
              $region46: #{convnet_forward.3} parent=43 // loop_header
                %s167 = sphi 0, %s171
                %p168 = scmp.ge.s32.totalorder %s167, 1
                %s172 = sphi %s157, %s157
                %s173 = sphi %s154, %s154
              $region47: #{convnet_forward.3} parent=43 // loop_header_branch
                %170 = sbr.rel (%p168) target = $region51
              $region48: #{convnet_forward.3} parent=43 // loop_body
                %v174 = vld [vmem:[%s172] sm:%s165]
                %175 = vst [vmem:[%s173] sm:%s165] %v174
                %v176 = vld [vmem:[%s172 + $0x4] sm:%s165]
                %177 = vst [vmem:[%s173 + $0x4] sm:%s165] %v176
                %v178 = vld [vmem:[%s172 + $0x8] sm:%s165]
                %179 = vst [vmem:[%s173 + $0x8] sm:%s165] %v178
                %v180 = vld [vmem:[%s172 + $0xc] sm:%s165]
                %181 = vst [vmem:[%s173 + $0xc] sm:%s165] %v180
                %v182 = vld [vmem:[%s172 + $0x10] sm:%s165]
                %183 = vst [vmem:[%s173 + $0x10] sm:%s165] %v182
                %v184 = vld [vmem:[%s172 + $0x14] sm:%s165]
                %185 = vst [vmem:[%s173 + $0x14] sm:%s165] %v184
                %v186 = vld [vmem:[%s172 + $0x18] sm:%s165]
                %187 = vst [vmem:[%s173 + $0x18] sm:%s165] %v186
                %v188 = vld [vmem:[%s172 + $0xc4] sm:%s165]
                %189 = vst [vmem:[%s173 + $0x1c] sm:%s165] %v188
                %v190 = vld [vmem:[%s172 + $0xc8] sm:%s165]
                %191 = vst [vmem:[%s173 + $0x20] sm:%s165] %v190
                %v192 = vld [vmem:[%s172 + $0xcc] sm:%s165]
                %193 = vst [vmem:[%s173 + $0x24] sm:%s165] %v192
                %v194 = vld [vmem:[%s172 + $0xd0] sm:%s165]
                %195 = vst [vmem:[%s173 + $0x28] sm:%s165] %v194
                %v196 = vld [vmem:[%s172 + $0xd4] sm:%s165]
                %197 = vst [vmem:[%s173 + $0x2c] sm:%s165] %v196
                %v198 = vld [vmem:[%s172 + $0xd8] sm:%s165]
                %199 = vst [vmem:[%s173 + $0x30] sm:%s165] %v198
                %v200 = vld [vmem:[%s172 + $0xdc] sm:%s165]
                %201 = vst [vmem:[%s173 + $0x34] sm:%s165] %v200
                %v202 = vld [vmem:[%s172 + $0x188] sm:%s165]
                %203 = vst [vmem:[%s173 + $0x38] sm:%s165] %v202
                %v204 = vld [vmem:[%s172 + $0x18c] sm:%s165]
                %205 = vst [vmem:[%s173 + $0x3c] sm:%s165] %v204
                %v206 = vld [vmem:[%s172 + $0x190] sm:%s165]
                %207 = vst [vmem:[%s173 + $0x40] sm:%s165] %v206
                %v208 = vld [vmem:[%s172 + $0x194] sm:%s165]
                %209 = vst [vmem:[%s173 + $0x44] sm:%s165] %v208
                %v210 = vld [vmem:[%s172 + $0x198] sm:%s165]
                %211 = vst [vmem:[%s173 + $0x48] sm:%s165] %v210
                %v212 = vld [vmem:[%s172 + $0x19c] sm:%s165]
                %213 = vst [vmem:[%s173 + $0x4c] sm:%s165] %v212
                %v214 = vld [vmem:[%s172 + $0x1a0] sm:%s165]
                %215 = vst [vmem:[%s173 + $0x50] sm:%s165] %v214
                %v216 = vld [vmem:[%s172 + $0x24c] sm:%s165]
                %217 = vst [vmem:[%s173 + $0x54] sm:%s165] %v216
                %v218 = vld [vmem:[%s172 + $0x250] sm:%s165]
                %219 = vst [vmem:[%s173 + $0x58] sm:%s165] %v218
                %v220 = vld [vmem:[%s172 + $0x254] sm:%s165]
                %221 = vst [vmem:[%s173 + $0x5c] sm:%s165] %v220
                %v222 = vld [vmem:[%s172 + $0x258] sm:%s165]
                %223 = vst [vmem:[%s173 + $0x60] sm:%s165] %v222
                %v224 = vld [vmem:[%s172 + $0x25c] sm:%s165]
                %225 = vst [vmem:[%s173 + $0x64] sm:%s165] %v224
                %v226 = vld [vmem:[%s172 + $0x260] sm:%s165]
                %227 = vst [vmem:[%s173 + $0x68] sm:%s165] %v226
                %v228 = vld [vmem:[%s172 + $0x264] sm:%s165]
                %229 = vst [vmem:[%s173 + $0x6c] sm:%s165] %v228
              $region49: #{convnet_forward.3} parent=43 // loop_footer
                %s171 = sadd.s32 1, %s167
              $region50: #{convnet_forward.3} parent=43 // loop_footer_branch
                %166 = sbr.rel target = $region46
              $region51: #{convnet_forward.3} parent=43 // loop_exit
                _
            $region44: #{convnet_forward.3} parent=35 // pred_fallthru
              _
          $region36: #{convnet_forward.3} parent=31 // pred_fallthru
            _
          %306 = vnop
        $region32: #{convnet_forward.3} parent=27 // pred_fallthru
          _
      $region28: #{convnet_forward.3} parent=5 // pred_fallthru
        _
      %p307 = scmp.le.s32.totalorder 1, %s10
      %p308 = scmp.lt.s32.totalorder %s10, 8
      %p309 = pnand %p307, %p308
      %p310 = pneg %p309
      // Predicated region
      $region70: #{convnet_forward.3} parent=5 // pred_check
        _
      $region71: #{convnet_forward.3} parent=5 // pred_check_branch
        %312 = sbr.rel (%p309) target = $region73
      $region72: #{convnet_forward.3} parent=5 // pred_region
        %s313 = ssub.s32 %s10, 1
        %s314 = sand.u32 %s23, 1
        %s315 = sand.u32 %s23, 1
        %s316 = smul.addr %s315, 112
        %s317 = scalar_lea.vmem [#allocation3], %s316
        // Predicated region
        $region74: #{convnet_forward.3} parent=72 // pred_check
          %p318 = pneg %p36
        $region75: #{convnet_forward.3} parent=72 // pred_check_branch
          %320 = sbr.rel (%p318) target = $region77
        $region76: #{convnet_forward.3} parent=72 // pred_region
          _
        $region77: #{convnet_forward.3} parent=72 // pred_fallthru
          _
        %s321 = sand.u32 %s23, 1
        %s322 = sand.u32 %s23, 1
        %s323 = smul.addr %s322, 112
        %s324 = scalar_lea.vmem [#allocation3], %s323
        %p325 = pneg %p36
        %p326 = pneg %p33
        %p327 = pneg %p57
        %p328 = pneg %p54
        %p329 = pneg %p78
        %p330 = pneg %p75
        %p331 = pneg %p99
        %p332 = pneg %p96
        %p333 = pneg %p120
        %p334 = pneg %p117
        %s335 = smul.u32 7, %s15
        %s337 = smul.u32 %s15, 56
        %v338 = vld [vmem:[%s317] sm:$0xf]
        %v339 = vld [vmem:[%s317 + $0x4] sm:$0xf]
        %v340 = vld [vmem:[%s317 + $0x8] sm:$0xf]
        %v341 = vld [vmem:[%s317 + $0xc] sm:$0xf]
        %v342 = vld [vmem:[%s317 + $0x10] sm:$0xf]
        %v343 = vld [vmem:[%s317 + $0x14] sm:$0xf]
        %v344 = vld [vmem:[%s317 + $0x18] sm:$0xf]
        %v345 = vld [vmem:[%s1] sm:$0xf]
        %v346 = vld [vmem:[%s1 + $0x4] sm:$0xf]
        %v347 = vld [vmem:[%s1 + $0x8] sm:$0xf]
        %v348 = vld [vmem:[%s1 + $0xc] sm:$0x1]
        %v356 = vunpack.c.l.b16 %v338
        %v357 = vunpack.c.l.b16 %v339
        %v358 = vunpack.c.l.b16 %v340
        %v359 = vunpack.c.l.b16 %v341
        %v360 = vunpack.c.l.b16 %v342
        %v361 = vunpack.c.l.b16 %v343
        %v362 = vunpack.c.l.b16 %v344
        %v363 = vpack.c.b16 %v357, %v356
        %v364 = vpack.c.b16 %v359, %v358
        %v365 = vpack.c.b16 %v361, %v360
        %v366 = vpack.c.b16 %v362, %v362
        %v371 = vunpack.c.l.b16 %v345
        %v372 = vunpack.c.l.b16 %v346
        %v373 = vunpack.c.l.b16 %v347
        %v374 = vunpack.c.l.b16 %v348
        %v375 = vpack.c.b16 %v372, %v371
        %v376 = vpack.c.b16 %v374, %v373
        %vm378 = vcmask 203776
        %v380 = vsel %vm378, %v363, 0
        %v383 = vsel %vm378, %v364, 0
        %v386 = vsel %vm378, %v365, 0
        %v389 = vsel %vm378, %v366, 0
        %vm391 = vcmask 1043456
        %vm392 = vcmask 1044480
        %v393 = vsel %vm391, 4294967295, 65535
        %v394 = vsel %vm392, %v393, 0
        %v396 = vand.u32 %v376, %v394
        %398 = vmatpush.bf16.msra.mxu0 0
        %399 = vmatpush.bf16.msra.mxu0 0
        %400 = vmatpush.bf16.msra.mxu0 0
        %401 = vmatpush.bf16.msra.mxu0 0
        %402 = vmatpush.bf16.msra.mxu0 0
        %403 = vmatpush.bf16.msra.mxu0 0
        %404 = vmatpush.bf16.msra.mxu0 %v396
        %405 = vmatpush.bf16.msra.mxu0 %v375
        %406 = vmatmul.bf16.gmra.mxu0 %v380
        %v407 = vpop.f32.mrf.mxu0
        %v408 = vadd.f32 0.0, %v407
        %v409 = vpop.f32.mrf.mxu0
        %v410 = vadd.f32 0.0, %v409
        %411 = vmatmul.bf16.gmra.mxu0 %v383
        %v412 = vpop.f32.mrf.mxu0
        %v413 = vadd.f32 0.0, %v412
        %v414 = vpop.f32.mrf.mxu0
        %v415 = vadd.f32 0.0, %v414
        %416 = vmatmul.bf16.gmra.mxu0 %v386
        %v417 = vpop.f32.mrf.mxu0
        %v418 = vadd.f32 0.0, %v417
        %v419 = vpop.f32.mrf.mxu0
        %v420 = vadd.f32 0.0, %v419
        %421 = vmatmul.bf16.gmra.mxu0 %v389
        %v422 = vpop.f32.mrf.mxu0
        %v423 = vadd.f32 0.0, %v422
        %v424 = vpop.f32.mrf.mxu0
        %425 = vdwg.mxu0
        %s426 = scalar_lea.vmem [#allocation2], %s337
        %vm427 = vcmask 130048
        %428 = vst.msk [vmem:[%s426] sm:$0xff] %vm427, %v408
        %429 = vst.msk [vmem:[%s426 + $0x8] sm:$0xff] %vm427, %v410
        %430 = vst.msk [vmem:[%s426 + $0x10] sm:$0xff] %vm427, %v413
        %431 = vst.msk [vmem:[%s426 + $0x18] sm:$0xff] %vm427, %v415
        %432 = vst.msk [vmem:[%s426 + $0x20] sm:$0xff] %vm427, %v418
        %433 = vst.msk [vmem:[%s426 + $0x28] sm:$0xff] %vm427, %v420
        %434 = vst.msk [vmem:[%s426 + $0x30] sm:$0xff] %vm427, %v423
        %s435 = scalar_lea.vmem %s317, 28 [#allocation3]
        %v436 = vld [vmem:[%s435] sm:$0xf]
        %v437 = vld [vmem:[%s435 + $0x4] sm:$0xf]
        %v438 = vld [vmem:[%s435 + $0x8] sm:$0xf]
        %v439 = vld [vmem:[%s435 + $0xc] sm:$0xf]
        %v440 = vld [vmem:[%s435 + $0x10] sm:$0xf]
        %v441 = vld [vmem:[%s435 + $0x14] sm:$0xf]
        %v442 = vld [vmem:[%s435 + $0x18] sm:$0xf]
        %v443 = vld [vmem:[%s1] sm:$0xf]
        %v444 = vld [vmem:[%s1 + $0x4] sm:$0xf]
        %v445 = vld [vmem:[%s1 + $0x8] sm:$0xf]
        %v446 = vld [vmem:[%s1 + $0xc] sm:$0x1]
        %v454 = vunpack.c.l.b16 %v436
        %v455 = vunpack.c.l.b16 %v437
        %v456 = vunpack.c.l.b16 %v438
        %v457 = vunpack.c.l.b16 %v439
        %v458 = vunpack.c.l.b16 %v440
        %v459 = vunpack.c.l.b16 %v441
        %v460 = vunpack.c.l.b16 %v442
        %v461 = vpack.c.b16 %v455, %v454
        %v462 = vpack.c.b16 %v457, %v456
        %v463 = vpack.c.b16 %v459, %v458
        %v464 = vpack.c.b16 %v460, %v460
        %v469 = vunpack.c.l.b16 %v443
        %v470 = vunpack.c.l.b16 %v444
        %v471 = vunpack.c.l.b16 %v445
        %v472 = vunpack.c.l.b16 %v446
        %v473 = vpack.c.b16 %v470, %v469
        %v474 = vpack.c.b16 %v472, %v471
        %v477 = vsel %vm378, %v461, 0
        %v480 = vsel %vm378, %v462, 0
        %v483 = vsel %vm378, %v463, 0
        %v486 = vsel %vm378, %v464, 0
        %v489 = vand.u32 %v474, %v394
        %491 = vmatpush.bf16.msra.mxu0 0
        %492 = vmatpush.bf16.msra.mxu0 0
        %493 = vmatpush.bf16.msra.mxu0 0
        %494 = vmatpush.bf16.msra.mxu0 0
        %495 = vmatpush.bf16.msra.mxu0 0
        %496 = vmatpush.bf16.msra.mxu0 0
        %497 = vmatpush.bf16.msra.mxu0 %v489
        %498 = vmatpush.bf16.msra.mxu0 %v473
        %499 = vmatmul.bf16.gmra.mxu0 %v477
        %v500 = vpop.f32.mrf.mxu0
        %v501 = vadd.f32 0.0, %v500
        %v502 = vpop.f32.mrf.mxu0
        %v503 = vadd.f32 0.0, %v502
        %504 = vmatmul.bf16.gmra.mxu0 %v480
        %v505 = vpop.f32.mrf.mxu0
        %v506 = vadd.f32 0.0, %v505
        %v507 = vpop.f32.mrf.mxu0
        %v508 = vadd.f32 0.0, %v507
        %509 = vmatmul.bf16.gmra.mxu0 %v483
        %v510 = vpop.f32.mrf.mxu0
        %v511 = vadd.f32 0.0, %v510
        %v512 = vpop.f32.mrf.mxu0
        %v513 = vadd.f32 0.0, %v512
        %514 = vmatmul.bf16.gmra.mxu0 %v486
        %v515 = vpop.f32.mrf.mxu0
        %v516 = vadd.f32 0.0, %v515
        %v517 = vpop.f32.mrf.mxu0
        %518 = vdwg.mxu0
        %s519 = sadd.s32 %s337, 392
        %s520 = scalar_lea.vmem [#allocation2], %s519
        %521 = vst.msk [vmem:[%s520] sm:$0xff] %vm427, %v501
        %522 = vst.msk [vmem:[%s520 + $0x8] sm:$0xff] %vm427, %v503
        %523 = vst.msk [vmem:[%s520 + $0x10] sm:$0xff] %vm427, %v506
        %524 = vst.msk [vmem:[%s520 + $0x18] sm:$0xff] %vm427, %v508
        %525 = vst.msk [vmem:[%s520 + $0x20] sm:$0xff] %vm427, %v511
        %526 = vst.msk [vmem:[%s520 + $0x28] sm:$0xff] %vm427, %v513
        %527 = vst.msk [vmem:[%s520 + $0x30] sm:$0xff] %vm427, %v516
        %s528 = scalar_lea.vmem %s317, 56 [#allocation3]
        %v529 = vld [vmem:[%s528] sm:$0xf]
        %v530 = vld [vmem:[%s528 + $0x4] sm:$0xf]
        %v531 = vld [vmem:[%s528 + $0x8] sm:$0xf]
        %v532 = vld [vmem:[%s528 + $0xc] sm:$0xf]
        %v533 = vld [vmem:[%s528 + $0x10] sm:$0xf]
        %v534 = vld [vmem:[%s528 + $0x14] sm:$0xf]
        %v535 = vld [vmem:[%s528 + $0x18] sm:$0xf]
        %v536 = vld [vmem:[%s1] sm:$0xf]
        %v537 = vld [vmem:[%s1 + $0x4] sm:$0xf]
        %v538 = vld [vmem:[%s1 + $0x8] sm:$0xf]
        %v539 = vld [vmem:[%s1 + $0xc] sm:$0x1]
        %v547 = vunpack.c.l.b16 %v529
        %v548 = vunpack.c.l.b16 %v530
        %v549 = vunpack.c.l.b16 %v531
        %v550 = vunpack.c.l.b16 %v532
        %v551 = vunpack.c.l.b16 %v533
        %v552 = vunpack.c.l.b16 %v534
        %v553 = vunpack.c.l.b16 %v535
        %v554 = vpack.c.b16 %v548, %v547
        %v555 = vpack.c.b16 %v550, %v549
        %v556 = vpack.c.b16 %v552, %v551
        %v557 = vpack.c.b16 %v553, %v553
        %v562 = vunpack.c.l.b16 %v536
        %v563 = vunpack.c.l.b16 %v537
        %v564 = vunpack.c.l.b16 %v538
        %v565 = vunpack.c.l.b16 %v539
        %v566 = vpack.c.b16 %v563, %v562
        %v567 = vpack.c.b16 %v565, %v564
        %v570 = vsel %vm378, %v554, 0
        %v573 = vsel %vm378, %v555, 0
        %v576 = vsel %vm378, %v556, 0
        %v579 = vsel %vm378, %v557, 0
        %v582 = vand.u32 %v567, %v394
        %584 = vmatpush.bf16.msra.mxu0 0
        %585 = vmatpush.bf16.msra.mxu0 0
        %586 = vmatpush.bf16.msra.mxu0 0
        %587 = vmatpush.bf16.msra.mxu0 0
        %588 = vmatpush.bf16.msra.mxu0 0
        %589 = vmatpush.bf16.msra.mxu0 0
        %590 = vmatpush.bf16.msra.mxu0 %v582
        %591 = vmatpush.bf16.msra.mxu0 %v566
        %592 = vmatmul.bf16.gmra.mxu0 %v570
        %v593 = vpop.f32.mrf.mxu0
        %v594 = vadd.f32 0.0, %v593
        %v595 = vpop.f32.mrf.mxu0
        %v596 = vadd.f32 0.0, %v595
        %597 = vmatmul.bf16.gmra.mxu0 %v573
        %v598 = vpop.f32.mrf.mxu0
        %v599 = vadd.f32 0.0, %v598
        %v600 = vpop.f32.mrf.mxu0
        %v601 = vadd.f32 0.0, %v600
        %602 = vmatmul.bf16.gmra.mxu0 %v576
        %v603 = vpop.f32.mrf.mxu0
        %v604 = vadd.f32 0.0, %v603
        %v605 = vpop.f32.mrf.mxu0
        %v606 = vadd.f32 0.0, %v605
        %607 = vmatmul.bf16.gmra.mxu0 %v579
        %v608 = vpop.f32.mrf.mxu0
        %v609 = vadd.f32 0.0, %v608
        %v610 = vpop.f32.mrf.mxu0
        %611 = vdwg.mxu0
        %s612 = sadd.s32 %s337, 784
        %s613 = scalar_lea.vmem [#allocation2], %s612
        %614 = vst.msk [vmem:[%s613] sm:$0xff] %vm427, %v594
        %615 = vst.msk [vmem:[%s613 + $0x8] sm:$0xff] %vm427, %v596
        %616 = vst.msk [vmem:[%s613 + $0x10] sm:$0xff] %vm427, %v599
        %617 = vst.msk [vmem:[%s613 + $0x18] sm:$0xff] %vm427, %v601
        %618 = vst.msk [vmem:[%s613 + $0x20] sm:$0xff] %vm427, %v604
        %619 = vst.msk [vmem:[%s613 + $0x28] sm:$0xff] %vm427, %v606
        %620 = vst.msk [vmem:[%s613 + $0x30] sm:$0xff] %vm427, %v609
        %s621 = scalar_lea.vmem %s317, 84 [#allocation3]
        %v622 = vld [vmem:[%s621] sm:$0xf]
        %v623 = vld [vmem:[%s621 + $0x4] sm:$0xf]
        %v624 = vld [vmem:[%s621 + $0x8] sm:$0xf]
        %v625 = vld [vmem:[%s621 + $0xc] sm:$0xf]
        %v626 = vld [vmem:[%s621 + $0x10] sm:$0xf]
        %v627 = vld [vmem:[%s621 + $0x14] sm:$0xf]
        %v628 = vld [vmem:[%s621 + $0x18] sm:$0xf]
        %v629 = vld [vmem:[%s1] sm:$0xf]
        %v630 = vld [vmem:[%s1 + $0x4] sm:$0xf]
        %v631 = vld [vmem:[%s1 + $0x8] sm:$0xf]
        %v632 = vld [vmem:[%s1 + $0xc] sm:$0x1]
        %v640 = vunpack.c.l.b16 %v622
        %v641 = vunpack.c.l.b16 %v623
        %v642 = vunpack.c.l.b16 %v624
        %v643 = vunpack.c.l.b16 %v625
        %v644 = vunpack.c.l.b16 %v626
        %v645 = vunpack.c.l.b16 %v627
        %v646 = vunpack.c.l.b16 %v628
        %v647 = vpack.c.b16 %v641, %v640
        %v648 = vpack.c.b16 %v643, %v642
        %v649 = vpack.c.b16 %v645, %v644
        %v650 = vpack.c.b16 %v646, %v646
        %v655 = vunpack.c.l.b16 %v629
        %v656 = vunpack.c.l.b16 %v630
        %v657 = vunpack.c.l.b16 %v631
        %v658 = vunpack.c.l.b16 %v632
        %v659 = vpack.c.b16 %v656, %v655
        %v660 = vpack.c.b16 %v658, %v657
        %v663 = vsel %vm378, %v647, 0
        %v666 = vsel %vm378, %v648, 0
        %v669 = vsel %vm378, %v649, 0
        %v672 = vsel %vm378, %v650, 0
        %v675 = vand.u32 %v660, %v394
        %677 = vmatpush.bf16.msra.mxu0 0
        %678 = vmatpush.bf16.msra.mxu0 0
        %679 = vmatpush.bf16.msra.mxu0 0
        %680 = vmatpush.bf16.msra.mxu0 0
        %681 = vmatpush.bf16.msra.mxu0 0
        %682 = vmatpush.bf16.msra.mxu0 0
        %683 = vmatpush.bf16.msra.mxu0 %v675
        %684 = vmatpush.bf16.msra.mxu0 %v659
        %685 = vmatmul.bf16.gmra.mxu0 %v663
        %v686 = vpop.f32.mrf.mxu0
        %v687 = vadd.f32 0.0, %v686
        %v688 = vpop.f32.mrf.mxu0
        %v689 = vadd.f32 0.0, %v688
        %690 = vmatmul.bf16.gmra.mxu0 %v666
        %v691 = vpop.f32.mrf.mxu0
        %v692 = vadd.f32 0.0, %v691
        %v693 = vpop.f32.mrf.mxu0
        %v694 = vadd.f32 0.0, %v693
        %695 = vmatmul.bf16.gmra.mxu0 %v669
        %v696 = vpop.f32.mrf.mxu0
        %v697 = vadd.f32 0.0, %v696
        %v698 = vpop.f32.mrf.mxu0
        %v699 = vadd.f32 0.0, %v698
        %700 = vmatmul.bf16.gmra.mxu0 %v672
        %v701 = vpop.f32.mrf.mxu0
        %v702 = vadd.f32 0.0, %v701
        %v703 = vpop.f32.mrf.mxu0
        %704 = vdwg.mxu0
        %s705 = sadd.s32 %s337, 1176
        %s706 = scalar_lea.vmem [#allocation2], %s705
        %707 = vst.msk [vmem:[%s706] sm:$0xff] %vm427, %v687
        %708 = vst.msk [vmem:[%s706 + $0x8] sm:$0xff] %vm427, %v689
        %709 = vst.msk [vmem:[%s706 + $0x10] sm:$0xff] %vm427, %v692
        %710 = vst.msk [vmem:[%s706 + $0x18] sm:$0xff] %vm427, %v694
        %711 = vst.msk [vmem:[%s706 + $0x20] sm:$0xff] %vm427, %v697
        %712 = vst.msk [vmem:[%s706 + $0x28] sm:$0xff] %vm427, %v699
        %713 = vst.msk [vmem:[%s706 + $0x30] sm:$0xff] %vm427, %v702
        %p714 = scmp.eq.s32.totalorder %s15, 6
        // Predicated region
        $region78: #{convnet_forward.3} parent=72 // pred_check
          %p715 = pneg %p714
        $region79: #{convnet_forward.3} parent=72 // pred_check_branch
          %717 = sbr.rel (%p715) target = $region81
        $region80: #{convnet_forward.3} parent=72 // pred_region
          %v718 = vld [vmem:[#allocation2] sm:$0xff]
          %v719 = vld [vmem:[#allocation2 + $0x8] sm:$0xff]
          %v720 = vld [vmem:[#allocation2 + $0x10] sm:$0xff]
          %v721 = vld [vmem:[#allocation2 + $0x18] sm:$0xff]
          %v722 = vld [vmem:[#allocation2 + $0x20] sm:$0xff]
          %v723 = vld [vmem:[#allocation2 + $0x28] sm:$0xff]
          %v724 = vld [vmem:[#allocation2 + $0x30] sm:$0xff]
          %v725 = vld [vmem:[#allocation2 + $0x38] sm:$0xff]
          %v726 = vld [vmem:[#allocation2 + $0x40] sm:$0xff]
          %v727 = vld [vmem:[#allocation2 + $0x48] sm:$0xff]
          %v728 = vld [vmem:[#allocation2 + $0x50] sm:$0xff]
          %v729 = vld [vmem:[#allocation2 + $0x58] sm:$0xff]
          %v730 = vld [vmem:[#allocation2 + $0x60] sm:$0xff]
          %v731 = vld [vmem:[#allocation2 + $0x68] sm:$0xff]
          %v732 = vld [vmem:[#allocation2 + $0x70] sm:$0xff]
          %v733 = vld [vmem:[#allocation2 + $0x78] sm:$0xff]
          %v734 = vld [vmem:[#allocation2 + $0x80] sm:$0xff]
          %v735 = vld [vmem:[#allocation2 + $0x88] sm:$0xff]
          %v736 = vld [vmem:[#allocation2 + $0x90] sm:$0xff]
          %v737 = vld [vmem:[#allocation2 + $0x98] sm:$0xff]
          %v738 = vld [vmem:[#allocation2 + $0xa0] sm:$0xff]
          %v739 = vld [vmem:[#allocation2 + $0xa8] sm:$0xff]
          %v740 = vld [vmem:[#allocation2 + $0xb0] sm:$0xff]
          %v741 = vld [vmem:[#allocation2 + $0xb8] sm:$0xff]
          %v742 = vld [vmem:[#allocation2 + $0xc0] sm:$0xff]
          %v743 = vld [vmem:[#allocation2 + $0xc8] sm:$0xff]
          %v744 = vld [vmem:[#allocation2 + $0xd0] sm:$0xff]
          %v745 = vld [vmem:[#allocation2 + $0xd8] sm:$0xff]
          %v746 = vld [vmem:[#allocation2 + $0xe0] sm:$0xff]
          %v747 = vld [vmem:[#allocation2 + $0xe8] sm:$0xff]
          %v748 = vld [vmem:[#allocation2 + $0xf0] sm:$0xff]
          %v749 = vld [vmem:[#allocation2 + $0xf8] sm:$0xff]
          %v750 = vld [vmem:[#allocation2 + $0x100] sm:$0xff]
          %v751 = vld [vmem:[#allocation2 + $0x108] sm:$0xff]
          %v752 = vld [vmem:[#allocation2 + $0x110] sm:$0xff]
          %v753 = vld [vmem:[#allocation2 + $0x118] sm:$0xff]
          %v754 = vld [vmem:[#allocation2 + $0x120] sm:$0xff]
          %v755 = vld [vmem:[#allocation2 + $0x128] sm:$0xff]
          %v756 = vld [vmem:[#allocation2 + $0x130] sm:$0xff]
          %v757 = vld [vmem:[#allocation2 + $0x138] sm:$0xff]
          %v758 = vld [vmem:[#allocation2 + $0x140] sm:$0xff]
          %v759 = vld [vmem:[#allocation2 + $0x148] sm:$0xff]
          %v760 = vld [vmem:[#allocation2 + $0x150] sm:$0xff]
          %v761 = vld [vmem:[#allocation2 + $0x158] sm:$0xff]
          %v762 = vld [vmem:[#allocation2 + $0x160] sm:$0xff]
          %v763 = vld [vmem:[#allocation2 + $0x168] sm:$0xff]
          %v764 = vld [vmem:[#allocation2 + $0x170] sm:$0xff]
          %v765 = vld [vmem:[#allocation2 + $0x178] sm:$0xff]
          %v766 = vld [vmem:[#allocation2 + $0x180] sm:$0xff]
          %v767 = vsel %vm427, %v718, 0.0
          %v768 = vsel %vm427, %v719, 0.0
          %v769 = vadd.f32 %v767, %v768
          %v770 = vsel %vm427, %v720, 0.0
          %v771 = vadd.f32 %v769, %v770
          %v772 = vsel %vm427, %v721, 0.0
          %v773 = vadd.f32 %v771, %v772
          %v774 = vsel %vm427, %v722, 0.0
          %v775 = vadd.f32 %v773, %v774
          %v776 = vsel %vm427, %v723, 0.0
          %v777 = vadd.f32 %v775, %v776
          %v778 = vsel %vm427, %v724, 0.0
          %v779 = vadd.f32 %v777, %v778
          %v780 = vsel %vm427, %v725, 0.0
          %v781 = vadd.f32 %v779, %v780
          %v782 = vsel %vm427, %v726, 0.0
          %v783 = vadd.f32 %v781, %v782
          %v784 = vsel %vm427, %v727, 0.0
          %v785 = vadd.f32 %v783, %v784
          %v786 = vsel %vm427, %v728, 0.0
          %v787 = vadd.f32 %v785, %v786
          %v788 = vsel %vm427, %v729, 0.0
          %v789 = vadd.f32 %v787, %v788
          %v790 = vsel %vm427, %v730, 0.0
          %v791 = vadd.f32 %v789, %v790
          %v792 = vsel %vm427, %v731, 0.0
          %v793 = vadd.f32 %v791, %v792
          %v794 = vsel %vm427, %v732, 0.0
          %v795 = vadd.f32 %v793, %v794
          %v796 = vsel %vm427, %v733, 0.0
          %v797 = vadd.f32 %v795, %v796
          %v798 = vsel %vm427, %v734, 0.0
          %v799 = vadd.f32 %v797, %v798
          %v800 = vsel %vm427, %v735, 0.0
          %v801 = vadd.f32 %v799, %v800
          %v802 = vsel %vm427, %v736, 0.0
          %v803 = vadd.f32 %v801, %v802
          %v804 = vsel %vm427, %v737, 0.0
          %v805 = vadd.f32 %v803, %v804
          %v806 = vsel %vm427, %v738, 0.0
          %v807 = vadd.f32 %v805, %v806
          %v808 = vsel %vm427, %v739, 0.0
          %v809 = vadd.f32 %v807, %v808
          %v810 = vsel %vm427, %v740, 0.0
          %v811 = vadd.f32 %v809, %v810
          %v812 = vsel %vm427, %v741, 0.0
          %v813 = vadd.f32 %v811, %v812
          %v814 = vsel %vm427, %v742, 0.0
          %v815 = vadd.f32 %v813, %v814
          %v816 = vsel %vm427, %v743, 0.0
          %v817 = vadd.f32 %v815, %v816
          %v818 = vsel %vm427, %v744, 0.0
          %v819 = vadd.f32 %v817, %v818
          %v820 = vsel %vm427, %v745, 0.0
          %v821 = vadd.f32 %v819, %v820
          %v822 = vsel %vm427, %v746, 0.0
          %v823 = vadd.f32 %v821, %v822
          %v824 = vsel %vm427, %v747, 0.0
          %v825 = vadd.f32 %v823, %v824
          %v826 = vsel %vm427, %v748, 0.0
          %v827 = vadd.f32 %v825, %v826
          %v828 = vsel %vm427, %v749, 0.0
          %v829 = vadd.f32 %v827, %v828
          %v830 = vsel %vm427, %v750, 0.0
          %v831 = vadd.f32 %v829, %v830
          %v832 = vsel %vm427, %v751, 0.0
          %v833 = vadd.f32 %v831, %v832
          %v834 = vsel %vm427, %v752, 0.0
          %v835 = vadd.f32 %v833, %v834
          %v836 = vsel %vm427, %v753, 0.0
          %v837 = vadd.f32 %v835, %v836
          %v838 = vsel %vm427, %v754, 0.0
          %v839 = vadd.f32 %v837, %v838
          %v840 = vsel %vm427, %v755, 0.0
          %v841 = vadd.f32 %v839, %v840
          %v842 = vsel %vm427, %v756, 0.0
          %v843 = vadd.f32 %v841, %v842
          %v844 = vsel %vm427, %v757, 0.0
          %v845 = vadd.f32 %v843, %v844
          %v846 = vsel %vm427, %v758, 0.0
          %v847 = vadd.f32 %v845, %v846
          %v848 = vsel %vm427, %v759, 0.0
          %v849 = vadd.f32 %v847, %v848
          %v850 = vsel %vm427, %v760, 0.0
          %v851 = vadd.f32 %v849, %v850
          %v852 = vsel %vm427, %v761, 0.0
          %v853 = vadd.f32 %v851, %v852
          %v854 = vsel %vm427, %v762, 0.0
          %v855 = vadd.f32 %v853, %v854
          %v856 = vsel %vm427, %v763, 0.0
          %v857 = vadd.f32 %v855, %v856
          %v858 = vsel %vm427, %v764, 0.0
          %v859 = vadd.f32 %v857, %v858
          %v860 = vsel %vm427, %v765, 0.0
          %v861 = vadd.f32 %v859, %v860
          %v862 = vsel %vm427, %v766, 0.0
          %v863 = vadd.f32 %v861, %v862
          %v864 = vrot.slane %v863, 4
          %v865 = vadd.f32 %v863, %v864
          %v866 = vrot.slane %v865, 2
          %v867 = vadd.f32 %v865, %v866
          %v868 = vrot.slane %v867, 1
          %v869 = vadd.f32 %v867, %v868
          %v870 = vadd.f32 %v869, 0.0
          %s871 = scalar_lea.vmem [#allocation2], 392
          %v872 = vld [vmem:[%s871] sm:$0xff]
          %v873 = vld [vmem:[%s871 + $0x8] sm:$0xff]
          %v874 = vld [vmem:[%s871 + $0x10] sm:$0xff]
          %v875 = vld [vmem:[%s871 + $0x18] sm:$0xff]
          %v876 = vld [vmem:[%s871 + $0x20] sm:$0xff]
          %v877 = vld [vmem:[%s871 + $0x28] sm:$0xff]
          %v878 = vld [vmem:[%s871 + $0x30] sm:$0xff]
          %v879 = vld [vmem:[%s871 + $0x38] sm:$0xff]
          %v880 = vld [vmem:[%s871 + $0x40] sm:$0xff]
          %v881 = vld [vmem:[%s871 + $0x48] sm:$0xff]
          %v882 = vld [vmem:[%s871 + $0x50] sm:$0xff]
          %v883 = vld [vmem:[%s871 + $0x58] sm:$0xff]
          %v884 = vld [vmem:[%s871 + $0x60] sm:$0xff]
          %v885 = vld [vmem:[%s871 + $0x68] sm:$0xff]
          %v886 = vld [vmem:[%s871 + $0x70] sm:$0xff]
          %v887 = vld [vmem:[%s871 + $0x78] sm:$0xff]
          %v888 = vld [vmem:[%s871 + $0x80] sm:$0xff]
          %v889 = vld [vmem:[%s871 + $0x88] sm:$0xff]
          %v890 = vld [vmem:[%s871 + $0x90] sm:$0xff]
          %v891 = vld [vmem:[%s871 + $0x98] sm:$0xff]
          %v892 = vld [vmem:[%s871 + $0xa0] sm:$0xff]
          %v893 = vld [vmem:[%s871 + $0xa8] sm:$0xff]
          %v894 = vld [vmem:[%s871 + $0xb0] sm:$0xff]
          %v895 = vld [vmem:[%s871 + $0xb8] sm:$0xff]
          %v896 = vld [vmem:[%s871 + $0xc0] sm:$0xff]
          %v897 = vld [vmem:[%s871 + $0xc8] sm:$0xff]
          %v898 = vld [vmem:[%s871 + $0xd0] sm:$0xff]
          %v899 = vld [vmem:[%s871 + $0xd8] sm:$0xff]
          %v900 = vld [vmem:[%s871 + $0xe0] sm:$0xff]
          %v901 = vld [vmem:[%s871 + $0xe8] sm:$0xff]
          %v902 = vld [vmem:[%s871 + $0xf0] sm:$0xff]
          %v903 = vld [vmem:[%s871 + $0xf8] sm:$0xff]
          %v904 = vld [vmem:[%s871 + $0x100] sm:$0xff]
          %v905 = vld [vmem:[%s871 + $0x108] sm:$0xff]
          %v906 = vld [vmem:[%s871 + $0x110] sm:$0xff]
          %v907 = vld [vmem:[%s871 + $0x118] sm:$0xff]
          %v908 = vld [vmem:[%s871 + $0x120] sm:$0xff]
          %v909 = vld [vmem:[%s871 + $0x128] sm:$0xff]
          %v910 = vld [vmem:[%s871 + $0x130] sm:$0xff]
          %v911 = vld [vmem:[%s871 + $0x138] sm:$0xff]
          %v912 = vld [vmem:[%s871 + $0x140] sm:$0xff]
          %v913 = vld [vmem:[%s871 + $0x148] sm:$0xff]
          %v914 = vld [vmem:[%s871 + $0x150] sm:$0xff]
          %v915 = vld [vmem:[%s871 + $0x158] sm:$0xff]
          %v916 = vld [vmem:[%s871 + $0x160] sm:$0xff]
          %v917 = vld [vmem:[%s871 + $0x168] sm:$0xff]
          %v918 = vld [vmem:[%s871 + $0x170] sm:$0xff]
          %v919 = vld [vmem:[%s871 + $0x178] sm:$0xff]
          %v920 = vld [vmem:[%s871 + $0x180] sm:$0xff]
          %v921 = vsel %vm427, %v872, 0.0
          %v922 = vsel %vm427, %v873, 0.0
          %v923 = vadd.f32 %v921, %v922
          %v924 = vsel %vm427, %v874, 0.0
          %v925 = vadd.f32 %v923, %v924
          %v926 = vsel %vm427, %v875, 0.0
          %v927 = vadd.f32 %v925, %v926
          %v928 = vsel %vm427, %v876, 0.0
          %v929 = vadd.f32 %v927, %v928
          %v930 = vsel %vm427, %v877, 0.0
          %v931 = vadd.f32 %v929, %v930
          %v932 = vsel %vm427, %v878, 0.0
          %v933 = vadd.f32 %v931, %v932
          %v934 = vsel %vm427, %v879, 0.0
          %v935 = vadd.f32 %v933, %v934
          %v936 = vsel %vm427, %v880, 0.0
          %v937 = vadd.f32 %v935, %v936
          %v938 = vsel %vm427, %v881, 0.0
          %v939 = vadd.f32 %v937, %v938
          %v940 = vsel %vm427, %v882, 0.0
          %v941 = vadd.f32 %v939, %v940
          %v942 = vsel %vm427, %v883, 0.0
          %v943 = vadd.f32 %v941, %v942
          %v944 = vsel %vm427, %v884, 0.0
          %v945 = vadd.f32 %v943, %v944
          %v946 = vsel %vm427, %v885, 0.0
          %v947 = vadd.f32 %v945, %v946
          %v948 = vsel %vm427, %v886, 0.0
          %v949 = vadd.f32 %v947, %v948
          %v950 = vsel %vm427, %v887, 0.0
          %v951 = vadd.f32 %v949, %v950
          %v952 = vsel %vm427, %v888, 0.0
          %v953 = vadd.f32 %v951, %v952
          %v954 = vsel %vm427, %v889, 0.0
          %v955 = vadd.f32 %v953, %v954
          %v956 = vsel %vm427, %v890, 0.0
          %v957 = vadd.f32 %v955, %v956
          %v958 = vsel %vm427, %v891, 0.0
          %v959 = vadd.f32 %v957, %v958
          %v960 = vsel %vm427, %v892, 0.0
          %v961 = vadd.f32 %v959, %v960
          %v962 = vsel %vm427, %v893, 0.0
          %v963 = vadd.f32 %v961, %v962
          %v964 = vsel %vm427, %v894, 0.0
          %v965 = vadd.f32 %v963, %v964
          %v966 = vsel %vm427, %v895, 0.0
          %v967 = vadd.f32 %v965, %v966
          %v968 = vsel %vm427, %v896, 0.0
          %v969 = vadd.f32 %v967, %v968
          %v970 = vsel %vm427, %v897, 0.0
          %v971 = vadd.f32 %v969, %v970
          %v972 = vsel %vm427, %v898, 0.0
          %v973 = vadd.f32 %v971, %v972
          %v974 = vsel %vm427, %v899, 0.0
          %v975 = vadd.f32 %v973, %v974
          %v976 = vsel %vm427, %v900, 0.0
          %v977 = vadd.f32 %v975, %v976
          %v978 = vsel %vm427, %v901, 0.0
          %v979 = vadd.f32 %v977, %v978
          %v980 = vsel %vm427, %v902, 0.0
          %v981 = vadd.f32 %v979, %v980
          %v982 = vsel %vm427, %v903, 0.0
          %v983 = vadd.f32 %v981, %v982
          %v984 = vsel %vm427, %v904, 0.0
          %v985 = vadd.f32 %v983, %v984
          %v986 = vsel %vm427, %v905, 0.0
          %v987 = vadd.f32 %v985, %v986
          %v988 = vsel %vm427, %v906, 0.0
          %v989 = vadd.f32 %v987, %v988
          %v990 = vsel %vm427, %v907, 0.0
          %v991 = vadd.f32 %v989, %v990
          %v992 = vsel %vm427, %v908, 0.0
          %v993 = vadd.f32 %v991, %v992
          %v994 = vsel %vm427, %v909, 0.0
          %v995 = vadd.f32 %v993, %v994
          %v996 = vsel %vm427, %v910, 0.0
          %v997 = vadd.f32 %v995, %v996
          %v998 = vsel %vm427, %v911, 0.0
          %v999 = vadd.f32 %v997, %v998
          %v1000 = vsel %vm427, %v912, 0.0
          %v1001 = vadd.f32 %v999, %v1000
          %v1002 = vsel %vm427, %v913, 0.0
          %v1003 = vadd.f32 %v1001, %v1002
          %v1004 = vsel %vm427, %v914, 0.0
          %v1005 = vadd.f32 %v1003, %v1004
          %v1006 = vsel %vm427, %v915, 0.0
          %v1007 = vadd.f32 %v1005, %v1006
          %v1008 = vsel %vm427, %v916, 0.0
          %v1009 = vadd.f32 %v1007, %v1008
          %v1010 = vsel %vm427, %v917, 0.0
          %v1011 = vadd.f32 %v1009, %v1010
          %v1012 = vsel %vm427, %v918, 0.0
          %v1013 = vadd.f32 %v1011, %v1012
          %v1014 = vsel %vm427, %v919, 0.0
          %v1015 = vadd.f32 %v1013, %v1014
          %v1016 = vsel %vm427, %v920, 0.0
          %v1017 = vadd.f32 %v1015, %v1016
          %v1018 = vrot.slane %v1017, 4
          %v1019 = vadd.f32 %v1017, %v1018
          %v1020 = vrot.slane %v1019, 2
          %v1021 = vadd.f32 %v1019, %v1020
          %v1022 = vrot.slane %v1021, 1
          %v1023 = vadd.f32 %v1021, %v1022
          %v1024 = vadd.f32 %v870, %v1023
          %s1025 = scalar_lea.vmem [#allocation2], 784
          %v1026 = vld [vmem:[%s1025] sm:$0xff]
          %v1027 = vld [vmem:[%s1025 + $0x8] sm:$0xff]
          %v1028 = vld [vmem:[%s1025 + $0x10] sm:$0xff]
          %v1029 = vld [vmem:[%s1025 + $0x18] sm:$0xff]
          %v1030 = vld [vmem:[%s1025 + $0x20] sm:$0xff]
          %v1031 = vld [vmem:[%s1025 + $0x28] sm:$0xff]
          %v1032 = vld [vmem:[%s1025 + $0x30] sm:$0xff]
          %v1033 = vld [vmem:[%s1025 + $0x38] sm:$0xff]
          %v1034 = vld [vmem:[%s1025 + $0x40] sm:$0xff]
          %v1035 = vld [vmem:[%s1025 + $0x48] sm:$0xff]
          %v1036 = vld [vmem:[%s1025 + $0x50] sm:$0xff]
          %v1037 = vld [vmem:[%s1025 + $0x58] sm:$0xff]
          %v1038 = vld [vmem:[%s1025 + $0x60] sm:$0xff]
          %v1039 = vld [vmem:[%s1025 + $0x68] sm:$0xff]
          %v1040 = vld [vmem:[%s1025 + $0x70] sm:$0xff]
          %v1041 = vld [vmem:[%s1025 + $0x78] sm:$0xff]
          %v1042 = vld [vmem:[%s1025 + $0x80] sm:$0xff]
          %v1043 = vld [vmem:[%s1025 + $0x88] sm:$0xff]
          %v1044 = vld [vmem:[%s1025 + $0x90] sm:$0xff]
          %v1045 = vld [vmem:[%s1025 + $0x98] sm:$0xff]
          %v1046 = vld [vmem:[%s1025 + $0xa0] sm:$0xff]
          %v1047 = vld [vmem:[%s1025 + $0xa8] sm:$0xff]
          %v1048 = vld [vmem:[%s1025 + $0xb0] sm:$0xff]
          %v1049 = vld [vmem:[%s1025 + $0xb8] sm:$0xff]
          %v1050 = vld [vmem:[%s1025 + $0xc0] sm:$0xff]
          %v1051 = vld [vmem:[%s1025 + $0xc8] sm:$0xff]
          %v1052 = vld [vmem:[%s1025 + $0xd0] sm:$0xff]
          %v1053 = vld [vmem:[%s1025 + $0xd8] sm:$0xff]
          %v1054 = vld [vmem:[%s1025 + $0xe0] sm:$0xff]
          %v1055 = vld [vmem:[%s1025 + $0xe8] sm:$0xff]
          %v1056 = vld [vmem:[%s1025 + $0xf0] sm:$0xff]
          %v1057 = vld [vmem:[%s1025 + $0xf8] sm:$0xff]
          %v1058 = vld [vmem:[%s1025 + $0x100] sm:$0xff]
          %v1059 = vld [vmem:[%s1025 + $0x108] sm:$0xff]
          %v1060 = vld [vmem:[%s1025 + $0x110] sm:$0xff]
          %v1061 = vld [vmem:[%s1025 + $0x118] sm:$0xff]
          %v1062 = vld [vmem:[%s1025 + $0x120] sm:$0xff]
          %v1063 = vld [vmem:[%s1025 + $0x128] sm:$0xff]
          %v1064 = vld [vmem:[%s1025 + $0x130] sm:$0xff]
          %v1065 = vld [vmem:[%s1025 + $0x138] sm:$0xff]
          %v1066 = vld [vmem:[%s1025 + $0x140] sm:$0xff]
          %v1067 = vld [vmem:[%s1025 + $0x148] sm:$0xff]
          %v1068 = vld [vmem:[%s1025 + $0x150] sm:$0xff]
          %v1069 = vld [vmem:[%s1025 + $0x158] sm:$0xff]
          %v1070 = vld [vmem:[%s1025 + $0x160] sm:$0xff]
          %v1071 = vld [vmem:[%s1025 + $0x168] sm:$0xff]
          %v1072 = vld [vmem:[%s1025 + $0x170] sm:$0xff]
          %v1073 = vld [vmem:[%s1025 + $0x178] sm:$0xff]
          %v1074 = vld [vmem:[%s1025 + $0x180] sm:$0xff]
          %v1075 = vsel %vm427, %v1026, 0.0
          %v1076 = vsel %vm427, %v1027, 0.0
          %v1077 = vadd.f32 %v1075, %v1076
          %v1078 = vsel %vm427, %v1028, 0.0
          %v1079 = vadd.f32 %v1077, %v1078
          %v1080 = vsel %vm427, %v1029, 0.0
          %v1081 = vadd.f32 %v1079, %v1080
          %v1082 = vsel %vm427, %v1030, 0.0
          %v1083 = vadd.f32 %v1081, %v1082
          %v1084 = vsel %vm427, %v1031, 0.0
          %v1085 = vadd.f32 %v1083, %v1084
          %v1086 = vsel %vm427, %v1032, 0.0
          %v1087 = vadd.f32 %v1085, %v1086
          %v1088 = vsel %vm427, %v1033, 0.0
          %v1089 = vadd.f32 %v1087, %v1088
          %v1090 = vsel %vm427, %v1034, 0.0
          %v1091 = vadd.f32 %v1089, %v1090
          %v1092 = vsel %vm427, %v1035, 0.0
          %v1093 = vadd.f32 %v1091, %v1092
          %v1094 = vsel %vm427, %v1036, 0.0
          %v1095 = vadd.f32 %v1093, %v1094
          %v1096 = vsel %vm427, %v1037, 0.0
          %v1097 = vadd.f32 %v1095, %v1096
          %v1098 = vsel %vm427, %v1038, 0.0
          %v1099 = vadd.f32 %v1097, %v1098
          %v1100 = vsel %vm427, %v1039, 0.0
          %v1101 = vadd.f32 %v1099, %v1100
          %v1102 = vsel %vm427, %v1040, 0.0
          %v1103 = vadd.f32 %v1101, %v1102
          %v1104 = vsel %vm427, %v1041, 0.0
          %v1105 = vadd.f32 %v1103, %v1104
          %v1106 = vsel %vm427, %v1042, 0.0
          %v1107 = vadd.f32 %v1105, %v1106
          %v1108 = vsel %vm427, %v1043, 0.0
          %v1109 = vadd.f32 %v1107, %v1108
          %v1110 = vsel %vm427, %v1044, 0.0
          %v1111 = vadd.f32 %v1109, %v1110
          %v1112 = vsel %vm427, %v1045, 0.0
          %v1113 = vadd.f32 %v1111, %v1112
          %v1114 = vsel %vm427, %v1046, 0.0
          %v1115 = vadd.f32 %v1113, %v1114
          %v1116 = vsel %vm427, %v1047, 0.0
          %v1117 = vadd.f32 %v1115, %v1116
          %v1118 = vsel %vm427, %v1048, 0.0
          %v1119 = vadd.f32 %v1117, %v1118
          %v1120 = vsel %vm427, %v1049, 0.0
          %v1121 = vadd.f32 %v1119, %v1120
          %v1122 = vsel %vm427, %v1050, 0.0
          %v1123 = vadd.f32 %v1121, %v1122
          %v1124 = vsel %vm427, %v1051, 0.0
          %v1125 = vadd.f32 %v1123, %v1124
          %v1126 = vsel %vm427, %v1052, 0.0
          %v1127 = vadd.f32 %v1125, %v1126
          %v1128 = vsel %vm427, %v1053, 0.0
          %v1129 = vadd.f32 %v1127, %v1128
          %v1130 = vsel %vm427, %v1054, 0.0
          %v1131 = vadd.f32 %v1129, %v1130
          %v1132 = vsel %vm427, %v1055, 0.0
          %v1133 = vadd.f32 %v1131, %v1132
          %v1134 = vsel %vm427, %v1056, 0.0
          %v1135 = vadd.f32 %v1133, %v1134
          %v1136 = vsel %vm427, %v1057, 0.0
          %v1137 = vadd.f32 %v1135, %v1136
          %v1138 = vsel %vm427, %v1058, 0.0
          %v1139 = vadd.f32 %v1137, %v1138
          %v1140 = vsel %vm427, %v1059, 0.0
          %v1141 = vadd.f32 %v1139, %v1140
          %v1142 = vsel %vm427, %v1060, 0.0
          %v1143 = vadd.f32 %v1141, %v1142
          %v1144 = vsel %vm427, %v1061, 0.0
          %v1145 = vadd.f32 %v1143, %v1144
          %v1146 = vsel %vm427, %v1062, 0.0
          %v1147 = vadd.f32 %v1145, %v1146
          %v1148 = vsel %vm427, %v1063, 0.0
          %v1149 = vadd.f32 %v1147, %v1148
          %v1150 = vsel %vm427, %v1064, 0.0
          %v1151 = vadd.f32 %v1149, %v1150
          %v1152 = vsel %vm427, %v1065, 0.0
          %v1153 = vadd.f32 %v1151, %v1152
          %v1154 = vsel %vm427, %v1066, 0.0
          %v1155 = vadd.f32 %v1153, %v1154
          %v1156 = vsel %vm427, %v1067, 0.0
          %v1157 = vadd.f32 %v1155, %v1156
          %v1158 = vsel %vm427, %v1068, 0.0
          %v1159 = vadd.f32 %v1157, %v1158
          %v1160 = vsel %vm427, %v1069, 0.0
          %v1161 = vadd.f32 %v1159, %v1160
          %v1162 = vsel %vm427, %v1070, 0.0
          %v1163 = vadd.f32 %v1161, %v1162
          %v1164 = vsel %vm427, %v1071, 0.0
          %v1165 = vadd.f32 %v1163, %v1164
          %v1166 = vsel %vm427, %v1072, 0.0
          %v1167 = vadd.f32 %v1165, %v1166
          %v1168 = vsel %vm427, %v1073, 0.0
          %v1169 = vadd.f32 %v1167, %v1168
          %v1170 = vsel %vm427, %v1074, 0.0
          %v1171 = vadd.f32 %v1169, %v1170
          %v1172 = vrot.slane %v1171, 4
          %v1173 = vadd.f32 %v1171, %v1172
          %v1174 = vrot.slane %v1173, 2
          %v1175 = vadd.f32 %v1173, %v1174
          %v1176 = vrot.slane %v1175, 1
          %v1177 = vadd.f32 %v1175, %v1176
          %v1178 = vadd.f32 %v1024, %v1177
          %s1179 = scalar_lea.vmem [#allocation2], 1176
          %v1180 = vld [vmem:[%s1179] sm:$0xff]
          %v1181 = vld [vmem:[%s1179 + $0x8] sm:$0xff]
          %v1182 = vld [vmem:[%s1179 + $0x10] sm:$0xff]
          %v1183 = vld [vmem:[%s1179 + $0x18] sm:$0xff]
          %v1184 = vld [vmem:[%s1179 + $0x20] sm:$0xff]
          %v1185 = vld [vmem:[%s1179 + $0x28] sm:$0xff]
          %v1186 = vld [vmem:[%s1179 + $0x30] sm:$0xff]
          %v1187 = vld [vmem:[%s1179 + $0x38] sm:$0xff]
          %v1188 = vld [vmem:[%s1179 + $0x40] sm:$0xff]
          %v1189 = vld [vmem:[%s1179 + $0x48] sm:$0xff]
          %v1190 = vld [vmem:[%s1179 + $0x50] sm:$0xff]
          %v1191 = vld [vmem:[%s1179 + $0x58] sm:$0xff]
          %v1192 = vld [vmem:[%s1179 + $0x60] sm:$0xff]
          %v1193 = vld [vmem:[%s1179 + $0x68] sm:$0xff]
          %v1194 = vld [vmem:[%s1179 + $0x70] sm:$0xff]
          %v1195 = vld [vmem:[%s1179 + $0x78] sm:$0xff]
          %v1196 = vld [vmem:[%s1179 + $0x80] sm:$0xff]
          %v1197 = vld [vmem:[%s1179 + $0x88] sm:$0xff]
          %v1198 = vld [vmem:[%s1179 + $0x90] sm:$0xff]
          %v1199 = vld [vmem:[%s1179 + $0x98] sm:$0xff]
          %v1200 = vld [vmem:[%s1179 + $0xa0] sm:$0xff]
          %v1201 = vld [vmem:[%s1179 + $0xa8] sm:$0xff]
          %v1202 = vld [vmem:[%s1179 + $0xb0] sm:$0xff]
          %v1203 = vld [vmem:[%s1179 + $0xb8] sm:$0xff]
          %v1204 = vld [vmem:[%s1179 + $0xc0] sm:$0xff]
          %v1205 = vld [vmem:[%s1179 + $0xc8] sm:$0xff]
          %v1206 = vld [vmem:[%s1179 + $0xd0] sm:$0xff]
          %v1207 = vld [vmem:[%s1179 + $0xd8] sm:$0xff]
          %v1208 = vld [vmem:[%s1179 + $0xe0] sm:$0xff]
          %v1209 = vld [vmem:[%s1179 + $0xe8] sm:$0xff]
          %v1210 = vld [vmem:[%s1179 + $0xf0] sm:$0xff]
          %v1211 = vld [vmem:[%s1179 + $0xf8] sm:$0xff]
          %v1212 = vld [vmem:[%s1179 + $0x100] sm:$0xff]
          %v1213 = vld [vmem:[%s1179 + $0x108] sm:$0xff]
          %v1214 = vld [vmem:[%s1179 + $0x110] sm:$0xff]
          %v1215 = vld [vmem:[%s1179 + $0x118] sm:$0xff]
          %v1216 = vld [vmem:[%s1179 + $0x120] sm:$0xff]
          %v1217 = vld [vmem:[%s1179 + $0x128] sm:$0xff]
          %v1218 = vld [vmem:[%s1179 + $0x130] sm:$0xff]
          %v1219 = vld [vmem:[%s1179 + $0x138] sm:$0xff]
          %v1220 = vld [vmem:[%s1179 + $0x140] sm:$0xff]
          %v1221 = vld [vmem:[%s1179 + $0x148] sm:$0xff]
          %v1222 = vld [vmem:[%s1179 + $0x150] sm:$0xff]
          %v1223 = vld [vmem:[%s1179 + $0x158] sm:$0xff]
          %v1224 = vld [vmem:[%s1179 + $0x160] sm:$0xff]
          %v1225 = vld [vmem:[%s1179 + $0x168] sm:$0xff]
          %v1226 = vld [vmem:[%s1179 + $0x170] sm:$0xff]
          %v1227 = vld [vmem:[%s1179 + $0x178] sm:$0xff]
          %v1228 = vld [vmem:[%s1179 + $0x180] sm:$0xff]
          %v1229 = vsel %vm427, %v1180, 0.0
          %v1230 = vsel %vm427, %v1181, 0.0
          %v1231 = vadd.f32 %v1229, %v1230
          %v1232 = vsel %vm427, %v1182, 0.0
          %v1233 = vadd.f32 %v1231, %v1232
          %v1234 = vsel %vm427, %v1183, 0.0
          %v1235 = vadd.f32 %v1233, %v1234
          %v1236 = vsel %vm427, %v1184, 0.0
          %v1237 = vadd.f32 %v1235, %v1236
          %v1238 = vsel %vm427, %v1185, 0.0
          %v1239 = vadd.f32 %v1237, %v1238
          %v1240 = vsel %vm427, %v1186, 0.0
          %v1241 = vadd.f32 %v1239, %v1240
          %v1242 = vsel %vm427, %v1187, 0.0
          %v1243 = vadd.f32 %v1241, %v1242
          %v1244 = vsel %vm427, %v1188, 0.0
          %v1245 = vadd.f32 %v1243, %v1244
          %v1246 = vsel %vm427, %v1189, 0.0
          %v1247 = vadd.f32 %v1245, %v1246
          %v1248 = vsel %vm427, %v1190, 0.0
          %v1249 = vadd.f32 %v1247, %v1248
          %v1250 = vsel %vm427, %v1191, 0.0
          %v1251 = vadd.f32 %v1249, %v1250
          %v1252 = vsel %vm427, %v1192, 0.0
          %v1253 = vadd.f32 %v1251, %v1252
          %v1254 = vsel %vm427, %v1193, 0.0
          %v1255 = vadd.f32 %v1253, %v1254
          %v1256 = vsel %vm427, %v1194, 0.0
          %v1257 = vadd.f32 %v1255, %v1256
          %v1258 = vsel %vm427, %v1195, 0.0
          %v1259 = vadd.f32 %v1257, %v1258
          %v1260 = vsel %vm427, %v1196, 0.0
          %v1261 = vadd.f32 %v1259, %v1260
          %v1262 = vsel %vm427, %v1197, 0.0
          %v1263 = vadd.f32 %v1261, %v1262
          %v1264 = vsel %vm427, %v1198, 0.0
          %v1265 = vadd.f32 %v1263, %v1264
          %v1266 = vsel %vm427, %v1199, 0.0
          %v1267 = vadd.f32 %v1265, %v1266
          %v1268 = vsel %vm427, %v1200, 0.0
          %v1269 = vadd.f32 %v1267, %v1268
          %v1270 = vsel %vm427, %v1201, 0.0
          %v1271 = vadd.f32 %v1269, %v1270
          %v1272 = vsel %vm427, %v1202, 0.0
          %v1273 = vadd.f32 %v1271, %v1272
          %v1274 = vsel %vm427, %v1203, 0.0
          %v1275 = vadd.f32 %v1273, %v1274
          %v1276 = vsel %vm427, %v1204, 0.0
          %v1277 = vadd.f32 %v1275, %v1276
          %v1278 = vsel %vm427, %v1205, 0.0
          %v1279 = vadd.f32 %v1277, %v1278
          %v1280 = vsel %vm427, %v1206, 0.0
          %v1281 = vadd.f32 %v1279, %v1280
          %v1282 = vsel %vm427, %v1207, 0.0
          %v1283 = vadd.f32 %v1281, %v1282
          %v1284 = vsel %vm427, %v1208, 0.0
          %v1285 = vadd.f32 %v1283, %v1284
          %v1286 = vsel %vm427, %v1209, 0.0
          %v1287 = vadd.f32 %v1285, %v1286
          %v1288 = vsel %vm427, %v1210, 0.0
          %v1289 = vadd.f32 %v1287, %v1288
          %v1290 = vsel %vm427, %v1211, 0.0
          %v1291 = vadd.f32 %v1289, %v1290
          %v1292 = vsel %vm427, %v1212, 0.0
          %v1293 = vadd.f32 %v1291, %v1292
          %v1294 = vsel %vm427, %v1213, 0.0
          %v1295 = vadd.f32 %v1293, %v1294
          %v1296 = vsel %vm427, %v1214, 0.0
          %v1297 = vadd.f32 %v1295, %v1296
          %v1298 = vsel %vm427, %v1215, 0.0
          %v1299 = vadd.f32 %v1297, %v1298
          %v1300 = vsel %vm427, %v1216, 0.0
          %v1301 = vadd.f32 %v1299, %v1300
          %v1302 = vsel %vm427, %v1217, 0.0
          %v1303 = vadd.f32 %v1301, %v1302
          %v1304 = vsel %vm427, %v1218, 0.0
          %v1305 = vadd.f32 %v1303, %v1304
          %v1306 = vsel %vm427, %v1219, 0.0
          %v1307 = vadd.f32 %v1305, %v1306
          %v1308 = vsel %vm427, %v1220, 0.0
          %v1309 = vadd.f32 %v1307, %v1308
          %v1310 = vsel %vm427, %v1221, 0.0
          %v1311 = vadd.f32 %v1309, %v1310
          %v1312 = vsel %vm427, %v1222, 0.0
          %v1313 = vadd.f32 %v1311, %v1312
          %v1314 = vsel %vm427, %v1223, 0.0
          %v1315 = vadd.f32 %v1313, %v1314
          %v1316 = vsel %vm427, %v1224, 0.0
          %v1317 = vadd.f32 %v1315, %v1316
          %v1318 = vsel %vm427, %v1225, 0.0
          %v1319 = vadd.f32 %v1317, %v1318
          %v1320 = vsel %vm427, %v1226, 0.0
          %v1321 = vadd.f32 %v1319, %v1320
          %v1322 = vsel %vm427, %v1227, 0.0
          %v1323 = vadd.f32 %v1321, %v1322
          %v1324 = vsel %vm427, %v1228, 0.0
          %v1325 = vadd.f32 %v1323, %v1324
          %v1326 = vrot.slane %v1325, 4
          %v1327 = vadd.f32 %v1325, %v1326
          %v1328 = vrot.slane %v1327, 2
          %v1329 = vadd.f32 %v1327, %v1328
          %v1330 = vrot.slane %v1329, 1
          %v1331 = vadd.f32 %v1329, %v1330
          %v1332 = vadd.f32 %v1178, %v1331
          %v1333 = vmul.f32 %v1332, 0.0006377551
          %v1334 = vsub.f32 %v718, %v1333
          %v1335 = vsub.f32 %v719, %v1333
          %v1336 = vsub.f32 %v720, %v1333
          %v1337 = vsub.f32 %v721, %v1333
          %v1338 = vsub.f32 %v722, %v1333
          %v1339 = vsub.f32 %v723, %v1333
          %v1340 = vsub.f32 %v724, %v1333
          %v1341 = vsub.f32 %v725, %v1333
          %v1342 = vsub.f32 %v726, %v1333
          %v1343 = vsub.f32 %v727, %v1333
          %v1344 = vsub.f32 %v728, %v1333
          %v1345 = vsub.f32 %v729, %v1333
          %v1346 = vsub.f32 %v730, %v1333
          %v1347 = vsub.f32 %v731, %v1333
          %v1348 = vsub.f32 %v732, %v1333
          %v1349 = vsub.f32 %v733, %v1333
          %v1350 = vsub.f32 %v734, %v1333
          %v1351 = vsub.f32 %v735, %v1333
          %v1352 = vsub.f32 %v736, %v1333
          %v1353 = vsub.f32 %v737, %v1333
          %v1354 = vsub.f32 %v738, %v1333
          %v1355 = vsub.f32 %v739, %v1333
          %v1356 = vsub.f32 %v740, %v1333
          %v1357 = vsub.f32 %v741, %v1333
          %v1358 = vsub.f32 %v742, %v1333
          %v1359 = vsub.f32 %v743, %v1333
          %v1360 = vsub.f32 %v744, %v1333
          %v1361 = vsub.f32 %v745, %v1333
          %v1362 = vsub.f32 %v746, %v1333
          %v1363 = vsub.f32 %v747, %v1333
          %v1364 = vsub.f32 %v748, %v1333
          %v1365 = vsub.f32 %v749, %v1333
          %v1366 = vsub.f32 %v750, %v1333
          %v1367 = vsub.f32 %v751, %v1333
          %v1368 = vsub.f32 %v752, %v1333
          %v1369 = vsub.f32 %v753, %v1333
          %v1370 = vsub.f32 %v754, %v1333
          %v1371 = vsub.f32 %v755, %v1333
          %v1372 = vsub.f32 %v756, %v1333
          %v1373 = vsub.f32 %v757, %v1333
          %v1374 = vsub.f32 %v758, %v1333
          %v1375 = vsub.f32 %v759, %v1333
          %v1376 = vsub.f32 %v760, %v1333
          %v1377 = vsub.f32 %v761, %v1333
          %v1378 = vsub.f32 %v762, %v1333
          %v1379 = vsub.f32 %v763, %v1333
          %v1380 = vsub.f32 %v764, %v1333
          %v1381 = vsub.f32 %v765, %v1333
          %v1382 = vsub.f32 %v766, %v1333
          %v1383 = vmul.f32 %v1334, %v1334
          %v1384 = vmul.f32 %v1335, %v1335
          %v1385 = vmul.f32 %v1336, %v1336
          %v1386 = vmul.f32 %v1337, %v1337
          %v1387 = vmul.f32 %v1338, %v1338
          %v1388 = vmul.f32 %v1339, %v1339
          %v1389 = vmul.f32 %v1340, %v1340
          %v1390 = vmul.f32 %v1341, %v1341
          %v1391 = vmul.f32 %v1342, %v1342
          %v1392 = vmul.f32 %v1343, %v1343
          %v1393 = vmul.f32 %v1344, %v1344
          %v1394 = vmul.f32 %v1345, %v1345
          %v1395 = vmul.f32 %v1346, %v1346
          %v1396 = vmul.f32 %v1347, %v1347
          %v1397 = vmul.f32 %v1348, %v1348
          %v1398 = vmul.f32 %v1349, %v1349
          %v1399 = vmul.f32 %v1350, %v1350
          %v1400 = vmul.f32 %v1351, %v1351
          %v1401 = vmul.f32 %v1352, %v1352
          %v1402 = vmul.f32 %v1353, %v1353
          %v1403 = vmul.f32 %v1354, %v1354
          %v1404 = vmul.f32 %v1355, %v1355
          %v1405 = vmul.f32 %v1356, %v1356
          %v1406 = vmul.f32 %v1357, %v1357
          %v1407 = vmul.f32 %v1358, %v1358
          %v1408 = vmul.f32 %v1359, %v1359
          %v1409 = vmul.f32 %v1360, %v1360
          %v1410 = vmul.f32 %v1361, %v1361
          %v1411 = vmul.f32 %v1362, %v1362
          %v1412 = vmul.f32 %v1363, %v1363
          %v1413 = vmul.f32 %v1364, %v1364
          %v1414 = vmul.f32 %v1365, %v1365
          %v1415 = vmul.f32 %v1366, %v1366
          %v1416 = vmul.f32 %v1367, %v1367
          %v1417 = vmul.f32 %v1368, %v1368
          %v1418 = vmul.f32 %v1369, %v1369
          %v1419 = vmul.f32 %v1370, %v1370
          %v1420 = vmul.f32 %v1371, %v1371
          %v1421 = vmul.f32 %v1372, %v1372
          %v1422 = vmul.f32 %v1373, %v1373
          %v1423 = vmul.f32 %v1374, %v1374
          %v1424 = vmul.f32 %v1375, %v1375
          %v1425 = vmul.f32 %v1376, %v1376
          %v1426 = vmul.f32 %v1377, %v1377
          %v1427 = vmul.f32 %v1378, %v1378
          %v1428 = vmul.f32 %v1379, %v1379
          %v1429 = vmul.f32 %v1380, %v1380
          %v1430 = vmul.f32 %v1381, %v1381
          %v1431 = vmul.f32 %v1382, %v1382
          %v1432 = vsel %vm427, %v1383, 0.0
          %v1433 = vsel %vm427, %v1384, 0.0
          %v1434 = vadd.f32 %v1432, %v1433
          %v1435 = vsel %vm427, %v1385, 0.0
          %v1436 = vadd.f32 %v1434, %v1435
          %v1437 = vsel %vm427, %v1386, 0.0
          %v1438 = vadd.f32 %v1436, %v1437
          %v1439 = vsel %vm427, %v1387, 0.0
          %v1440 = vadd.f32 %v1438, %v1439
          %v1441 = vsel %vm427, %v1388, 0.0
          %v1442 = vadd.f32 %v1440, %v1441
          %v1443 = vsel %vm427, %v1389, 0.0
          %v1444 = vadd.f32 %v1442, %v1443
          %v1445 = vsel %vm427, %v1390, 0.0
          %v1446 = vadd.f32 %v1444, %v1445
          %v1447 = vsel %vm427, %v1391, 0.0
          %v1448 = vadd.f32 %v1446, %v1447
          %v1449 = vsel %vm427, %v1392, 0.0
          %v1450 = vadd.f32 %v1448, %v1449
          %v1451 = vsel %vm427, %v1393, 0.0
          %v1452 = vadd.f32 %v1450, %v1451
          %v1453 = vsel %vm427, %v1394, 0.0
          %v1454 = vadd.f32 %v1452, %v1453
          %v1455 = vsel %vm427, %v1395, 0.0
          %v1456 = vadd.f32 %v1454, %v1455
          %v1457 = vsel %vm427, %v1396, 0.0
          %v1458 = vadd.f32 %v1456, %v1457
          %v1459 = vsel %vm427, %v1397, 0.0
          %v1460 = vadd.f32 %v1458, %v1459
          %v1461 = vsel %vm427, %v1398, 0.0
          %v1462 = vadd.f32 %v1460, %v1461
          %v1463 = vsel %vm427, %v1399, 0.0
          %v1464 = vadd.f32 %v1462, %v1463
          %v1465 = vsel %vm427, %v1400, 0.0
          %v1466 = vadd.f32 %v1464, %v1465
          %v1467 = vsel %vm427, %v1401, 0.0
          %v1468 = vadd.f32 %v1466, %v1467
          %v1469 = vsel %vm427, %v1402, 0.0
          %v1470 = vadd.f32 %v1468, %v1469
          %v1471 = vsel %vm427, %v1403, 0.0
          %v1472 = vadd.f32 %v1470, %v1471
          %v1473 = vsel %vm427, %v1404, 0.0
          %v1474 = vadd.f32 %v1472, %v1473
          %v1475 = vsel %vm427, %v1405, 0.0
          %v1476 = vadd.f32 %v1474, %v1475
          %v1477 = vsel %vm427, %v1406, 0.0
          %v1478 = vadd.f32 %v1476, %v1477
          %v1479 = vsel %vm427, %v1407, 0.0
          %v1480 = vadd.f32 %v1478, %v1479
          %v1481 = vsel %vm427, %v1408, 0.0
          %v1482 = vadd.f32 %v1480, %v1481
          %v1483 = vsel %vm427, %v1409, 0.0
          %v1484 = vadd.f32 %v1482, %v1483
          %v1485 = vsel %vm427, %v1410, 0.0
          %v1486 = vadd.f32 %v1484, %v1485
          %v1487 = vsel %vm427, %v1411, 0.0
          %v1488 = vadd.f32 %v1486, %v1487
          %v1489 = vsel %vm427, %v1412, 0.0
          %v1490 = vadd.f32 %v1488, %v1489
          %v1491 = vsel %vm427, %v1413, 0.0
          %v1492 = vadd.f32 %v1490, %v1491
          %v1493 = vsel %vm427, %v1414, 0.0
          %v1494 = vadd.f32 %v1492, %v1493
          %v1495 = vsel %vm427, %v1415, 0.0
          %v1496 = vadd.f32 %v1494, %v1495
          %v1497 = vsel %vm427, %v1416, 0.0
          %v1498 = vadd.f32 %v1496, %v1497
          %v1499 = vsel %vm427, %v1417, 0.0
          %v1500 = vadd.f32 %v1498, %v1499
          %v1501 = vsel %vm427, %v1418, 0.0
          %v1502 = vadd.f32 %v1500, %v1501
          %v1503 = vsel %vm427, %v1419, 0.0
          %v1504 = vadd.f32 %v1502, %v1503
          %v1505 = vsel %vm427, %v1420, 0.0
          %v1506 = vadd.f32 %v1504, %v1505
          %v1507 = vsel %vm427, %v1421, 0.0
          %v1508 = vadd.f32 %v1506, %v1507
          %v1509 = vsel %vm427, %v1422, 0.0
          %v1510 = vadd.f32 %v1508, %v1509
          %v1511 = vsel %vm427, %v1423, 0.0
          %v1512 = vadd.f32 %v1510, %v1511
          %v1513 = vsel %vm427, %v1424, 0.0
          %v1514 = vadd.f32 %v1512, %v1513
          %v1515 = vsel %vm427, %v1425, 0.0
          %v1516 = vadd.f32 %v1514, %v1515
          %v1517 = vsel %vm427, %v1426, 0.0
          %v1518 = vadd.f32 %v1516, %v1517
          %v1519 = vsel %vm427, %v1427, 0.0
          %v1520 = vadd.f32 %v1518, %v1519
          %v1521 = vsel %vm427, %v1428, 0.0
          %v1522 = vadd.f32 %v1520, %v1521
          %v1523 = vsel %vm427, %v1429, 0.0
          %v1524 = vadd.f32 %v1522, %v1523
          %v1525 = vsel %vm427, %v1430, 0.0
          %v1526 = vadd.f32 %v1524, %v1525
          %v1527 = vsel %vm427, %v1431, 0.0
          %v1528 = vadd.f32 %v1526, %v1527
          %v1529 = vrot.slane %v1528, 4
          %v1530 = vadd.f32 %v1528, %v1529
          %v1531 = vrot.slane %v1530, 2
          %v1532 = vadd.f32 %v1530, %v1531
          %v1533 = vrot.slane %v1532, 1
          %v1534 = vadd.f32 %v1532, %v1533
          %v1535 = vadd.f32 %v1534, 0.0
          %v1536 = vsub.f32 %v872, %v1333
          %v1537 = vsub.f32 %v873, %v1333
          %v1538 = vsub.f32 %v874, %v1333
          %v1539 = vsub.f32 %v875, %v1333
          %v1540 = vsub.f32 %v876, %v1333
          %v1541 = vsub.f32 %v877, %v1333
          %v1542 = vsub.f32 %v878, %v1333
          %v1543 = vsub.f32 %v879, %v1333
          %v1544 = vsub.f32 %v880, %v1333
          %v1545 = vsub.f32 %v881, %v1333
          %v1546 = vsub.f32 %v882, %v1333
          %v1547 = vsub.f32 %v883, %v1333
          %v1548 = vsub.f32 %v884, %v1333
          %v1549 = vsub.f32 %v885, %v1333
          %v1550 = vsub.f32 %v886, %v1333
          %v1551 = vsub.f32 %v887, %v1333
          %v1552 = vsub.f32 %v888, %v1333
          %v1553 = vsub.f32 %v889, %v1333
          %v1554 = vsub.f32 %v890, %v1333
          %v1555 = vsub.f32 %v891, %v1333
          %v1556 = vsub.f32 %v892, %v1333
          %v1557 = vsub.f32 %v893, %v1333
          %v1558 = vsub.f32 %v894, %v1333
          %v1559 = vsub.f32 %v895, %v1333
          %v1560 = vsub.f32 %v896, %v1333
          %v1561 = vsub.f32 %v897, %v1333
          %v1562 = vsub.f32 %v898, %v1333
          %v1563 = vsub.f32 %v899, %v1333
          %v1564 = vsub.f32 %v900, %v1333
          %v1565 = vsub.f32 %v901, %v1333
          %v1566 = vsub.f32 %v902, %v1333
          %v1567 = vsub.f32 %v903, %v1333
          %v1568 = vsub.f32 %v904, %v1333
          %v1569 = vsub.f32 %v905, %v1333
          %v1570 = vsub.f32 %v906, %v1333
          %v1571 = vsub.f32 %v907, %v1333
          %v1572 = vsub.f32 %v908, %v1333
          %v1573 = vsub.f32 %v909, %v1333
          %v1574 = vsub.f32 %v910, %v1333
          %v1575 = vsub.f32 %v911, %v1333
          %v1576 = vsub.f32 %v912, %v1333
          %v1577 = vsub.f32 %v913, %v1333
          %v1578 = vsub.f32 %v914, %v1333
          %v1579 = vsub.f32 %v915, %v1333
          %v1580 = vsub.f32 %v916, %v1333
          %v1581 = vsub.f32 %v917, %v1333
          %v1582 = vsub.f32 %v918, %v1333
          %v1583 = vsub.f32 %v919, %v1333
          %v1584 = vsub.f32 %v920, %v1333
          %v1585 = vmul.f32 %v1536, %v1536
          %v1586 = vmul.f32 %v1537, %v1537
          %v1587 = vmul.f32 %v1538, %v1538
          %v1588 = vmul.f32 %v1539, %v1539
          %v1589 = vmul.f32 %v1540, %v1540
          %v1590 = vmul.f32 %v1541, %v1541
          %v1591 = vmul.f32 %v1542, %v1542
          %v1592 = vmul.f32 %v1543, %v1543
          %v1593 = vmul.f32 %v1544, %v1544
          %v1594 = vmul.f32 %v1545, %v1545
          %v1595 = vmul.f32 %v1546, %v1546
          %v1596 = vmul.f32 %v1547, %v1547
          %v1597 = vmul.f32 %v1548, %v1548
          %v1598 = vmul.f32 %v1549, %v1549
          %v1599 = vmul.f32 %v1550, %v1550
          %v1600 = vmul.f32 %v1551, %v1551
          %v1601 = vmul.f32 %v1552, %v1552
          %v1602 = vmul.f32 %v1553, %v1553
          %v1603 = vmul.f32 %v1554, %v1554
          %v1604 = vmul.f32 %v1555, %v1555
          %v1605 = vmul.f32 %v1556, %v1556
          %v1606 = vmul.f32 %v1557, %v1557
          %v1607 = vmul.f32 %v1558, %v1558
          %v1608 = vmul.f32 %v1559, %v1559
          %v1609 = vmul.f32 %v1560, %v1560
          %v1610 = vmul.f32 %v1561, %v1561
          %v1611 = vmul.f32 %v1562, %v1562
          %v1612 = vmul.f32 %v1563, %v1563
          %v1613 = vmul.f32 %v1564, %v1564
          %v1614 = vmul.f32 %v1565, %v1565
          %v1615 = vmul.f32 %v1566, %v1566
          %v1616 = vmul.f32 %v1567, %v1567
          %v1617 = vmul.f32 %v1568, %v1568
          %v1618 = vmul.f32 %v1569, %v1569
          %v1619 = vmul.f32 %v1570, %v1570
          %v1620 = vmul.f32 %v1571, %v1571
          %v1621 = vmul.f32 %v1572, %v1572
          %v1622 = vmul.f32 %v1573, %v1573
          %v1623 = vmul.f32 %v1574, %v1574
          %v1624 = vmul.f32 %v1575, %v1575
          %v1625 = vmul.f32 %v1576, %v1576
          %v1626 = vmul.f32 %v1577, %v1577
          %v1627 = vmul.f32 %v1578, %v1578
          %v1628 = vmul.f32 %v1579, %v1579
          %v1629 = vmul.f32 %v1580, %v1580
          %v1630 = vmul.f32 %v1581, %v1581
          %v1631 = vmul.f32 %v1582, %v1582
          %v1632 = vmul.f32 %v1583, %v1583
          %v1633 = vmul.f32 %v1584, %v1584
          %v1634 = vsel %vm427, %v1585, 0.0
          %v1635 = vsel %vm427, %v1586, 0.0
          %v1636 = vadd.f32 %v1634, %v1635
          %v1637 = vsel %vm427, %v1587, 0.0
          %v1638 = vadd.f32 %v1636, %v1637
          %v1639 = vsel %vm427, %v1588, 0.0
          %v1640 = vadd.f32 %v1638, %v1639
          %v1641 = vsel %vm427, %v1589, 0.0
          %v1642 = vadd.f32 %v1640, %v1641
          %v1643 = vsel %vm427, %v1590, 0.0
          %v1644 = vadd.f32 %v1642, %v1643
          %v1645 = vsel %vm427, %v1591, 0.0
          %v1646 = vadd.f32 %v1644, %v1645
          %v1647 = vsel %vm427, %v1592, 0.0
          %v1648 = vadd.f32 %v1646, %v1647
          %v1649 = vsel %vm427, %v1593, 0.0
          %v1650 = vadd.f32 %v1648, %v1649
          %v1651 = vsel %vm427, %v1594, 0.0
          %v1652 = vadd.f32 %v1650, %v1651
          %v1653 = vsel %vm427, %v1595, 0.0
          %v1654 = vadd.f32 %v1652, %v1653
          %v1655 = vsel %vm427, %v1596, 0.0
          %v1656 = vadd.f32 %v1654, %v1655
          %v1657 = vsel %vm427, %v1597, 0.0
          %v1658 = vadd.f32 %v1656, %v1657
          %v1659 = vsel %vm427, %v1598, 0.0
          %v1660 = vadd.f32 %v1658, %v1659
          %v1661 = vsel %vm427, %v1599, 0.0
          %v1662 = vadd.f32 %v1660, %v1661
          %v1663 = vsel %vm427, %v1600, 0.0
          %v1664 = vadd.f32 %v1662, %v1663
          %v1665 = vsel %vm427, %v1601, 0.0
          %v1666 = vadd.f32 %v1664, %v1665
          %v1667 = vsel %vm427, %v1602, 0.0
          %v1668 = vadd.f32 %v1666, %v1667
          %v1669 = vsel %vm427, %v1603, 0.0
          %v1670 = vadd.f32 %v1668, %v1669
          %v1671 = vsel %vm427, %v1604, 0.0
          %v1672 = vadd.f32 %v1670, %v1671
          %v1673 = vsel %vm427, %v1605, 0.0
          %v1674 = vadd.f32 %v1672, %v1673
          %v1675 = vsel %vm427, %v1606, 0.0
          %v1676 = vadd.f32 %v1674, %v1675
          %v1677 = vsel %vm427, %v1607, 0.0
          %v1678 = vadd.f32 %v1676, %v1677
          %v1679 = vsel %vm427, %v1608, 0.0
          %v1680 = vadd.f32 %v1678, %v1679
          %v1681 = vsel %vm427, %v1609, 0.0
          %v1682 = vadd.f32 %v1680, %v1681
          %v1683 = vsel %vm427, %v1610, 0.0
          %v1684 = vadd.f32 %v1682, %v1683
          %v1685 = vsel %vm427, %v1611, 0.0
          %v1686 = vadd.f32 %v1684, %v1685
          %v1687 = vsel %vm427, %v1612, 0.0
          %v1688 = vadd.f32 %v1686, %v1687
          %v1689 = vsel %vm427, %v1613, 0.0
          %v1690 = vadd.f32 %v1688, %v1689
          %v1691 = vsel %vm427, %v1614, 0.0
          %v1692 = vadd.f32 %v1690, %v1691
          %v1693 = vsel %vm427, %v1615, 0.0
          %v1694 = vadd.f32 %v1692, %v1693
          %v1695 = vsel %vm427, %v1616, 0.0
          %v1696 = vadd.f32 %v1694, %v1695
          %v1697 = vsel %vm427, %v1617, 0.0
          %v1698 = vadd.f32 %v1696, %v1697
          %v1699 = vsel %vm427, %v1618, 0.0
          %v1700 = vadd.f32 %v1698, %v1699
          %v1701 = vsel %vm427, %v1619, 0.0
          %v1702 = vadd.f32 %v1700, %v1701
          %v1703 = vsel %vm427, %v1620, 0.0
          %v1704 = vadd.f32 %v1702, %v1703
          %v1705 = vsel %vm427, %v1621, 0.0
          %v1706 = vadd.f32 %v1704, %v1705
          %v1707 = vsel %vm427, %v1622, 0.0
          %v1708 = vadd.f32 %v1706, %v1707
          %v1709 = vsel %vm427, %v1623, 0.0
          %v1710 = vadd.f32 %v1708, %v1709
          %v1711 = vsel %vm427, %v1624, 0.0
          %v1712 = vadd.f32 %v1710, %v1711
          %v1713 = vsel %vm427, %v1625, 0.0
          %v1714 = vadd.f32 %v1712, %v1713
          %v1715 = vsel %vm427, %v1626, 0.0
          %v1716 = vadd.f32 %v1714, %v1715
          %v1717 = vsel %vm427, %v1627, 0.0
          %v1718 = vadd.f32 %v1716, %v1717
          %v1719 = vsel %vm427, %v1628, 0.0
          %v1720 = vadd.f32 %v1718, %v1719
          %v1721 = vsel %vm427, %v1629, 0.0
          %v1722 = vadd.f32 %v1720, %v1721
          %v1723 = vsel %vm427, %v1630, 0.0
          %v1724 = vadd.f32 %v1722, %v1723
          %v1725 = vsel %vm427, %v1631, 0.0
          %v1726 = vadd.f32 %v1724, %v1725
          %v1727 = vsel %vm427, %v1632, 0.0
          %v1728 = vadd.f32 %v1726, %v1727
          %v1729 = vsel %vm427, %v1633, 0.0
          %v1730 = vadd.f32 %v1728, %v1729
          %v1731 = vrot.slane %v1730, 4
          %v1732 = vadd.f32 %v1730, %v1731
          %v1733 = vrot.slane %v1732, 2
          %v1734 = vadd.f32 %v1732, %v1733
          %v1735 = vrot.slane %v1734, 1
          %v1736 = vadd.f32 %v1734, %v1735
          %v1737 = vadd.f32 %v1535, %v1736
          %v1738 = vsub.f32 %v1026, %v1333
          %v1739 = vsub.f32 %v1027, %v1333
          %v1740 = vsub.f32 %v1028, %v1333
          %v1741 = vsub.f32 %v1029, %v1333
          %v1742 = vsub.f32 %v1030, %v1333
          %v1743 = vsub.f32 %v1031, %v1333
          %v1744 = vsub.f32 %v1032, %v1333
          %v1745 = vsub.f32 %v1033, %v1333
          %v1746 = vsub.f32 %v1034, %v1333
          %v1747 = vsub.f32 %v1035, %v1333
          %v1748 = vsub.f32 %v1036, %v1333
          %v1749 = vsub.f32 %v1037, %v1333
          %v1750 = vsub.f32 %v1038, %v1333
          %v1751 = vsub.f32 %v1039, %v1333
          %v1752 = vsub.f32 %v1040, %v1333
          %v1753 = vsub.f32 %v1041, %v1333
          %v1754 = vsub.f32 %v1042, %v1333
          %v1755 = vsub.f32 %v1043, %v1333
          %v1756 = vsub.f32 %v1044, %v1333
          %v1757 = vsub.f32 %v1045, %v1333
          %v1758 = vsub.f32 %v1046, %v1333
          %v1759 = vsub.f32 %v1047, %v1333
          %v1760 = vsub.f32 %v1048, %v1333
          %v1761 = vsub.f32 %v1049, %v1333
          %v1762 = vsub.f32 %v1050, %v1333
          %v1763 = vsub.f32 %v1051, %v1333
          %v1764 = vsub.f32 %v1052, %v1333
          %v1765 = vsub.f32 %v1053, %v1333
          %v1766 = vsub.f32 %v1054, %v1333
          %v1767 = vsub.f32 %v1055, %v1333
          %v1768 = vsub.f32 %v1056, %v1333
          %v1769 = vsub.f32 %v1057, %v1333
          %v1770 = vsub.f32 %v1058, %v1333
          %v1771 = vsub.f32 %v1059, %v1333
          %v1772 = vsub.f32 %v1060, %v1333
          %v1773 = vsub.f32 %v1061, %v1333
          %v1774 = vsub.f32 %v1062, %v1333
          %v1775 = vsub.f32 %v1063, %v1333
          %v1776 = vsub.f32 %v1064, %v1333
          %v1777 = vsub.f32 %v1065, %v1333
          %v1778 = vsub.f32 %v1066, %v1333
          %v1779 = vsub.f32 %v1067, %v1333
          %v1780 = vsub.f32 %v1068, %v1333
          %v1781 = vsub.f32 %v1069, %v1333
          %v1782 = vsub.f32 %v1070, %v1333
          %v1783 = vsub.f32 %v1071, %v1333
          %v1784 = vsub.f32 %v1072, %v1333
          %v1785 = vsub.f32 %v1073, %v1333
          %v1786 = vsub.f32 %v1074, %v1333
          %v1787 = vmul.f32 %v1738, %v1738
          %v1788 = vmul.f32 %v1739, %v1739
          %v1789 = vmul.f32 %v1740, %v1740
          %v1790 = vmul.f32 %v1741, %v1741
          %v1791 = vmul.f32 %v1742, %v1742
          %v1792 = vmul.f32 %v1743, %v1743
          %v1793 = vmul.f32 %v1744, %v1744
          %v1794 = vmul.f32 %v1745, %v1745
          %v1795 = vmul.f32 %v1746, %v1746
          %v1796 = vmul.f32 %v1747, %v1747
          %v1797 = vmul.f32 %v1748, %v1748
          %v1798 = vmul.f32 %v1749, %v1749
          %v1799 = vmul.f32 %v1750, %v1750
          %v1800 = vmul.f32 %v1751, %v1751
          %v1801 = vmul.f32 %v1752, %v1752
          %v1802 = vmul.f32 %v1753, %v1753
          %v1803 = vmul.f32 %v1754, %v1754
          %v1804 = vmul.f32 %v1755, %v1755
          %v1805 = vmul.f32 %v1756, %v1756
          %v1806 = vmul.f32 %v1757, %v1757
          %v1807 = vmul.f32 %v1758, %v1758
          %v1808 = vmul.f32 %v1759, %v1759
          %v1809 = vmul.f32 %v1760, %v1760
          %v1810 = vmul.f32 %v1761, %v1761
          %v1811 = vmul.f32 %v1762, %v1762
          %v1812 = vmul.f32 %v1763, %v1763
          %v1813 = vmul.f32 %v1764, %v1764
          %v1814 = vmul.f32 %v1765, %v1765
          %v1815 = vmul.f32 %v1766, %v1766
          %v1816 = vmul.f32 %v1767, %v1767
          %v1817 = vmul.f32 %v1768, %v1768
          %v1818 = vmul.f32 %v1769, %v1769
          %v1819 = vmul.f32 %v1770, %v1770
          %v1820 = vmul.f32 %v1771, %v1771
          %v1821 = vmul.f32 %v1772, %v1772
          %v1822 = vmul.f32 %v1773, %v1773
          %v1823 = vmul.f32 %v1774, %v1774
          %v1824 = vmul.f32 %v1775, %v1775
          %v1825 = vmul.f32 %v1776, %v1776
          %v1826 = vmul.f32 %v1777, %v1777
          %v1827 = vmul.f32 %v1778, %v1778
          %v1828 = vmul.f32 %v1779, %v1779
          %v1829 = vmul.f32 %v1780, %v1780
          %v1830 = vmul.f32 %v1781, %v1781
          %v1831 = vmul.f32 %v1782, %v1782
          %v1832 = vmul.f32 %v1783, %v1783
          %v1833 = vmul.f32 %v1784, %v1784
          %v1834 = vmul.f32 %v1785, %v1785
          %v1835 = vmul.f32 %v1786, %v1786
          %v1836 = vsel %vm427, %v1787, 0.0
          %v1837 = vsel %vm427, %v1788, 0.0
          %v1838 = vadd.f32 %v1836, %v1837
          %v1839 = vsel %vm427, %v1789, 0.0
          %v1840 = vadd.f32 %v1838, %v1839
          %v1841 = vsel %vm427, %v1790, 0.0
          %v1842 = vadd.f32 %v1840, %v1841
          %v1843 = vsel %vm427, %v1791, 0.0
          %v1844 = vadd.f32 %v1842, %v1843
          %v1845 = vsel %vm427, %v1792, 0.0
          %v1846 = vadd.f32 %v1844, %v1845
          %v1847 = vsel %vm427, %v1793, 0.0
          %v1848 = vadd.f32 %v1846, %v1847
          %v1849 = vsel %vm427, %v1794, 0.0
          %v1850 = vadd.f32 %v1848, %v1849
          %v1851 = vsel %vm427, %v1795, 0.0
          %v1852 = vadd.f32 %v1850, %v1851
          %v1853 = vsel %vm427, %v1796, 0.0
          %v1854 = vadd.f32 %v1852, %v1853
          %v1855 = vsel %vm427, %v1797, 0.0
          %v1856 = vadd.f32 %v1854, %v1855
          %v1857 = vsel %vm427, %v1798, 0.0
          %v1858 = vadd.f32 %v1856, %v1857
          %v1859 = vsel %vm427, %v1799, 0.0
          %v1860 = vadd.f32 %v1858, %v1859
          %v1861 = vsel %vm427, %v1800, 0.0
          %v1862 = vadd.f32 %v1860, %v1861
          %v1863 = vsel %vm427, %v1801, 0.0
          %v1864 = vadd.f32 %v1862, %v1863
          %v1865 = vsel %vm427, %v1802, 0.0
          %v1866 = vadd.f32 %v1864, %v1865
          %v1867 = vsel %vm427, %v1803, 0.0
          %v1868 = vadd.f32 %v1866, %v1867
          %v1869 = vsel %vm427, %v1804, 0.0
          %v1870 = vadd.f32 %v1868, %v1869
          %v1871 = vsel %vm427, %v1805, 0.0
          %v1872 = vadd.f32 %v1870, %v1871
          %v1873 = vsel %vm427, %v1806, 0.0
          %v1874 = vadd.f32 %v1872, %v1873
          %v1875 = vsel %vm427, %v1807, 0.0
          %v1876 = vadd.f32 %v1874, %v1875
          %v1877 = vsel %vm427, %v1808, 0.0
          %v1878 = vadd.f32 %v1876, %v1877
          %v1879 = vsel %vm427, %v1809, 0.0
          %v1880 = vadd.f32 %v1878, %v1879
          %v1881 = vsel %vm427, %v1810, 0.0
          %v1882 = vadd.f32 %v1880, %v1881
          %v1883 = vsel %vm427, %v1811, 0.0
          %v1884 = vadd.f32 %v1882, %v1883
          %v1885 = vsel %vm427, %v1812, 0.0
          %v1886 = vadd.f32 %v1884, %v1885
          %v1887 = vsel %vm427, %v1813, 0.0
          %v1888 = vadd.f32 %v1886, %v1887
          %v1889 = vsel %vm427, %v1814, 0.0
          %v1890 = vadd.f32 %v1888, %v1889
          %v1891 = vsel %vm427, %v1815, 0.0
          %v1892 = vadd.f32 %v1890, %v1891
          %v1893 = vsel %vm427, %v1816, 0.0
          %v1894 = vadd.f32 %v1892, %v1893
          %v1895 = vsel %vm427, %v1817, 0.0
          %v1896 = vadd.f32 %v1894, %v1895
          %v1897 = vsel %vm427, %v1818, 0.0
          %v1898 = vadd.f32 %v1896, %v1897
          %v1899 = vsel %vm427, %v1819, 0.0
          %v1900 = vadd.f32 %v1898, %v1899
          %v1901 = vsel %vm427, %v1820, 0.0
          %v1902 = vadd.f32 %v1900, %v1901
          %v1903 = vsel %vm427, %v1821, 0.0
          %v1904 = vadd.f32 %v1902, %v1903
          %v1905 = vsel %vm427, %v1822, 0.0
          %v1906 = vadd.f32 %v1904, %v1905
          %v1907 = vsel %vm427, %v1823, 0.0
          %v1908 = vadd.f32 %v1906, %v1907
          %v1909 = vsel %vm427, %v1824, 0.0
          %v1910 = vadd.f32 %v1908, %v1909
          %v1911 = vsel %vm427, %v1825, 0.0
          %v1912 = vadd.f32 %v1910, %v1911
          %v1913 = vsel %vm427, %v1826, 0.0
          %v1914 = vadd.f32 %v1912, %v1913
          %v1915 = vsel %vm427, %v1827, 0.0
          %v1916 = vadd.f32 %v1914, %v1915
          %v1917 = vsel %vm427, %v1828, 0.0
          %v1918 = vadd.f32 %v1916, %v1917
          %v1919 = vsel %vm427, %v1829, 0.0
          %v1920 = vadd.f32 %v1918, %v1919
          %v1921 = vsel %vm427, %v1830, 0.0
          %v1922 = vadd.f32 %v1920, %v1921
          %v1923 = vsel %vm427, %v1831, 0.0
          %v1924 = vadd.f32 %v1922, %v1923
          %v1925 = vsel %vm427, %v1832, 0.0
          %v1926 = vadd.f32 %v1924, %v1925
          %v1927 = vsel %vm427, %v1833, 0.0
          %v1928 = vadd.f32 %v1926, %v1927
          %v1929 = vsel %vm427, %v1834, 0.0
          %v1930 = vadd.f32 %v1928, %v1929
          %v1931 = vsel %vm427, %v1835, 0.0
          %v1932 = vadd.f32 %v1930, %v1931
          %v1933 = vrot.slane %v1932, 4
          %v1934 = vadd.f32 %v1932, %v1933
          %v1935 = vrot.slane %v1934, 2
          %v1936 = vadd.f32 %v1934, %v1935
          %v1937 = vrot.slane %v1936, 1
          %v1938 = vadd.f32 %v1936, %v1937
          %v1939 = vadd.f32 %v1737, %v1938
          %v1940 = vsub.f32 %v1180, %v1333
          %v1941 = vsub.f32 %v1181, %v1333
          %v1942 = vsub.f32 %v1182, %v1333
          %v1943 = vsub.f32 %v1183, %v1333
          %v1944 = vsub.f32 %v1184, %v1333
          %v1945 = vsub.f32 %v1185, %v1333
          %v1946 = vsub.f32 %v1186, %v1333
          %v1947 = vsub.f32 %v1187, %v1333
          %v1948 = vsub.f32 %v1188, %v1333
          %v1949 = vsub.f32 %v1189, %v1333
          %v1950 = vsub.f32 %v1190, %v1333
          %v1951 = vsub.f32 %v1191, %v1333
          %v1952 = vsub.f32 %v1192, %v1333
          %v1953 = vsub.f32 %v1193, %v1333
          %v1954 = vsub.f32 %v1194, %v1333
          %v1955 = vsub.f32 %v1195, %v1333
          %v1956 = vsub.f32 %v1196, %v1333
          %v1957 = vsub.f32 %v1197, %v1333
          %v1958 = vsub.f32 %v1198, %v1333
          %v1959 = vsub.f32 %v1199, %v1333
          %v1960 = vsub.f32 %v1200, %v1333
          %v1961 = vsub.f32 %v1201, %v1333
          %v1962 = vsub.f32 %v1202, %v1333
          %v1963 = vsub.f32 %v1203, %v1333
          %v1964 = vsub.f32 %v1204, %v1333
          %v1965 = vsub.f32 %v1205, %v1333
          %v1966 = vsub.f32 %v1206, %v1333
          %v1967 = vsub.f32 %v1207, %v1333
          %v1968 = vsub.f32 %v1208, %v1333
          %v1969 = vsub.f32 %v1209, %v1333
          %v1970 = vsub.f32 %v1210, %v1333
          %v1971 = vsub.f32 %v1211, %v1333
          %v1972 = vsub.f32 %v1212, %v1333
          %v1973 = vsub.f32 %v1213, %v1333
          %v1974 = vsub.f32 %v1214, %v1333
          %v1975 = vsub.f32 %v1215, %v1333
          %v1976 = vsub.f32 %v1216, %v1333
          %v1977 = vsub.f32 %v1217, %v1333
          %v1978 = vsub.f32 %v1218, %v1333
          %v1979 = vsub.f32 %v1219, %v1333
          %v1980 = vsub.f32 %v1220, %v1333
          %v1981 = vsub.f32 %v1221, %v1333
          %v1982 = vsub.f32 %v1222, %v1333
          %v1983 = vsub.f32 %v1223, %v1333
          %v1984 = vsub.f32 %v1224, %v1333
          %v1985 = vsub.f32 %v1225, %v1333
          %v1986 = vsub.f32 %v1226, %v1333
          %v1987 = vsub.f32 %v1227, %v1333
          %v1988 = vsub.f32 %v1228, %v1333
          %v1989 = vmul.f32 %v1940, %v1940
          %v1990 = vmul.f32 %v1941, %v1941
          %v1991 = vmul.f32 %v1942, %v1942
          %v1992 = vmul.f32 %v1943, %v1943
          %v1993 = vmul.f32 %v1944, %v1944
          %v1994 = vmul.f32 %v1945, %v1945
          %v1995 = vmul.f32 %v1946, %v1946
          %v1996 = vmul.f32 %v1947, %v1947
          %v1997 = vmul.f32 %v1948, %v1948
          %v1998 = vmul.f32 %v1949, %v1949
          %v1999 = vmul.f32 %v1950, %v1950
          %v2000 = vmul.f32 %v1951, %v1951
          %v2001 = vmul.f32 %v1952, %v1952
          %v2002 = vmul.f32 %v1953, %v1953
          %v2003 = vmul.f32 %v1954, %v1954
          %v2004 = vmul.f32 %v1955, %v1955
          %v2005 = vmul.f32 %v1956, %v1956
          %v2006 = vmul.f32 %v1957, %v1957
          %v2007 = vmul.f32 %v1958, %v1958
          %v2008 = vmul.f32 %v1959, %v1959
          %v2009 = vmul.f32 %v1960, %v1960
          %v2010 = vmul.f32 %v1961, %v1961
          %v2011 = vmul.f32 %v1962, %v1962
          %v2012 = vmul.f32 %v1963, %v1963
          %v2013 = vmul.f32 %v1964, %v1964
          %v2014 = vmul.f32 %v1965, %v1965
          %v2015 = vmul.f32 %v1966, %v1966
          %v2016 = vmul.f32 %v1967, %v1967
          %v2017 = vmul.f32 %v1968, %v1968
          %v2018 = vmul.f32 %v1969, %v1969
          %v2019 = vmul.f32 %v1970, %v1970
          %v2020 = vmul.f32 %v1971, %v1971
          %v2021 = vmul.f32 %v1972, %v1972
          %v2022 = vmul.f32 %v1973, %v1973
          %v2023 = vmul.f32 %v1974, %v1974
          %v2024 = vmul.f32 %v1975, %v1975
          %v2025 = vmul.f32 %v1976, %v1976
          %v2026 = vmul.f32 %v1977, %v1977
          %v2027 = vmul.f32 %v1978, %v1978
          %v2028 = vmul.f32 %v1979, %v1979
          %v2029 = vmul.f32 %v1980, %v1980
          %v2030 = vmul.f32 %v1981, %v1981
          %v2031 = vmul.f32 %v1982, %v1982
          %v2032 = vmul.f32 %v1983, %v1983
          %v2033 = vmul.f32 %v1984, %v1984
          %v2034 = vmul.f32 %v1985, %v1985
          %v2035 = vmul.f32 %v1986, %v1986
          %v2036 = vmul.f32 %v1987, %v1987
          %v2037 = vmul.f32 %v1988, %v1988
          %v2038 = vsel %vm427, %v1989, 0.0
          %v2039 = vsel %vm427, %v1990, 0.0
          %v2040 = vadd.f32 %v2038, %v2039
          %v2041 = vsel %vm427, %v1991, 0.0
          %v2042 = vadd.f32 %v2040, %v2041
          %v2043 = vsel %vm427, %v1992, 0.0
          %v2044 = vadd.f32 %v2042, %v2043
          %v2045 = vsel %vm427, %v1993, 0.0
          %v2046 = vadd.f32 %v2044, %v2045
          %v2047 = vsel %vm427, %v1994, 0.0
          %v2048 = vadd.f32 %v2046, %v2047
          %v2049 = vsel %vm427, %v1995, 0.0
          %v2050 = vadd.f32 %v2048, %v2049
          %v2051 = vsel %vm427, %v1996, 0.0
          %v2052 = vadd.f32 %v2050, %v2051
          %v2053 = vsel %vm427, %v1997, 0.0
          %v2054 = vadd.f32 %v2052, %v2053
          %v2055 = vsel %vm427, %v1998, 0.0
          %v2056 = vadd.f32 %v2054, %v2055
          %v2057 = vsel %vm427, %v1999, 0.0
          %v2058 = vadd.f32 %v2056, %v2057
          %v2059 = vsel %vm427, %v2000, 0.0
          %v2060 = vadd.f32 %v2058, %v2059
          %v2061 = vsel %vm427, %v2001, 0.0
          %v2062 = vadd.f32 %v2060, %v2061
          %v2063 = vsel %vm427, %v2002, 0.0
          %v2064 = vadd.f32 %v2062, %v2063
          %v2065 = vsel %vm427, %v2003, 0.0
          %v2066 = vadd.f32 %v2064, %v2065
          %v2067 = vsel %vm427, %v2004, 0.0
          %v2068 = vadd.f32 %v2066, %v2067
          %v2069 = vsel %vm427, %v2005, 0.0
          %v2070 = vadd.f32 %v2068, %v2069
          %v2071 = vsel %vm427, %v2006, 0.0
          %v2072 = vadd.f32 %v2070, %v2071
          %v2073 = vsel %vm427, %v2007, 0.0
          %v2074 = vadd.f32 %v2072, %v2073
          %v2075 = vsel %vm427, %v2008, 0.0
          %v2076 = vadd.f32 %v2074, %v2075
          %v2077 = vsel %vm427, %v2009, 0.0
          %v2078 = vadd.f32 %v2076, %v2077
          %v2079 = vsel %vm427, %v2010, 0.0
          %v2080 = vadd.f32 %v2078, %v2079
          %v2081 = vsel %vm427, %v2011, 0.0
          %v2082 = vadd.f32 %v2080, %v2081
          %v2083 = vsel %vm427, %v2012, 0.0
          %v2084 = vadd.f32 %v2082, %v2083
          %v2085 = vsel %vm427, %v2013, 0.0
          %v2086 = vadd.f32 %v2084, %v2085
          %v2087 = vsel %vm427, %v2014, 0.0
          %v2088 = vadd.f32 %v2086, %v2087
          %v2089 = vsel %vm427, %v2015, 0.0
          %v2090 = vadd.f32 %v2088, %v2089
          %v2091 = vsel %vm427, %v2016, 0.0
          %v2092 = vadd.f32 %v2090, %v2091
          %v2093 = vsel %vm427, %v2017, 0.0
          %v2094 = vadd.f32 %v2092, %v2093
          %v2095 = vsel %vm427, %v2018, 0.0
          %v2096 = vadd.f32 %v2094, %v2095
          %v2097 = vsel %vm427, %v2019, 0.0
          %v2098 = vadd.f32 %v2096, %v2097
          %v2099 = vsel %vm427, %v2020, 0.0
          %v2100 = vadd.f32 %v2098, %v2099
          %v2101 = vsel %vm427, %v2021, 0.0
          %v2102 = vadd.f32 %v2100, %v2101
          %v2103 = vsel %vm427, %v2022, 0.0
          %v2104 = vadd.f32 %v2102, %v2103
          %v2105 = vsel %vm427, %v2023, 0.0
          %v2106 = vadd.f32 %v2104, %v2105
          %v2107 = vsel %vm427, %v2024, 0.0
          %v2108 = vadd.f32 %v2106, %v2107
          %v2109 = vsel %vm427, %v2025, 0.0
          %v2110 = vadd.f32 %v2108, %v2109
          %v2111 = vsel %vm427, %v2026, 0.0
          %v2112 = vadd.f32 %v2110, %v2111
          %v2113 = vsel %vm427, %v2027, 0.0
          %v2114 = vadd.f32 %v2112, %v2113
          %v2115 = vsel %vm427, %v2028, 0.0
          %v2116 = vadd.f32 %v2114, %v2115
          %v2117 = vsel %vm427, %v2029, 0.0
          %v2118 = vadd.f32 %v2116, %v2117
          %v2119 = vsel %vm427, %v2030, 0.0
          %v2120 = vadd.f32 %v2118, %v2119
          %v2121 = vsel %vm427, %v2031, 0.0
          %v2122 = vadd.f32 %v2120, %v2121
          %v2123 = vsel %vm427, %v2032, 0.0
          %v2124 = vadd.f32 %v2122, %v2123
          %v2125 = vsel %vm427, %v2033, 0.0
          %v2126 = vadd.f32 %v2124, %v2125
          %v2127 = vsel %vm427, %v2034, 0.0
          %v2128 = vadd.f32 %v2126, %v2127
          %v2129 = vsel %vm427, %v2035, 0.0
          %v2130 = vadd.f32 %v2128, %v2129
          %v2131 = vsel %vm427, %v2036, 0.0
          %v2132 = vadd.f32 %v2130, %v2131
          %v2133 = vsel %vm427, %v2037, 0.0
          %v2134 = vadd.f32 %v2132, %v2133
          %v2135 = vrot.slane %v2134, 4
          %v2136 = vadd.f32 %v2134, %v2135
          %v2137 = vrot.slane %v2136, 2
          %v2138 = vadd.f32 %v2136, %v2137
          %v2139 = vrot.slane %v2138, 1
          %v2140 = vadd.f32 %v2138, %v2139
          %v2141 = vadd.f32 %v1939, %v2140
          %v2142 = vmul.f32 %v2141, 0.0006377551
          %v2143 = vld [vmem:[%s2] sm:$0x1]
          %v2144 = vadd.f32 %v2142, 1e-05
          %v2145 = vrsqrt.pop %v2144
          %v2146 = vmul.f32 %v2145, %v2144
          %v2147 = vmul.f32 %v2146, %v2145
          %v2148 = vmul.f32 0.5, %v2147
          %v2149 = vsub.f32 1.5, %v2148
          %v2150 = vmul.f32 %v2145, %v2149
          %vm2151 = vweird.f32 %v2144
          %vm2152 = vweird.f32 %v2145
          %vm2153 = vmor %vm2151, %vm2152
          %v2154 = vsel %vm2153, %v2145, %v2150
          %v2155 = vmul.f32 %v2143, %v2154
          %v2156 = vld [vmem:[%s3] sm:$0x1]
          %v2157 = vmul.f32 %v1333, %v2155
          %v2158 = vsub.f32 %v2156, %v2157
          %v2160 = vperm.slane %v2155, 0
          %v2162 = vmul.f32 %v718, %v2160
          %v2163 = vmul.f32 %v719, %v2160
          %v2164 = vmul.f32 %v720, %v2160
          %v2165 = vmul.f32 %v721, %v2160
          %v2166 = vmul.f32 %v722, %v2160
          %v2167 = vmul.f32 %v723, %v2160
          %v2168 = vmul.f32 %v724, %v2160
          %v2169 = vmul.f32 %v725, %v2160
          %v2170 = vmul.f32 %v726, %v2160
          %v2171 = vmul.f32 %v727, %v2160
          %v2172 = vmul.f32 %v728, %v2160
          %v2173 = vmul.f32 %v729, %v2160
          %v2174 = vmul.f32 %v730, %v2160
          %v2175 = vmul.f32 %v731, %v2160
          %v2176 = vmul.f32 %v732, %v2160
          %v2177 = vmul.f32 %v733, %v2160
          %v2178 = vmul.f32 %v734, %v2160
          %v2179 = vmul.f32 %v735, %v2160
          %v2180 = vmul.f32 %v736, %v2160
          %v2181 = vmul.f32 %v737, %v2160
          %v2182 = vmul.f32 %v738, %v2160
          %v2183 = vmul.f32 %v739, %v2160
          %v2184 = vmul.f32 %v740, %v2160
          %v2185 = vmul.f32 %v741, %v2160
          %v2186 = vmul.f32 %v742, %v2160
          %v2187 = vmul.f32 %v743, %v2160
          %v2188 = vmul.f32 %v744, %v2160
          %v2189 = vmul.f32 %v745, %v2160
          %v2190 = vmul.f32 %v746, %v2160
          %v2191 = vmul.f32 %v747, %v2160
          %v2192 = vmul.f32 %v748, %v2160
          %v2193 = vmul.f32 %v749, %v2160
          %v2194 = vmul.f32 %v750, %v2160
          %v2195 = vmul.f32 %v751, %v2160
          %v2196 = vmul.f32 %v752, %v2160
          %v2197 = vmul.f32 %v753, %v2160
          %v2198 = vmul.f32 %v754, %v2160
          %v2199 = vmul.f32 %v755, %v2160
          %v2200 = vmul.f32 %v756, %v2160
          %v2201 = vmul.f32 %v757, %v2160
          %v2202 = vmul.f32 %v758, %v2160
          %v2203 = vmul.f32 %v759, %v2160
          %v2204 = vmul.f32 %v760, %v2160
          %v2205 = vmul.f32 %v761, %v2160
          %v2206 = vmul.f32 %v762, %v2160
          %v2207 = vmul.f32 %v763, %v2160
          %v2208 = vmul.f32 %v764, %v2160
          %v2209 = vmul.f32 %v765, %v2160
          %v2210 = vmul.f32 %v766, %v2160
          %v2212 = vperm.slane %v2158, 0
          %v2214 = vadd.f32 %v2162, %v2212
          %v2215 = vadd.f32 %v2163, %v2212
          %v2216 = vadd.f32 %v2164, %v2212
          %v2217 = vadd.f32 %v2165, %v2212
          %v2218 = vadd.f32 %v2166, %v2212
          %v2219 = vadd.f32 %v2167, %v2212
          %v2220 = vadd.f32 %v2168, %v2212
          %v2221 = vadd.f32 %v2169, %v2212
          %v2222 = vadd.f32 %v2170, %v2212
          %v2223 = vadd.f32 %v2171, %v2212
          %v2224 = vadd.f32 %v2172, %v2212
          %v2225 = vadd.f32 %v2173, %v2212
          %v2226 = vadd.f32 %v2174, %v2212
          %v2227 = vadd.f32 %v2175, %v2212
          %v2228 = vadd.f32 %v2176, %v2212
          %v2229 = vadd.f32 %v2177, %v2212
          %v2230 = vadd.f32 %v2178, %v2212
          %v2231 = vadd.f32 %v2179, %v2212
          %v2232 = vadd.f32 %v2180, %v2212
          %v2233 = vadd.f32 %v2181, %v2212
          %v2234 = vadd.f32 %v2182, %v2212
          %v2235 = vadd.f32 %v2183, %v2212
          %v2236 = vadd.f32 %v2184, %v2212
          %v2237 = vadd.f32 %v2185, %v2212
          %v2238 = vadd.f32 %v2186, %v2212
          %v2239 = vadd.f32 %v2187, %v2212
          %v2240 = vadd.f32 %v2188, %v2212
          %v2241 = vadd.f32 %v2189, %v2212
          %v2242 = vadd.f32 %v2190, %v2212
          %v2243 = vadd.f32 %v2191, %v2212
          %v2244 = vadd.f32 %v2192, %v2212
          %v2245 = vadd.f32 %v2193, %v2212
          %v2246 = vadd.f32 %v2194, %v2212
          %v2247 = vadd.f32 %v2195, %v2212
          %v2248 = vadd.f32 %v2196, %v2212
          %v2249 = vadd.f32 %v2197, %v2212
          %v2250 = vadd.f32 %v2198, %v2212
          %v2251 = vadd.f32 %v2199, %v2212
          %v2252 = vadd.f32 %v2200, %v2212
          %v2253 = vadd.f32 %v2201, %v2212
          %v2254 = vadd.f32 %v2202, %v2212
          %v2255 = vadd.f32 %v2203, %v2212
          %v2256 = vadd.f32 %v2204, %v2212
          %v2257 = vadd.f32 %v2205, %v2212
          %v2258 = vadd.f32 %v2206, %v2212
          %v2259 = vadd.f32 %v2207, %v2212
          %v2260 = vadd.f32 %v2208, %v2212
          %v2261 = vadd.f32 %v2209, %v2212
          %v2262 = vadd.f32 %v2210, %v2212
          %v2263 = vmul.f32 %v872, %v2160
          %v2264 = vmul.f32 %v873, %v2160
          %v2265 = vmul.f32 %v874, %v2160
          %v2266 = vmul.f32 %v875, %v2160
          %v2267 = vmul.f32 %v876, %v2160
          %v2268 = vmul.f32 %v877, %v2160
          %v2269 = vmul.f32 %v878, %v2160
          %v2270 = vmul.f32 %v879, %v2160
          %v2271 = vmul.f32 %v880, %v2160
          %v2272 = vmul.f32 %v881, %v2160
          %v2273 = vmul.f32 %v882, %v2160
          %v2274 = vmul.f32 %v883, %v2160
          %v2275 = vmul.f32 %v884, %v2160
          %v2276 = vmul.f32 %v885, %v2160
          %v2277 = vmul.f32 %v886, %v2160
          %v2278 = vmul.f32 %v887, %v2160
          %v2279 = vmul.f32 %v888, %v2160
          %v2280 = vmul.f32 %v889, %v2160
          %v2281 = vmul.f32 %v890, %v2160
          %v2282 = vmul.f32 %v891, %v2160
          %v2283 = vmul.f32 %v892, %v2160
          %v2284 = vmul.f32 %v893, %v2160
          %v2285 = vmul.f32 %v894, %v2160
          %v2286 = vmul.f32 %v895, %v2160
          %v2287 = vmul.f32 %v896, %v2160
          %v2288 = vmul.f32 %v897, %v2160
          %v2289 = vmul.f32 %v898, %v2160
          %v2290 = vmul.f32 %v899, %v2160
          %v2291 = vmul.f32 %v900, %v2160
          %v2292 = vmul.f32 %v901, %v2160
          %v2293 = vmul.f32 %v902, %v2160
          %v2294 = vmul.f32 %v903, %v2160
          %v2295 = vmul.f32 %v904, %v2160
          %v2296 = vmul.f32 %v905, %v2160
          %v2297 = vmul.f32 %v906, %v2160
          %v2298 = vmul.f32 %v907, %v2160
          %v2299 = vmul.f32 %v908, %v2160
          %v2300 = vmul.f32 %v909, %v2160
          %v2301 = vmul.f32 %v910, %v2160
          %v2302 = vmul.f32 %v911, %v2160
          %v2303 = vmul.f32 %v912, %v2160
          %v2304 = vmul.f32 %v913, %v2160
          %v2305 = vmul.f32 %v914, %v2160
          %v2306 = vmul.f32 %v915, %v2160
          %v2307 = vmul.f32 %v916, %v2160
          %v2308 = vmul.f32 %v917, %v2160
          %v2309 = vmul.f32 %v918, %v2160
          %v2310 = vmul.f32 %v919, %v2160
          %v2311 = vmul.f32 %v920, %v2160
          %v2312 = vadd.f32 %v2263, %v2212
          %v2313 = vadd.f32 %v2264, %v2212
          %v2314 = vadd.f32 %v2265, %v2212
          %v2315 = vadd.f32 %v2266, %v2212
          %v2316 = vadd.f32 %v2267, %v2212
          %v2317 = vadd.f32 %v2268, %v2212
          %v2318 = vadd.f32 %v2269, %v2212
          %v2319 = vadd.f32 %v2270, %v2212
          %v2320 = vadd.f32 %v2271, %v2212
          %v2321 = vadd.f32 %v2272, %v2212
          %v2322 = vadd.f32 %v2273, %v2212
          %v2323 = vadd.f32 %v2274, %v2212
          %v2324 = vadd.f32 %v2275, %v2212
          %v2325 = vadd.f32 %v2276, %v2212
          %v2326 = vadd.f32 %v2277, %v2212
          %v2327 = vadd.f32 %v2278, %v2212
          %v2328 = vadd.f32 %v2279, %v2212
          %v2329 = vadd.f32 %v2280, %v2212
          %v2330 = vadd.f32 %v2281, %v2212
          %v2331 = vadd.f32 %v2282, %v2212
          %v2332 = vadd.f32 %v2283, %v2212
          %v2333 = vadd.f32 %v2284, %v2212
          %v2334 = vadd.f32 %v2285, %v2212
          %v2335 = vadd.f32 %v2286, %v2212
          %v2336 = vadd.f32 %v2287, %v2212
          %v2337 = vadd.f32 %v2288, %v2212
          %v2338 = vadd.f32 %v2289, %v2212
          %v2339 = vadd.f32 %v2290, %v2212
          %v2340 = vadd.f32 %v2291, %v2212
          %v2341 = vadd.f32 %v2292, %v2212
          %v2342 = vadd.f32 %v2293, %v2212
          %v2343 = vadd.f32 %v2294, %v2212
          %v2344 = vadd.f32 %v2295, %v2212
          %v2345 = vadd.f32 %v2296, %v2212
          %v2346 = vadd.f32 %v2297, %v2212
          %v2347 = vadd.f32 %v2298, %v2212
          %v2348 = vadd.f32 %v2299, %v2212
          %v2349 = vadd.f32 %v2300, %v2212
          %v2350 = vadd.f32 %v2301, %v2212
          %v2351 = vadd.f32 %v2302, %v2212
          %v2352 = vadd.f32 %v2303, %v2212
          %v2353 = vadd.f32 %v2304, %v2212
          %v2354 = vadd.f32 %v2305, %v2212
          %v2355 = vadd.f32 %v2306, %v2212
          %v2356 = vadd.f32 %v2307, %v2212
          %v2357 = vadd.f32 %v2308, %v2212
          %v2358 = vadd.f32 %v2309, %v2212
          %v2359 = vadd.f32 %v2310, %v2212
          %v2360 = vadd.f32 %v2311, %v2212
          %v2361 = vmax.f32 %v2214, %v2312
          %v2362 = vmax.f32 %v2215, %v2313
          %v2363 = vmax.f32 %v2216, %v2314
          %v2364 = vmax.f32 %v2217, %v2315
          %v2365 = vmax.f32 %v2218, %v2316
          %v2366 = vmax.f32 %v2219, %v2317
          %v2367 = vmax.f32 %v2220, %v2318
          %v2368 = vmax.f32 %v2221, %v2319
          %v2369 = vmax.f32 %v2222, %v2320
          %v2370 = vmax.f32 %v2223, %v2321
          %v2371 = vmax.f32 %v2224, %v2322
          %v2372 = vmax.f32 %v2225, %v2323
          %v2373 = vmax.f32 %v2226, %v2324
          %v2374 = vmax.f32 %v2227, %v2325
          %v2375 = vmax.f32 %v2228, %v2326
          %v2376 = vmax.f32 %v2229, %v2327
          %v2377 = vmax.f32 %v2230, %v2328
          %v2378 = vmax.f32 %v2231, %v2329
          %v2379 = vmax.f32 %v2232, %v2330
          %v2380 = vmax.f32 %v2233, %v2331
          %v2381 = vmax.f32 %v2234, %v2332
          %v2382 = vmax.f32 %v2235, %v2333
          %v2383 = vmax.f32 %v2236, %v2334
          %v2384 = vmax.f32 %v2237, %v2335
          %v2385 = vmax.f32 %v2238, %v2336
          %v2386 = vmax.f32 %v2239, %v2337
          %v2387 = vmax.f32 %v2240, %v2338
          %v2388 = vmax.f32 %v2241, %v2339
          %v2389 = vmax.f32 %v2242, %v2340
          %v2390 = vmax.f32 %v2243, %v2341
          %v2391 = vmax.f32 %v2244, %v2342
          %v2392 = vmax.f32 %v2245, %v2343
          %v2393 = vmax.f32 %v2246, %v2344
          %v2394 = vmax.f32 %v2247, %v2345
          %v2395 = vmax.f32 %v2248, %v2346
          %v2396 = vmax.f32 %v2249, %v2347
          %v2397 = vmax.f32 %v2250, %v2348
          %v2398 = vmax.f32 %v2251, %v2349
          %v2399 = vmax.f32 %v2252, %v2350
          %v2400 = vmax.f32 %v2253, %v2351
          %v2401 = vmax.f32 %v2254, %v2352
          %v2402 = vmax.f32 %v2255, %v2353
          %v2403 = vmax.f32 %v2256, %v2354
          %v2404 = vmax.f32 %v2257, %v2355
          %v2405 = vmax.f32 %v2258, %v2356
          %v2406 = vmax.f32 %v2259, %v2357
          %v2407 = vmax.f32 %v2260, %v2358
          %v2408 = vmax.f32 %v2261, %v2359
          %v2409 = vmax.f32 %v2262, %v2360
          %v2410 = vmul.f32 %v1026, %v2160
          %v2411 = vmul.f32 %v1027, %v2160
          %v2412 = vmul.f32 %v1028, %v2160
          %v2413 = vmul.f32 %v1029, %v2160
          %v2414 = vmul.f32 %v1030, %v2160
          %v2415 = vmul.f32 %v1031, %v2160
          %v2416 = vmul.f32 %v1032, %v2160
          %v2417 = vmul.f32 %v1033, %v2160
          %v2418 = vmul.f32 %v1034, %v2160
          %v2419 = vmul.f32 %v1035, %v2160
          %v2420 = vmul.f32 %v1036, %v2160
          %v2421 = vmul.f32 %v1037, %v2160
          %v2422 = vmul.f32 %v1038, %v2160
          %v2423 = vmul.f32 %v1039, %v2160
          %v2424 = vmul.f32 %v1040, %v2160
          %v2425 = vmul.f32 %v1041, %v2160
          %v2426 = vmul.f32 %v1042, %v2160
          %v2427 = vmul.f32 %v1043, %v2160
          %v2428 = vmul.f32 %v1044, %v2160
          %v2429 = vmul.f32 %v1045, %v2160
          %v2430 = vmul.f32 %v1046, %v2160
          %v2431 = vmul.f32 %v1047, %v2160
          %v2432 = vmul.f32 %v1048, %v2160
          %v2433 = vmul.f32 %v1049, %v2160
          %v2434 = vmul.f32 %v1050, %v2160
          %v2435 = vmul.f32 %v1051, %v2160
          %v2436 = vmul.f32 %v1052, %v2160
          %v2437 = vmul.f32 %v1053, %v2160
          %v2438 = vmul.f32 %v1054, %v2160
          %v2439 = vmul.f32 %v1055, %v2160
          %v2440 = vmul.f32 %v1056, %v2160
          %v2441 = vmul.f32 %v1057, %v2160
          %v2442 = vmul.f32 %v1058, %v2160
          %v2443 = vmul.f32 %v1059, %v2160
          %v2444 = vmul.f32 %v1060, %v2160
          %v2445 = vmul.f32 %v1061, %v2160
          %v2446 = vmul.f32 %v1062, %v2160
          %v2447 = vmul.f32 %v1063, %v2160
          %v2448 = vmul.f32 %v1064, %v2160
          %v2449 = vmul.f32 %v1065, %v2160
          %v2450 = vmul.f32 %v1066, %v2160
          %v2451 = vmul.f32 %v1067, %v2160
          %v2452 = vmul.f32 %v1068, %v2160
          %v2453 = vmul.f32 %v1069, %v2160
          %v2454 = vmul.f32 %v1070, %v2160
          %v2455 = vmul.f32 %v1071, %v2160
          %v2456 = vmul.f32 %v1072, %v2160
          %v2457 = vmul.f32 %v1073, %v2160
          %v2458 = vmul.f32 %v1074, %v2160
          %v2459 = vadd.f32 %v2410, %v2212
          %v2460 = vadd.f32 %v2411, %v2212
          %v2461 = vadd.f32 %v2412, %v2212
          %v2462 = vadd.f32 %v2413, %v2212
          %v2463 = vadd.f32 %v2414, %v2212
          %v2464 = vadd.f32 %v2415, %v2212
          %v2465 = vadd.f32 %v2416, %v2212
          %v2466 = vadd.f32 %v2417, %v2212
          %v2467 = vadd.f32 %v2418, %v2212
          %v2468 = vadd.f32 %v2419, %v2212
          %v2469 = vadd.f32 %v2420, %v2212
          %v2470 = vadd.f32 %v2421, %v2212
          %v2471 = vadd.f32 %v2422, %v2212
          %v2472 = vadd.f32 %v2423, %v2212
          %v2473 = vadd.f32 %v2424, %v2212
          %v2474 = vadd.f32 %v2425, %v2212
          %v2475 = vadd.f32 %v2426, %v2212
          %v2476 = vadd.f32 %v2427, %v2212
          %v2477 = vadd.f32 %v2428, %v2212
          %v2478 = vadd.f32 %v2429, %v2212
          %v2479 = vadd.f32 %v2430, %v2212
          %v2480 = vadd.f32 %v2431, %v2212
          %v2481 = vadd.f32 %v2432, %v2212
          %v2482 = vadd.f32 %v2433, %v2212
          %v2483 = vadd.f32 %v2434, %v2212
          %v2484 = vadd.f32 %v2435, %v2212
          %v2485 = vadd.f32 %v2436, %v2212
          %v2486 = vadd.f32 %v2437, %v2212
          %v2487 = vadd.f32 %v2438, %v2212
          %v2488 = vadd.f32 %v2439, %v2212
          %v2489 = vadd.f32 %v2440, %v2212
          %v2490 = vadd.f32 %v2441, %v2212
          %v2491 = vadd.f32 %v2442, %v2212
          %v2492 = vadd.f32 %v2443, %v2212
          %v2493 = vadd.f32 %v2444, %v2212
          %v2494 = vadd.f32 %v2445, %v2212
          %v2495 = vadd.f32 %v2446, %v2212
          %v2496 = vadd.f32 %v2447, %v2212
          %v2497 = vadd.f32 %v2448, %v2212
          %v2498 = vadd.f32 %v2449, %v2212
          %v2499 = vadd.f32 %v2450, %v2212
          %v2500 = vadd.f32 %v2451, %v2212
          %v2501 = vadd.f32 %v2452, %v2212
          %v2502 = vadd.f32 %v2453, %v2212
          %v2503 = vadd.f32 %v2454, %v2212
          %v2504 = vadd.f32 %v2455, %v2212
          %v2505 = vadd.f32 %v2456, %v2212
          %v2506 = vadd.f32 %v2457, %v2212
          %v2507 = vadd.f32 %v2458, %v2212
          %v2508 = vmax.f32 %v2361, %v2459
          %v2509 = vmax.f32 %v2362, %v2460
          %v2510 = vmax.f32 %v2363, %v2461
          %v2511 = vmax.f32 %v2364, %v2462
          %v2512 = vmax.f32 %v2365, %v2463
          %v2513 = vmax.f32 %v2366, %v2464
          %v2514 = vmax.f32 %v2367, %v2465
          %v2515 = vmax.f32 %v2368, %v2466
          %v2516 = vmax.f32 %v2369, %v2467
          %v2517 = vmax.f32 %v2370, %v2468
          %v2518 = vmax.f32 %v2371, %v2469
          %v2519 = vmax.f32 %v2372, %v2470
          %v2520 = vmax.f32 %v2373, %v2471
          %v2521 = vmax.f32 %v2374, %v2472
          %v2522 = vmax.f32 %v2375, %v2473
          %v2523 = vmax.f32 %v2376, %v2474
          %v2524 = vmax.f32 %v2377, %v2475
          %v2525 = vmax.f32 %v2378, %v2476
          %v2526 = vmax.f32 %v2379, %v2477
          %v2527 = vmax.f32 %v2380, %v2478
          %v2528 = vmax.f32 %v2381, %v2479
          %v2529 = vmax.f32 %v2382, %v2480
          %v2530 = vmax.f32 %v2383, %v2481
          %v2531 = vmax.f32 %v2384, %v2482
          %v2532 = vmax.f32 %v2385, %v2483
          %v2533 = vmax.f32 %v2386, %v2484
          %v2534 = vmax.f32 %v2387, %v2485
          %v2535 = vmax.f32 %v2388, %v2486
          %v2536 = vmax.f32 %v2389, %v2487
          %v2537 = vmax.f32 %v2390, %v2488
          %v2538 = vmax.f32 %v2391, %v2489
          %v2539 = vmax.f32 %v2392, %v2490
          %v2540 = vmax.f32 %v2393, %v2491
          %v2541 = vmax.f32 %v2394, %v2492
          %v2542 = vmax.f32 %v2395, %v2493
          %v2543 = vmax.f32 %v2396, %v2494
          %v2544 = vmax.f32 %v2397, %v2495
          %v2545 = vmax.f32 %v2398, %v2496
          %v2546 = vmax.f32 %v2399, %v2497
          %v2547 = vmax.f32 %v2400, %v2498
          %v2548 = vmax.f32 %v2401, %v2499
          %v2549 = vmax.f32 %v2402, %v2500
          %v2550 = vmax.f32 %v2403, %v2501
          %v2551 = vmax.f32 %v2404, %v2502
          %v2552 = vmax.f32 %v2405, %v2503
          %v2553 = vmax.f32 %v2406, %v2504
          %v2554 = vmax.f32 %v2407, %v2505
          %v2555 = vmax.f32 %v2408, %v2506
          %v2556 = vmax.f32 %v2409, %v2507
          %v2557 = vmul.f32 %v1180, %v2160
          %v2558 = vmul.f32 %v1181, %v2160
          %v2559 = vmul.f32 %v1182, %v2160
          %v2560 = vmul.f32 %v1183, %v2160
          %v2561 = vmul.f32 %v1184, %v2160
          %v2562 = vmul.f32 %v1185, %v2160
          %v2563 = vmul.f32 %v1186, %v2160
          %v2564 = vmul.f32 %v1187, %v2160
          %v2565 = vmul.f32 %v1188, %v2160
          %v2566 = vmul.f32 %v1189, %v2160
          %v2567 = vmul.f32 %v1190, %v2160
          %v2568 = vmul.f32 %v1191, %v2160
          %v2569 = vmul.f32 %v1192, %v2160
          %v2570 = vmul.f32 %v1193, %v2160
          %v2571 = vmul.f32 %v1194, %v2160
          %v2572 = vmul.f32 %v1195, %v2160
          %v2573 = vmul.f32 %v1196, %v2160
          %v2574 = vmul.f32 %v1197, %v2160
          %v2575 = vmul.f32 %v1198, %v2160
          %v2576 = vmul.f32 %v1199, %v2160
          %v2577 = vmul.f32 %v1200, %v2160
          %v2578 = vmul.f32 %v1201, %v2160
          %v2579 = vmul.f32 %v1202, %v2160
          %v2580 = vmul.f32 %v1203, %v2160
          %v2581 = vmul.f32 %v1204, %v2160
          %v2582 = vmul.f32 %v1205, %v2160
          %v2583 = vmul.f32 %v1206, %v2160
          %v2584 = vmul.f32 %v1207, %v2160
          %v2585 = vmul.f32 %v1208, %v2160
          %v2586 = vmul.f32 %v1209, %v2160
          %v2587 = vmul.f32 %v1210, %v2160
          %v2588 = vmul.f32 %v1211, %v2160
          %v2589 = vmul.f32 %v1212, %v2160
          %v2590 = vmul.f32 %v1213, %v2160
          %v2591 = vmul.f32 %v1214, %v2160
          %v2592 = vmul.f32 %v1215, %v2160
          %v2593 = vmul.f32 %v1216, %v2160
          %v2594 = vmul.f32 %v1217, %v2160
          %v2595 = vmul.f32 %v1218, %v2160
          %v2596 = vmul.f32 %v1219, %v2160
          %v2597 = vmul.f32 %v1220, %v2160
          %v2598 = vmul.f32 %v1221, %v2160
          %v2599 = vmul.f32 %v1222, %v2160
          %v2600 = vmul.f32 %v1223, %v2160
          %v2601 = vmul.f32 %v1224, %v2160
          %v2602 = vmul.f32 %v1225, %v2160
          %v2603 = vmul.f32 %v1226, %v2160
          %v2604 = vmul.f32 %v1227, %v2160
          %v2605 = vmul.f32 %v1228, %v2160
          %v2606 = vadd.f32 %v2557, %v2212
          %v2607 = vadd.f32 %v2558, %v2212
          %v2608 = vadd.f32 %v2559, %v2212
          %v2609 = vadd.f32 %v2560, %v2212
          %v2610 = vadd.f32 %v2561, %v2212
          %v2611 = vadd.f32 %v2562, %v2212
          %v2612 = vadd.f32 %v2563, %v2212
          %v2613 = vadd.f32 %v2564, %v2212
          %v2614 = vadd.f32 %v2565, %v2212
          %v2615 = vadd.f32 %v2566, %v2212
          %v2616 = vadd.f32 %v2567, %v2212
          %v2617 = vadd.f32 %v2568, %v2212
          %v2618 = vadd.f32 %v2569, %v2212
          %v2619 = vadd.f32 %v2570, %v2212
          %v2620 = vadd.f32 %v2571, %v2212
          %v2621 = vadd.f32 %v2572, %v2212
          %v2622 = vadd.f32 %v2573, %v2212
          %v2623 = vadd.f32 %v2574, %v2212
          %v2624 = vadd.f32 %v2575, %v2212
          %v2625 = vadd.f32 %v2576, %v2212
          %v2626 = vadd.f32 %v2577, %v2212
          %v2627 = vadd.f32 %v2578, %v2212
          %v2628 = vadd.f32 %v2579, %v2212
          %v2629 = vadd.f32 %v2580, %v2212
          %v2630 = vadd.f32 %v2581, %v2212
          %v2631 = vadd.f32 %v2582, %v2212
          %v2632 = vadd.f32 %v2583, %v2212
          %v2633 = vadd.f32 %v2584, %v2212
          %v2634 = vadd.f32 %v2585, %v2212
          %v2635 = vadd.f32 %v2586, %v2212
          %v2636 = vadd.f32 %v2587, %v2212
          %v2637 = vadd.f32 %v2588, %v2212
          %v2638 = vadd.f32 %v2589, %v2212
          %v2639 = vadd.f32 %v2590, %v2212
          %v2640 = vadd.f32 %v2591, %v2212
          %v2641 = vadd.f32 %v2592, %v2212
          %v2642 = vadd.f32 %v2593, %v2212
          %v2643 = vadd.f32 %v2594, %v2212
          %v2644 = vadd.f32 %v2595, %v2212
          %v2645 = vadd.f32 %v2596, %v2212
          %v2646 = vadd.f32 %v2597, %v2212
          %v2647 = vadd.f32 %v2598, %v2212
          %v2648 = vadd.f32 %v2599, %v2212
          %v2649 = vadd.f32 %v2600, %v2212
          %v2650 = vadd.f32 %v2601, %v2212
          %v2651 = vadd.f32 %v2602, %v2212
          %v2652 = vadd.f32 %v2603, %v2212
          %v2653 = vadd.f32 %v2604, %v2212
          %v2654 = vadd.f32 %v2605, %v2212
          %v2655 = vmax.f32 %v2508, %v2606
          %v2656 = vmax.f32 %v2509, %v2607
          %v2657 = vmax.f32 %v2510, %v2608
          %v2658 = vmax.f32 %v2511, %v2609
          %v2659 = vmax.f32 %v2512, %v2610
          %v2660 = vmax.f32 %v2513, %v2611
          %v2661 = vmax.f32 %v2514, %v2612
          %v2662 = vmax.f32 %v2515, %v2613
          %v2663 = vmax.f32 %v2516, %v2614
          %v2664 = vmax.f32 %v2517, %v2615
          %v2665 = vmax.f32 %v2518, %v2616
          %v2666 = vmax.f32 %v2519, %v2617
          %v2667 = vmax.f32 %v2520, %v2618
          %v2668 = vmax.f32 %v2521, %v2619
          %v2669 = vmax.f32 %v2522, %v2620
          %v2670 = vmax.f32 %v2523, %v2621
          %v2671 = vmax.f32 %v2524, %v2622
          %v2672 = vmax.f32 %v2525, %v2623
          %v2673 = vmax.f32 %v2526, %v2624
          %v2674 = vmax.f32 %v2527, %v2625
          %v2675 = vmax.f32 %v2528, %v2626
          %v2676 = vmax.f32 %v2529, %v2627
          %v2677 = vmax.f32 %v2530, %v2628
          %v2678 = vmax.f32 %v2531, %v2629
          %v2679 = vmax.f32 %v2532, %v2630
          %v2680 = vmax.f32 %v2533, %v2631
          %v2681 = vmax.f32 %v2534, %v2632
          %v2682 = vmax.f32 %v2535, %v2633
          %v2683 = vmax.f32 %v2536, %v2634
          %v2684 = vmax.f32 %v2537, %v2635
          %v2685 = vmax.f32 %v2538, %v2636
          %v2686 = vmax.f32 %v2539, %v2637
          %v2687 = vmax.f32 %v2540, %v2638
          %v2688 = vmax.f32 %v2541, %v2639
          %v2689 = vmax.f32 %v2542, %v2640
          %v2690 = vmax.f32 %v2543, %v2641
          %v2691 = vmax.f32 %v2544, %v2642
          %v2692 = vmax.f32 %v2545, %v2643
          %v2693 = vmax.f32 %v2546, %v2644
          %v2694 = vmax.f32 %v2547, %v2645
          %v2695 = vmax.f32 %v2548, %v2646
          %v2696 = vmax.f32 %v2549, %v2647
          %v2697 = vmax.f32 %v2550, %v2648
          %v2698 = vmax.f32 %v2551, %v2649
          %v2699 = vmax.f32 %v2552, %v2650
          %v2700 = vmax.f32 %v2553, %v2651
          %v2701 = vmax.f32 %v2554, %v2652
          %v2702 = vmax.f32 %v2555, %v2653
          %v2703 = vmax.f32 %v2556, %v2654
          %v2704 = vmax.f32 %v2655, 0.0
          %v2705 = vmax.f32 %v2656, 0.0
          %v2706 = vmax.f32 %v2657, 0.0
          %v2707 = vmax.f32 %v2658, 0.0
          %v2708 = vmax.f32 %v2659, 0.0
          %v2709 = vmax.f32 %v2660, 0.0
          %v2710 = vmax.f32 %v2661, 0.0
          %v2711 = vmax.f32 %v2662, 0.0
          %v2712 = vmax.f32 %v2663, 0.0
          %v2713 = vmax.f32 %v2664, 0.0
          %v2714 = vmax.f32 %v2665, 0.0
          %v2715 = vmax.f32 %v2666, 0.0
          %v2716 = vmax.f32 %v2667, 0.0
          %v2717 = vmax.f32 %v2668, 0.0
          %v2718 = vmax.f32 %v2669, 0.0
          %v2719 = vmax.f32 %v2670, 0.0
          %v2720 = vmax.f32 %v2671, 0.0
          %v2721 = vmax.f32 %v2672, 0.0
          %v2722 = vmax.f32 %v2673, 0.0
          %v2723 = vmax.f32 %v2674, 0.0
          %v2724 = vmax.f32 %v2675, 0.0
          %v2725 = vmax.f32 %v2676, 0.0
          %v2726 = vmax.f32 %v2677, 0.0
          %v2727 = vmax.f32 %v2678, 0.0
          %v2728 = vmax.f32 %v2679, 0.0
          %v2729 = vmax.f32 %v2680, 0.0
          %v2730 = vmax.f32 %v2681, 0.0
          %v2731 = vmax.f32 %v2682, 0.0
          %v2732 = vmax.f32 %v2683, 0.0
          %v2733 = vmax.f32 %v2684, 0.0
          %v2734 = vmax.f32 %v2685, 0.0
          %v2735 = vmax.f32 %v2686, 0.0
          %v2736 = vmax.f32 %v2687, 0.0
          %v2737 = vmax.f32 %v2688, 0.0
          %v2738 = vmax.f32 %v2689, 0.0
          %v2739 = vmax.f32 %v2690, 0.0
          %v2740 = vmax.f32 %v2691, 0.0
          %v2741 = vmax.f32 %v2692, 0.0
          %v2742 = vmax.f32 %v2693, 0.0
          %v2743 = vmax.f32 %v2694, 0.0
          %v2744 = vmax.f32 %v2695, 0.0
          %v2745 = vmax.f32 %v2696, 0.0
          %v2746 = vmax.f32 %v2697, 0.0
          %v2747 = vmax.f32 %v2698, 0.0
          %v2748 = vmax.f32 %v2699, 0.0
          %v2749 = vmax.f32 %v2700, 0.0
          %v2750 = vmax.f32 %v2701, 0.0
          %v2751 = vmax.f32 %v2702, 0.0
          %v2752 = vmax.f32 %v2703, 0.0
          %v2753 = vpack.c.bf16 %v2704, %v2704
          %v2754 = vpack.c.bf16 %v2705, %v2705
          %v2755 = vpack.c.bf16 %v2706, %v2706
          %v2756 = vpack.c.bf16 %v2707, %v2707
          %v2757 = vpack.c.bf16 %v2708, %v2708
          %v2758 = vpack.c.bf16 %v2709, %v2709
          %v2759 = vpack.c.bf16 %v2710, %v2710
          %v2760 = vpack.c.bf16 %v2711, %v2711
          %v2761 = vpack.c.bf16 %v2712, %v2712
          %v2762 = vpack.c.bf16 %v2713, %v2713
          %v2763 = vpack.c.bf16 %v2714, %v2714
          %v2764 = vpack.c.bf16 %v2715, %v2715
          %v2765 = vpack.c.bf16 %v2716, %v2716
          %v2766 = vpack.c.bf16 %v2717, %v2717
          %v2767 = vpack.c.bf16 %v2718, %v2718
          %v2768 = vpack.c.bf16 %v2719, %v2719
          %v2769 = vpack.c.bf16 %v2720, %v2720
          %v2770 = vpack.c.bf16 %v2721, %v2721
          %v2771 = vpack.c.bf16 %v2722, %v2722
          %v2772 = vpack.c.bf16 %v2723, %v2723
          %v2773 = vpack.c.bf16 %v2724, %v2724
          %v2774 = vpack.c.bf16 %v2725, %v2725
          %v2775 = vpack.c.bf16 %v2726, %v2726
          %v2776 = vpack.c.bf16 %v2727, %v2727
          %v2777 = vpack.c.bf16 %v2728, %v2728
          %v2778 = vpack.c.bf16 %v2729, %v2729
          %v2779 = vpack.c.bf16 %v2730, %v2730
          %v2780 = vpack.c.bf16 %v2731, %v2731
          %v2781 = vpack.c.bf16 %v2732, %v2732
          %v2782 = vpack.c.bf16 %v2733, %v2733
          %v2783 = vpack.c.bf16 %v2734, %v2734
          %v2784 = vpack.c.bf16 %v2735, %v2735
          %v2785 = vpack.c.bf16 %v2736, %v2736
          %v2786 = vpack.c.bf16 %v2737, %v2737
          %v2787 = vpack.c.bf16 %v2738, %v2738
          %v2788 = vpack.c.bf16 %v2739, %v2739
          %v2789 = vpack.c.bf16 %v2740, %v2740
          %v2790 = vpack.c.bf16 %v2741, %v2741
          %v2791 = vpack.c.bf16 %v2742, %v2742
          %v2792 = vpack.c.bf16 %v2743, %v2743
          %v2793 = vpack.c.bf16 %v2744, %v2744
          %v2794 = vpack.c.bf16 %v2745, %v2745
          %v2795 = vpack.c.bf16 %v2746, %v2746
          %v2796 = vpack.c.bf16 %v2747, %v2747
          %v2797 = vpack.c.bf16 %v2748, %v2748
          %v2798 = vpack.c.bf16 %v2749, %v2749
          %v2799 = vpack.c.bf16 %v2750, %v2750
          %v2800 = vpack.c.bf16 %v2751, %v2751
          %v2801 = vpack.c.bf16 %v2752, %v2752
          %vm2802 = vcmask 125952
          %2803 = vst.msk [vmem:[%s4] sm:$0xf] %vm2802, %v2753
          %2804 = vst.msk [vmem:[%s4 + $0x4] sm:$0xf] %vm2802, %v2754
          %2805 = vst.msk [vmem:[%s4 + $0x8] sm:$0xf] %vm2802, %v2755
          %2806 = vst.msk [vmem:[%s4 + $0xc] sm:$0xf] %vm2802, %v2756
          %2807 = vst.msk [vmem:[%s4 + $0x10] sm:$0xf] %vm2802, %v2757
          %2808 = vst.msk [vmem:[%s4 + $0x14] sm:$0xf] %vm2802, %v2758
          %2809 = vst.msk [vmem:[%s4 + $0x18] sm:$0xf] %vm2802, %v2759
          %2810 = vst.msk [vmem:[%s4 + $0x1c] sm:$0xf] %vm2802, %v2760
          %2811 = vst.msk [vmem:[%s4 + $0x20] sm:$0xf] %vm2802, %v2761
          %2812 = vst.msk [vmem:[%s4 + $0x24] sm:$0xf] %vm2802, %v2762
          %2813 = vst.msk [vmem:[%s4 + $0x28] sm:$0xf] %vm2802, %v2763
          %2814 = vst.msk [vmem:[%s4 + $0x2c] sm:$0xf] %vm2802, %v2764
          %2815 = vst.msk [vmem:[%s4 + $0x30] sm:$0xf] %vm2802, %v2765
          %2816 = vst.msk [vmem:[%s4 + $0x34] sm:$0xf] %vm2802, %v2766
          %2817 = vst.msk [vmem:[%s4 + $0x38] sm:$0xf] %vm2802, %v2767
          %2818 = vst.msk [vmem:[%s4 + $0x3c] sm:$0xf] %vm2802, %v2768
          %2819 = vst.msk [vmem:[%s4 + $0x40] sm:$0xf] %vm2802, %v2769
          %2820 = vst.msk [vmem:[%s4 + $0x44] sm:$0xf] %vm2802, %v2770
          %2821 = vst.msk [vmem:[%s4 + $0x48] sm:$0xf] %vm2802, %v2771
          %2822 = vst.msk [vmem:[%s4 + $0x4c] sm:$0xf] %vm2802, %v2772
          %2823 = vst.msk [vmem:[%s4 + $0x50] sm:$0xf] %vm2802, %v2773
          %2824 = vst.msk [vmem:[%s4 + $0x54] sm:$0xf] %vm2802, %v2774
          %2825 = vst.msk [vmem:[%s4 + $0x58] sm:$0xf] %vm2802, %v2775
          %2826 = vst.msk [vmem:[%s4 + $0x5c] sm:$0xf] %vm2802, %v2776
          %2827 = vst.msk [vmem:[%s4 + $0x60] sm:$0xf] %vm2802, %v2777
          %2828 = vst.msk [vmem:[%s4 + $0x64] sm:$0xf] %vm2802, %v2778
          %2829 = vst.msk [vmem:[%s4 + $0x68] sm:$0xf] %vm2802, %v2779
          %2830 = vst.msk [vmem:[%s4 + $0x6c] sm:$0xf] %vm2802, %v2780
          %2831 = vst.msk [vmem:[%s4 + $0x70] sm:$0xf] %vm2802, %v2781
          %2832 = vst.msk [vmem:[%s4 + $0x74] sm:$0xf] %vm2802, %v2782
          %2833 = vst.msk [vmem:[%s4 + $0x78] sm:$0xf] %vm2802, %v2783
          %2834 = vst.msk [vmem:[%s4 + $0x7c] sm:$0xf] %vm2802, %v2784
          %2835 = vst.msk [vmem:[%s4 + $0x80] sm:$0xf] %vm2802, %v2785
          %2836 = vst.msk [vmem:[%s4 + $0x84] sm:$0xf] %vm2802, %v2786
          %2837 = vst.msk [vmem:[%s4 + $0x88] sm:$0xf] %vm2802, %v2787
          %2838 = vst.msk [vmem:[%s4 + $0x8c] sm:$0xf] %vm2802, %v2788
          %2839 = vst.msk [vmem:[%s4 + $0x90] sm:$0xf] %vm2802, %v2789
          %2840 = vst.msk [vmem:[%s4 + $0x94] sm:$0xf] %vm2802, %v2790
          %2841 = vst.msk [vmem:[%s4 + $0x98] sm:$0xf] %vm2802, %v2791
          %2842 = vst.msk [vmem:[%s4 + $0x9c] sm:$0xf] %vm2802, %v2792
          %2843 = vst.msk [vmem:[%s4 + $0xa0] sm:$0xf] %vm2802, %v2793
          %2844 = vst.msk [vmem:[%s4 + $0xa4] sm:$0xf] %vm2802, %v2794
          %2845 = vst.msk [vmem:[%s4 + $0xa8] sm:$0xf] %vm2802, %v2795
          %2846 = vst.msk [vmem:[%s4 + $0xac] sm:$0xf] %vm2802, %v2796
          %2847 = vst.msk [vmem:[%s4 + $0xb0] sm:$0xf] %vm2802, %v2797
          %2848 = vst.msk [vmem:[%s4 + $0xb4] sm:$0xf] %vm2802, %v2798
          %2849 = vst.msk [vmem:[%s4 + $0xb8] sm:$0xf] %vm2802, %v2799
          %2850 = vst.msk [vmem:[%s4 + $0xbc] sm:$0xf] %vm2802, %v2800
          %2851 = vst.msk [vmem:[%s4 + $0xc0] sm:$0xf] %vm2802, %v2801
        $region81: #{convnet_forward.3} parent=72 // pred_fallthru
          _
        // Predicated region
        $region82: #{convnet_forward.3} parent=72 // pred_check
          %p2852 = pneg %p117
        $region83: #{convnet_forward.3} parent=72 // pred_check_branch
          %2854 = sbr.rel (%p2852) target = $region85
        $region84: #{convnet_forward.3} parent=72 // pred_region
          _
        $region85: #{convnet_forward.3} parent=72 // pred_fallthru
          _
        // Predicated region
        $region86: #{convnet_forward.3} parent=72 // pred_check
          %p2855 = pneg %p117
        $region87: #{convnet_forward.3} parent=72 // pred_check_branch
          %2857 = sbr.rel (%p2855) target = $region89
        $region88: #{convnet_forward.3} parent=72 // pred_region
          _
        $region89: #{convnet_forward.3} parent=72 // pred_fallthru
          _
      $region73: #{convnet_forward.3} parent=5 // pred_fallthru
        _
      %p2858 = scmp.le.s32.totalorder 2, %s10
      // Predicated region
      $region90: #{convnet_forward.3} parent=5 // pred_check
        %p2859 = pneg %p2858
      $region91: #{convnet_forward.3} parent=5 // pred_check_branch
        %2861 = sbr.rel (%p2859) target = $region93
      $region92: #{convnet_forward.3} parent=5 // pred_region
        %s2862 = ssub.s32 %s10, 2
      $region93: #{convnet_forward.3} parent=5 // pred_fallthru
        _
    $region6: #{convnet_forward.3} parent=1 // loop_footer
      %s14 = sadd.s32 1, %s10
    $region7: #{convnet_forward.3} parent=1 // loop_footer_branch
      %9 = sbr.rel target = $region3
    $region8: #{convnet_forward.3} parent=1 // loop_exit
      _

// kernel: convnet_forward.4
$region0: #{convnet_forward.4}
  #allocation0 [shape = 'u32[]', space=smem, size = 0x4, offset = 0x4, fixed_abs, tag = 'smem constant byte address 0x4 - core index']
  #allocation1 [shape = 'u32[72,128]{1,0:T(1,128)}', space=vmem, size = 0x9000, scoped, tag = 'internal scratch']
  #allocation2 [shape = 'f32[4,98,32]{2,1,0:T(8,128)}', space=vmem, size = 0x34000, scoped, tag = 'scratch operand']
  %s0 = inlined_call_operand.vmem [shape: bf16[4,98,400], index: 0, kind: input, shape index: {}]
  %s1 = inlined_call_operand.vmem [shape: bf16[400,32], index: 1, kind: input, shape index: {}]
  %s2 = inlined_call_operand.vmem [shape: f32[1,32], index: 2, kind: input, shape index: {}]
  %s3 = inlined_call_operand.vmem [shape: f32[1,32], index: 3, kind: input, shape index: {}]
  %s4 = inlined_call_operand.vmem [shape: bf16[98,32], index: 4, kind: output, shape index: {}]
  %s5 = sld [smem:[#allocation0]]
  $region30: #{convnet_forward.4} parent=0
    _
  %s7 = ssub.s32 1, %s5
  %s8 = scalar_select 0, %s7, %s5
  // Predicated region
  $region2: #{convnet_forward.4} parent=0 // pred_check
    _
  $region3: #{convnet_forward.4} parent=0 // pred_check_branch
    %10 = sbr.rel (0) target = $region5
  $region4: #{convnet_forward.4} parent=0 // pred_region
    _
  $region5: #{convnet_forward.4} parent=0 // pred_fallthru
    _
  // Predicated region
  $region6: #{convnet_forward.4} parent=0 // pred_check
    _
  $region7: #{convnet_forward.4} parent=0 // pred_check_branch
    %12 = sbr.rel (0) target = $region9
  $region8: #{convnet_forward.4} parent=0 // pred_region
    _
  $region9: #{convnet_forward.4} parent=0 // pred_fallthru
    _
  // Predicated region
  $region10: #{convnet_forward.4} parent=0 // pred_check
    _
  $region11: #{convnet_forward.4} parent=0 // pred_check_branch
    %14 = sbr.rel (0) target = $region13
  $region12: #{convnet_forward.4} parent=0 // pred_region
    _
  $region13: #{convnet_forward.4} parent=0 // pred_fallthru
    _
  // Predicated region
  $region14: #{convnet_forward.4} parent=0 // pred_check
    _
  $region15: #{convnet_forward.4} parent=0 // pred_check_branch
    %16 = sbr.rel (0) target = $region17
  $region16: #{convnet_forward.4} parent=0 // pred_region
    _
  $region17: #{convnet_forward.4} parent=0 // pred_fallthru
    _
  %s18 = smul.u32 0, 98
  %v19 = vld [vmem:[%s0] sm:$0xff]
  %v20 = vld [vmem:[%s0 + $0x8] sm:$0xff]
  %v21 = vld [vmem:[%s0 + $0x10] sm:$0xff]
  %v22 = vld [vmem:[%s0 + $0x18] sm:$0xff]
  %v23 = vld [vmem:[%s0 + $0x20] sm:$0xff]
  %v24 = vld [vmem:[%s0 + $0x28] sm:$0xff]
  %v25 = vld [vmem:[%s0 + $0x30] sm:$0xff]
  %v26 = vld [vmem:[%s0 + $0x38] sm:$0xff]
  %v27 = vld [vmem:[%s0 + $0x40] sm:$0xff]
  %v28 = vld [vmem:[%s0 + $0x48] sm:$0xff]
  %v29 = vld [vmem:[%s0 + $0x50] sm:$0xff]
  %v30 = vld [vmem:[%s0 + $0x58] sm:$0xff]
  %v31 = vld [vmem:[%s0 + $0x60] sm:$0xff]
  %v32 = vld [vmem:[%s0 + $0x68] sm:$0xff]
  %v33 = vld [vmem:[%s0 + $0x70] sm:$0xff]
  %v34 = vld [vmem:[%s0 + $0x78] sm:$0xff]
  %v35 = vld [vmem:[%s0 + $0x80] sm:$0xff]
  %v36 = vld [vmem:[%s0 + $0x88] sm:$0xff]
  %v37 = vld [vmem:[%s0 + $0x90] sm:$0xff]
  %v38 = vld [vmem:[%s0 + $0x98] sm:$0xff]
  %v39 = vld [vmem:[%s0 + $0xa0] sm:$0xff]
  %v40 = vld [vmem:[%s0 + $0xa8] sm:$0xff]
  %v41 = vld [vmem:[%s0 + $0xb0] sm:$0xff]
  %v42 = vld [vmem:[%s0 + $0xb8] sm:$0xff]
  %v43 = vld [vmem:[%s0 + $0xc0] sm:$0x11]
  %v44 = vld [vmem:[%s0 + $0xc8] sm:$0x11]
  %v45 = vld [vmem:[%s1] sm:$0xf]
  %v46 = vld [vmem:[%s1 + $0x4] sm:$0xf]
  %v47 = vld [vmem:[%s1 + $0x8] sm:$0xf]
  %v48 = vld [vmem:[%s1 + $0xc] sm:$0xf]
  %v49 = vld [vmem:[%s1 + $0x10] sm:$0xf]
  %v50 = vld [vmem:[%s1 + $0x14] sm:$0xf]
  %v51 = vld [vmem:[%s1 + $0x18] sm:$0xf]
  %v52 = vld [vmem:[%s1 + $0x1c] sm:$0xf]
  %v53 = vld [vmem:[%s1 + $0x20] sm:$0xf]
  %v54 = vld [vmem:[%s1 + $0x24] sm:$0xf]
  %v55 = vld [vmem:[%s1 + $0x28] sm:$0xf]
  %v56 = vld [vmem:[%s1 + $0x2c] sm:$0xf]
  %v57 = vld [vmem:[%s1 + $0x30] sm:$0xf]
  %v58 = vld [vmem:[%s1 + $0x34] sm:$0xf]
  %v59 = vld [vmem:[%s1 + $0x38] sm:$0xf]
  %v60 = vld [vmem:[%s1 + $0x3c] sm:$0xf]
  %v61 = vld [vmem:[%s1 + $0x40] sm:$0xf]
  %v62 = vld [vmem:[%s1 + $0x44] sm:$0xf]
  %v63 = vld [vmem:[%s1 + $0x48] sm:$0xf]
  %v64 = vld [vmem:[%s1 + $0x4c] sm:$0xf]
  %v65 = vld [vmem:[%s1 + $0x50] sm:$0xf]
  %v66 = vld [vmem:[%s1 + $0x54] sm:$0xf]
  %v67 = vld [vmem:[%s1 + $0x58] sm:$0xf]
  %v68 = vld [vmem:[%s1 + $0x5c] sm:$0xf]
  %v69 = vld [vmem:[%s1 + $0x60] sm:$0xf]
  %v70 = vld [vmem:[%s1 + $0x64] sm:$0xf]
  %v71 = vld [vmem:[%s1 + $0x68] sm:$0xf]
  %v72 = vld [vmem:[%s1 + $0x6c] sm:$0xf]
  %v73 = vld [vmem:[%s1 + $0x70] sm:$0xf]
  %v74 = vld [vmem:[%s1 + $0x74] sm:$0xf]
  %v75 = vld [vmem:[%s1 + $0x78] sm:$0xf]
  %v76 = vld [vmem:[%s1 + $0x7c] sm:$0xf]
  %v77 = vld [vmem:[%s1 + $0x80] sm:$0xf]
  %v78 = vld [vmem:[%s1 + $0x84] sm:$0xf]
  %v79 = vld [vmem:[%s1 + $0x88] sm:$0xf]
  %v80 = vld [vmem:[%s1 + $0x8c] sm:$0xf]
  %v81 = vld [vmem:[%s1 + $0x90] sm:$0xf]
  %v82 = vld [vmem:[%s1 + $0x94] sm:$0xf]
  %v83 = vld [vmem:[%s1 + $0x98] sm:$0xf]
  %v84 = vld [vmem:[%s1 + $0x9c] sm:$0xf]
  %v85 = vld [vmem:[%s1 + $0xa0] sm:$0xf]
  %v86 = vld [vmem:[%s1 + $0xa4] sm:$0xf]
  %v87 = vld [vmem:[%s1 + $0xa8] sm:$0xf]
  %v88 = vld [vmem:[%s1 + $0xac] sm:$0xf]
  %v89 = vld [vmem:[%s1 + $0xb0] sm:$0xf]
  %v90 = vld [vmem:[%s1 + $0xb4] sm:$0xf]
  %v91 = vld [vmem:[%s1 + $0xb8] sm:$0xf]
  %v92 = vld [vmem:[%s1 + $0xbc] sm:$0xf]
  %v93 = vld [vmem:[%s1 + $0xc0] sm:$0xf]
  %v94 = vld [vmem:[%s1 + $0xc4] sm:$0xf]
  %v121 = vunpack.c.l.b16 %v19
  %v122 = vunpack.c.h.b16 %v19
  %v123 = vunpack.c.l.b16 %v20
  %v124 = vunpack.c.h.b16 %v20
  %v125 = vunpack.c.l.b16 %v21
  %v126 = vunpack.c.h.b16 %v21
  %v127 = vunpack.c.l.b16 %v22
  %v128 = vunpack.c.h.b16 %v22
  %v129 = vunpack.c.l.b16 %v23
  %v130 = vunpack.c.h.b16 %v23
  %v131 = vunpack.c.l.b16 %v24
  %v132 = vunpack.c.h.b16 %v24
  %v133 = vunpack.c.l.b16 %v25
  %v134 = vunpack.c.h.b16 %v25
  %v135 = vunpack.c.l.b16 %v26
  %v136 = vunpack.c.h.b16 %v26
  %v137 = vunpack.c.l.b16 %v27
  %v138 = vunpack.c.h.b16 %v27
  %v139 = vunpack.c.l.b16 %v28
  %v140 = vunpack.c.h.b16 %v28
  %v141 = vunpack.c.l.b16 %v29
  %v142 = vunpack.c.h.b16 %v29
  %v143 = vunpack.c.l.b16 %v30
  %v144 = vunpack.c.h.b16 %v30
  %v145 = vunpack.c.l.b16 %v31
  %v146 = vunpack.c.h.b16 %v31
  %v147 = vunpack.c.l.b16 %v32
  %v148 = vunpack.c.h.b16 %v32
  %v149 = vunpack.c.l.b16 %v33
  %v150 = vunpack.c.h.b16 %v33
  %v151 = vunpack.c.l.b16 %v34
  %v152 = vunpack.c.h.b16 %v34
  %v153 = vunpack.c.l.b16 %v35
  %v154 = vunpack.c.h.b16 %v35
  %v155 = vunpack.c.l.b16 %v36
  %v156 = vunpack.c.h.b16 %v36
  %v157 = vunpack.c.l.b16 %v37
  %v158 = vunpack.c.h.b16 %v37
  %v159 = vunpack.c.l.b16 %v38
  %v160 = vunpack.c.h.b16 %v38
  %v161 = vunpack.c.l.b16 %v39
  %v162 = vunpack.c.h.b16 %v39
  %v163 = vunpack.c.l.b16 %v40
  %v164 = vunpack.c.h.b16 %v40
  %v165 = vunpack.c.l.b16 %v41
  %v166 = vunpack.c.h.b16 %v41
  %v167 = vunpack.c.l.b16 %v42
  %v168 = vunpack.c.h.b16 %v42
  %v169 = vunpack.c.l.b16 %v43
  %v170 = vunpack.c.h.b16 %v43
  %v171 = vunpack.c.l.b16 %v44
  %v172 = vunpack.c.h.b16 %v44
  %v173 = vpack.c.b16 %v125, %v121
  %v174 = vpack.c.b16 %v126, %v122
  %v175 = vpack.c.b16 %v127, %v123
  %v176 = vpack.c.b16 %v128, %v124
  %v177 = vpack.c.b16 %v133, %v129
  %v178 = vpack.c.b16 %v134, %v130
  %v179 = vpack.c.b16 %v135, %v131
  %v180 = vpack.c.b16 %v136, %v132
  %v181 = vpack.c.b16 %v141, %v137
  %v182 = vpack.c.b16 %v142, %v138
  %v183 = vpack.c.b16 %v143, %v139
  %v184 = vpack.c.b16 %v144, %v140
  %v185 = vpack.c.b16 %v149, %v145
  %v186 = vpack.c.b16 %v150, %v146
  %v187 = vpack.c.b16 %v151, %v147
  %v188 = vpack.c.b16 %v152, %v148
  %v189 = vpack.c.b16 %v157, %v153
  %v190 = vpack.c.b16 %v158, %v154
  %v191 = vpack.c.b16 %v159, %v155
  %v192 = vpack.c.b16 %v160, %v156
  %v193 = vpack.c.b16 %v165, %v161
  %v194 = vpack.c.b16 %v166, %v162
  %v195 = vpack.c.b16 %v167, %v163
  %v196 = vpack.c.b16 %v168, %v164
  %v197 = vpack.c.b16 %v169, %v169
  %v198 = vpack.c.b16 %v170, %v170
  %v199 = vpack.c.b16 %v171, %v171
  %v200 = vpack.c.b16 %v172, %v172
  %v272 = vunpack.c.l.b16 %v45
  %v273 = vunpack.c.l.b16 %v46
  %v274 = vunpack.c.l.b16 %v47
  %v275 = vunpack.c.l.b16 %v48
  %v276 = vunpack.c.l.b16 %v49
  %v277 = vunpack.c.l.b16 %v50
  %v278 = vunpack.c.l.b16 %v51
  %v279 = vunpack.c.l.b16 %v52
  %v280 = vunpack.c.l.b16 %v53
  %v281 = vunpack.c.l.b16 %v54
  %v282 = vunpack.c.l.b16 %v55
  %v283 = vunpack.c.l.b16 %v56
  %v284 = vunpack.c.l.b16 %v57
  %v285 = vunpack.c.l.b16 %v58
  %v286 = vunpack.c.l.b16 %v59
  %v287 = vunpack.c.l.b16 %v60
  %v288 = vunpack.c.l.b16 %v61
  %v289 = vunpack.c.l.b16 %v62
  %v290 = vunpack.c.l.b16 %v63
  %v291 = vunpack.c.l.b16 %v64
  %v292 = vunpack.c.l.b16 %v65
  %v293 = vunpack.c.l.b16 %v66
  %v294 = vunpack.c.l.b16 %v67
  %v295 = vunpack.c.l.b16 %v68
  %v296 = vunpack.c.l.b16 %v69
  %v297 = vunpack.c.l.b16 %v70
  %v298 = vunpack.c.l.b16 %v71
  %v299 = vunpack.c.l.b16 %v72
  %v300 = vunpack.c.l.b16 %v73
  %v301 = vunpack.c.l.b16 %v74
  %v302 = vunpack.c.l.b16 %v75
  %v303 = vunpack.c.l.b16 %v76
  %v304 = vunpack.c.l.b16 %v77
  %v305 = vunpack.c.l.b16 %v78
  %v306 = vunpack.c.l.b16 %v79
  %v307 = vunpack.c.l.b16 %v80
  %v308 = vunpack.c.l.b16 %v81
  %v309 = vunpack.c.l.b16 %v82
  %v310 = vunpack.c.l.b16 %v83
  %v311 = vunpack.c.l.b16 %v84
  %v312 = vunpack.c.l.b16 %v85
  %v313 = vunpack.c.l.b16 %v86
  %v314 = vunpack.c.l.b16 %v87
  %v315 = vunpack.c.l.b16 %v88
  %v316 = vunpack.c.l.b16 %v89
  %v317 = vunpack.c.l.b16 %v90
  %v318 = vunpack.c.l.b16 %v91
  %v319 = vunpack.c.l.b16 %v92
  %v320 = vunpack.c.l.b16 %v93
  %v321 = vunpack.c.l.b16 %v94
  %v322 = vpack.c.b16 %v273, %v272
  %v323 = vpack.c.b16 %v275, %v274
  %v324 = vpack.c.b16 %v277, %v276
  %v325 = vpack.c.b16 %v279, %v278
  %v326 = vpack.c.b16 %v281, %v280
  %v327 = vpack.c.b16 %v283, %v282
  %v328 = vpack.c.b16 %v285, %v284
  %v329 = vpack.c.b16 %v287, %v286
  %v330 = vpack.c.b16 %v289, %v288
  %v331 = vpack.c.b16 %v291, %v290
  %v332 = vpack.c.b16 %v293, %v292
  %v333 = vpack.c.b16 %v295, %v294
  %v334 = vpack.c.b16 %v297, %v296
  %v335 = vpack.c.b16 %v299, %v298
  %v336 = vpack.c.b16 %v301, %v300
  %v337 = vpack.c.b16 %v303, %v302
  %v338 = vpack.c.b16 %v305, %v304
  %v339 = vpack.c.b16 %v307, %v306
  %v340 = vpack.c.b16 %v309, %v308
  %v341 = vpack.c.b16 %v311, %v310
  %v342 = vpack.c.b16 %v313, %v312
  %v343 = vpack.c.b16 %v315, %v314
  %v344 = vpack.c.b16 %v317, %v316
  %v345 = vpack.c.b16 %v319, %v318
  %v346 = vpack.c.b16 %v321, %v320
  %vm372 = vcmask 130048
  %v374 = vsel %vm372, %v176, 0
  %v377 = vsel %vm372, %v180, 0
  %v380 = vsel %vm372, %v184, 0
  %v383 = vsel %vm372, %v188, 0
  %v386 = vsel %vm372, %v192, 0
  %v389 = vsel %vm372, %v196, 0
  %v392 = vsel %vm372, %v200, 0
  %394 = vmatpush.bf16.msra.mxu0 %v329
  %395 = vmatpush.bf16.msra.mxu0 %v328
  %396 = vmatpush.bf16.msra.mxu0 %v327
  %397 = vmatpush.bf16.msra.mxu0 %v326
  %398 = vmatpush.bf16.msra.mxu0 %v325
  %399 = vmatpush.bf16.msra.mxu0 %v324
  %400 = vmatpush.bf16.msra.mxu0 %v323
  %401 = vmatpush.bf16.msra.mxu0 %v322
  %402 = vmatmul.bf16.gmra.mxu0 %v173
  %v403 = vpop.f32.mrf.mxu0
  %v404 = vadd.f32 0.0, %v403
  %v405 = vpop.f32.mrf.mxu0
  %v406 = vadd.f32 0.0, %v405
  %407 = vmatmul.bf16.gmra.mxu0 %v177
  %v408 = vpop.f32.mrf.mxu0
  %v409 = vadd.f32 0.0, %v408
  %v410 = vpop.f32.mrf.mxu0
  %v411 = vadd.f32 0.0, %v410
  %412 = vmatmul.bf16.gmra.mxu0 %v181
  %v413 = vpop.f32.mrf.mxu0
  %v414 = vadd.f32 0.0, %v413
  %v415 = vpop.f32.mrf.mxu0
  %v416 = vadd.f32 0.0, %v415
  %417 = vmatmul.bf16.gmra.mxu0 %v185
  %v418 = vpop.f32.mrf.mxu0
  %v419 = vadd.f32 0.0, %v418
  %v420 = vpop.f32.mrf.mxu0
  %v421 = vadd.f32 0.0, %v420
  %422 = vmatmul.bf16.gmra.mxu0 %v189
  %v423 = vpop.f32.mrf.mxu0
  %v424 = vadd.f32 0.0, %v423
  %v425 = vpop.f32.mrf.mxu0
  %v426 = vadd.f32 0.0, %v425
  %427 = vmatmul.bf16.gmra.mxu0 %v193
  %v428 = vpop.f32.mrf.mxu0
  %v429 = vadd.f32 0.0, %v428
  %v430 = vpop.f32.mrf.mxu0
  %v431 = vadd.f32 0.0, %v430
  %432 = vmatmul.bf16.gmra.mxu0 %v197
  %v433 = vpop.f32.mrf.mxu0
  %v434 = vadd.f32 0.0, %v433
  %v435 = vpop.f32.mrf.mxu0
  %436 = vdwg.mxu0
  %437 = vmatpush.bf16.msra.mxu0 %v337
  %438 = vmatpush.bf16.msra.mxu0 %v336
  %439 = vmatpush.bf16.msra.mxu0 %v335
  %440 = vmatpush.bf16.msra.mxu0 %v334
  %441 = vmatpush.bf16.msra.mxu0 %v333
  %442 = vmatpush.bf16.msra.mxu0 %v332
  %443 = vmatpush.bf16.msra.mxu0 %v331
  %444 = vmatpush.bf16.msra.mxu0 %v330
  %445 = vmatmul.bf16.gmra.mxu0 %v174
  %v446 = vpop.f32.mrf.mxu0
  %v447 = vadd.f32 %v404, %v446
  %v448 = vpop.f32.mrf.mxu0
  %v449 = vadd.f32 %v406, %v448
  %450 = vmatmul.bf16.gmra.mxu0 %v178
  %v451 = vpop.f32.mrf.mxu0
  %v452 = vadd.f32 %v409, %v451
  %v453 = vpop.f32.mrf.mxu0
  %v454 = vadd.f32 %v411, %v453
  %455 = vmatmul.bf16.gmra.mxu0 %v182
  %v456 = vpop.f32.mrf.mxu0
  %v457 = vadd.f32 %v414, %v456
  %v458 = vpop.f32.mrf.mxu0
  %v459 = vadd.f32 %v416, %v458
  %460 = vmatmul.bf16.gmra.mxu0 %v186
  %v461 = vpop.f32.mrf.mxu0
  %v462 = vadd.f32 %v419, %v461
  %v463 = vpop.f32.mrf.mxu0
  %v464 = vadd.f32 %v421, %v463
  %465 = vmatmul.bf16.gmra.mxu0 %v190
  %v466 = vpop.f32.mrf.mxu0
  %v467 = vadd.f32 %v424, %v466
  %v468 = vpop.f32.mrf.mxu0
  %v469 = vadd.f32 %v426, %v468
  %470 = vmatmul.bf16.gmra.mxu0 %v194
  %v471 = vpop.f32.mrf.mxu0
  %v472 = vadd.f32 %v429, %v471
  %v473 = vpop.f32.mrf.mxu0
  %v474 = vadd.f32 %v431, %v473
  %475 = vmatmul.bf16.gmra.mxu0 %v198
  %v476 = vpop.f32.mrf.mxu0
  %v477 = vadd.f32 %v434, %v476
  %v478 = vpop.f32.mrf.mxu0
  %479 = vdwg.mxu0
  %480 = vmatpush.bf16.msra.mxu0 %v345
  %481 = vmatpush.bf16.msra.mxu0 %v344
  %482 = vmatpush.bf16.msra.mxu0 %v343
  %483 = vmatpush.bf16.msra.mxu0 %v342
  %484 = vmatpush.bf16.msra.mxu0 %v341
  %485 = vmatpush.bf16.msra.mxu0 %v340
  %486 = vmatpush.bf16.msra.mxu0 %v339
  %487 = vmatpush.bf16.msra.mxu0 %v338
  %488 = vmatmul.bf16.gmra.mxu0 %v175
  %v489 = vpop.f32.mrf.mxu0
  %v490 = vadd.f32 %v447, %v489
  %v491 = vpop.f32.mrf.mxu0
  %v492 = vadd.f32 %v449, %v491
  %493 = vmatmul.bf16.gmra.mxu0 %v179
  %v494 = vpop.f32.mrf.mxu0
  %v495 = vadd.f32 %v452, %v494
  %v496 = vpop.f32.mrf.mxu0
  %v497 = vadd.f32 %v454, %v496
  %498 = vmatmul.bf16.gmra.mxu0 %v183
  %v499 = vpop.f32.mrf.mxu0
  %v500 = vadd.f32 %v457, %v499
  %v501 = vpop.f32.mrf.mxu0
  %v502 = vadd.f32 %v459, %v501
  %503 = vmatmul.bf16.gmra.mxu0 %v187
  %v504 = vpop.f32.mrf.mxu0
  %v505 = vadd.f32 %v462, %v504
  %v506 = vpop.f32.mrf.mxu0
  %v507 = vadd.f32 %v464, %v506
  %508 = vmatmul.bf16.gmra.mxu0 %v191
  %v509 = vpop.f32.mrf.mxu0
  %v510 = vadd.f32 %v467, %v509
  %v511 = vpop.f32.mrf.mxu0
  %v512 = vadd.f32 %v469, %v511
  %513 = vmatmul.bf16.gmra.mxu0 %v195
  %v514 = vpop.f32.mrf.mxu0
  %v515 = vadd.f32 %v472, %v514
  %v516 = vpop.f32.mrf.mxu0
  %v517 = vadd.f32 %v474, %v516
  %518 = vmatmul.bf16.gmra.mxu0 %v199
  %v519 = vpop.f32.mrf.mxu0
  %v520 = vadd.f32 %v477, %v519
  %v521 = vpop.f32.mrf.mxu0
  %522 = vdwg.mxu0
  %523 = vmatpush.bf16.msra.mxu0 0
  %524 = vmatpush.bf16.msra.mxu0 0
  %525 = vmatpush.bf16.msra.mxu0 0
  %526 = vmatpush.bf16.msra.mxu0 0
  %527 = vmatpush.bf16.msra.mxu0 0
  %528 = vmatpush.bf16.msra.mxu0 0
  %529 = vmatpush.bf16.msra.mxu0 0
  %530 = vmatpush.bf16.msra.mxu0 %v346
  %531 = vmatmul.bf16.gmra.mxu0 %v374
  %v532 = vpop.f32.mrf.mxu0
  %v533 = vadd.f32 %v490, %v532
  %v534 = vpop.f32.mrf.mxu0
  %v535 = vadd.f32 %v492, %v534
  %536 = vmatmul.bf16.gmra.mxu0 %v377
  %v537 = vpop.f32.mrf.mxu0
  %v538 = vadd.f32 %v495, %v537
  %v539 = vpop.f32.mrf.mxu0
  %v540 = vadd.f32 %v497, %v539
  %541 = vmatmul.bf16.gmra.mxu0 %v380
  %v542 = vpop.f32.mrf.mxu0
  %v543 = vadd.f32 %v500, %v542
  %v544 = vpop.f32.mrf.mxu0
  %v545 = vadd.f32 %v502, %v544
  %546 = vmatmul.bf16.gmra.mxu0 %v383
  %v547 = vpop.f32.mrf.mxu0
  %v548 = vadd.f32 %v505, %v547
  %v549 = vpop.f32.mrf.mxu0
  %v550 = vadd.f32 %v507, %v549
  %551 = vmatmul.bf16.gmra.mxu0 %v386
  %v552 = vpop.f32.mrf.mxu0
  %v553 = vadd.f32 %v510, %v552
  %v554 = vpop.f32.mrf.mxu0
  %v555 = vadd.f32 %v512, %v554
  %556 = vmatmul.bf16.gmra.mxu0 %v389
  %v557 = vpop.f32.mrf.mxu0
  %v558 = vadd.f32 %v515, %v557
  %v559 = vpop.f32.mrf.mxu0
  %v560 = vadd.f32 %v517, %v559
  %561 = vmatmul.bf16.gmra.mxu0 %v392
  %v562 = vpop.f32.mrf.mxu0
  %v563 = vadd.f32 %v520, %v562
  %v564 = vpop.f32.mrf.mxu0
  %565 = vdwg.mxu0
  %s566 = scalar_lea.vmem [#allocation2], %s18
  %vm567 = vcmask 261120
  %568 = vst.msk [vmem:[%s566] sm:$0xff] %vm567, %v533
  %569 = vst.msk [vmem:[%s566 + $0x8] sm:$0xff] %vm567, %v535
  %570 = vst.msk [vmem:[%s566 + $0x10] sm:$0xff] %vm567, %v538
  %571 = vst.msk [vmem:[%s566 + $0x18] sm:$0xff] %vm567, %v540
  %572 = vst.msk [vmem:[%s566 + $0x20] sm:$0xff] %vm567, %v543
  %573 = vst.msk [vmem:[%s566 + $0x28] sm:$0xff] %vm567, %v545
  %574 = vst.msk [vmem:[%s566 + $0x30] sm:$0xff] %vm567, %v548
  %575 = vst.msk [vmem:[%s566 + $0x38] sm:$0xff] %vm567, %v550
  %576 = vst.msk [vmem:[%s566 + $0x40] sm:$0xff] %vm567, %v553
  %577 = vst.msk [vmem:[%s566 + $0x48] sm:$0xff] %vm567, %v555
  %578 = vst.msk [vmem:[%s566 + $0x50] sm:$0xff] %vm567, %v558
  %579 = vst.msk [vmem:[%s566 + $0x58] sm:$0xff] %vm567, %v560
  %vm580 = vcmask 254976
  %581 = vst.msk [vmem:[%s566 + $0x60] sm:$0x3] %vm580, %v563
  %s582 = scalar_lea.vmem %s0, 208
  %v583 = vld [vmem:[%s582] sm:$0xff]
  %v584 = vld [vmem:[%s582 + $0x8] sm:$0xff]
  %v585 = vld [vmem:[%s582 + $0x10] sm:$0xff]
  %v586 = vld [vmem:[%s582 + $0x18] sm:$0xff]
  %v587 = vld [vmem:[%s582 + $0x20] sm:$0xff]
  %v588 = vld [vmem:[%s582 + $0x28] sm:$0xff]
  %v589 = vld [vmem:[%s582 + $0x30] sm:$0xff]
  %v590 = vld [vmem:[%s582 + $0x38] sm:$0xff]
  %v591 = vld [vmem:[%s582 + $0x40] sm:$0xff]
  %v592 = vld [vmem:[%s582 + $0x48] sm:$0xff]
  %v593 = vld [vmem:[%s582 + $0x50] sm:$0xff]
  %v594 = vld [vmem:[%s582 + $0x58] sm:$0xff]
  %v595 = vld [vmem:[%s582 + $0x60] sm:$0xff]
  %v596 = vld [vmem:[%s582 + $0x68] sm:$0xff]
  %v597 = vld [vmem:[%s582 + $0x70] sm:$0xff]
  %v598 = vld [vmem:[%s582 + $0x78] sm:$0xff]
  %v599 = vld [vmem:[%s582 + $0x80] sm:$0xff]
  %v600 = vld [vmem:[%s582 + $0x88] sm:$0xff]
  %v601 = vld [vmem:[%s582 + $0x90] sm:$0xff]
  %v602 = vld [vmem:[%s582 + $0x98] sm:$0xff]
  %v603 = vld [vmem:[%s582 + $0xa0] sm:$0xff]
  %v604 = vld [vmem:[%s582 + $0xa8] sm:$0xff]
  %v605 = vld [vmem:[%s582 + $0xb0] sm:$0xff]
  %v606 = vld [vmem:[%s582 + $0xb8] sm:$0xff]
  %v607 = vld [vmem:[%s582 + $0xc0] sm:$0x11]
  %v608 = vld [vmem:[%s582 + $0xc8] sm:$0x11]
  %v609 = vld [vmem:[%s1] sm:$0xf]
  %v610 = vld [vmem:[%s1 + $0x4] sm:$0xf]
  %v611 = vld [vmem:[%s1 + $0x8] sm:$0xf]
  %v612 = vld [vmem:[%s1 + $0xc] sm:$0xf]
  %v613 = vld [vmem:[%s1 + $0x10] sm:$0xf]
  %v614 = vld [vmem:[%s1 + $0x14] sm:$0xf]
  %v615 = vld [vmem:[%s1 + $0x18] sm:$0xf]
  %v616 = vld [vmem:[%s1 + $0x1c] sm:$0xf]
  %v617 = vld [vmem:[%s1 + $0x20] sm:$0xf]
  %v618 = vld [vmem:[%s1 + $0x24] sm:$0xf]
  %v619 = vld [vmem:[%s1 + $0x28] sm:$0xf]
  %v620 = vld [vmem:[%s1 + $0x2c] sm:$0xf]
  %v621 = vld [vmem:[%s1 + $0x30] sm:$0xf]
  %v622 = vld [vmem:[%s1 + $0x34] sm:$0xf]
  %v623 = vld [vmem:[%s1 + $0x38] sm:$0xf]
  %v624 = vld [vmem:[%s1 + $0x3c] sm:$0xf]
  %v625 = vld [vmem:[%s1 + $0x40] sm:$0xf]
  %v626 = vld [vmem:[%s1 + $0x44] sm:$0xf]
  %v627 = vld [vmem:[%s1 + $0x48] sm:$0xf]
  %v628 = vld [vmem:[%s1 + $0x4c] sm:$0xf]
  %v629 = vld [vmem:[%s1 + $0x50] sm:$0xf]
  %v630 = vld [vmem:[%s1 + $0x54] sm:$0xf]
  %v631 = vld [vmem:[%s1 + $0x58] sm:$0xf]
  %v632 = vld [vmem:[%s1 + $0x5c] sm:$0xf]
  %v633 = vld [vmem:[%s1 + $0x60] sm:$0xf]
  %v634 = vld [vmem:[%s1 + $0x64] sm:$0xf]
  %v635 = vld [vmem:[%s1 + $0x68] sm:$0xf]
  %v636 = vld [vmem:[%s1 + $0x6c] sm:$0xf]
  %v637 = vld [vmem:[%s1 + $0x70] sm:$0xf]
  %v638 = vld [vmem:[%s1 + $0x74] sm:$0xf]
  %v639 = vld [vmem:[%s1 + $0x78] sm:$0xf]
  %v640 = vld [vmem:[%s1 + $0x7c] sm:$0xf]
  %v641 = vld [vmem:[%s1 + $0x80] sm:$0xf]
  %v642 = vld [vmem:[%s1 + $0x84] sm:$0xf]
  %v643 = vld [vmem:[%s1 + $0x88] sm:$0xf]
  %v644 = vld [vmem:[%s1 + $0x8c] sm:$0xf]
  %v645 = vld [vmem:[%s1 + $0x90] sm:$0xf]
  %v646 = vld [vmem:[%s1 + $0x94] sm:$0xf]
  %v647 = vld [vmem:[%s1 + $0x98] sm:$0xf]
  %v648 = vld [vmem:[%s1 + $0x9c] sm:$0xf]
  %v649 = vld [vmem:[%s1 + $0xa0] sm:$0xf]
  %v650 = vld [vmem:[%s1 + $0xa4] sm:$0xf]
  %v651 = vld [vmem:[%s1 + $0xa8] sm:$0xf]
  %v652 = vld [vmem:[%s1 + $0xac] sm:$0xf]
  %v653 = vld [vmem:[%s1 + $0xb0] sm:$0xf]
  %v654 = vld [vmem:[%s1 + $0xb4] sm:$0xf]
  %v655 = vld [vmem:[%s1 + $0xb8] sm:$0xf]
  %v656 = vld [vmem:[%s1 + $0xbc] sm:$0xf]
  %v657 = vld [vmem:[%s1 + $0xc0] sm:$0xf]
  %v658 = vld [vmem:[%s1 + $0xc4] sm:$0xf]
  %v685 = vunpack.c.l.b16 %v583
  %v686 = vunpack.c.h.b16 %v583
  %v687 = vunpack.c.l.b16 %v584
  %v688 = vunpack.c.h.b16 %v584
  %v689 = vunpack.c.l.b16 %v585
  %v690 = vunpack.c.h.b16 %v585
  %v691 = vunpack.c.l.b16 %v586
  %v692 = vunpack.c.h.b16 %v586
  %v693 = vunpack.c.l.b16 %v587
  %v694 = vunpack.c.h.b16 %v587
  %v695 = vunpack.c.l.b16 %v588
  %v696 = vunpack.c.h.b16 %v588
  %v697 = vunpack.c.l.b16 %v589
  %v698 = vunpack.c.h.b16 %v589
  %v699 = vunpack.c.l.b16 %v590
  %v700 = vunpack.c.h.b16 %v590
  %v701 = vunpack.c.l.b16 %v591
  %v702 = vunpack.c.h.b16 %v591
  %v703 = vunpack.c.l.b16 %v592
  %v704 = vunpack.c.h.b16 %v592
  %v705 = vunpack.c.l.b16 %v593
  %v706 = vunpack.c.h.b16 %v593
  %v707 = vunpack.c.l.b16 %v594
  %v708 = vunpack.c.h.b16 %v594
  %v709 = vunpack.c.l.b16 %v595
  %v710 = vunpack.c.h.b16 %v595
  %v711 = vunpack.c.l.b16 %v596
  %v712 = vunpack.c.h.b16 %v596
  %v713 = vunpack.c.l.b16 %v597
  %v714 = vunpack.c.h.b16 %v597
  %v715 = vunpack.c.l.b16 %v598
  %v716 = vunpack.c.h.b16 %v598
  %v717 = vunpack.c.l.b16 %v599
  %v718 = vunpack.c.h.b16 %v599
  %v719 = vunpack.c.l.b16 %v600
  %v720 = vunpack.c.h.b16 %v600
  %v721 = vunpack.c.l.b16 %v601
  %v722 = vunpack.c.h.b16 %v601
  %v723 = vunpack.c.l.b16 %v602
  %v724 = vunpack.c.h.b16 %v602
  %v725 = vunpack.c.l.b16 %v603
  %v726 = vunpack.c.h.b16 %v603
  %v727 = vunpack.c.l.b16 %v604
  %v728 = vunpack.c.h.b16 %v604
  %v729 = vunpack.c.l.b16 %v605
  %v730 = vunpack.c.h.b16 %v605
  %v731 = vunpack.c.l.b16 %v606
  %v732 = vunpack.c.h.b16 %v606
  %v733 = vunpack.c.l.b16 %v607
  %v734 = vunpack.c.h.b16 %v607
  %v735 = vunpack.c.l.b16 %v608
  %v736 = vunpack.c.h.b16 %v608
  %v737 = vpack.c.b16 %v689, %v685
  %v738 = vpack.c.b16 %v690, %v686
  %v739 = vpack.c.b16 %v691, %v687
  %v740 = vpack.c.b16 %v692, %v688
  %v741 = vpack.c.b16 %v697, %v693
  %v742 = vpack.c.b16 %v698, %v694
  %v743 = vpack.c.b16 %v699, %v695
  %v744 = vpack.c.b16 %v700, %v696
  %v745 = vpack.c.b16 %v705, %v701
  %v746 = vpack.c.b16 %v706, %v702
  %v747 = vpack.c.b16 %v707, %v703
  %v748 = vpack.c.b16 %v708, %v704
  %v749 = vpack.c.b16 %v713, %v709
  %v750 = vpack.c.b16 %v714, %v710
  %v751 = vpack.c.b16 %v715, %v711
  %v752 = vpack.c.b16 %v716, %v712
  %v753 = vpack.c.b16 %v721, %v717
  %v754 = vpack.c.b16 %v722, %v718
  %v755 = vpack.c.b16 %v723, %v719
  %v756 = vpack.c.b16 %v724, %v720
  %v757 = vpack.c.b16 %v729, %v725
  %v758 = vpack.c.b16 %v730, %v726
  %v759 = vpack.c.b16 %v731, %v727
  %v760 = vpack.c.b16 %v732, %v728
  %v761 = vpack.c.b16 %v733, %v733
  %v762 = vpack.c.b16 %v734, %v734
  %v763 = vpack.c.b16 %v735, %v735
  %v764 = vpack.c.b16 %v736, %v736
  %v836 = vunpack.c.l.b16 %v609
  %v837 = vunpack.c.l.b16 %v610
  %v838 = vunpack.c.l.b16 %v611
  %v839 = vunpack.c.l.b16 %v612
  %v840 = vunpack.c.l.b16 %v613
  %v841 = vunpack.c.l.b16 %v614
  %v842 = vunpack.c.l.b16 %v615
  %v843 = vunpack.c.l.b16 %v616
  %v844 = vunpack.c.l.b16 %v617
  %v845 = vunpack.c.l.b16 %v618
  %v846 = vunpack.c.l.b16 %v619
  %v847 = vunpack.c.l.b16 %v620
  %v848 = vunpack.c.l.b16 %v621
  %v849 = vunpack.c.l.b16 %v622
  %v850 = vunpack.c.l.b16 %v623
  %v851 = vunpack.c.l.b16 %v624
  %v852 = vunpack.c.l.b16 %v625
  %v853 = vunpack.c.l.b16 %v626
  %v854 = vunpack.c.l.b16 %v627
  %v855 = vunpack.c.l.b16 %v628
  %v856 = vunpack.c.l.b16 %v629
  %v857 = vunpack.c.l.b16 %v630
  %v858 = vunpack.c.l.b16 %v631
  %v859 = vunpack.c.l.b16 %v632
  %v860 = vunpack.c.l.b16 %v633
  %v861 = vunpack.c.l.b16 %v634
  %v862 = vunpack.c.l.b16 %v635
  %v863 = vunpack.c.l.b16 %v636
  %v864 = vunpack.c.l.b16 %v637
  %v865 = vunpack.c.l.b16 %v638
  %v866 = vunpack.c.l.b16 %v639
  %v867 = vunpack.c.l.b16 %v640
  %v868 = vunpack.c.l.b16 %v641
  %v869 = vunpack.c.l.b16 %v642
  %v870 = vunpack.c.l.b16 %v643
  %v871 = vunpack.c.l.b16 %v644
  %v872 = vunpack.c.l.b16 %v645
  %v873 = vunpack.c.l.b16 %v646
  %v874 = vunpack.c.l.b16 %v647
  %v875 = vunpack.c.l.b16 %v648
  %v876 = vunpack.c.l.b16 %v649
  %v877 = vunpack.c.l.b16 %v650
  %v878 = vunpack.c.l.b16 %v651
  %v879 = vunpack.c.l.b16 %v652
  %v880 = vunpack.c.l.b16 %v653
  %v881 = vunpack.c.l.b16 %v654
  %v882 = vunpack.c.l.b16 %v655
  %v883 = vunpack.c.l.b16 %v656
  %v884 = vunpack.c.l.b16 %v657
  %v885 = vunpack.c.l.b16 %v658
  %v886 = vpack.c.b16 %v837, %v836
  %v887 = vpack.c.b16 %v839, %v838
  %v888 = vpack.c.b16 %v841, %v840
  %v889 = vpack.c.b16 %v843, %v842
  %v890 = vpack.c.b16 %v845, %v844
  %v891 = vpack.c.b16 %v847, %v846
  %v892 = vpack.c.b16 %v849, %v848
  %v893 = vpack.c.b16 %v851, %v850
  %v894 = vpack.c.b16 %v853, %v852
  %v895 = vpack.c.b16 %v855, %v854
  %v896 = vpack.c.b16 %v857, %v856
  %v897 = vpack.c.b16 %v859, %v858
  %v898 = vpack.c.b16 %v861, %v860
  %v899 = vpack.c.b16 %v863, %v862
  %v900 = vpack.c.b16 %v865, %v864
  %v901 = vpack.c.b16 %v867, %v866
  %v902 = vpack.c.b16 %v869, %v868
  %v903 = vpack.c.b16 %v871, %v870
  %v904 = vpack.c.b16 %v873, %v872
  %v905 = vpack.c.b16 %v875, %v874
  %v906 = vpack.c.b16 %v877, %v876
  %v907 = vpack.c.b16 %v879, %v878
  %v908 = vpack.c.b16 %v881, %v880
  %v909 = vpack.c.b16 %v883, %v882
  %v910 = vpack.c.b16 %v885, %v884
  %v937 = vsel %vm372, %v740, 0
  %v940 = vsel %vm372, %v744, 0
  %v943 = vsel %vm372, %v748, 0
  %v946 = vsel %vm372, %v752, 0
  %v949 = vsel %vm372, %v756, 0
  %v952 = vsel %vm372, %v760, 0
  %v955 = vsel %vm372, %v764, 0
  %957 = vmatpush.bf16.msra.mxu0 %v893
  %958 = vmatpush.bf16.msra.mxu0 %v892
  %959 = vmatpush.bf16.msra.mxu0 %v891
  %960 = vmatpush.bf16.msra.mxu0 %v890
  %961 = vmatpush.bf16.msra.mxu0 %v889
  %962 = vmatpush.bf16.msra.mxu0 %v888
  %963 = vmatpush.bf16.msra.mxu0 %v887
  %964 = vmatpush.bf16.msra.mxu0 %v886
  %965 = vmatmul.bf16.gmra.mxu0 %v737
  %v966 = vpop.f32.mrf.mxu0
  %v967 = vadd.f32 0.0, %v966
  %v968 = vpop.f32.mrf.mxu0
  %v969 = vadd.f32 0.0, %v968
  %970 = vmatmul.bf16.gmra.mxu0 %v741
  %v971 = vpop.f32.mrf.mxu0
  %v972 = vadd.f32 0.0, %v971
  %v973 = vpop.f32.mrf.mxu0
  %v974 = vadd.f32 0.0, %v973
  %975 = vmatmul.bf16.gmra.mxu0 %v745
  %v976 = vpop.f32.mrf.mxu0
  %v977 = vadd.f32 0.0, %v976
  %v978 = vpop.f32.mrf.mxu0
  %v979 = vadd.f32 0.0, %v978
  %980 = vmatmul.bf16.gmra.mxu0 %v749
  %v981 = vpop.f32.mrf.mxu0
  %v982 = vadd.f32 0.0, %v981
  %v983 = vpop.f32.mrf.mxu0
  %v984 = vadd.f32 0.0, %v983
  %985 = vmatmul.bf16.gmra.mxu0 %v753
  %v986 = vpop.f32.mrf.mxu0
  %v987 = vadd.f32 0.0, %v986
  %v988 = vpop.f32.mrf.mxu0
  %v989 = vadd.f32 0.0, %v988
  %990 = vmatmul.bf16.gmra.mxu0 %v757
  %v991 = vpop.f32.mrf.mxu0
  %v992 = vadd.f32 0.0, %v991
  %v993 = vpop.f32.mrf.mxu0
  %v994 = vadd.f32 0.0, %v993
  %995 = vmatmul.bf16.gmra.mxu0 %v761
  %v996 = vpop.f32.mrf.mxu0
  %v997 = vadd.f32 0.0, %v996
  %v998 = vpop.f32.mrf.mxu0
  %999 = vdwg.mxu0
  %1000 = vmatpush.bf16.msra.mxu0 %v901
  %1001 = vmatpush.bf16.msra.mxu0 %v900
  %1002 = vmatpush.bf16.msra.mxu0 %v899
  %1003 = vmatpush.bf16.msra.mxu0 %v898
  %1004 = vmatpush.bf16.msra.mxu0 %v897
  %1005 = vmatpush.bf16.msra.mxu0 %v896
  %1006 = vmatpush.bf16.msra.mxu0 %v895
  %1007 = vmatpush.bf16.msra.mxu0 %v894
  %1008 = vmatmul.bf16.gmra.mxu0 %v738
  %v1009 = vpop.f32.mrf.mxu0
  %v1010 = vadd.f32 %v967, %v1009
  %v1011 = vpop.f32.mrf.mxu0
  %v1012 = vadd.f32 %v969, %v1011
  %1013 = vmatmul.bf16.gmra.mxu0 %v742
  %v1014 = vpop.f32.mrf.mxu0
  %v1015 = vadd.f32 %v972, %v1014
  %v1016 = vpop.f32.mrf.mxu0
  %v1017 = vadd.f32 %v974, %v1016
  %1018 = vmatmul.bf16.gmra.mxu0 %v746
  %v1019 = vpop.f32.mrf.mxu0
  %v1020 = vadd.f32 %v977, %v1019
  %v1021 = vpop.f32.mrf.mxu0
  %v1022 = vadd.f32 %v979, %v1021
  %1023 = vmatmul.bf16.gmra.mxu0 %v750
  %v1024 = vpop.f32.mrf.mxu0
  %v1025 = vadd.f32 %v982, %v1024
  %v1026 = vpop.f32.mrf.mxu0
  %v1027 = vadd.f32 %v984, %v1026
  %1028 = vmatmul.bf16.gmra.mxu0 %v754
  %v1029 = vpop.f32.mrf.mxu0
  %v1030 = vadd.f32 %v987, %v1029
  %v1031 = vpop.f32.mrf.mxu0
  %v1032 = vadd.f32 %v989, %v1031
  %1033 = vmatmul.bf16.gmra.mxu0 %v758
  %v1034 = vpop.f32.mrf.mxu0
  %v1035 = vadd.f32 %v992, %v1034
  %v1036 = vpop.f32.mrf.mxu0
  %v1037 = vadd.f32 %v994, %v1036
  %1038 = vmatmul.bf16.gmra.mxu0 %v762
  %v1039 = vpop.f32.mrf.mxu0
  %v1040 = vadd.f32 %v997, %v1039
  %v1041 = vpop.f32.mrf.mxu0
  %1042 = vdwg.mxu0
  %1043 = vmatpush.bf16.msra.mxu0 %v909
  %1044 = vmatpush.bf16.msra.mxu0 %v908
  %1045 = vmatpush.bf16.msra.mxu0 %v907
  %1046 = vmatpush.bf16.msra.mxu0 %v906
  %1047 = vmatpush.bf16.msra.mxu0 %v905
  %1048 = vmatpush.bf16.msra.mxu0 %v904
  %1049 = vmatpush.bf16.msra.mxu0 %v903
  %1050 = vmatpush.bf16.msra.mxu0 %v902
  %1051 = vmatmul.bf16.gmra.mxu0 %v739
  %v1052 = vpop.f32.mrf.mxu0
  %v1053 = vadd.f32 %v1010, %v1052
  %v1054 = vpop.f32.mrf.mxu0
  %v1055 = vadd.f32 %v1012, %v1054
  %1056 = vmatmul.bf16.gmra.mxu0 %v743
  %v1057 = vpop.f32.mrf.mxu0
  %v1058 = vadd.f32 %v1015, %v1057
  %v1059 = vpop.f32.mrf.mxu0
  %v1060 = vadd.f32 %v1017, %v1059
  %1061 = vmatmul.bf16.gmra.mxu0 %v747
  %v1062 = vpop.f32.mrf.mxu0
  %v1063 = vadd.f32 %v1020, %v1062
  %v1064 = vpop.f32.mrf.mxu0
  %v1065 = vadd.f32 %v1022, %v1064
  %1066 = vmatmul.bf16.gmra.mxu0 %v751
  %v1067 = vpop.f32.mrf.mxu0
  %v1068 = vadd.f32 %v1025, %v1067
  %v1069 = vpop.f32.mrf.mxu0
  %v1070 = vadd.f32 %v1027, %v1069
  %1071 = vmatmul.bf16.gmra.mxu0 %v755
  %v1072 = vpop.f32.mrf.mxu0
  %v1073 = vadd.f32 %v1030, %v1072
  %v1074 = vpop.f32.mrf.mxu0
  %v1075 = vadd.f32 %v1032, %v1074
  %1076 = vmatmul.bf16.gmra.mxu0 %v759
  %v1077 = vpop.f32.mrf.mxu0
  %v1078 = vadd.f32 %v1035, %v1077
  %v1079 = vpop.f32.mrf.mxu0
  %v1080 = vadd.f32 %v1037, %v1079
  %1081 = vmatmul.bf16.gmra.mxu0 %v763
  %v1082 = vpop.f32.mrf.mxu0
  %v1083 = vadd.f32 %v1040, %v1082
  %v1084 = vpop.f32.mrf.mxu0
  %1085 = vdwg.mxu0
  %1086 = vmatpush.bf16.msra.mxu0 0
  %1087 = vmatpush.bf16.msra.mxu0 0
  %1088 = vmatpush.bf16.msra.mxu0 0
  %1089 = vmatpush.bf16.msra.mxu0 0
  %1090 = vmatpush.bf16.msra.mxu0 0
  %1091 = vmatpush.bf16.msra.mxu0 0
  %1092 = vmatpush.bf16.msra.mxu0 0
  %1093 = vmatpush.bf16.msra.mxu0 %v910
  %1094 = vmatmul.bf16.gmra.mxu0 %v937
  %v1095 = vpop.f32.mrf.mxu0
  %v1096 = vadd.f32 %v1053, %v1095
  %v1097 = vpop.f32.mrf.mxu0
  %v1098 = vadd.f32 %v1055, %v1097
  %1099 = vmatmul.bf16.gmra.mxu0 %v940
  %v1100 = vpop.f32.mrf.mxu0
  %v1101 = vadd.f32 %v1058, %v1100
  %v1102 = vpop.f32.mrf.mxu0
  %v1103 = vadd.f32 %v1060, %v1102
  %1104 = vmatmul.bf16.gmra.mxu0 %v943
  %v1105 = vpop.f32.mrf.mxu0
  %v1106 = vadd.f32 %v1063, %v1105
  %v1107 = vpop.f32.mrf.mxu0
  %v1108 = vadd.f32 %v1065, %v1107
  %1109 = vmatmul.bf16.gmra.mxu0 %v946
  %v1110 = vpop.f32.mrf.mxu0
  %v1111 = vadd.f32 %v1068, %v1110
  %v1112 = vpop.f32.mrf.mxu0
  %v1113 = vadd.f32 %v1070, %v1112
  %1114 = vmatmul.bf16.gmra.mxu0 %v949
  %v1115 = vpop.f32.mrf.mxu0
  %v1116 = vadd.f32 %v1073, %v1115
  %v1117 = vpop.f32.mrf.mxu0
  %v1118 = vadd.f32 %v1075, %v1117
  %1119 = vmatmul.bf16.gmra.mxu0 %v952
  %v1120 = vpop.f32.mrf.mxu0
  %v1121 = vadd.f32 %v1078, %v1120
  %v1122 = vpop.f32.mrf.mxu0
  %v1123 = vadd.f32 %v1080, %v1122
  %1124 = vmatmul.bf16.gmra.mxu0 %v955
  %v1125 = vpop.f32.mrf.mxu0
  %v1126 = vadd.f32 %v1083, %v1125
  %v1127 = vpop.f32.mrf.mxu0
  %1128 = vdwg.mxu0
  %s1129 = sadd.s32 %s18, 104
  %s1130 = scalar_lea.vmem [#allocation2], %s1129
  %1131 = vst.msk [vmem:[%s1130] sm:$0xff] %vm567, %v1096
  %1132 = vst.msk [vmem:[%s1130 + $0x8] sm:$0xff] %vm567, %v1098
  %1133 = vst.msk [vmem:[%s1130 + $0x10] sm:$0xff] %vm567, %v1101
  %1134 = vst.msk [vmem:[%s1130 + $0x18] sm:$0xff] %vm567, %v1103
  %1135 = vst.msk [vmem:[%s1130 + $0x20] sm:$0xff] %vm567, %v1106
  %1136 = vst.msk [vmem:[%s1130 + $0x28] sm:$0xff] %vm567, %v1108
  %1137 = vst.msk [vmem:[%s1130 + $0x30] sm:$0xff] %vm567, %v1111
  %1138 = vst.msk [vmem:[%s1130 + $0x38] sm:$0xff] %vm567, %v1113
  %1139 = vst.msk [vmem:[%s1130 + $0x40] sm:$0xff] %vm567, %v1116
  %1140 = vst.msk [vmem:[%s1130 + $0x48] sm:$0xff] %vm567, %v1118
  %1141 = vst.msk [vmem:[%s1130 + $0x50] sm:$0xff] %vm567, %v1121
  %1142 = vst.msk [vmem:[%s1130 + $0x58] sm:$0xff] %vm567, %v1123
  %1143 = vst.msk [vmem:[%s1130 + $0x60] sm:$0x3] %vm580, %v1126
  %s1144 = scalar_lea.vmem %s0, 416
  %v1145 = vld [vmem:[%s1144] sm:$0xff]
  %v1146 = vld [vmem:[%s1144 + $0x8] sm:$0xff]
  %v1147 = vld [vmem:[%s1144 + $0x10] sm:$0xff]
  %v1148 = vld [vmem:[%s1144 + $0x18] sm:$0xff]
  %v1149 = vld [vmem:[%s1144 + $0x20] sm:$0xff]
  %v1150 = vld [vmem:[%s1144 + $0x28] sm:$0xff]
  %v1151 = vld [vmem:[%s1144 + $0x30] sm:$0xff]
  %v1152 = vld [vmem:[%s1144 + $0x38] sm:$0xff]
  %v1153 = vld [vmem:[%s1144 + $0x40] sm:$0xff]
  %v1154 = vld [vmem:[%s1144 + $0x48] sm:$0xff]
  %v1155 = vld [vmem:[%s1144 + $0x50] sm:$0xff]
  %v1156 = vld [vmem:[%s1144 + $0x58] sm:$0xff]
  %v1157 = vld [vmem:[%s1144 + $0x60] sm:$0xff]
  %v1158 = vld [vmem:[%s1144 + $0x68] sm:$0xff]
  %v1159 = vld [vmem:[%s1144 + $0x70] sm:$0xff]
  %v1160 = vld [vmem:[%s1144 + $0x78] sm:$0xff]
  %v1161 = vld [vmem:[%s1144 + $0x80] sm:$0xff]
  %v1162 = vld [vmem:[%s1144 + $0x88] sm:$0xff]
  %v1163 = vld [vmem:[%s1144 + $0x90] sm:$0xff]
  %v1164 = vld [vmem:[%s1144 + $0x98] sm:$0xff]
  %v1165 = vld [vmem:[%s1144 + $0xa0] sm:$0xff]
  %v1166 = vld [vmem:[%s1144 + $0xa8] sm:$0xff]
  %v1167 = vld [vmem:[%s1144 + $0xb0] sm:$0xff]
  %v1168 = vld [vmem:[%s1144 + $0xb8] sm:$0xff]
  %v1169 = vld [vmem:[%s1144 + $0xc0] sm:$0x11]
  %v1170 = vld [vmem:[%s1144 + $0xc8] sm:$0x11]
  %v1171 = vld [vmem:[%s1] sm:$0xf]
  %v1172 = vld [vmem:[%s1 + $0x4] sm:$0xf]
  %v1173 = vld [vmem:[%s1 + $0x8] sm:$0xf]
  %v1174 = vld [vmem:[%s1 + $0xc] sm:$0xf]
  %v1175 = vld [vmem:[%s1 + $0x10] sm:$0xf]
  %v1176 = vld [vmem:[%s1 + $0x14] sm:$0xf]
  %v1177 = vld [vmem:[%s1 + $0x18] sm:$0xf]
  %v1178 = vld [vmem:[%s1 + $0x1c] sm:$0xf]
  %v1179 = vld [vmem:[%s1 + $0x20] sm:$0xf]
  %v1180 = vld [vmem:[%s1 + $0x24] sm:$0xf]
  %v1181 = vld [vmem:[%s1 + $0x28] sm:$0xf]
  %v1182 = vld [vmem:[%s1 + $0x2c] sm:$0xf]
  %v1183 = vld [vmem:[%s1 + $0x30] sm:$0xf]
  %v1184 = vld [vmem:[%s1 + $0x34] sm:$0xf]
  %v1185 = vld [vmem:[%s1 + $0x38] sm:$0xf]
  %v1186 = vld [vmem:[%s1 + $0x3c] sm:$0xf]
  %v1187 = vld [vmem:[%s1 + $0x40] sm:$0xf]
  %v1188 = vld [vmem:[%s1 + $0x44] sm:$0xf]
  %v1189 = vld [vmem:[%s1 + $0x48] sm:$0xf]
  %v1190 = vld [vmem:[%s1 + $0x4c] sm:$0xf]
  %v1191 = vld [vmem:[%s1 + $0x50] sm:$0xf]
  %v1192 = vld [vmem:[%s1 + $0x54] sm:$0xf]
  %v1193 = vld [vmem:[%s1 + $0x58] sm:$0xf]
  %v1194 = vld [vmem:[%s1 + $0x5c] sm:$0xf]
  %v1195 = vld [vmem:[%s1 + $0x60] sm:$0xf]
  %v1196 = vld [vmem:[%s1 + $0x64] sm:$0xf]
  %v1197 = vld [vmem:[%s1 + $0x68] sm:$0xf]
  %v1198 = vld [vmem:[%s1 + $0x6c] sm:$0xf]
  %v1199 = vld [vmem:[%s1 + $0x70] sm:$0xf]
  %v1200 = vld [vmem:[%s1 + $0x74] sm:$0xf]
  %v1201 = vld [vmem:[%s1 + $0x78] sm:$0xf]
  %v1202 = vld [vmem:[%s1 + $0x7c] sm:$0xf]
  %v1203 = vld [vmem:[%s1 + $0x80] sm:$0xf]
  %v1204 = vld [vmem:[%s1 + $0x84] sm:$0xf]
  %v1205 = vld [vmem:[%s1 + $0x88] sm:$0xf]
  %v1206 = vld [vmem:[%s1 + $0x8c] sm:$0xf]
  %v1207 = vld [vmem:[%s1 + $0x90] sm:$0xf]
  %v1208 = vld [vmem:[%s1 + $0x94] sm:$0xf]
  %v1209 = vld [vmem:[%s1 + $0x98] sm:$0xf]
  %v1210 = vld [vmem:[%s1 + $0x9c] sm:$0xf]
  %v1211 = vld [vmem:[%s1 + $0xa0] sm:$0xf]
  %v1212 = vld [vmem:[%s1 + $0xa4] sm:$0xf]
  %v1213 = vld [vmem:[%s1 + $0xa8] sm:$0xf]
  %v1214 = vld [vmem:[%s1 + $0xac] sm:$0xf]
  %v1215 = vld [vmem:[%s1 + $0xb0] sm:$0xf]
  %v1216 = vld [vmem:[%s1 + $0xb4] sm:$0xf]
  %v1217 = vld [vmem:[%s1 + $0xb8] sm:$0xf]
  %v1218 = vld [vmem:[%s1 + $0xbc] sm:$0xf]
  %v1219 = vld [vmem:[%s1 + $0xc0] sm:$0xf]
  %v1220 = vld [vmem:[%s1 + $0xc4] sm:$0xf]
  %v1247 = vunpack.c.l.b16 %v1145
  %v1248 = vunpack.c.h.b16 %v1145
  %v1249 = vunpack.c.l.b16 %v1146
  %v1250 = vunpack.c.h.b16 %v1146
  %v1251 = vunpack.c.l.b16 %v1147
  %v1252 = vunpack.c.h.b16 %v1147
  %v1253 = vunpack.c.l.b16 %v1148
  %v1254 = vunpack.c.h.b16 %v1148
  %v1255 = vunpack.c.l.b16 %v1149
  %v1256 = vunpack.c.h.b16 %v1149
  %v1257 = vunpack.c.l.b16 %v1150
  %v1258 = vunpack.c.h.b16 %v1150
  %v1259 = vunpack.c.l.b16 %v1151
  %v1260 = vunpack.c.h.b16 %v1151
  %v1261 = vunpack.c.l.b16 %v1152
  %v1262 = vunpack.c.h.b16 %v1152
  %v1263 = vunpack.c.l.b16 %v1153
  %v1264 = vunpack.c.h.b16 %v1153
  %v1265 = vunpack.c.l.b16 %v1154
  %v1266 = vunpack.c.h.b16 %v1154
  %v1267 = vunpack.c.l.b16 %v1155
  %v1268 = vunpack.c.h.b16 %v1155
  %v1269 = vunpack.c.l.b16 %v1156
  %v1270 = vunpack.c.h.b16 %v1156
  %v1271 = vunpack.c.l.b16 %v1157
  %v1272 = vunpack.c.h.b16 %v1157
  %v1273 = vunpack.c.l.b16 %v1158
  %v1274 = vunpack.c.h.b16 %v1158
  %v1275 = vunpack.c.l.b16 %v1159
  %v1276 = vunpack.c.h.b16 %v1159
  %v1277 = vunpack.c.l.b16 %v1160
  %v1278 = vunpack.c.h.b16 %v1160
  %v1279 = vunpack.c.l.b16 %v1161
  %v1280 = vunpack.c.h.b16 %v1161
  %v1281 = vunpack.c.l.b16 %v1162
  %v1282 = vunpack.c.h.b16 %v1162
  %v1283 = vunpack.c.l.b16 %v1163
  %v1284 = vunpack.c.h.b16 %v1163
  %v1285 = vunpack.c.l.b16 %v1164
  %v1286 = vunpack.c.h.b16 %v1164
  %v1287 = vunpack.c.l.b16 %v1165
  %v1288 = vunpack.c.h.b16 %v1165
  %v1289 = vunpack.c.l.b16 %v1166
  %v1290 = vunpack.c.h.b16 %v1166
  %v1291 = vunpack.c.l.b16 %v1167
  %v1292 = vunpack.c.h.b16 %v1167
  %v1293 = vunpack.c.l.b16 %v1168
  %v1294 = vunpack.c.h.b16 %v1168
  %v1295 = vunpack.c.l.b16 %v1169
  %v1296 = vunpack.c.h.b16 %v1169
  %v1297 = vunpack.c.l.b16 %v1170
  %v1298 = vunpack.c.h.b16 %v1170
  %v1299 = vpack.c.b16 %v1251, %v1247
  %v1300 = vpack.c.b16 %v1252, %v1248
  %v1301 = vpack.c.b16 %v1253, %v1249
  %v1302 = vpack.c.b16 %v1254, %v1250
  %v1303 = vpack.c.b16 %v1259, %v1255
  %v1304 = vpack.c.b16 %v1260, %v1256
  %v1305 = vpack.c.b16 %v1261, %v1257
  %v1306 = vpack.c.b16 %v1262, %v1258
  %v1307 = vpack.c.b16 %v1267, %v1263
  %v1308 = vpack.c.b16 %v1268, %v1264
  %v1309 = vpack.c.b16 %v1269, %v1265
  %v1310 = vpack.c.b16 %v1270, %v1266
  %v1311 = vpack.c.b16 %v1275, %v1271
  %v1312 = vpack.c.b16 %v1276, %v1272
  %v1313 = vpack.c.b16 %v1277, %v1273
  %v1314 = vpack.c.b16 %v1278, %v1274
  %v1315 = vpack.c.b16 %v1283, %v1279
  %v1316 = vpack.c.b16 %v1284, %v1280
  %v1317 = vpack.c.b16 %v1285, %v1281
  %v1318 = vpack.c.b16 %v1286, %v1282
  %v1319 = vpack.c.b16 %v1291, %v1287
  %v1320 = vpack.c.b16 %v1292, %v1288
  %v1321 = vpack.c.b16 %v1293, %v1289
  %v1322 = vpack.c.b16 %v1294, %v1290
  %v1323 = vpack.c.b16 %v1295, %v1295
  %v1324 = vpack.c.b16 %v1296, %v1296
  %v1325 = vpack.c.b16 %v1297, %v1297
  %v1326 = vpack.c.b16 %v1298, %v1298
  %v1398 = vunpack.c.l.b16 %v1171
  %v1399 = vunpack.c.l.b16 %v1172
  %v1400 = vunpack.c.l.b16 %v1173
  %v1401 = vunpack.c.l.b16 %v1174
  %v1402 = vunpack.c.l.b16 %v1175
  %v1403 = vunpack.c.l.b16 %v1176
  %v1404 = vunpack.c.l.b16 %v1177
  %v1405 = vunpack.c.l.b16 %v1178
  %v1406 = vunpack.c.l.b16 %v1179
  %v1407 = vunpack.c.l.b16 %v1180
  %v1408 = vunpack.c.l.b16 %v1181
  %v1409 = vunpack.c.l.b16 %v1182
  %v1410 = vunpack.c.l.b16 %v1183
  %v1411 = vunpack.c.l.b16 %v1184
  %v1412 = vunpack.c.l.b16 %v1185
  %v1413 = vunpack.c.l.b16 %v1186
  %v1414 = vunpack.c.l.b16 %v1187
  %v1415 = vunpack.c.l.b16 %v1188
  %v1416 = vunpack.c.l.b16 %v1189
  %v1417 = vunpack.c.l.b16 %v1190
  %v1418 = vunpack.c.l.b16 %v1191
  %v1419 = vunpack.c.l.b16 %v1192
  %v1420 = vunpack.c.l.b16 %v1193
  %v1421 = vunpack.c.l.b16 %v1194
  %v1422 = vunpack.c.l.b16 %v1195
  %v1423 = vunpack.c.l.b16 %v1196
  %v1424 = vunpack.c.l.b16 %v1197
  %v1425 = vunpack.c.l.b16 %v1198
  %v1426 = vunpack.c.l.b16 %v1199
  %v1427 = vunpack.c.l.b16 %v1200
  %v1428 = vunpack.c.l.b16 %v1201
  %v1429 = vunpack.c.l.b16 %v1202
  %v1430 = vunpack.c.l.b16 %v1203
  %v1431 = vunpack.c.l.b16 %v1204
  %v1432 = vunpack.c.l.b16 %v1205
  %v1433 = vunpack.c.l.b16 %v1206
  %v1434 = vunpack.c.l.b16 %v1207
  %v1435 = vunpack.c.l.b16 %v1208
  %v1436 = vunpack.c.l.b16 %v1209
  %v1437 = vunpack.c.l.b16 %v1210
  %v1438 = vunpack.c.l.b16 %v1211
  %v1439 = vunpack.c.l.b16 %v1212
  %v1440 = vunpack.c.l.b16 %v1213
  %v1441 = vunpack.c.l.b16 %v1214
  %v1442 = vunpack.c.l.b16 %v1215
  %v1443 = vunpack.c.l.b16 %v1216
  %v1444 = vunpack.c.l.b16 %v1217
  %v1445 = vunpack.c.l.b16 %v1218
  %v1446 = vunpack.c.l.b16 %v1219
  %v1447 = vunpack.c.l.b16 %v1220
  %v1448 = vpack.c.b16 %v1399, %v1398
  %v1449 = vpack.c.b16 %v1401, %v1400
  %v1450 = vpack.c.b16 %v1403, %v1402
  %v1451 = vpack.c.b16 %v1405, %v1404
  %v1452 = vpack.c.b16 %v1407, %v1406
  %v1453 = vpack.c.b16 %v1409, %v1408
  %v1454 = vpack.c.b16 %v1411, %v1410
  %v1455 = vpack.c.b16 %v1413, %v1412
  %v1456 = vpack.c.b16 %v1415, %v1414
  %v1457 = vpack.c.b16 %v1417, %v1416
  %v1458 = vpack.c.b16 %v1419, %v1418
  %v1459 = vpack.c.b16 %v1421, %v1420
  %v1460 = vpack.c.b16 %v1423, %v1422
  %v1461 = vpack.c.b16 %v1425, %v1424
  %v1462 = vpack.c.b16 %v1427, %v1426
  %v1463 = vpack.c.b16 %v1429, %v1428
  %v1464 = vpack.c.b16 %v1431, %v1430
  %v1465 = vpack.c.b16 %v1433, %v1432
  %v1466 = vpack.c.b16 %v1435, %v1434
  %v1467 = vpack.c.b16 %v1437, %v1436
  %v1468 = vpack.c.b16 %v1439, %v1438
  %v1469 = vpack.c.b16 %v1441, %v1440
  %v1470 = vpack.c.b16 %v1443, %v1442
  %v1471 = vpack.c.b16 %v1445, %v1444
  %v1472 = vpack.c.b16 %v1447, %v1446
  %v1499 = vsel %vm372, %v1302, 0
  %v1502 = vsel %vm372, %v1306, 0
  %v1505 = vsel %vm372, %v1310, 0
  %v1508 = vsel %vm372, %v1314, 0
  %v1511 = vsel %vm372, %v1318, 0
  %v1514 = vsel %vm372, %v1322, 0
  %v1517 = vsel %vm372, %v1326, 0
  %1519 = vmatpush.bf16.msra.mxu0 %v1455
  %1520 = vmatpush.bf16.msra.mxu0 %v1454
  %1521 = vmatpush.bf16.msra.mxu0 %v1453
  %1522 = vmatpush.bf16.msra.mxu0 %v1452
  %1523 = vmatpush.bf16.msra.mxu0 %v1451
  %1524 = vmatpush.bf16.msra.mxu0 %v1450
  %1525 = vmatpush.bf16.msra.mxu0 %v1449
  %1526 = vmatpush.bf16.msra.mxu0 %v1448
  %1527 = vmatmul.bf16.gmra.mxu0 %v1299
  %v1528 = vpop.f32.mrf.mxu0
  %v1529 = vadd.f32 0.0, %v1528
  %v1530 = vpop.f32.mrf.mxu0
  %v1531 = vadd.f32 0.0, %v1530
  %1532 = vmatmul.bf16.gmra.mxu0 %v1303
  %v1533 = vpop.f32.mrf.mxu0
  %v1534 = vadd.f32 0.0, %v1533
  %v1535 = vpop.f32.mrf.mxu0
  %v1536 = vadd.f32 0.0, %v1535
  %1537 = vmatmul.bf16.gmra.mxu0 %v1307
  %v1538 = vpop.f32.mrf.mxu0
  %v1539 = vadd.f32 0.0, %v1538
  %v1540 = vpop.f32.mrf.mxu0
  %v1541 = vadd.f32 0.0, %v1540
  %1542 = vmatmul.bf16.gmra.mxu0 %v1311
  %v1543 = vpop.f32.mrf.mxu0
  %v1544 = vadd.f32 0.0, %v1543
  %v1545 = vpop.f32.mrf.mxu0
  %v1546 = vadd.f32 0.0, %v1545
  %1547 = vmatmul.bf16.gmra.mxu0 %v1315
  %v1548 = vpop.f32.mrf.mxu0
  %v1549 = vadd.f32 0.0, %v1548
  %v1550 = vpop.f32.mrf.mxu0
  %v1551 = vadd.f32 0.0, %v1550
  %1552 = vmatmul.bf16.gmra.mxu0 %v1319
  %v1553 = vpop.f32.mrf.mxu0
  %v1554 = vadd.f32 0.0, %v1553
  %v1555 = vpop.f32.mrf.mxu0
  %v1556 = vadd.f32 0.0, %v1555
  %1557 = vmatmul.bf16.gmra.mxu0 %v1323
  %v1558 = vpop.f32.mrf.mxu0
  %v1559 = vadd.f32 0.0, %v1558
  %v1560 = vpop.f32.mrf.mxu0
  %1561 = vdwg.mxu0
  %1562 = vmatpush.bf16.msra.mxu0 %v1463
  %1563 = vmatpush.bf16.msra.mxu0 %v1462
  %1564 = vmatpush.bf16.msra.mxu0 %v1461
  %1565 = vmatpush.bf16.msra.mxu0 %v1460
  %1566 = vmatpush.bf16.msra.mxu0 %v1459
  %1567 = vmatpush.bf16.msra.mxu0 %v1458
  %1568 = vmatpush.bf16.msra.mxu0 %v1457
  %1569 = vmatpush.bf16.msra.mxu0 %v1456
  %1570 = vmatmul.bf16.gmra.mxu0 %v1300
  %v1571 = vpop.f32.mrf.mxu0
  %v1572 = vadd.f32 %v1529, %v1571
  %v1573 = vpop.f32.mrf.mxu0
  %v1574 = vadd.f32 %v1531, %v1573
  %1575 = vmatmul.bf16.gmra.mxu0 %v1304
  %v1576 = vpop.f32.mrf.mxu0
  %v1577 = vadd.f32 %v1534, %v1576
  %v1578 = vpop.f32.mrf.mxu0
  %v1579 = vadd.f32 %v1536, %v1578
  %1580 = vmatmul.bf16.gmra.mxu0 %v1308
  %v1581 = vpop.f32.mrf.mxu0
  %v1582 = vadd.f32 %v1539, %v1581
  %v1583 = vpop.f32.mrf.mxu0
  %v1584 = vadd.f32 %v1541, %v1583
  %1585 = vmatmul.bf16.gmra.mxu0 %v1312
  %v1586 = vpop.f32.mrf.mxu0
  %v1587 = vadd.f32 %v1544, %v1586
  %v1588 = vpop.f32.mrf.mxu0
  %v1589 = vadd.f32 %v1546, %v1588
  %1590 = vmatmul.bf16.gmra.mxu0 %v1316
  %v1591 = vpop.f32.mrf.mxu0
  %v1592 = vadd.f32 %v1549, %v1591
  %v1593 = vpop.f32.mrf.mxu0
  %v1594 = vadd.f32 %v1551, %v1593
  %1595 = vmatmul.bf16.gmra.mxu0 %v1320
  %v1596 = vpop.f32.mrf.mxu0
  %v1597 = vadd.f32 %v1554, %v1596
  %v1598 = vpop.f32.mrf.mxu0
  %v1599 = vadd.f32 %v1556, %v1598
  %1600 = vmatmul.bf16.gmra.mxu0 %v1324
  %v1601 = vpop.f32.mrf.mxu0
  %v1602 = vadd.f32 %v1559, %v1601
  %v1603 = vpop.f32.mrf.mxu0
  %1604 = vdwg.mxu0
  %1605 = vmatpush.bf16.msra.mxu0 %v1471
  %1606 = vmatpush.bf16.msra.mxu0 %v1470
  %1607 = vmatpush.bf16.msra.mxu0 %v1469
  %1608 = vmatpush.bf16.msra.mxu0 %v1468
  %1609 = vmatpush.bf16.msra.mxu0 %v1467
  %1610 = vmatpush.bf16.msra.mxu0 %v1466
  %1611 = vmatpush.bf16.msra.mxu0 %v1465
  %1612 = vmatpush.bf16.msra.mxu0 %v1464
  %1613 = vmatmul.bf16.gmra.mxu0 %v1301
  %v1614 = vpop.f32.mrf.mxu0
  %v1615 = vadd.f32 %v1572, %v1614
  %v1616 = vpop.f32.mrf.mxu0
  %v1617 = vadd.f32 %v1574, %v1616
  %1618 = vmatmul.bf16.gmra.mxu0 %v1305
  %v1619 = vpop.f32.mrf.mxu0
  %v1620 = vadd.f32 %v1577, %v1619
  %v1621 = vpop.f32.mrf.mxu0
  %v1622 = vadd.f32 %v1579, %v1621
  %1623 = vmatmul.bf16.gmra.mxu0 %v1309
  %v1624 = vpop.f32.mrf.mxu0
  %v1625 = vadd.f32 %v1582, %v1624
  %v1626 = vpop.f32.mrf.mxu0
  %v1627 = vadd.f32 %v1584, %v1626
  %1628 = vmatmul.bf16.gmra.mxu0 %v1313
  %v1629 = vpop.f32.mrf.mxu0
  %v1630 = vadd.f32 %v1587, %v1629
  %v1631 = vpop.f32.mrf.mxu0
  %v1632 = vadd.f32 %v1589, %v1631
  %1633 = vmatmul.bf16.gmra.mxu0 %v1317
  %v1634 = vpop.f32.mrf.mxu0
  %v1635 = vadd.f32 %v1592, %v1634
  %v1636 = vpop.f32.mrf.mxu0
  %v1637 = vadd.f32 %v1594, %v1636
  %1638 = vmatmul.bf16.gmra.mxu0 %v1321
  %v1639 = vpop.f32.mrf.mxu0
  %v1640 = vadd.f32 %v1597, %v1639
  %v1641 = vpop.f32.mrf.mxu0
  %v1642 = vadd.f32 %v1599, %v1641
  %1643 = vmatmul.bf16.gmra.mxu0 %v1325
  %v1644 = vpop.f32.mrf.mxu0
  %v1645 = vadd.f32 %v1602, %v1644
  %v1646 = vpop.f32.mrf.mxu0
  %1647 = vdwg.mxu0
  %1648 = vmatpush.bf16.msra.mxu0 0
  %1649 = vmatpush.bf16.msra.mxu0 0
  %1650 = vmatpush.bf16.msra.mxu0 0
  %1651 = vmatpush.bf16.msra.mxu0 0
  %1652 = vmatpush.bf16.msra.mxu0 0
  %1653 = vmatpush.bf16.msra.mxu0 0
  %1654 = vmatpush.bf16.msra.mxu0 0
  %1655 = vmatpush.bf16.msra.mxu0 %v1472
  %1656 = vmatmul.bf16.gmra.mxu0 %v1499
  %v1657 = vpop.f32.mrf.mxu0
  %v1658 = vadd.f32 %v1615, %v1657
  %v1659 = vpop.f32.mrf.mxu0
  %v1660 = vadd.f32 %v1617, %v1659
  %1661 = vmatmul.bf16.gmra.mxu0 %v1502
  %v1662 = vpop.f32.mrf.mxu0
  %v1663 = vadd.f32 %v1620, %v1662
  %v1664 = vpop.f32.mrf.mxu0
  %v1665 = vadd.f32 %v1622, %v1664
  %1666 = vmatmul.bf16.gmra.mxu0 %v1505
  %v1667 = vpop.f32.mrf.mxu0
  %v1668 = vadd.f32 %v1625, %v1667
  %v1669 = vpop.f32.mrf.mxu0
  %v1670 = vadd.f32 %v1627, %v1669
  %1671 = vmatmul.bf16.gmra.mxu0 %v1508
  %v1672 = vpop.f32.mrf.mxu0
  %v1673 = vadd.f32 %v1630, %v1672
  %v1674 = vpop.f32.mrf.mxu0
  %v1675 = vadd.f32 %v1632, %v1674
  %1676 = vmatmul.bf16.gmra.mxu0 %v1511
  %v1677 = vpop.f32.mrf.mxu0
  %v1678 = vadd.f32 %v1635, %v1677
  %v1679 = vpop.f32.mrf.mxu0
  %v1680 = vadd.f32 %v1637, %v1679
  %1681 = vmatmul.bf16.gmra.mxu0 %v1514
  %v1682 = vpop.f32.mrf.mxu0
  %v1683 = vadd.f32 %v1640, %v1682
  %v1684 = vpop.f32.mrf.mxu0
  %v1685 = vadd.f32 %v1642, %v1684
  %1686 = vmatmul.bf16.gmra.mxu0 %v1517
  %v1687 = vpop.f32.mrf.mxu0
  %v1688 = vadd.f32 %v1645, %v1687
  %v1689 = vpop.f32.mrf.mxu0
  %1690 = vdwg.mxu0
  %s1691 = sadd.s32 %s18, 208
  %s1692 = scalar_lea.vmem [#allocation2], %s1691
  %1693 = vst.msk [vmem:[%s1692] sm:$0xff] %vm567, %v1658
  %1694 = vst.msk [vmem:[%s1692 + $0x8] sm:$0xff] %vm567, %v1660
  %1695 = vst.msk [vmem:[%s1692 + $0x10] sm:$0xff] %vm567, %v1663
  %1696 = vst.msk [vmem:[%s1692 + $0x18] sm:$0xff] %vm567, %v1665
  %1697 = vst.msk [vmem:[%s1692 + $0x20] sm:$0xff] %vm567, %v1668
  %1698 = vst.msk [vmem:[%s1692 + $0x28] sm:$0xff] %vm567, %v1670
  %1699 = vst.msk [vmem:[%s1692 + $0x30] sm:$0xff] %vm567, %v1673
  %1700 = vst.msk [vmem:[%s1692 + $0x38] sm:$0xff] %vm567, %v1675
  %1701 = vst.msk [vmem:[%s1692 + $0x40] sm:$0xff] %vm567, %v1678
  %1702 = vst.msk [vmem:[%s1692 + $0x48] sm:$0xff] %vm567, %v1680
  %1703 = vst.msk [vmem:[%s1692 + $0x50] sm:$0xff] %vm567, %v1683
  %1704 = vst.msk [vmem:[%s1692 + $0x58] sm:$0xff] %vm567, %v1685
  %1705 = vst.msk [vmem:[%s1692 + $0x60] sm:$0x3] %vm580, %v1688
  %s1706 = scalar_lea.vmem %s0, 624
  %v1707 = vld [vmem:[%s1706] sm:$0xff]
  %v1708 = vld [vmem:[%s1706 + $0x8] sm:$0xff]
  %v1709 = vld [vmem:[%s1706 + $0x10] sm:$0xff]
  %v1710 = vld [vmem:[%s1706 + $0x18] sm:$0xff]
  %v1711 = vld [vmem:[%s1706 + $0x20] sm:$0xff]
  %v1712 = vld [vmem:[%s1706 + $0x28] sm:$0xff]
  %v1713 = vld [vmem:[%s1706 + $0x30] sm:$0xff]
  %v1714 = vld [vmem:[%s1706 + $0x38] sm:$0xff]
  %v1715 = vld [vmem:[%s1706 + $0x40] sm:$0xff]
  %v1716 = vld [vmem:[%s1706 + $0x48] sm:$0xff]
  %v1717 = vld [vmem:[%s1706 + $0x50] sm:$0xff]
  %v1718 = vld [vmem:[%s1706 + $0x58] sm:$0xff]
  %v1719 = vld [vmem:[%s1706 + $0x60] sm:$0xff]
  %v1720 = vld [vmem:[%s1706 + $0x68] sm:$0xff]
  %v1721 = vld [vmem:[%s1706 + $0x70] sm:$0xff]
  %v1722 = vld [vmem:[%s1706 + $0x78] sm:$0xff]
  %v1723 = vld [vmem:[%s1706 + $0x80] sm:$0xff]
  %v1724 = vld [vmem:[%s1706 + $0x88] sm:$0xff]
  %v1725 = vld [vmem:[%s1706 + $0x90] sm:$0xff]
  %v1726 = vld [vmem:[%s1706 + $0x98] sm:$0xff]
  %v1727 = vld [vmem:[%s1706 + $0xa0] sm:$0xff]
  %v1728 = vld [vmem:[%s1706 + $0xa8] sm:$0xff]
  %v1729 = vld [vmem:[%s1706 + $0xb0] sm:$0xff]
  %v1730 = vld [vmem:[%s1706 + $0xb8] sm:$0xff]
  %v1731 = vld [vmem:[%s1706 + $0xc0] sm:$0x11]
  %v1732 = vld [vmem:[%s1706 + $0xc8] sm:$0x11]
  %v1733 = vld [vmem:[%s1] sm:$0xf]
  %v1734 = vld [vmem:[%s1 + $0x4] sm:$0xf]
  %v1735 = vld [vmem:[%s1 + $0x8] sm:$0xf]
  %v1736 = vld [vmem:[%s1 + $0xc] sm:$0xf]
  %v1737 = vld [vmem:[%s1 + $0x10] sm:$0xf]
  %v1738 = vld [vmem:[%s1 + $0x14] sm:$0xf]
  %v1739 = vld [vmem:[%s1 + $0x18] sm:$0xf]
  %v1740 = vld [vmem:[%s1 + $0x1c] sm:$0xf]
  %v1741 = vld [vmem:[%s1 + $0x20] sm:$0xf]
  %v1742 = vld [vmem:[%s1 + $0x24] sm:$0xf]
  %v1743 = vld [vmem:[%s1 + $0x28] sm:$0xf]
  %v1744 = vld [vmem:[%s1 + $0x2c] sm:$0xf]
  %v1745 = vld [vmem:[%s1 + $0x30] sm:$0xf]
  %v1746 = vld [vmem:[%s1 + $0x34] sm:$0xf]
  %v1747 = vld [vmem:[%s1 + $0x38] sm:$0xf]
  %v1748 = vld [vmem:[%s1 + $0x3c] sm:$0xf]
  %v1749 = vld [vmem:[%s1 + $0x40] sm:$0xf]
  %v1750 = vld [vmem:[%s1 + $0x44] sm:$0xf]
  %v1751 = vld [vmem:[%s1 + $0x48] sm:$0xf]
  %v1752 = vld [vmem:[%s1 + $0x4c] sm:$0xf]
  %v1753 = vld [vmem:[%s1 + $0x50] sm:$0xf]
  %v1754 = vld [vmem:[%s1 + $0x54] sm:$0xf]
  %v1755 = vld [vmem:[%s1 + $0x58] sm:$0xf]
  %v1756 = vld [vmem:[%s1 + $0x5c] sm:$0xf]
  %v1757 = vld [vmem:[%s1 + $0x60] sm:$0xf]
  %v1758 = vld [vmem:[%s1 + $0x64] sm:$0xf]
  %v1759 = vld [vmem:[%s1 + $0x68] sm:$0xf]
  %v1760 = vld [vmem:[%s1 + $0x6c] sm:$0xf]
  %v1761 = vld [vmem:[%s1 + $0x70] sm:$0xf]
  %v1762 = vld [vmem:[%s1 + $0x74] sm:$0xf]
  %v1763 = vld [vmem:[%s1 + $0x78] sm:$0xf]
  %v1764 = vld [vmem:[%s1 + $0x7c] sm:$0xf]
  %v1765 = vld [vmem:[%s1 + $0x80] sm:$0xf]
  %v1766 = vld [vmem:[%s1 + $0x84] sm:$0xf]
  %v1767 = vld [vmem:[%s1 + $0x88] sm:$0xf]
  %v1768 = vld [vmem:[%s1 + $0x8c] sm:$0xf]
  %v1769 = vld [vmem:[%s1 + $0x90] sm:$0xf]
  %v1770 = vld [vmem:[%s1 + $0x94] sm:$0xf]
  %v1771 = vld [vmem:[%s1 + $0x98] sm:$0xf]
  %v1772 = vld [vmem:[%s1 + $0x9c] sm:$0xf]
  %v1773 = vld [vmem:[%s1 + $0xa0] sm:$0xf]
  %v1774 = vld [vmem:[%s1 + $0xa4] sm:$0xf]
  %v1775 = vld [vmem:[%s1 + $0xa8] sm:$0xf]
  %v1776 = vld [vmem:[%s1 + $0xac] sm:$0xf]
  %v1777 = vld [vmem:[%s1 + $0xb0] sm:$0xf]
  %v1778 = vld [vmem:[%s1 + $0xb4] sm:$0xf]
  %v1779 = vld [vmem:[%s1 + $0xb8] sm:$0xf]
  %v1780 = vld [vmem:[%s1 + $0xbc] sm:$0xf]
  %v1781 = vld [vmem:[%s1 + $0xc0] sm:$0xf]
  %v1782 = vld [vmem:[%s1 + $0xc4] sm:$0xf]
  %v1809 = vunpack.c.l.b16 %v1707
  %v1810 = vunpack.c.h.b16 %v1707
  %v1811 = vunpack.c.l.b16 %v1708
  %v1812 = vunpack.c.h.b16 %v1708
  %v1813 = vunpack.c.l.b16 %v1709
  %v1814 = vunpack.c.h.b16 %v1709
  %v1815 = vunpack.c.l.b16 %v1710
  %v1816 = vunpack.c.h.b16 %v1710
  %v1817 = vunpack.c.l.b16 %v1711
  %v1818 = vunpack.c.h.b16 %v1711
  %v1819 = vunpack.c.l.b16 %v1712
  %v1820 = vunpack.c.h.b16 %v1712
  %v1821 = vunpack.c.l.b16 %v1713
  %v1822 = vunpack.c.h.b16 %v1713
  %v1823 = vunpack.c.l.b16 %v1714
  %v1824 = vunpack.c.h.b16 %v1714
  %v1825 = vunpack.c.l.b16 %v1715
  %v1826 = vunpack.c.h.b16 %v1715
  %v1827 = vunpack.c.l.b16 %v1716
  %v1828 = vunpack.c.h.b16 %v1716
  %v1829 = vunpack.c.l.b16 %v1717
  %v1830 = vunpack.c.h.b16 %v1717
  %v1831 = vunpack.c.l.b16 %v1718
  %v1832 = vunpack.c.h.b16 %v1718
  %v1833 = vunpack.c.l.b16 %v1719
  %v1834 = vunpack.c.h.b16 %v1719
  %v1835 = vunpack.c.l.b16 %v1720
  %v1836 = vunpack.c.h.b16 %v1720
  %v1837 = vunpack.c.l.b16 %v1721
  %v1838 = vunpack.c.h.b16 %v1721
  %v1839 = vunpack.c.l.b16 %v1722
  %v1840 = vunpack.c.h.b16 %v1722
  %v1841 = vunpack.c.l.b16 %v1723
  %v1842 = vunpack.c.h.b16 %v1723
  %v1843 = vunpack.c.l.b16 %v1724
  %v1844 = vunpack.c.h.b16 %v1724
  %v1845 = vunpack.c.l.b16 %v1725
  %v1846 = vunpack.c.h.b16 %v1725
  %v1847 = vunpack.c.l.b16 %v1726
  %v1848 = vunpack.c.h.b16 %v1726
  %v1849 = vunpack.c.l.b16 %v1727
  %v1850 = vunpack.c.h.b16 %v1727
  %v1851 = vunpack.c.l.b16 %v1728
  %v1852 = vunpack.c.h.b16 %v1728
  %v1853 = vunpack.c.l.b16 %v1729
  %v1854 = vunpack.c.h.b16 %v1729
  %v1855 = vunpack.c.l.b16 %v1730
  %v1856 = vunpack.c.h.b16 %v1730
  %v1857 = vunpack.c.l.b16 %v1731
  %v1858 = vunpack.c.h.b16 %v1731
  %v1859 = vunpack.c.l.b16 %v1732
  %v1860 = vunpack.c.h.b16 %v1732
  %v1861 = vpack.c.b16 %v1813, %v1809
  %v1862 = vpack.c.b16 %v1814, %v1810
  %v1863 = vpack.c.b16 %v1815, %v1811
  %v1864 = vpack.c.b16 %v1816, %v1812
  %v1865 = vpack.c.b16 %v1821, %v1817
  %v1866 = vpack.c.b16 %v1822, %v1818
  %v1867 = vpack.c.b16 %v1823, %v1819
  %v1868 = vpack.c.b16 %v1824, %v1820
  %v1869 = vpack.c.b16 %v1829, %v1825
  %v1870 = vpack.c.b16 %v1830, %v1826
  %v1871 = vpack.c.b16 %v1831, %v1827
  %v1872 = vpack.c.b16 %v1832, %v1828
  %v1873 = vpack.c.b16 %v1837, %v1833
  %v1874 = vpack.c.b16 %v1838, %v1834
  %v1875 = vpack.c.b16 %v1839, %v1835
  %v1876 = vpack.c.b16 %v1840, %v1836
  %v1877 = vpack.c.b16 %v1845, %v1841
  %v1878 = vpack.c.b16 %v1846, %v1842
  %v1879 = vpack.c.b16 %v1847, %v1843
  %v1880 = vpack.c.b16 %v1848, %v1844
  %v1881 = vpack.c.b16 %v1853, %v1849
  %v1882 = vpack.c.b16 %v1854, %v1850
  %v1883 = vpack.c.b16 %v1855, %v1851
  %v1884 = vpack.c.b16 %v1856, %v1852
  %v1885 = vpack.c.b16 %v1857, %v1857
  %v1886 = vpack.c.b16 %v1858, %v1858
  %v1887 = vpack.c.b16 %v1859, %v1859
  %v1888 = vpack.c.b16 %v1860, %v1860
  %v1960 = vunpack.c.l.b16 %v1733
  %v1961 = vunpack.c.l.b16 %v1734
  %v1962 = vunpack.c.l.b16 %v1735
  %v1963 = vunpack.c.l.b16 %v1736
  %v1964 = vunpack.c.l.b16 %v1737
  %v1965 = vunpack.c.l.b16 %v1738
  %v1966 = vunpack.c.l.b16 %v1739
  %v1967 = vunpack.c.l.b16 %v1740
  %v1968 = vunpack.c.l.b16 %v1741
  %v1969 = vunpack.c.l.b16 %v1742
  %v1970 = vunpack.c.l.b16 %v1743
  %v1971 = vunpack.c.l.b16 %v1744
  %v1972 = vunpack.c.l.b16 %v1745
  %v1973 = vunpack.c.l.b16 %v1746
  %v1974 = vunpack.c.l.b16 %v1747
  %v1975 = vunpack.c.l.b16 %v1748
  %v1976 = vunpack.c.l.b16 %v1749
  %v1977 = vunpack.c.l.b16 %v1750
  %v1978 = vunpack.c.l.b16 %v1751
  %v1979 = vunpack.c.l.b16 %v1752
  %v1980 = vunpack.c.l.b16 %v1753
  %v1981 = vunpack.c.l.b16 %v1754
  %v1982 = vunpack.c.l.b16 %v1755
  %v1983 = vunpack.c.l.b16 %v1756
  %v1984 = vunpack.c.l.b16 %v1757
  %v1985 = vunpack.c.l.b16 %v1758
  %v1986 = vunpack.c.l.b16 %v1759
  %v1987 = vunpack.c.l.b16 %v1760
  %v1988 = vunpack.c.l.b16 %v1761
  %v1989 = vunpack.c.l.b16 %v1762
  %v1990 = vunpack.c.l.b16 %v1763
  %v1991 = vunpack.c.l.b16 %v1764
  %v1992 = vunpack.c.l.b16 %v1765
  %v1993 = vunpack.c.l.b16 %v1766
  %v1994 = vunpack.c.l.b16 %v1767
  %v1995 = vunpack.c.l.b16 %v1768
  %v1996 = vunpack.c.l.b16 %v1769
  %v1997 = vunpack.c.l.b16 %v1770
  %v1998 = vunpack.c.l.b16 %v1771
  %v1999 = vunpack.c.l.b16 %v1772
  %v2000 = vunpack.c.l.b16 %v1773
  %v2001 = vunpack.c.l.b16 %v1774
  %v2002 = vunpack.c.l.b16 %v1775
  %v2003 = vunpack.c.l.b16 %v1776
  %v2004 = vunpack.c.l.b16 %v1777
  %v2005 = vunpack.c.l.b16 %v1778
  %v2006 = vunpack.c.l.b16 %v1779
  %v2007 = vunpack.c.l.b16 %v1780
  %v2008 = vunpack.c.l.b16 %v1781
  %v2009 = vunpack.c.l.b16 %v1782
  %v2010 = vpack.c.b16 %v1961, %v1960
  %v2011 = vpack.c.b16 %v1963, %v1962
  %v2012 = vpack.c.b16 %v1965, %v1964
  %v2013 = vpack.c.b16 %v1967, %v1966
  %v2014 = vpack.c.b16 %v1969, %v1968
  %v2015 = vpack.c.b16 %v1971, %v1970
  %v2016 = vpack.c.b16 %v1973, %v1972
  %v2017 = vpack.c.b16 %v1975, %v1974
  %v2018 = vpack.c.b16 %v1977, %v1976
  %v2019 = vpack.c.b16 %v1979, %v1978
  %v2020 = vpack.c.b16 %v1981, %v1980
  %v2021 = vpack.c.b16 %v1983, %v1982
  %v2022 = vpack.c.b16 %v1985, %v1984
  %v2023 = vpack.c.b16 %v1987, %v1986
  %v2024 = vpack.c.b16 %v1989, %v1988
  %v2025 = vpack.c.b16 %v1991, %v1990
  %v2026 = vpack.c.b16 %v1993, %v1992
  %v2027 = vpack.c.b16 %v1995, %v1994
  %v2028 = vpack.c.b16 %v1997, %v1996
  %v2029 = vpack.c.b16 %v1999, %v1998
  %v2030 = vpack.c.b16 %v2001, %v2000
  %v2031 = vpack.c.b16 %v2003, %v2002
  %v2032 = vpack.c.b16 %v2005, %v2004
  %v2033 = vpack.c.b16 %v2007, %v2006
  %v2034 = vpack.c.b16 %v2009, %v2008
  %v2061 = vsel %vm372, %v1864, 0
  %v2064 = vsel %vm372, %v1868, 0
  %v2067 = vsel %vm372, %v1872, 0
  %v2070 = vsel %vm372, %v1876, 0
  %v2073 = vsel %vm372, %v1880, 0
  %v2076 = vsel %vm372, %v1884, 0
  %v2079 = vsel %vm372, %v1888, 0
  %2081 = vmatpush.bf16.msra.mxu0 %v2017
  %2082 = vmatpush.bf16.msra.mxu0 %v2016
  %2083 = vmatpush.bf16.msra.mxu0 %v2015
  %2084 = vmatpush.bf16.msra.mxu0 %v2014
  %2085 = vmatpush.bf16.msra.mxu0 %v2013
  %2086 = vmatpush.bf16.msra.mxu0 %v2012
  %2087 = vmatpush.bf16.msra.mxu0 %v2011
  %2088 = vmatpush.bf16.msra.mxu0 %v2010
  %2089 = vmatmul.bf16.gmra.mxu0 %v1861
  %v2090 = vpop.f32.mrf.mxu0
  %v2091 = vadd.f32 0.0, %v2090
  %v2092 = vpop.f32.mrf.mxu0
  %v2093 = vadd.f32 0.0, %v2092
  %2094 = vmatmul.bf16.gmra.mxu0 %v1865
  %v2095 = vpop.f32.mrf.mxu0
  %v2096 = vadd.f32 0.0, %v2095
  %v2097 = vpop.f32.mrf.mxu0
  %v2098 = vadd.f32 0.0, %v2097
  %2099 = vmatmul.bf16.gmra.mxu0 %v1869
  %v2100 = vpop.f32.mrf.mxu0
  %v2101 = vadd.f32 0.0, %v2100
  %v2102 = vpop.f32.mrf.mxu0
  %v2103 = vadd.f32 0.0, %v2102
  %2104 = vmatmul.bf16.gmra.mxu0 %v1873
  %v2105 = vpop.f32.mrf.mxu0
  %v2106 = vadd.f32 0.0, %v2105
  %v2107 = vpop.f32.mrf.mxu0
  %v2108 = vadd.f32 0.0, %v2107
  %2109 = vmatmul.bf16.gmra.mxu0 %v1877
  %v2110 = vpop.f32.mrf.mxu0
  %v2111 = vadd.f32 0.0, %v2110
  %v2112 = vpop.f32.mrf.mxu0
  %v2113 = vadd.f32 0.0, %v2112
  %2114 = vmatmul.bf16.gmra.mxu0 %v1881
  %v2115 = vpop.f32.mrf.mxu0
  %v2116 = vadd.f32 0.0, %v2115
  %v2117 = vpop.f32.mrf.mxu0
  %v2118 = vadd.f32 0.0, %v2117
  %2119 = vmatmul.bf16.gmra.mxu0 %v1885
  %v2120 = vpop.f32.mrf.mxu0
  %v2121 = vadd.f32 0.0, %v2120
  %v2122 = vpop.f32.mrf.mxu0
  %2123 = vdwg.mxu0
  %2124 = vmatpush.bf16.msra.mxu0 %v2025
  %2125 = vmatpush.bf16.msra.mxu0 %v2024
  %2126 = vmatpush.bf16.msra.mxu0 %v2023
  %2127 = vmatpush.bf16.msra.mxu0 %v2022
  %2128 = vmatpush.bf16.msra.mxu0 %v2021
  %2129 = vmatpush.bf16.msra.mxu0 %v2020
  %2130 = vmatpush.bf16.msra.mxu0 %v2019
  %2131 = vmatpush.bf16.msra.mxu0 %v2018
  %2132 = vmatmul.bf16.gmra.mxu0 %v1862
  %v2133 = vpop.f32.mrf.mxu0
  %v2134 = vadd.f32 %v2091, %v2133
  %v2135 = vpop.f32.mrf.mxu0
  %v2136 = vadd.f32 %v2093, %v2135
  %2137 = vmatmul.bf16.gmra.mxu0 %v1866
  %v2138 = vpop.f32.mrf.mxu0
  %v2139 = vadd.f32 %v2096, %v2138
  %v2140 = vpop.f32.mrf.mxu0
  %v2141 = vadd.f32 %v2098, %v2140
  %2142 = vmatmul.bf16.gmra.mxu0 %v1870
  %v2143 = vpop.f32.mrf.mxu0
  %v2144 = vadd.f32 %v2101, %v2143
  %v2145 = vpop.f32.mrf.mxu0
  %v2146 = vadd.f32 %v2103, %v2145
  %2147 = vmatmul.bf16.gmra.mxu0 %v1874
  %v2148 = vpop.f32.mrf.mxu0
  %v2149 = vadd.f32 %v2106, %v2148
  %v2150 = vpop.f32.mrf.mxu0
  %v2151 = vadd.f32 %v2108, %v2150
  %2152 = vmatmul.bf16.gmra.mxu0 %v1878
  %v2153 = vpop.f32.mrf.mxu0
  %v2154 = vadd.f32 %v2111, %v2153
  %v2155 = vpop.f32.mrf.mxu0
  %v2156 = vadd.f32 %v2113, %v2155
  %2157 = vmatmul.bf16.gmra.mxu0 %v1882
  %v2158 = vpop.f32.mrf.mxu0
  %v2159 = vadd.f32 %v2116, %v2158
  %v2160 = vpop.f32.mrf.mxu0
  %v2161 = vadd.f32 %v2118, %v2160
  %2162 = vmatmul.bf16.gmra.mxu0 %v1886
  %v2163 = vpop.f32.mrf.mxu0
  %v2164 = vadd.f32 %v2121, %v2163
  %v2165 = vpop.f32.mrf.mxu0
  %2166 = vdwg.mxu0
  %2167 = vmatpush.bf16.msra.mxu0 %v2033
  %2168 = vmatpush.bf16.msra.mxu0 %v2032
  %2169 = vmatpush.bf16.msra.mxu0 %v2031
  %2170 = vmatpush.bf16.msra.mxu0 %v2030
  %2171 = vmatpush.bf16.msra.mxu0 %v2029
  %2172 = vmatpush.bf16.msra.mxu0 %v2028
  %2173 = vmatpush.bf16.msra.mxu0 %v2027
  %2174 = vmatpush.bf16.msra.mxu0 %v2026
  %2175 = vmatmul.bf16.gmra.mxu0 %v1863
  %v2176 = vpop.f32.mrf.mxu0
  %v2177 = vadd.f32 %v2134, %v2176
  %v2178 = vpop.f32.mrf.mxu0
  %v2179 = vadd.f32 %v2136, %v2178
  %2180 = vmatmul.bf16.gmra.mxu0 %v1867
  %v2181 = vpop.f32.mrf.mxu0
  %v2182 = vadd.f32 %v2139, %v2181
  %v2183 = vpop.f32.mrf.mxu0
  %v2184 = vadd.f32 %v2141, %v2183
  %2185 = vmatmul.bf16.gmra.mxu0 %v1871
  %v2186 = vpop.f32.mrf.mxu0
  %v2187 = vadd.f32 %v2144, %v2186
  %v2188 = vpop.f32.mrf.mxu0
  %v2189 = vadd.f32 %v2146, %v2188
  %2190 = vmatmul.bf16.gmra.mxu0 %v1875
  %v2191 = vpop.f32.mrf.mxu0
  %v2192 = vadd.f32 %v2149, %v2191
  %v2193 = vpop.f32.mrf.mxu0
  %v2194 = vadd.f32 %v2151, %v2193
  %2195 = vmatmul.bf16.gmra.mxu0 %v1879
  %v2196 = vpop.f32.mrf.mxu0
  %v2197 = vadd.f32 %v2154, %v2196
  %v2198 = vpop.f32.mrf.mxu0
  %v2199 = vadd.f32 %v2156, %v2198
  %2200 = vmatmul.bf16.gmra.mxu0 %v1883
  %v2201 = vpop.f32.mrf.mxu0
  %v2202 = vadd.f32 %v2159, %v2201
  %v2203 = vpop.f32.mrf.mxu0
  %v2204 = vadd.f32 %v2161, %v2203
  %2205 = vmatmul.bf16.gmra.mxu0 %v1887
  %v2206 = vpop.f32.mrf.mxu0
  %v2207 = vadd.f32 %v2164, %v2206
  %v2208 = vpop.f32.mrf.mxu0
  %2209 = vdwg.mxu0
  %2210 = vmatpush.bf16.msra.mxu0 0
  %2211 = vmatpush.bf16.msra.mxu0 0
  %2212 = vmatpush.bf16.msra.mxu0 0
  %2213 = vmatpush.bf16.msra.mxu0 0
  %2214 = vmatpush.bf16.msra.mxu0 0
  %2215 = vmatpush.bf16.msra.mxu0 0
  %2216 = vmatpush.bf16.msra.mxu0 0
  %2217 = vmatpush.bf16.msra.mxu0 %v2034
  %2218 = vmatmul.bf16.gmra.mxu0 %v2061
  %v2219 = vpop.f32.mrf.mxu0
  %v2220 = vadd.f32 %v2177, %v2219
  %v2221 = vpop.f32.mrf.mxu0
  %v2222 = vadd.f32 %v2179, %v2221
  %2223 = vmatmul.bf16.gmra.mxu0 %v2064
  %v2224 = vpop.f32.mrf.mxu0
  %v2225 = vadd.f32 %v2182, %v2224
  %v2226 = vpop.f32.mrf.mxu0
  %v2227 = vadd.f32 %v2184, %v2226
  %2228 = vmatmul.bf16.gmra.mxu0 %v2067
  %v2229 = vpop.f32.mrf.mxu0
  %v2230 = vadd.f32 %v2187, %v2229
  %v2231 = vpop.f32.mrf.mxu0
  %v2232 = vadd.f32 %v2189, %v2231
  %2233 = vmatmul.bf16.gmra.mxu0 %v2070
  %v2234 = vpop.f32.mrf.mxu0
  %v2235 = vadd.f32 %v2192, %v2234
  %v2236 = vpop.f32.mrf.mxu0
  %v2237 = vadd.f32 %v2194, %v2236
  %2238 = vmatmul.bf16.gmra.mxu0 %v2073
  %v2239 = vpop.f32.mrf.mxu0
  %v2240 = vadd.f32 %v2197, %v2239
  %v2241 = vpop.f32.mrf.mxu0
  %v2242 = vadd.f32 %v2199, %v2241
  %2243 = vmatmul.bf16.gmra.mxu0 %v2076
  %v2244 = vpop.f32.mrf.mxu0
  %v2245 = vadd.f32 %v2202, %v2244
  %v2246 = vpop.f32.mrf.mxu0
  %v2247 = vadd.f32 %v2204, %v2246
  %2248 = vmatmul.bf16.gmra.mxu0 %v2079
  %v2249 = vpop.f32.mrf.mxu0
  %v2250 = vadd.f32 %v2207, %v2249
  %v2251 = vpop.f32.mrf.mxu0
  %2252 = vdwg.mxu0
  %s2253 = sadd.s32 %s18, 312
  %s2254 = scalar_lea.vmem [#allocation2], %s2253
  %2255 = vst.msk [vmem:[%s2254] sm:$0xff] %vm567, %v2220
  %2256 = vst.msk [vmem:[%s2254 + $0x8] sm:$0xff] %vm567, %v2222
  %2257 = vst.msk [vmem:[%s2254 + $0x10] sm:$0xff] %vm567, %v2225
  %2258 = vst.msk [vmem:[%s2254 + $0x18] sm:$0xff] %vm567, %v2227
  %2259 = vst.msk [vmem:[%s2254 + $0x20] sm:$0xff] %vm567, %v2230
  %2260 = vst.msk [vmem:[%s2254 + $0x28] sm:$0xff] %vm567, %v2232
  %2261 = vst.msk [vmem:[%s2254 + $0x30] sm:$0xff] %vm567, %v2235
  %2262 = vst.msk [vmem:[%s2254 + $0x38] sm:$0xff] %vm567, %v2237
  %2263 = vst.msk [vmem:[%s2254 + $0x40] sm:$0xff] %vm567, %v2240
  %2264 = vst.msk [vmem:[%s2254 + $0x48] sm:$0xff] %vm567, %v2242
  %2265 = vst.msk [vmem:[%s2254 + $0x50] sm:$0xff] %vm567, %v2245
  %2266 = vst.msk [vmem:[%s2254 + $0x58] sm:$0xff] %vm567, %v2247
  %2267 = vst.msk [vmem:[%s2254 + $0x60] sm:$0x3] %vm580, %v2250
  %p2268 = scmp.eq.s32.totalorder 0, 0
  // Predicated region
  $region18: #{convnet_forward.4} parent=0 // pred_check
    %p2269 = pneg %p2268
  $region19: #{convnet_forward.4} parent=0 // pred_check_branch
    %2271 = sbr.rel (%p2269) target = $region21
  $region20: #{convnet_forward.4} parent=0 // pred_region
    %v2272 = vld [vmem:[#allocation2] sm:$0xff]
    %v2273 = vld [vmem:[#allocation2 + $0x8] sm:$0xff]
    %v2274 = vld [vmem:[#allocation2 + $0x10] sm:$0xff]
    %v2275 = vld [vmem:[#allocation2 + $0x18] sm:$0xff]
    %v2276 = vld [vmem:[#allocation2 + $0x20] sm:$0xff]
    %v2277 = vld [vmem:[#allocation2 + $0x28] sm:$0xff]
    %v2278 = vld [vmem:[#allocation2 + $0x30] sm:$0xff]
    %v2279 = vld [vmem:[#allocation2 + $0x38] sm:$0xff]
    %v2280 = vld [vmem:[#allocation2 + $0x40] sm:$0xff]
    %v2281 = vld [vmem:[#allocation2 + $0x48] sm:$0xff]
    %v2282 = vld [vmem:[#allocation2 + $0x50] sm:$0xff]
    %v2283 = vld [vmem:[#allocation2 + $0x58] sm:$0xff]
    %v2284 = vld [vmem:[#allocation2 + $0x60] sm:$0x3]
    %v2285 = vsel %vm567, %v2272, 0.0
    %v2286 = vsel %vm567, %v2273, 0.0
    %v2287 = vadd.f32 %v2285, %v2286
    %v2288 = vsel %vm567, %v2274, 0.0
    %v2289 = vadd.f32 %v2287, %v2288
    %v2290 = vsel %vm567, %v2275, 0.0
    %v2291 = vadd.f32 %v2289, %v2290
    %v2292 = vsel %vm567, %v2276, 0.0
    %v2293 = vadd.f32 %v2291, %v2292
    %v2294 = vsel %vm567, %v2277, 0.0
    %v2295 = vadd.f32 %v2293, %v2294
    %v2296 = vsel %vm567, %v2278, 0.0
    %v2297 = vadd.f32 %v2295, %v2296
    %v2298 = vsel %vm567, %v2279, 0.0
    %v2299 = vadd.f32 %v2297, %v2298
    %v2300 = vsel %vm567, %v2280, 0.0
    %v2301 = vadd.f32 %v2299, %v2300
    %v2302 = vsel %vm567, %v2281, 0.0
    %v2303 = vadd.f32 %v2301, %v2302
    %v2304 = vsel %vm567, %v2282, 0.0
    %v2305 = vadd.f32 %v2303, %v2304
    %v2306 = vsel %vm567, %v2283, 0.0
    %v2307 = vadd.f32 %v2305, %v2306
    %v2308 = vsel %vm580, %v2284, 0.0
    %v2309 = vadd.f32 %v2307, %v2308
    %v2310 = vrot.slane %v2309, 4
    %v2311 = vadd.f32 %v2309, %v2310
    %v2312 = vrot.slane %v2311, 2
    %v2313 = vadd.f32 %v2311, %v2312
    %v2314 = vrot.slane %v2313, 1
    %v2315 = vadd.f32 %v2313, %v2314
    %v2316 = vadd.f32 %v2315, 0.0
    %s2317 = scalar_lea.vmem [#allocation2], 104
    %v2318 = vld [vmem:[%s2317] sm:$0xff]
    %v2319 = vld [vmem:[%s2317 + $0x8] sm:$0xff]
    %v2320 = vld [vmem:[%s2317 + $0x10] sm:$0xff]
    %v2321 = vld [vmem:[%s2317 + $0x18] sm:$0xff]
    %v2322 = vld [vmem:[%s2317 + $0x20] sm:$0xff]
    %v2323 = vld [vmem:[%s2317 + $0x28] sm:$0xff]
    %v2324 = vld [vmem:[%s2317 + $0x30] sm:$0xff]
    %v2325 = vld [vmem:[%s2317 + $0x38] sm:$0xff]
    %v2326 = vld [vmem:[%s2317 + $0x40] sm:$0xff]
    %v2327 = vld [vmem:[%s2317 + $0x48] sm:$0xff]
    %v2328 = vld [vmem:[%s2317 + $0x50] sm:$0xff]
    %v2329 = vld [vmem:[%s2317 + $0x58] sm:$0xff]
    %v2330 = vld [vmem:[%s2317 + $0x60] sm:$0x3]
    %v2331 = vsel %vm567, %v2318, 0.0
    %v2332 = vsel %vm567, %v2319, 0.0
    %v2333 = vadd.f32 %v2331, %v2332
    %v2334 = vsel %vm567, %v2320, 0.0
    %v2335 = vadd.f32 %v2333, %v2334
    %v2336 = vsel %vm567, %v2321, 0.0
    %v2337 = vadd.f32 %v2335, %v2336
    %v2338 = vsel %vm567, %v2322, 0.0
    %v2339 = vadd.f32 %v2337, %v2338
    %v2340 = vsel %vm567, %v2323, 0.0
    %v2341 = vadd.f32 %v2339, %v2340
    %v2342 = vsel %vm567, %v2324, 0.0
    %v2343 = vadd.f32 %v2341, %v2342
    %v2344 = vsel %vm567, %v2325, 0.0
    %v2345 = vadd.f32 %v2343, %v2344
    %v2346 = vsel %vm567, %v2326, 0.0
    %v2347 = vadd.f32 %v2345, %v2346
    %v2348 = vsel %vm567, %v2327, 0.0
    %v2349 = vadd.f32 %v2347, %v2348
    %v2350 = vsel %vm567, %v2328, 0.0
    %v2351 = vadd.f32 %v2349, %v2350
    %v2352 = vsel %vm567, %v2329, 0.0
    %v2353 = vadd.f32 %v2351, %v2352
    %v2354 = vsel %vm580, %v2330, 0.0
    %v2355 = vadd.f32 %v2353, %v2354
    %v2356 = vrot.slane %v2355, 4
    %v2357 = vadd.f32 %v2355, %v2356
    %v2358 = vrot.slane %v2357, 2
    %v2359 = vadd.f32 %v2357, %v2358
    %v2360 = vrot.slane %v2359, 1
    %v2361 = vadd.f32 %v2359, %v2360
    %v2362 = vadd.f32 %v2316, %v2361
    %s2363 = scalar_lea.vmem [#allocation2], 208
    %v2364 = vld [vmem:[%s2363] sm:$0xff]
    %v2365 = vld [vmem:[%s2363 + $0x8] sm:$0xff]
    %v2366 = vld [vmem:[%s2363 + $0x10] sm:$0xff]
    %v2367 = vld [vmem:[%s2363 + $0x18] sm:$0xff]
    %v2368 = vld [vmem:[%s2363 + $0x20] sm:$0xff]
    %v2369 = vld [vmem:[%s2363 + $0x28] sm:$0xff]
    %v2370 = vld [vmem:[%s2363 + $0x30] sm:$0xff]
    %v2371 = vld [vmem:[%s2363 + $0x38] sm:$0xff]
    %v2372 = vld [vmem:[%s2363 + $0x40] sm:$0xff]
    %v2373 = vld [vmem:[%s2363 + $0x48] sm:$0xff]
    %v2374 = vld [vmem:[%s2363 + $0x50] sm:$0xff]
    %v2375 = vld [vmem:[%s2363 + $0x58] sm:$0xff]
    %v2376 = vld [vmem:[%s2363 + $0x60] sm:$0x3]
    %v2377 = vsel %vm567, %v2364, 0.0
    %v2378 = vsel %vm567, %v2365, 0.0
    %v2379 = vadd.f32 %v2377, %v2378
    %v2380 = vsel %vm567, %v2366, 0.0
    %v2381 = vadd.f32 %v2379, %v2380
    %v2382 = vsel %vm567, %v2367, 0.0
    %v2383 = vadd.f32 %v2381, %v2382
    %v2384 = vsel %vm567, %v2368, 0.0
    %v2385 = vadd.f32 %v2383, %v2384
    %v2386 = vsel %vm567, %v2369, 0.0
    %v2387 = vadd.f32 %v2385, %v2386
    %v2388 = vsel %vm567, %v2370, 0.0
    %v2389 = vadd.f32 %v2387, %v2388
    %v2390 = vsel %vm567, %v2371, 0.0
    %v2391 = vadd.f32 %v2389, %v2390
    %v2392 = vsel %vm567, %v2372, 0.0
    %v2393 = vadd.f32 %v2391, %v2392
    %v2394 = vsel %vm567, %v2373, 0.0
    %v2395 = vadd.f32 %v2393, %v2394
    %v2396 = vsel %vm567, %v2374, 0.0
    %v2397 = vadd.f32 %v2395, %v2396
    %v2398 = vsel %vm567, %v2375, 0.0
    %v2399 = vadd.f32 %v2397, %v2398
    %v2400 = vsel %vm580, %v2376, 0.0
    %v2401 = vadd.f32 %v2399, %v2400
    %v2402 = vrot.slane %v2401, 4
    %v2403 = vadd.f32 %v2401, %v2402
    %v2404 = vrot.slane %v2403, 2
    %v2405 = vadd.f32 %v2403, %v2404
    %v2406 = vrot.slane %v2405, 1
    %v2407 = vadd.f32 %v2405, %v2406
    %v2408 = vadd.f32 %v2362, %v2407
    %s2409 = scalar_lea.vmem [#allocation2], 312
    %v2410 = vld [vmem:[%s2409] sm:$0xff]
    %v2411 = vld [vmem:[%s2409 + $0x8] sm:$0xff]
    %v2412 = vld [vmem:[%s2409 + $0x10] sm:$0xff]
    %v2413 = vld [vmem:[%s2409 + $0x18] sm:$0xff]
    %v2414 = vld [vmem:[%s2409 + $0x20] sm:$0xff]
    %v2415 = vld [vmem:[%s2409 + $0x28] sm:$0xff]
    %v2416 = vld [vmem:[%s2409 + $0x30] sm:$0xff]
    %v2417 = vld [vmem:[%s2409 + $0x38] sm:$0xff]
    %v2418 = vld [vmem:[%s2409 + $0x40] sm:$0xff]
    %v2419 = vld [vmem:[%s2409 + $0x48] sm:$0xff]
    %v2420 = vld [vmem:[%s2409 + $0x50] sm:$0xff]
    %v2421 = vld [vmem:[%s2409 + $0x58] sm:$0xff]
    %v2422 = vld [vmem:[%s2409 + $0x60] sm:$0x3]
    %v2423 = vsel %vm567, %v2410, 0.0
    %v2424 = vsel %vm567, %v2411, 0.0
    %v2425 = vadd.f32 %v2423, %v2424
    %v2426 = vsel %vm567, %v2412, 0.0
    %v2427 = vadd.f32 %v2425, %v2426
    %v2428 = vsel %vm567, %v2413, 0.0
    %v2429 = vadd.f32 %v2427, %v2428
    %v2430 = vsel %vm567, %v2414, 0.0
    %v2431 = vadd.f32 %v2429, %v2430
    %v2432 = vsel %vm567, %v2415, 0.0
    %v2433 = vadd.f32 %v2431, %v2432
    %v2434 = vsel %vm567, %v2416, 0.0
    %v2435 = vadd.f32 %v2433, %v2434
    %v2436 = vsel %vm567, %v2417, 0.0
    %v2437 = vadd.f32 %v2435, %v2436
    %v2438 = vsel %vm567, %v2418, 0.0
    %v2439 = vadd.f32 %v2437, %v2438
    %v2440 = vsel %vm567, %v2419, 0.0
    %v2441 = vadd.f32 %v2439, %v2440
    %v2442 = vsel %vm567, %v2420, 0.0
    %v2443 = vadd.f32 %v2441, %v2442
    %v2444 = vsel %vm567, %v2421, 0.0
    %v2445 = vadd.f32 %v2443, %v2444
    %v2446 = vsel %vm580, %v2422, 0.0
    %v2447 = vadd.f32 %v2445, %v2446
    %v2448 = vrot.slane %v2447, 4
    %v2449 = vadd.f32 %v2447, %v2448
    %v2450 = vrot.slane %v2449, 2
    %v2451 = vadd.f32 %v2449, %v2450
    %v2452 = vrot.slane %v2451, 1
    %v2453 = vadd.f32 %v2451, %v2452
    %v2454 = vadd.f32 %v2408, %v2453
    %v2455 = vmul.f32 %v2454, 0.0025510204
    %v2456 = vsub.f32 %v2272, %v2455
    %v2457 = vsub.f32 %v2273, %v2455
    %v2458 = vsub.f32 %v2274, %v2455
    %v2459 = vsub.f32 %v2275, %v2455
    %v2460 = vsub.f32 %v2276, %v2455
    %v2461 = vsub.f32 %v2277, %v2455
    %v2462 = vsub.f32 %v2278, %v2455
    %v2463 = vsub.f32 %v2279, %v2455
    %v2464 = vsub.f32 %v2280, %v2455
    %v2465 = vsub.f32 %v2281, %v2455
    %v2466 = vsub.f32 %v2282, %v2455
    %v2467 = vsub.f32 %v2283, %v2455
    %v2468 = vsub.f32 %v2284, %v2455
    %v2469 = vmul.f32 %v2456, %v2456
    %v2470 = vmul.f32 %v2457, %v2457
    %v2471 = vmul.f32 %v2458, %v2458
    %v2472 = vmul.f32 %v2459, %v2459
    %v2473 = vmul.f32 %v2460, %v2460
    %v2474 = vmul.f32 %v2461, %v2461
    %v2475 = vmul.f32 %v2462, %v2462
    %v2476 = vmul.f32 %v2463, %v2463
    %v2477 = vmul.f32 %v2464, %v2464
    %v2478 = vmul.f32 %v2465, %v2465
    %v2479 = vmul.f32 %v2466, %v2466
    %v2480 = vmul.f32 %v2467, %v2467
    %v2481 = vmul.f32 %v2468, %v2468
    %v2482 = vsel %vm567, %v2469, 0.0
    %v2483 = vsel %vm567, %v2470, 0.0
    %v2484 = vadd.f32 %v2482, %v2483
    %v2485 = vsel %vm567, %v2471, 0.0
    %v2486 = vadd.f32 %v2484, %v2485
    %v2487 = vsel %vm567, %v2472, 0.0
    %v2488 = vadd.f32 %v2486, %v2487
    %v2489 = vsel %vm567, %v2473, 0.0
    %v2490 = vadd.f32 %v2488, %v2489
    %v2491 = vsel %vm567, %v2474, 0.0
    %v2492 = vadd.f32 %v2490, %v2491
    %v2493 = vsel %vm567, %v2475, 0.0
    %v2494 = vadd.f32 %v2492, %v2493
    %v2495 = vsel %vm567, %v2476, 0.0
    %v2496 = vadd.f32 %v2494, %v2495
    %v2497 = vsel %vm567, %v2477, 0.0
    %v2498 = vadd.f32 %v2496, %v2497
    %v2499 = vsel %vm567, %v2478, 0.0
    %v2500 = vadd.f32 %v2498, %v2499
    %v2501 = vsel %vm567, %v2479, 0.0
    %v2502 = vadd.f32 %v2500, %v2501
    %v2503 = vsel %vm567, %v2480, 0.0
    %v2504 = vadd.f32 %v2502, %v2503
    %v2505 = vsel %vm580, %v2481, 0.0
    %v2506 = vadd.f32 %v2504, %v2505
    %v2507 = vrot.slane %v2506, 4
    %v2508 = vadd.f32 %v2506, %v2507
    %v2509 = vrot.slane %v2508, 2
    %v2510 = vadd.f32 %v2508, %v2509
    %v2511 = vrot.slane %v2510, 1
    %v2512 = vadd.f32 %v2510, %v2511
    %v2513 = vadd.f32 %v2512, 0.0
    %v2514 = vsub.f32 %v2318, %v2455
    %v2515 = vsub.f32 %v2319, %v2455
    %v2516 = vsub.f32 %v2320, %v2455
    %v2517 = vsub.f32 %v2321, %v2455
    %v2518 = vsub.f32 %v2322, %v2455
    %v2519 = vsub.f32 %v2323, %v2455
    %v2520 = vsub.f32 %v2324, %v2455
    %v2521 = vsub.f32 %v2325, %v2455
    %v2522 = vsub.f32 %v2326, %v2455
    %v2523 = vsub.f32 %v2327, %v2455
    %v2524 = vsub.f32 %v2328, %v2455
    %v2525 = vsub.f32 %v2329, %v2455
    %v2526 = vsub.f32 %v2330, %v2455
    %v2527 = vmul.f32 %v2514, %v2514
    %v2528 = vmul.f32 %v2515, %v2515
    %v2529 = vmul.f32 %v2516, %v2516
    %v2530 = vmul.f32 %v2517, %v2517
    %v2531 = vmul.f32 %v2518, %v2518
    %v2532 = vmul.f32 %v2519, %v2519
    %v2533 = vmul.f32 %v2520, %v2520
    %v2534 = vmul.f32 %v2521, %v2521
    %v2535 = vmul.f32 %v2522, %v2522
    %v2536 = vmul.f32 %v2523, %v2523
    %v2537 = vmul.f32 %v2524, %v2524
    %v2538 = vmul.f32 %v2525, %v2525
    %v2539 = vmul.f32 %v2526, %v2526
    %v2540 = vsel %vm567, %v2527, 0.0
    %v2541 = vsel %vm567, %v2528, 0.0
    %v2542 = vadd.f32 %v2540, %v2541
    %v2543 = vsel %vm567, %v2529, 0.0
    %v2544 = vadd.f32 %v2542, %v2543
    %v2545 = vsel %vm567, %v2530, 0.0
    %v2546 = vadd.f32 %v2544, %v2545
    %v2547 = vsel %vm567, %v2531, 0.0
    %v2548 = vadd.f32 %v2546, %v2547
    %v2549 = vsel %vm567, %v2532, 0.0
    %v2550 = vadd.f32 %v2548, %v2549
    %v2551 = vsel %vm567, %v2533, 0.0
    %v2552 = vadd.f32 %v2550, %v2551
    %v2553 = vsel %vm567, %v2534, 0.0
    %v2554 = vadd.f32 %v2552, %v2553
    %v2555 = vsel %vm567, %v2535, 0.0
    %v2556 = vadd.f32 %v2554, %v2555
    %v2557 = vsel %vm567, %v2536, 0.0
    %v2558 = vadd.f32 %v2556, %v2557
    %v2559 = vsel %vm567, %v2537, 0.0
    %v2560 = vadd.f32 %v2558, %v2559
    %v2561 = vsel %vm567, %v2538, 0.0
    %v2562 = vadd.f32 %v2560, %v2561
    %v2563 = vsel %vm580, %v2539, 0.0
    %v2564 = vadd.f32 %v2562, %v2563
    %v2565 = vrot.slane %v2564, 4
    %v2566 = vadd.f32 %v2564, %v2565
    %v2567 = vrot.slane %v2566, 2
    %v2568 = vadd.f32 %v2566, %v2567
    %v2569 = vrot.slane %v2568, 1
    %v2570 = vadd.f32 %v2568, %v2569
    %v2571 = vadd.f32 %v2513, %v2570
    %v2572 = vsub.f32 %v2364, %v2455
    %v2573 = vsub.f32 %v2365, %v2455
    %v2574 = vsub.f32 %v2366, %v2455
    %v2575 = vsub.f32 %v2367, %v2455
    %v2576 = vsub.f32 %v2368, %v2455
    %v2577 = vsub.f32 %v2369, %v2455
    %v2578 = vsub.f32 %v2370, %v2455
    %v2579 = vsub.f32 %v2371, %v2455
    %v2580 = vsub.f32 %v2372, %v2455
    %v2581 = vsub.f32 %v2373, %v2455
    %v2582 = vsub.f32 %v2374, %v2455
    %v2583 = vsub.f32 %v2375, %v2455
    %v2584 = vsub.f32 %v2376, %v2455
    %v2585 = vmul.f32 %v2572, %v2572
    %v2586 = vmul.f32 %v2573, %v2573
    %v2587 = vmul.f32 %v2574, %v2574
    %v2588 = vmul.f32 %v2575, %v2575
    %v2589 = vmul.f32 %v2576, %v2576
    %v2590 = vmul.f32 %v2577, %v2577
    %v2591 = vmul.f32 %v2578, %v2578
    %v2592 = vmul.f32 %v2579, %v2579
    %v2593 = vmul.f32 %v2580, %v2580
    %v2594 = vmul.f32 %v2581, %v2581
    %v2595 = vmul.f32 %v2582, %v2582
    %v2596 = vmul.f32 %v2583, %v2583
    %v2597 = vmul.f32 %v2584, %v2584
    %v2598 = vsel %vm567, %v2585, 0.0
    %v2599 = vsel %vm567, %v2586, 0.0
    %v2600 = vadd.f32 %v2598, %v2599
    %v2601 = vsel %vm567, %v2587, 0.0
    %v2602 = vadd.f32 %v2600, %v2601
    %v2603 = vsel %vm567, %v2588, 0.0
    %v2604 = vadd.f32 %v2602, %v2603
    %v2605 = vsel %vm567, %v2589, 0.0
    %v2606 = vadd.f32 %v2604, %v2605
    %v2607 = vsel %vm567, %v2590, 0.0
    %v2608 = vadd.f32 %v2606, %v2607
    %v2609 = vsel %vm567, %v2591, 0.0
    %v2610 = vadd.f32 %v2608, %v2609
    %v2611 = vsel %vm567, %v2592, 0.0
    %v2612 = vadd.f32 %v2610, %v2611
    %v2613 = vsel %vm567, %v2593, 0.0
    %v2614 = vadd.f32 %v2612, %v2613
    %v2615 = vsel %vm567, %v2594, 0.0
    %v2616 = vadd.f32 %v2614, %v2615
    %v2617 = vsel %vm567, %v2595, 0.0
    %v2618 = vadd.f32 %v2616, %v2617
    %v2619 = vsel %vm567, %v2596, 0.0
    %v2620 = vadd.f32 %v2618, %v2619
    %v2621 = vsel %vm580, %v2597, 0.0
    %v2622 = vadd.f32 %v2620, %v2621
    %v2623 = vrot.slane %v2622, 4
    %v2624 = vadd.f32 %v2622, %v2623
    %v2625 = vrot.slane %v2624, 2
    %v2626 = vadd.f32 %v2624, %v2625
    %v2627 = vrot.slane %v2626, 1
    %v2628 = vadd.f32 %v2626, %v2627
    %v2629 = vadd.f32 %v2571, %v2628
    %v2630 = vsub.f32 %v2410, %v2455
    %v2631 = vsub.f32 %v2411, %v2455
    %v2632 = vsub.f32 %v2412, %v2455
    %v2633 = vsub.f32 %v2413, %v2455
    %v2634 = vsub.f32 %v2414, %v2455
    %v2635 = vsub.f32 %v2415, %v2455
    %v2636 = vsub.f32 %v2416, %v2455
    %v2637 = vsub.f32 %v2417, %v2455
    %v2638 = vsub.f32 %v2418, %v2455
    %v2639 = vsub.f32 %v2419, %v2455
    %v2640 = vsub.f32 %v2420, %v2455
    %v2641 = vsub.f32 %v2421, %v2455
    %v2642 = vsub.f32 %v2422, %v2455
    %v2643 = vmul.f32 %v2630, %v2630
    %v2644 = vmul.f32 %v2631, %v2631
    %v2645 = vmul.f32 %v2632, %v2632
    %v2646 = vmul.f32 %v2633, %v2633
    %v2647 = vmul.f32 %v2634, %v2634
    %v2648 = vmul.f32 %v2635, %v2635
    %v2649 = vmul.f32 %v2636, %v2636
    %v2650 = vmul.f32 %v2637, %v2637
    %v2651 = vmul.f32 %v2638, %v2638
    %v2652 = vmul.f32 %v2639, %v2639
    %v2653 = vmul.f32 %v2640, %v2640
    %v2654 = vmul.f32 %v2641, %v2641
    %v2655 = vmul.f32 %v2642, %v2642
    %v2656 = vsel %vm567, %v2643, 0.0
    %v2657 = vsel %vm567, %v2644, 0.0
    %v2658 = vadd.f32 %v2656, %v2657
    %v2659 = vsel %vm567, %v2645, 0.0
    %v2660 = vadd.f32 %v2658, %v2659
    %v2661 = vsel %vm567, %v2646, 0.0
    %v2662 = vadd.f32 %v2660, %v2661
    %v2663 = vsel %vm567, %v2647, 0.0
    %v2664 = vadd.f32 %v2662, %v2663
    %v2665 = vsel %vm567, %v2648, 0.0
    %v2666 = vadd.f32 %v2664, %v2665
    %v2667 = vsel %vm567, %v2649, 0.0
    %v2668 = vadd.f32 %v2666, %v2667
    %v2669 = vsel %vm567, %v2650, 0.0
    %v2670 = vadd.f32 %v2668, %v2669
    %v2671 = vsel %vm567, %v2651, 0.0
    %v2672 = vadd.f32 %v2670, %v2671
    %v2673 = vsel %vm567, %v2652, 0.0
    %v2674 = vadd.f32 %v2672, %v2673
    %v2675 = vsel %vm567, %v2653, 0.0
    %v2676 = vadd.f32 %v2674, %v2675
    %v2677 = vsel %vm567, %v2654, 0.0
    %v2678 = vadd.f32 %v2676, %v2677
    %v2679 = vsel %vm580, %v2655, 0.0
    %v2680 = vadd.f32 %v2678, %v2679
    %v2681 = vrot.slane %v2680, 4
    %v2682 = vadd.f32 %v2680, %v2681
    %v2683 = vrot.slane %v2682, 2
    %v2684 = vadd.f32 %v2682, %v2683
    %v2685 = vrot.slane %v2684, 1
    %v2686 = vadd.f32 %v2684, %v2685
    %v2687 = vadd.f32 %v2629, %v2686
    %v2688 = vmul.f32 %v2687, 0.0025510204
    %v2689 = vld [vmem:[%s2] sm:$0x1]
    %v2690 = vadd.f32 %v2688, 1e-05
    %v2691 = vrsqrt.pop %v2690
    %v2692 = vmul.f32 %v2691, %v2690
    %v2693 = vmul.f32 %v2692, %v2691
    %v2694 = vmul.f32 0.5, %v2693
    %v2695 = vsub.f32 1.5, %v2694
    %v2696 = vmul.f32 %v2691, %v2695
    %vm2697 = vweird.f32 %v2690
    %vm2698 = vweird.f32 %v2691
    %vm2699 = vmor %vm2697, %vm2698
    %v2700 = vsel %vm2699, %v2691, %v2696
    %v2701 = vmul.f32 %v2689, %v2700
    %v2702 = vld [vmem:[%s3] sm:$0x1]
    %v2703 = vmul.f32 %v2455, %v2701
    %v2704 = vsub.f32 %v2702, %v2703
    %v2706 = vperm.slane %v2701, 0
    %v2708 = vmul.f32 %v2272, %v2706
    %v2709 = vmul.f32 %v2273, %v2706
    %v2710 = vmul.f32 %v2274, %v2706
    %v2711 = vmul.f32 %v2275, %v2706
    %v2712 = vmul.f32 %v2276, %v2706
    %v2713 = vmul.f32 %v2277, %v2706
    %v2714 = vmul.f32 %v2278, %v2706
    %v2715 = vmul.f32 %v2279, %v2706
    %v2716 = vmul.f32 %v2280, %v2706
    %v2717 = vmul.f32 %v2281, %v2706
    %v2718 = vmul.f32 %v2282, %v2706
    %v2719 = vmul.f32 %v2283, %v2706
    %v2720 = vmul.f32 %v2284, %v2706
    %v2722 = vperm.slane %v2704, 0
    %v2724 = vadd.f32 %v2708, %v2722
    %v2725 = vadd.f32 %v2709, %v2722
    %v2726 = vadd.f32 %v2710, %v2722
    %v2727 = vadd.f32 %v2711, %v2722
    %v2728 = vadd.f32 %v2712, %v2722
    %v2729 = vadd.f32 %v2713, %v2722
    %v2730 = vadd.f32 %v2714, %v2722
    %v2731 = vadd.f32 %v2715, %v2722
    %v2732 = vadd.f32 %v2716, %v2722
    %v2733 = vadd.f32 %v2717, %v2722
    %v2734 = vadd.f32 %v2718, %v2722
    %v2735 = vadd.f32 %v2719, %v2722
    %v2736 = vadd.f32 %v2720, %v2722
    %v2737 = vmul.f32 %v2318, %v2706
    %v2738 = vmul.f32 %v2319, %v2706
    %v2739 = vmul.f32 %v2320, %v2706
    %v2740 = vmul.f32 %v2321, %v2706
    %v2741 = vmul.f32 %v2322, %v2706
    %v2742 = vmul.f32 %v2323, %v2706
    %v2743 = vmul.f32 %v2324, %v2706
    %v2744 = vmul.f32 %v2325, %v2706
    %v2745 = vmul.f32 %v2326, %v2706
    %v2746 = vmul.f32 %v2327, %v2706
    %v2747 = vmul.f32 %v2328, %v2706
    %v2748 = vmul.f32 %v2329, %v2706
    %v2749 = vmul.f32 %v2330, %v2706
    %v2750 = vadd.f32 %v2737, %v2722
    %v2751 = vadd.f32 %v2738, %v2722
    %v2752 = vadd.f32 %v2739, %v2722
    %v2753 = vadd.f32 %v2740, %v2722
    %v2754 = vadd.f32 %v2741, %v2722
    %v2755 = vadd.f32 %v2742, %v2722
    %v2756 = vadd.f32 %v2743, %v2722
    %v2757 = vadd.f32 %v2744, %v2722
    %v2758 = vadd.f32 %v2745, %v2722
    %v2759 = vadd.f32 %v2746, %v2722
    %v2760 = vadd.f32 %v2747, %v2722
    %v2761 = vadd.f32 %v2748, %v2722
    %v2762 = vadd.f32 %v2749, %v2722
    %v2763 = vmax.f32 %v2724, %v2750
    %v2764 = vmax.f32 %v2725, %v2751
    %v2765 = vmax.f32 %v2726, %v2752
    %v2766 = vmax.f32 %v2727, %v2753
    %v2767 = vmax.f32 %v2728, %v2754
    %v2768 = vmax.f32 %v2729, %v2755
    %v2769 = vmax.f32 %v2730, %v2756
    %v2770 = vmax.f32 %v2731, %v2757
    %v2771 = vmax.f32 %v2732, %v2758
    %v2772 = vmax.f32 %v2733, %v2759
    %v2773 = vmax.f32 %v2734, %v2760
    %v2774 = vmax.f32 %v2735, %v2761
    %v2775 = vmax.f32 %v2736, %v2762
    %v2776 = vmul.f32 %v2364, %v2706
    %v2777 = vmul.f32 %v2365, %v2706
    %v2778 = vmul.f32 %v2366, %v2706
    %v2779 = vmul.f32 %v2367, %v2706
    %v2780 = vmul.f32 %v2368, %v2706
    %v2781 = vmul.f32 %v2369, %v2706
    %v2782 = vmul.f32 %v2370, %v2706
    %v2783 = vmul.f32 %v2371, %v2706
    %v2784 = vmul.f32 %v2372, %v2706
    %v2785 = vmul.f32 %v2373, %v2706
    %v2786 = vmul.f32 %v2374, %v2706
    %v2787 = vmul.f32 %v2375, %v2706
    %v2788 = vmul.f32 %v2376, %v2706
    %v2789 = vadd.f32 %v2776, %v2722
    %v2790 = vadd.f32 %v2777, %v2722
    %v2791 = vadd.f32 %v2778, %v2722
    %v2792 = vadd.f32 %v2779, %v2722
    %v2793 = vadd.f32 %v2780, %v2722
    %v2794 = vadd.f32 %v2781, %v2722
    %v2795 = vadd.f32 %v2782, %v2722
    %v2796 = vadd.f32 %v2783, %v2722
    %v2797 = vadd.f32 %v2784, %v2722
    %v2798 = vadd.f32 %v2785, %v2722
    %v2799 = vadd.f32 %v2786, %v2722
    %v2800 = vadd.f32 %v2787, %v2722
    %v2801 = vadd.f32 %v2788, %v2722
    %v2802 = vmax.f32 %v2763, %v2789
    %v2803 = vmax.f32 %v2764, %v2790
    %v2804 = vmax.f32 %v2765, %v2791
    %v2805 = vmax.f32 %v2766, %v2792
    %v2806 = vmax.f32 %v2767, %v2793
    %v2807 = vmax.f32 %v2768, %v2794
    %v2808 = vmax.f32 %v2769, %v2795
    %v2809 = vmax.f32 %v2770, %v2796
    %v2810 = vmax.f32 %v2771, %v2797
    %v2811 = vmax.f32 %v2772, %v2798
    %v2812 = vmax.f32 %v2773, %v2799
    %v2813 = vmax.f32 %v2774, %v2800
    %v2814 = vmax.f32 %v2775, %v2801
    %v2815 = vmul.f32 %v2410, %v2706
    %v2816 = vmul.f32 %v2411, %v2706
    %v2817 = vmul.f32 %v2412, %v2706
    %v2818 = vmul.f32 %v2413, %v2706
    %v2819 = vmul.f32 %v2414, %v2706
    %v2820 = vmul.f32 %v2415, %v2706
    %v2821 = vmul.f32 %v2416, %v2706
    %v2822 = vmul.f32 %v2417, %v2706
    %v2823 = vmul.f32 %v2418, %v2706
    %v2824 = vmul.f32 %v2419, %v2706
    %v2825 = vmul.f32 %v2420, %v2706
    %v2826 = vmul.f32 %v2421, %v2706
    %v2827 = vmul.f32 %v2422, %v2706
    %v2828 = vadd.f32 %v2815, %v2722
    %v2829 = vadd.f32 %v2816, %v2722
    %v2830 = vadd.f32 %v2817, %v2722
    %v2831 = vadd.f32 %v2818, %v2722
    %v2832 = vadd.f32 %v2819, %v2722
    %v2833 = vadd.f32 %v2820, %v2722
    %v2834 = vadd.f32 %v2821, %v2722
    %v2835 = vadd.f32 %v2822, %v2722
    %v2836 = vadd.f32 %v2823, %v2722
    %v2837 = vadd.f32 %v2824, %v2722
    %v2838 = vadd.f32 %v2825, %v2722
    %v2839 = vadd.f32 %v2826, %v2722
    %v2840 = vadd.f32 %v2827, %v2722
    %v2841 = vmax.f32 %v2802, %v2828
    %v2842 = vmax.f32 %v2803, %v2829
    %v2843 = vmax.f32 %v2804, %v2830
    %v2844 = vmax.f32 %v2805, %v2831
    %v2845 = vmax.f32 %v2806, %v2832
    %v2846 = vmax.f32 %v2807, %v2833
    %v2847 = vmax.f32 %v2808, %v2834
    %v2848 = vmax.f32 %v2809, %v2835
    %v2849 = vmax.f32 %v2810, %v2836
    %v2850 = vmax.f32 %v2811, %v2837
    %v2851 = vmax.f32 %v2812, %v2838
    %v2852 = vmax.f32 %v2813, %v2839
    %v2853 = vmax.f32 %v2814, %v2840
    %v2854 = vmax.f32 %v2841, 0.0
    %v2855 = vmax.f32 %v2842, 0.0
    %v2856 = vmax.f32 %v2843, 0.0
    %v2857 = vmax.f32 %v2844, 0.0
    %v2858 = vmax.f32 %v2845, 0.0
    %v2859 = vmax.f32 %v2846, 0.0
    %v2860 = vmax.f32 %v2847, 0.0
    %v2861 = vmax.f32 %v2848, 0.0
    %v2862 = vmax.f32 %v2849, 0.0
    %v2863 = vmax.f32 %v2850, 0.0
    %v2864 = vmax.f32 %v2851, 0.0
    %v2865 = vmax.f32 %v2852, 0.0
    %v2866 = vmax.f32 %v2853, 0.0
    %v2867 = vpack.c.bf16 %v2854, %v2854
    %v2868 = vpack.c.bf16 %v2855, %v2855
    %v2869 = vpack.c.bf16 %v2856, %v2856
    %v2870 = vpack.c.bf16 %v2857, %v2857
    %v2871 = vpack.c.bf16 %v2858, %v2858
    %v2872 = vpack.c.bf16 %v2859, %v2859
    %v2873 = vpack.c.bf16 %v2860, %v2860
    %v2874 = vpack.c.bf16 %v2861, %v2861
    %v2875 = vpack.c.bf16 %v2862, %v2862
    %v2876 = vpack.c.bf16 %v2863, %v2863
    %v2877 = vpack.c.bf16 %v2864, %v2864
    %v2878 = vpack.c.bf16 %v2865, %v2865
    %v2879 = vpack.c.bf16 %v2866, %v2866
    %vm2880 = vcmask 257024
    %2881 = vst.msk [vmem:[%s4] sm:$0xf] %vm2880, %v2867
    %2882 = vst.msk [vmem:[%s4 + $0x4] sm:$0xf] %vm2880, %v2868
    %2883 = vst.msk [vmem:[%s4 + $0x8] sm:$0xf] %vm2880, %v2869
    %2884 = vst.msk [vmem:[%s4 + $0xc] sm:$0xf] %vm2880, %v2870
    %2885 = vst.msk [vmem:[%s4 + $0x10] sm:$0xf] %vm2880, %v2871
    %2886 = vst.msk [vmem:[%s4 + $0x14] sm:$0xf] %vm2880, %v2872
    %2887 = vst.msk [vmem:[%s4 + $0x18] sm:$0xf] %vm2880, %v2873
    %2888 = vst.msk [vmem:[%s4 + $0x1c] sm:$0xf] %vm2880, %v2874
    %2889 = vst.msk [vmem:[%s4 + $0x20] sm:$0xf] %vm2880, %v2875
    %2890 = vst.msk [vmem:[%s4 + $0x24] sm:$0xf] %vm2880, %v2876
    %2891 = vst.msk [vmem:[%s4 + $0x28] sm:$0xf] %vm2880, %v2877
    %2892 = vst.msk [vmem:[%s4 + $0x2c] sm:$0xf] %vm2880, %v2878
    %vm2893 = vcmask 253952
    %2894 = vst.msk [vmem:[%s4 + $0x30] sm:$0x1] %vm2893, %v2879
  $region21: #{convnet_forward.4} parent=0 // pred_fallthru
    _
  // Predicated region
  $region22: #{convnet_forward.4} parent=0 // pred_check
    _
  $region23: #{convnet_forward.4} parent=0 // pred_check_branch
    %2896 = sbr.rel (0) target = $region25
  $region24: #{convnet_forward.4} parent=0 // pred_region
    _
  $region25: #{convnet_forward.4} parent=0 // pred_fallthru
    _
  // Predicated region
  $region26: #{convnet_forward.4} parent=0 // pred_check
    _
  $region27: #{convnet_forward.4} parent=0 // pred_check_branch
    %2898 = sbr.rel (0) target = $region29
  $region28: #{convnet_forward.4} parent=0 // pred_region
    _
  $region29: #{convnet_forward.4} parent=0 // pred_fallthru
    _

// kernel: convnet_forward.5
$region0: #{convnet_forward.5}
  #allocation0 [shape = 'u32[]', space=smem, size = 0x4, offset = 0x4, fixed_abs, tag = 'smem constant byte address 0x4 - core index']
  #allocation1 [shape = 'u32[72,128]{1,0:T(1,128)}', space=vmem, size = 0x9000, scoped, tag = 'internal scratch']
  %s0 = inlined_call_operand.vmem [shape: bf16[2,1568], index: 0, kind: input, shape index: {}]
  %s1 = inlined_call_operand.vmem [shape: bf16[1568,128], index: 1, kind: input, shape index: {}]
  %s2 = inlined_call_operand.vmem [shape: f32[1,128], index: 2, kind: input, shape index: {}]
  %s3 = inlined_call_operand.hbm [shape: f32[2,128], index: 3, kind: output, shape index: {}]
  %s4 = sld [smem:[#allocation0]]
  $region22: #{convnet_forward.5} parent=0
    _
  %s6 = ssub.s32 1, %s4
  %s7 = scalar_select 0, %s6, %s4
  $region1: #{convnet_forward.5} parent=0
    #allocation2 [shape = 'u8[1024]{0}', space=vmem, size = 0x400, scoped, tag = 'output window, operand 0, single buffered']
    #allocation3 [shape = 's32[1]{0}', space=sflag, size = 0x4, scoped, tag = 'scoped memory for convnet_forward.5']
    %8 = vsyncpa [#allocation3], 0
    // Predicated region
    $region2: #{convnet_forward.5} parent=1 // pred_check
      _
    $region3: #{convnet_forward.5} parent=1 // pred_check_branch
      %10 = sbr.rel (0) target = $region5
    $region4: #{convnet_forward.5} parent=1 // pred_region
      _
    $region5: #{convnet_forward.5} parent=1 // pred_fallthru
      _
    // Predicated region
    $region6: #{convnet_forward.5} parent=1 // pred_check
      _
    $region7: #{convnet_forward.5} parent=1 // pred_check_branch
      %12 = sbr.rel (0) target = $region9
    $region8: #{convnet_forward.5} parent=1 // pred_region
      _
    $region9: #{convnet_forward.5} parent=1 // pred_fallthru
      _
    // Predicated region
    $region10: #{convnet_forward.5} parent=1 // pred_check
      _
    $region11: #{convnet_forward.5} parent=1 // pred_check_branch
      %14 = sbr.rel (0) target = $region13
    $region12: #{convnet_forward.5} parent=1 // pred_region
      _
    $region13: #{convnet_forward.5} parent=1 // pred_fallthru
      _
    %v16 = vld [vmem:[%s0] sm:$0xff]
    %v17 = vld [vmem:[%s0 + $0x8] sm:$0x1f]
    %v18 = vld [vmem:[%s1] sm:$0xf]
    %v19 = vld [vmem:[%s1 + $0x4] sm:$0xf]
    %v20 = vld [vmem:[%s1 + $0x8] sm:$0xf]
    %v21 = vld [vmem:[%s1 + $0xc] sm:$0xf]
    %v22 = vld [vmem:[%s1 + $0x10] sm:$0xf]
    %v23 = vld [vmem:[%s1 + $0x14] sm:$0xf]
    %v24 = vld [vmem:[%s1 + $0x18] sm:$0xf]
    %v25 = vld [vmem:[%s1 + $0x1c] sm:$0xf]
    %v26 = vld [vmem:[%s1 + $0x20] sm:$0xf]
    %v27 = vld [vmem:[%s1 + $0x24] sm:$0xf]
    %v28 = vld [vmem:[%s1 + $0x28] sm:$0xf]
    %v29 = vld [vmem:[%s1 + $0x2c] sm:$0xf]
    %v30 = vld [vmem:[%s1 + $0x30] sm:$0xf]
    %v31 = vld [vmem:[%s1 + $0x34] sm:$0xf]
    %v32 = vld [vmem:[%s1 + $0x38] sm:$0xf]
    %v33 = vld [vmem:[%s1 + $0x3c] sm:$0xf]
    %v34 = vld [vmem:[%s1 + $0x40] sm:$0xf]
    %v35 = vld [vmem:[%s1 + $0x44] sm:$0xf]
    %v36 = vld [vmem:[%s1 + $0x48] sm:$0xf]
    %v37 = vld [vmem:[%s1 + $0x4c] sm:$0xf]
    %v38 = vld [vmem:[%s1 + $0x50] sm:$0xf]
    %v39 = vld [vmem:[%s1 + $0x54] sm:$0xf]
    %v40 = vld [vmem:[%s1 + $0x58] sm:$0xf]
    %v41 = vld [vmem:[%s1 + $0x5c] sm:$0xf]
    %v42 = vld [vmem:[%s1 + $0x60] sm:$0xf]
    %v43 = vld [vmem:[%s1 + $0x64] sm:$0xf]
    %v44 = vld [vmem:[%s1 + $0x68] sm:$0xf]
    %v45 = vld [vmem:[%s1 + $0x6c] sm:$0xf]
    %v46 = vld [vmem:[%s1 + $0x70] sm:$0xf]
    %v47 = vld [vmem:[%s1 + $0x74] sm:$0xf]
    %v48 = vld [vmem:[%s1 + $0x78] sm:$0xf]
    %v49 = vld [vmem:[%s1 + $0x7c] sm:$0xf]
    %v50 = vld [vmem:[%s1 + $0x80] sm:$0xf]
    %v51 = vld [vmem:[%s1 + $0x84] sm:$0xf]
    %v52 = vld [vmem:[%s1 + $0x88] sm:$0xf]
    %v53 = vld [vmem:[%s1 + $0x8c] sm:$0xf]
    %v54 = vld [vmem:[%s1 + $0x90] sm:$0xf]
    %v55 = vld [vmem:[%s1 + $0x94] sm:$0xf]
    %v56 = vld [vmem:[%s1 + $0x98] sm:$0xf]
    %v57 = vld [vmem:[%s1 + $0x9c] sm:$0xf]
    %v58 = vld [vmem:[%s1 + $0xa0] sm:$0xf]
    %v59 = vld [vmem:[%s1 + $0xa4] sm:$0xf]
    %v60 = vld [vmem:[%s1 + $0xa8] sm:$0xf]
    %v61 = vld [vmem:[%s1 + $0xac] sm:$0xf]
    %v62 = vld [vmem:[%s1 + $0xb0] sm:$0xf]
    %v63 = vld [vmem:[%s1 + $0xb4] sm:$0xf]
    %v64 = vld [vmem:[%s1 + $0xb8] sm:$0xf]
    %v65 = vld [vmem:[%s1 + $0xbc] sm:$0xf]
    %v66 = vld [vmem:[%s1 + $0xc0] sm:$0xf]
    %v67 = vld [vmem:[%s1 + $0xc4] sm:$0xf]
    %v68 = vld [vmem:[%s1 + $0xc8] sm:$0xf]
    %v69 = vld [vmem:[%s1 + $0xcc] sm:$0xf]
    %v70 = vld [vmem:[%s1 + $0xd0] sm:$0xf]
    %v71 = vld [vmem:[%s1 + $0xd4] sm:$0xf]
    %v72 = vld [vmem:[%s1 + $0xd8] sm:$0xf]
    %v73 = vld [vmem:[%s1 + $0xdc] sm:$0xf]
    %v74 = vld [vmem:[%s1 + $0xe0] sm:$0xf]
    %v75 = vld [vmem:[%s1 + $0xe4] sm:$0xf]
    %v76 = vld [vmem:[%s1 + $0xe8] sm:$0xf]
    %v77 = vld [vmem:[%s1 + $0xec] sm:$0xf]
    %v78 = vld [vmem:[%s1 + $0xf0] sm:$0xf]
    %v79 = vld [vmem:[%s1 + $0xf4] sm:$0xf]
    %v80 = vld [vmem:[%s1 + $0xf8] sm:$0xf]
    %v81 = vld [vmem:[%s1 + $0xfc] sm:$0xf]
    %v82 = vld [vmem:[%s1 + $0x100] sm:$0xf]
    %v83 = vld [vmem:[%s1 + $0x104] sm:$0xf]
    %v84 = vld [vmem:[%s1 + $0x108] sm:$0xf]
    %v85 = vld [vmem:[%s1 + $0x10c] sm:$0xf]
    %v86 = vld [vmem:[%s1 + $0x110] sm:$0xf]
    %v87 = vld [vmem:[%s1 + $0x114] sm:$0xf]
    %v88 = vld [vmem:[%s1 + $0x118] sm:$0xf]
    %v89 = vld [vmem:[%s1 + $0x11c] sm:$0xf]
    %v90 = vld [vmem:[%s1 + $0x120] sm:$0xf]
    %v91 = vld [vmem:[%s1 + $0x124] sm:$0xf]
    %v92 = vld [vmem:[%s1 + $0x128] sm:$0xf]
    %v93 = vld [vmem:[%s1 + $0x12c] sm:$0xf]
    %v94 = vld [vmem:[%s1 + $0x130] sm:$0xf]
    %v95 = vld [vmem:[%s1 + $0x134] sm:$0xf]
    %v96 = vld [vmem:[%s1 + $0x138] sm:$0xf]
    %v97 = vld [vmem:[%s1 + $0x13c] sm:$0xf]
    %v98 = vld [vmem:[%s1 + $0x140] sm:$0xf]
    %v99 = vld [vmem:[%s1 + $0x144] sm:$0xf]
    %v100 = vld [vmem:[%s1 + $0x148] sm:$0xf]
    %v101 = vld [vmem:[%s1 + $0x14c] sm:$0xf]
    %v102 = vld [vmem:[%s1 + $0x150] sm:$0xf]
    %v103 = vld [vmem:[%s1 + $0x154] sm:$0xf]
    %v104 = vld [vmem:[%s1 + $0x158] sm:$0xf]
    %v105 = vld [vmem:[%s1 + $0x15c] sm:$0xf]
    %v106 = vld [vmem:[%s1 + $0x160] sm:$0xf]
    %v107 = vld [vmem:[%s1 + $0x164] sm:$0xf]
    %v108 = vld [vmem:[%s1 + $0x168] sm:$0xf]
    %v109 = vld [vmem:[%s1 + $0x16c] sm:$0xf]
    %v110 = vld [vmem:[%s1 + $0x170] sm:$0xf]
    %v111 = vld [vmem:[%s1 + $0x174] sm:$0xf]
    %v112 = vld [vmem:[%s1 + $0x178] sm:$0xf]
    %v113 = vld [vmem:[%s1 + $0x17c] sm:$0xf]
    %v114 = vld [vmem:[%s1 + $0x180] sm:$0xf]
    %v115 = vld [vmem:[%s1 + $0x184] sm:$0xf]
    %v116 = vld [vmem:[%s1 + $0x188] sm:$0xf]
    %v117 = vld [vmem:[%s1 + $0x18c] sm:$0xf]
    %v118 = vld [vmem:[%s1 + $0x190] sm:$0xf]
    %v119 = vld [vmem:[%s1 + $0x194] sm:$0xf]
    %v120 = vld [vmem:[%s1 + $0x198] sm:$0xf]
    %v121 = vld [vmem:[%s1 + $0x19c] sm:$0xf]
    %v122 = vld [vmem:[%s1 + $0x1a0] sm:$0xf]
    %v123 = vld [vmem:[%s1 + $0x1a4] sm:$0xf]
    %v124 = vld [vmem:[%s1 + $0x1a8] sm:$0xf]
    %v125 = vld [vmem:[%s1 + $0x1ac] sm:$0xf]
    %v126 = vld [vmem:[%s1 + $0x1b0] sm:$0xf]
    %v127 = vld [vmem:[%s1 + $0x1b4] sm:$0xf]
    %v128 = vld [vmem:[%s1 + $0x1b8] sm:$0xf]
    %v129 = vld [vmem:[%s1 + $0x1bc] sm:$0xf]
    %v130 = vld [vmem:[%s1 + $0x1c0] sm:$0xf]
    %v131 = vld [vmem:[%s1 + $0x1c4] sm:$0xf]
    %v132 = vld [vmem:[%s1 + $0x1c8] sm:$0xf]
    %v133 = vld [vmem:[%s1 + $0x1cc] sm:$0xf]
    %v134 = vld [vmem:[%s1 + $0x1d0] sm:$0xf]
    %v135 = vld [vmem:[%s1 + $0x1d4] sm:$0xf]
    %v136 = vld [vmem:[%s1 + $0x1d8] sm:$0xf]
    %v137 = vld [vmem:[%s1 + $0x1dc] sm:$0xf]
    %v138 = vld [vmem:[%s1 + $0x1e0] sm:$0xf]
    %v139 = vld [vmem:[%s1 + $0x1e4] sm:$0xf]
    %v140 = vld [vmem:[%s1 + $0x1e8] sm:$0xf]
    %v141 = vld [vmem:[%s1 + $0x1ec] sm:$0xf]
    %v142 = vld [vmem:[%s1 + $0x1f0] sm:$0xf]
    %v143 = vld [vmem:[%s1 + $0x1f4] sm:$0xf]
    %v144 = vld [vmem:[%s1 + $0x1f8] sm:$0xf]
    %v145 = vld [vmem:[%s1 + $0x1fc] sm:$0xf]
    %v146 = vld [vmem:[%s1 + $0x200] sm:$0xf]
    %v147 = vld [vmem:[%s1 + $0x204] sm:$0xf]
    %v148 = vld [vmem:[%s1 + $0x208] sm:$0xf]
    %v149 = vld [vmem:[%s1 + $0x20c] sm:$0xf]
    %v150 = vld [vmem:[%s1 + $0x210] sm:$0xf]
    %v151 = vld [vmem:[%s1 + $0x214] sm:$0xf]
    %v152 = vld [vmem:[%s1 + $0x218] sm:$0xf]
    %v153 = vld [vmem:[%s1 + $0x21c] sm:$0xf]
    %v154 = vld [vmem:[%s1 + $0x220] sm:$0xf]
    %v155 = vld [vmem:[%s1 + $0x224] sm:$0xf]
    %v156 = vld [vmem:[%s1 + $0x228] sm:$0xf]
    %v157 = vld [vmem:[%s1 + $0x22c] sm:$0xf]
    %v158 = vld [vmem:[%s1 + $0x230] sm:$0xf]
    %v159 = vld [vmem:[%s1 + $0x234] sm:$0xf]
    %v160 = vld [vmem:[%s1 + $0x238] sm:$0xf]
    %v161 = vld [vmem:[%s1 + $0x23c] sm:$0xf]
    %v162 = vld [vmem:[%s1 + $0x240] sm:$0xf]
    %v163 = vld [vmem:[%s1 + $0x244] sm:$0xf]
    %v164 = vld [vmem:[%s1 + $0x248] sm:$0xf]
    %v165 = vld [vmem:[%s1 + $0x24c] sm:$0xf]
    %v166 = vld [vmem:[%s1 + $0x250] sm:$0xf]
    %v167 = vld [vmem:[%s1 + $0x254] sm:$0xf]
    %v168 = vld [vmem:[%s1 + $0x258] sm:$0xf]
    %v169 = vld [vmem:[%s1 + $0x25c] sm:$0xf]
    %v170 = vld [vmem:[%s1 + $0x260] sm:$0xf]
    %v171 = vld [vmem:[%s1 + $0x264] sm:$0xf]
    %v172 = vld [vmem:[%s1 + $0x268] sm:$0xf]
    %v173 = vld [vmem:[%s1 + $0x26c] sm:$0xf]
    %v174 = vld [vmem:[%s1 + $0x270] sm:$0xf]
    %v175 = vld [vmem:[%s1 + $0x274] sm:$0xf]
    %v176 = vld [vmem:[%s1 + $0x278] sm:$0xf]
    %v177 = vld [vmem:[%s1 + $0x27c] sm:$0xf]
    %v178 = vld [vmem:[%s1 + $0x280] sm:$0xf]
    %v179 = vld [vmem:[%s1 + $0x284] sm:$0xf]
    %v180 = vld [vmem:[%s1 + $0x288] sm:$0xf]
    %v181 = vld [vmem:[%s1 + $0x28c] sm:$0xf]
    %v182 = vld [vmem:[%s1 + $0x290] sm:$0xf]
    %v183 = vld [vmem:[%s1 + $0x294] sm:$0xf]
    %v184 = vld [vmem:[%s1 + $0x298] sm:$0xf]
    %v185 = vld [vmem:[%s1 + $0x29c] sm:$0xf]
    %v186 = vld [vmem:[%s1 + $0x2a0] sm:$0xf]
    %v187 = vld [vmem:[%s1 + $0x2a4] sm:$0xf]
    %v188 = vld [vmem:[%s1 + $0x2a8] sm:$0xf]
    %v189 = vld [vmem:[%s1 + $0x2ac] sm:$0xf]
    %v190 = vld [vmem:[%s1 + $0x2b0] sm:$0xf]
    %v191 = vld [vmem:[%s1 + $0x2b4] sm:$0xf]
    %v192 = vld [vmem:[%s1 + $0x2b8] sm:$0xf]
    %v193 = vld [vmem:[%s1 + $0x2bc] sm:$0xf]
    %v194 = vld [vmem:[%s1 + $0x2c0] sm:$0xf]
    %v195 = vld [vmem:[%s1 + $0x2c4] sm:$0xf]
    %v196 = vld [vmem:[%s1 + $0x2c8] sm:$0xf]
    %v197 = vld [vmem:[%s1 + $0x2cc] sm:$0xf]
    %v198 = vld [vmem:[%s1 + $0x2d0] sm:$0xf]
    %v199 = vld [vmem:[%s1 + $0x2d4] sm:$0xf]
    %v200 = vld [vmem:[%s1 + $0x2d8] sm:$0xf]
    %v201 = vld [vmem:[%s1 + $0x2dc] sm:$0xf]
    %v202 = vld [vmem:[%s1 + $0x2e0] sm:$0xf]
    %v203 = vld [vmem:[%s1 + $0x2e4] sm:$0xf]
    %v204 = vld [vmem:[%s1 + $0x2e8] sm:$0xf]
    %v205 = vld [vmem:[%s1 + $0x2ec] sm:$0xf]
    %v206 = vld [vmem:[%s1 + $0x2f0] sm:$0xf]
    %v207 = vld [vmem:[%s1 + $0x2f4] sm:$0xf]
    %v208 = vld [vmem:[%s1 + $0x2f8] sm:$0xf]
    %v209 = vld [vmem:[%s1 + $0x2fc] sm:$0xf]
    %v210 = vld [vmem:[%s1 + $0x300] sm:$0xf]
    %v211 = vld [vmem:[%s1 + $0x304] sm:$0xf]
    %v212 = vld [vmem:[%s1 + $0x308] sm:$0xf]
    %v213 = vld [vmem:[%s1 + $0x30c] sm:$0xf]
    %v214 = vld [vmem:[%s2] sm:$0x1]
    %v216 = vperm.slane %v214, 0
    %219 = vst [vmem:[#allocation1] ss:$9 sm:$0xff] %v16
    %v220 = vld [vmem:[#allocation1] sm:$0xff]
    %v221 = vld [vmem:[#allocation1 + $0x9] sm:$0xff]
    %v222 = vld [vmem:[#allocation1 + $0x12] sm:$0xff]
    %v223 = vld [vmem:[#allocation1 + $0x1b] sm:$0xff]
    %v224 = vld [vmem:[#allocation1 + $0x24] sm:$0xff]
    %v225 = vld [vmem:[#allocation1 + $0x2d] sm:$0xff]
    %v226 = vld [vmem:[#allocation1 + $0x36] sm:$0xff]
    %v227 = vld [vmem:[#allocation1 + $0x3f] sm:$0xff]
    %229 = vst [vmem:[#allocation1] ss:$9 sm:$0xff] %v17
    %v230 = vld [vmem:[#allocation1] sm:$0xff]
    %v231 = vld [vmem:[#allocation1 + $0x9] sm:$0xff]
    %v232 = vld [vmem:[#allocation1 + $0x12] sm:$0xff]
    %v233 = vld [vmem:[#allocation1 + $0x1b] sm:$0xff]
    %v234 = vld [vmem:[#allocation1 + $0x24] sm:$0xff]
    %v443 = vunpack.c.l.b16 %v18
    %v444 = vunpack.c.l.b16 %v19
    %v445 = vunpack.c.l.b16 %v20
    %v446 = vunpack.c.l.b16 %v21
    %v447 = vunpack.c.l.b16 %v22
    %v448 = vunpack.c.l.b16 %v23
    %v449 = vunpack.c.l.b16 %v24
    %v450 = vunpack.c.l.b16 %v25
    %v451 = vunpack.c.l.b16 %v26
    %v452 = vunpack.c.l.b16 %v27
    %v453 = vunpack.c.l.b16 %v28
    %v454 = vunpack.c.l.b16 %v29
    %v455 = vunpack.c.l.b16 %v30
    %v456 = vunpack.c.l.b16 %v31
    %v457 = vunpack.c.l.b16 %v32
    %v458 = vunpack.c.l.b16 %v33
    %v459 = vunpack.c.l.b16 %v34
    %v460 = vunpack.c.l.b16 %v35
    %v461 = vunpack.c.l.b16 %v36
    %v462 = vunpack.c.l.b16 %v37
    %v463 = vunpack.c.l.b16 %v38
    %v464 = vunpack.c.l.b16 %v39
    %v465 = vunpack.c.l.b16 %v40
    %v466 = vunpack.c.l.b16 %v41
    %v467 = vunpack.c.l.b16 %v42
    %v468 = vunpack.c.l.b16 %v43
    %v469 = vunpack.c.l.b16 %v44
    %v470 = vunpack.c.l.b16 %v45
    %v471 = vunpack.c.l.b16 %v46
    %v472 = vunpack.c.l.b16 %v47
    %v473 = vunpack.c.l.b16 %v48
    %v474 = vunpack.c.l.b16 %v49
    %v475 = vunpack.c.l.b16 %v50
    %v476 = vunpack.c.l.b16 %v51
    %v477 = vunpack.c.l.b16 %v52
    %v478 = vunpack.c.l.b16 %v53
    %v479 = vunpack.c.l.b16 %v54
    %v480 = vunpack.c.l.b16 %v55
    %v481 = vunpack.c.l.b16 %v56
    %v482 = vunpack.c.l.b16 %v57
    %v483 = vunpack.c.l.b16 %v58
    %v484 = vunpack.c.l.b16 %v59
    %v485 = vunpack.c.l.b16 %v60
    %v486 = vunpack.c.l.b16 %v61
    %v487 = vunpack.c.l.b16 %v62
    %v488 = vunpack.c.l.b16 %v63
    %v489 = vunpack.c.l.b16 %v64
    %v490 = vunpack.c.l.b16 %v65
    %v491 = vunpack.c.l.b16 %v66
    %v492 = vunpack.c.l.b16 %v67
    %v493 = vunpack.c.l.b16 %v68
    %v494 = vunpack.c.l.b16 %v69
    %v495 = vunpack.c.l.b16 %v70
    %v496 = vunpack.c.l.b16 %v71
    %v497 = vunpack.c.l.b16 %v72
    %v498 = vunpack.c.l.b16 %v73
    %v499 = vunpack.c.l.b16 %v74
    %v500 = vunpack.c.l.b16 %v75
    %v501 = vunpack.c.l.b16 %v76
    %v502 = vunpack.c.l.b16 %v77
    %v503 = vunpack.c.l.b16 %v78
    %v504 = vunpack.c.l.b16 %v79
    %v505 = vunpack.c.l.b16 %v80
    %v506 = vunpack.c.l.b16 %v81
    %v507 = vunpack.c.l.b16 %v82
    %v508 = vunpack.c.l.b16 %v83
    %v509 = vunpack.c.l.b16 %v84
    %v510 = vunpack.c.l.b16 %v85
    %v511 = vunpack.c.l.b16 %v86
    %v512 = vunpack.c.l.b16 %v87
    %v513 = vunpack.c.l.b16 %v88
    %v514 = vunpack.c.l.b16 %v89
    %v515 = vunpack.c.l.b16 %v90
    %v516 = vunpack.c.l.b16 %v91
    %v517 = vunpack.c.l.b16 %v92
    %v518 = vunpack.c.l.b16 %v93
    %v519 = vunpack.c.l.b16 %v94
    %v520 = vunpack.c.l.b16 %v95
    %v521 = vunpack.c.l.b16 %v96
    %v522 = vunpack.c.l.b16 %v97
    %v523 = vunpack.c.l.b16 %v98
    %v524 = vunpack.c.l.b16 %v99
    %v525 = vunpack.c.l.b16 %v100
    %v526 = vunpack.c.l.b16 %v101
    %v527 = vunpack.c.l.b16 %v102
    %v528 = vunpack.c.l.b16 %v103
    %v529 = vunpack.c.l.b16 %v104
    %v530 = vunpack.c.l.b16 %v105
    %v531 = vunpack.c.l.b16 %v106
    %v532 = vunpack.c.l.b16 %v107
    %v533 = vunpack.c.l.b16 %v108
    %v534 = vunpack.c.l.b16 %v109
    %v535 = vunpack.c.l.b16 %v110
    %v536 = vunpack.c.l.b16 %v111
    %v537 = vunpack.c.l.b16 %v112
    %v538 = vunpack.c.l.b16 %v113
    %v539 = vunpack.c.l.b16 %v114
    %v540 = vunpack.c.l.b16 %v115
    %v541 = vunpack.c.l.b16 %v116
    %v542 = vunpack.c.l.b16 %v117
    %v543 = vunpack.c.l.b16 %v118
    %v544 = vunpack.c.l.b16 %v119
    %v545 = vunpack.c.l.b16 %v120
    %v546 = vunpack.c.l.b16 %v121
    %v547 = vunpack.c.l.b16 %v122
    %v548 = vunpack.c.l.b16 %v123
    %v549 = vunpack.c.l.b16 %v124
    %v550 = vunpack.c.l.b16 %v125
    %v551 = vunpack.c.l.b16 %v126
    %v552 = vunpack.c.l.b16 %v127
    %v553 = vunpack.c.l.b16 %v128
    %v554 = vunpack.c.l.b16 %v129
    %v555 = vunpack.c.l.b16 %v130
    %v556 = vunpack.c.l.b16 %v131
    %v557 = vunpack.c.l.b16 %v132
    %v558 = vunpack.c.l.b16 %v133
    %v559 = vunpack.c.l.b16 %v134
    %v560 = vunpack.c.l.b16 %v135
    %v561 = vunpack.c.l.b16 %v136
    %v562 = vunpack.c.l.b16 %v137
    %v563 = vunpack.c.l.b16 %v138
    %v564 = vunpack.c.l.b16 %v139
    %v565 = vunpack.c.l.b16 %v140
    %v566 = vunpack.c.l.b16 %v141
    %v567 = vunpack.c.l.b16 %v142
    %v568 = vunpack.c.l.b16 %v143
    %v569 = vunpack.c.l.b16 %v144
    %v570 = vunpack.c.l.b16 %v145
    %v571 = vunpack.c.l.b16 %v146
    %v572 = vunpack.c.l.b16 %v147
    %v573 = vunpack.c.l.b16 %v148
    %v574 = vunpack.c.l.b16 %v149
    %v575 = vunpack.c.l.b16 %v150
    %v576 = vunpack.c.l.b16 %v151
    %v577 = vunpack.c.l.b16 %v152
    %v578 = vunpack.c.l.b16 %v153
    %v579 = vunpack.c.l.b16 %v154
    %v580 = vunpack.c.l.b16 %v155
    %v581 = vunpack.c.l.b16 %v156
    %v582 = vunpack.c.l.b16 %v157
    %v583 = vunpack.c.l.b16 %v158
    %v584 = vunpack.c.l.b16 %v159
    %v585 = vunpack.c.l.b16 %v160
    %v586 = vunpack.c.l.b16 %v161
    %v587 = vunpack.c.l.b16 %v162
    %v588 = vunpack.c.l.b16 %v163
    %v589 = vunpack.c.l.b16 %v164
    %v590 = vunpack.c.l.b16 %v165
    %v591 = vunpack.c.l.b16 %v166
    %v592 = vunpack.c.l.b16 %v167
    %v593 = vunpack.c.l.b16 %v168
    %v594 = vunpack.c.l.b16 %v169
    %v595 = vunpack.c.l.b16 %v170
    %v596 = vunpack.c.l.b16 %v171
    %v597 = vunpack.c.l.b16 %v172
    %v598 = vunpack.c.l.b16 %v173
    %v599 = vunpack.c.l.b16 %v174
    %v600 = vunpack.c.l.b16 %v175
    %v601 = vunpack.c.l.b16 %v176
    %v602 = vunpack.c.l.b16 %v177
    %v603 = vunpack.c.l.b16 %v178
    %v604 = vunpack.c.l.b16 %v179
    %v605 = vunpack.c.l.b16 %v180
    %v606 = vunpack.c.l.b16 %v181
    %v607 = vunpack.c.l.b16 %v182
    %v608 = vunpack.c.l.b16 %v183
    %v609 = vunpack.c.l.b16 %v184
    %v610 = vunpack.c.l.b16 %v185
    %v611 = vunpack.c.l.b16 %v186
    %v612 = vunpack.c.l.b16 %v187
    %v613 = vunpack.c.l.b16 %v188
    %v614 = vunpack.c.l.b16 %v189
    %v615 = vunpack.c.l.b16 %v190
    %v616 = vunpack.c.l.b16 %v191
    %v617 = vunpack.c.l.b16 %v192
    %v618 = vunpack.c.l.b16 %v193
    %v619 = vunpack.c.l.b16 %v194
    %v620 = vunpack.c.l.b16 %v195
    %v621 = vunpack.c.l.b16 %v196
    %v622 = vunpack.c.l.b16 %v197
    %v623 = vunpack.c.l.b16 %v198
    %v624 = vunpack.c.l.b16 %v199
    %v625 = vunpack.c.l.b16 %v200
    %v626 = vunpack.c.l.b16 %v201
    %v627 = vunpack.c.l.b16 %v202
    %v628 = vunpack.c.l.b16 %v203
    %v629 = vunpack.c.l.b16 %v204
    %v630 = vunpack.c.l.b16 %v205
    %v631 = vunpack.c.l.b16 %v206
    %v632 = vunpack.c.l.b16 %v207
    %v633 = vunpack.c.l.b16 %v208
    %v634 = vunpack.c.l.b16 %v209
    %v635 = vunpack.c.l.b16 %v210
    %v636 = vunpack.c.l.b16 %v211
    %v637 = vunpack.c.l.b16 %v212
    %v638 = vunpack.c.l.b16 %v213
    %v639 = vpack.c.b16 %v444, %v443
    %v640 = vpack.c.b16 %v446, %v445
    %v641 = vpack.c.b16 %v448, %v447
    %v642 = vpack.c.b16 %v450, %v449
    %v643 = vpack.c.b16 %v452, %v451
    %v644 = vpack.c.b16 %v454, %v453
    %v645 = vpack.c.b16 %v456, %v455
    %v646 = vpack.c.b16 %v458, %v457
    %v647 = vpack.c.b16 %v460, %v459
    %v648 = vpack.c.b16 %v462, %v461
    %v649 = vpack.c.b16 %v464, %v463
    %v650 = vpack.c.b16 %v466, %v465
    %v651 = vpack.c.b16 %v468, %v467
    %v652 = vpack.c.b16 %v470, %v469
    %v653 = vpack.c.b16 %v472, %v471
    %v654 = vpack.c.b16 %v474, %v473
    %v655 = vpack.c.b16 %v476, %v475
    %v656 = vpack.c.b16 %v478, %v477
    %v657 = vpack.c.b16 %v480, %v479
    %v658 = vpack.c.b16 %v482, %v481
    %v659 = vpack.c.b16 %v484, %v483
    %v660 = vpack.c.b16 %v486, %v485
    %v661 = vpack.c.b16 %v488, %v487
    %v662 = vpack.c.b16 %v490, %v489
    %v663 = vpack.c.b16 %v492, %v491
    %v664 = vpack.c.b16 %v494, %v493
    %v665 = vpack.c.b16 %v496, %v495
    %v666 = vpack.c.b16 %v498, %v497
    %v667 = vpack.c.b16 %v500, %v499
    %v668 = vpack.c.b16 %v502, %v501
    %v669 = vpack.c.b16 %v504, %v503
    %v670 = vpack.c.b16 %v506, %v505
    %v671 = vpack.c.b16 %v508, %v507
    %v672 = vpack.c.b16 %v510, %v509
    %v673 = vpack.c.b16 %v512, %v511
    %v674 = vpack.c.b16 %v514, %v513
    %v675 = vpack.c.b16 %v516, %v515
    %v676 = vpack.c.b16 %v518, %v517
    %v677 = vpack.c.b16 %v520, %v519
    %v678 = vpack.c.b16 %v522, %v521
    %v679 = vpack.c.b16 %v524, %v523
    %v680 = vpack.c.b16 %v526, %v525
    %v681 = vpack.c.b16 %v528, %v527
    %v682 = vpack.c.b16 %v530, %v529
    %v683 = vpack.c.b16 %v532, %v531
    %v684 = vpack.c.b16 %v534, %v533
    %v685 = vpack.c.b16 %v536, %v535
    %v686 = vpack.c.b16 %v538, %v537
    %v687 = vpack.c.b16 %v540, %v539
    %v688 = vpack.c.b16 %v542, %v541
    %v689 = vpack.c.b16 %v544, %v543
    %v690 = vpack.c.b16 %v546, %v545
    %v691 = vpack.c.b16 %v548, %v547
    %v692 = vpack.c.b16 %v550, %v549
    %v693 = vpack.c.b16 %v552, %v551
    %v694 = vpack.c.b16 %v554, %v553
    %v695 = vpack.c.b16 %v556, %v555
    %v696 = vpack.c.b16 %v558, %v557
    %v697 = vpack.c.b16 %v560, %v559
    %v698 = vpack.c.b16 %v562, %v561
    %v699 = vpack.c.b16 %v564, %v563
    %v700 = vpack.c.b16 %v566, %v565
    %v701 = vpack.c.b16 %v568, %v567
    %v702 = vpack.c.b16 %v570, %v569
    %v703 = vpack.c.b16 %v572, %v571
    %v704 = vpack.c.b16 %v574, %v573
    %v705 = vpack.c.b16 %v576, %v575
    %v706 = vpack.c.b16 %v578, %v577
    %v707 = vpack.c.b16 %v580, %v579
    %v708 = vpack.c.b16 %v582, %v581
    %v709 = vpack.c.b16 %v584, %v583
    %v710 = vpack.c.b16 %v586, %v585
    %v711 = vpack.c.b16 %v588, %v587
    %v712 = vpack.c.b16 %v590, %v589
    %v713 = vpack.c.b16 %v592, %v591
    %v714 = vpack.c.b16 %v594, %v593
    %v715 = vpack.c.b16 %v596, %v595
    %v716 = vpack.c.b16 %v598, %v597
    %v717 = vpack.c.b16 %v600, %v599
    %v718 = vpack.c.b16 %v602, %v601
    %v719 = vpack.c.b16 %v604, %v603
    %v720 = vpack.c.b16 %v606, %v605
    %v721 = vpack.c.b16 %v608, %v607
    %v722 = vpack.c.b16 %v610, %v609
    %v723 = vpack.c.b16 %v612, %v611
    %v724 = vpack.c.b16 %v614, %v613
    %v725 = vpack.c.b16 %v616, %v615
    %v726 = vpack.c.b16 %v618, %v617
    %v727 = vpack.c.b16 %v620, %v619
    %v728 = vpack.c.b16 %v622, %v621
    %v729 = vpack.c.b16 %v624, %v623
    %v730 = vpack.c.b16 %v626, %v625
    %v731 = vpack.c.b16 %v628, %v627
    %v732 = vpack.c.b16 %v630, %v629
    %v733 = vpack.c.b16 %v632, %v631
    %v734 = vpack.c.b16 %v634, %v633
    %v735 = vpack.c.b16 %v636, %v635
    %v736 = vpack.c.b16 %v638, %v637
    %vm835 = vcmask 261120
    %v836 = vsel %vm835, %v234, 0
    %838 = vmatpush.bf16.msra.mxu0 %v646
    %839 = vmatpush.bf16.msra.mxu0 %v645
    %840 = vmatpush.bf16.msra.mxu0 %v644
    %841 = vmatpush.bf16.msra.mxu0 %v643
    %842 = vmatpush.bf16.msra.mxu0 %v642
    %843 = vmatpush.bf16.msra.mxu0 %v641
    %844 = vmatpush.bf16.msra.mxu0 %v640
    %845 = vmatpush.bf16.msra.mxu0 %v639
    %846 = vmatmul.bf16.gmra.mxu0 %v220
    %v847 = vpop.f32.mrf.mxu0
    %v848 = vadd.f32 %v216, %v847
    %v849 = vpop.f32.mrf.mxu0
    %850 = vdwg.mxu0
    %851 = vmatpush.bf16.msra.mxu0 %v654
    %852 = vmatpush.bf16.msra.mxu0 %v653
    %853 = vmatpush.bf16.msra.mxu0 %v652
    %854 = vmatpush.bf16.msra.mxu0 %v651
    %855 = vmatpush.bf16.msra.mxu0 %v650
    %856 = vmatpush.bf16.msra.mxu0 %v649
    %857 = vmatpush.bf16.msra.mxu0 %v648
    %858 = vmatpush.bf16.msra.mxu0 %v647
    %859 = vmatmul.bf16.gmra.mxu0 %v221
    %v860 = vpop.f32.mrf.mxu0
    %v861 = vadd.f32 %v848, %v860
    %v862 = vpop.f32.mrf.mxu0
    %863 = vdwg.mxu0
    %864 = vmatpush.bf16.msra.mxu0 %v662
    %865 = vmatpush.bf16.msra.mxu0 %v661
    %866 = vmatpush.bf16.msra.mxu0 %v660
    %867 = vmatpush.bf16.msra.mxu0 %v659
    %868 = vmatpush.bf16.msra.mxu0 %v658
    %869 = vmatpush.bf16.msra.mxu0 %v657
    %870 = vmatpush.bf16.msra.mxu0 %v656
    %871 = vmatpush.bf16.msra.mxu0 %v655
    %872 = vmatmul.bf16.gmra.mxu0 %v222
    %v873 = vpop.f32.mrf.mxu0
    %v874 = vadd.f32 %v861, %v873
    %v875 = vpop.f32.mrf.mxu0
    %876 = vdwg.mxu0
    %877 = vmatpush.bf16.msra.mxu0 %v670
    %878 = vmatpush.bf16.msra.mxu0 %v669
    %879 = vmatpush.bf16.msra.mxu0 %v668
    %880 = vmatpush.bf16.msra.mxu0 %v667
    %881 = vmatpush.bf16.msra.mxu0 %v666
    %882 = vmatpush.bf16.msra.mxu0 %v665
    %883 = vmatpush.bf16.msra.mxu0 %v664
    %884 = vmatpush.bf16.msra.mxu0 %v663
    %885 = vmatmul.bf16.gmra.mxu0 %v223
    %v886 = vpop.f32.mrf.mxu0
    %v887 = vadd.f32 %v874, %v886
    %v888 = vpop.f32.mrf.mxu0
    %889 = vdwg.mxu0
    %890 = vmatpush.bf16.msra.mxu0 %v678
    %891 = vmatpush.bf16.msra.mxu0 %v677
    %892 = vmatpush.bf16.msra.mxu0 %v676
    %893 = vmatpush.bf16.msra.mxu0 %v675
    %894 = vmatpush.bf16.msra.mxu0 %v674
    %895 = vmatpush.bf16.msra.mxu0 %v673
    %896 = vmatpush.bf16.msra.mxu0 %v672
    %897 = vmatpush.bf16.msra.mxu0 %v671
    %898 = vmatmul.bf16.gmra.mxu0 %v224
    %v899 = vpop.f32.mrf.mxu0
    %v900 = vadd.f32 %v887, %v899
    %v901 = vpop.f32.mrf.mxu0
    %902 = vdwg.mxu0
    %903 = vmatpush.bf16.msra.mxu0 %v686
    %904 = vmatpush.bf16.msra.mxu0 %v685
    %905 = vmatpush.bf16.msra.mxu0 %v684
    %906 = vmatpush.bf16.msra.mxu0 %v683
    %907 = vmatpush.bf16.msra.mxu0 %v682
    %908 = vmatpush.bf16.msra.mxu0 %v681
    %909 = vmatpush.bf16.msra.mxu0 %v680
    %910 = vmatpush.bf16.msra.mxu0 %v679
    %911 = vmatmul.bf16.gmra.mxu0 %v225
    %v912 = vpop.f32.mrf.mxu0
    %v913 = vadd.f32 %v900, %v912
    %v914 = vpop.f32.mrf.mxu0
    %915 = vdwg.mxu0
    %916 = vmatpush.bf16.msra.mxu0 %v694
    %917 = vmatpush.bf16.msra.mxu0 %v693
    %918 = vmatpush.bf16.msra.mxu0 %v692
    %919 = vmatpush.bf16.msra.mxu0 %v691
    %920 = vmatpush.bf16.msra.mxu0 %v690
    %921 = vmatpush.bf16.msra.mxu0 %v689
    %922 = vmatpush.bf16.msra.mxu0 %v688
    %923 = vmatpush.bf16.msra.mxu0 %v687
    %924 = vmatmul.bf16.gmra.mxu0 %v226
    %v925 = vpop.f32.mrf.mxu0
    %v926 = vadd.f32 %v913, %v925
    %v927 = vpop.f32.mrf.mxu0
    %928 = vdwg.mxu0
    %929 = vmatpush.bf16.msra.mxu0 %v702
    %930 = vmatpush.bf16.msra.mxu0 %v701
    %931 = vmatpush.bf16.msra.mxu0 %v700
    %932 = vmatpush.bf16.msra.mxu0 %v699
    %933 = vmatpush.bf16.msra.mxu0 %v698
    %934 = vmatpush.bf16.msra.mxu0 %v697
    %935 = vmatpush.bf16.msra.mxu0 %v696
    %936 = vmatpush.bf16.msra.mxu0 %v695
    %937 = vmatmul.bf16.gmra.mxu0 %v227
    %v938 = vpop.f32.mrf.mxu0
    %v939 = vadd.f32 %v926, %v938
    %v940 = vpop.f32.mrf.mxu0
    %941 = vdwg.mxu0
    %942 = vmatpush.bf16.msra.mxu0 %v710
    %943 = vmatpush.bf16.msra.mxu0 %v709
    %944 = vmatpush.bf16.msra.mxu0 %v708
    %945 = vmatpush.bf16.msra.mxu0 %v707
    %946 = vmatpush.bf16.msra.mxu0 %v706
    %947 = vmatpush.bf16.msra.mxu0 %v705
    %948 = vmatpush.bf16.msra.mxu0 %v704
    %949 = vmatpush.bf16.msra.mxu0 %v703
    %950 = vmatmul.bf16.gmra.mxu0 %v230
    %v951 = vpop.f32.mrf.mxu0
    %v952 = vadd.f32 %v939, %v951
    %v953 = vpop.f32.mrf.mxu0
    %954 = vdwg.mxu0
    %955 = vmatpush.bf16.msra.mxu0 %v718
    %956 = vmatpush.bf16.msra.mxu0 %v717
    %957 = vmatpush.bf16.msra.mxu0 %v716
    %958 = vmatpush.bf16.msra.mxu0 %v715
    %959 = vmatpush.bf16.msra.mxu0 %v714
    %960 = vmatpush.bf16.msra.mxu0 %v713
    %961 = vmatpush.bf16.msra.mxu0 %v712
    %962 = vmatpush.bf16.msra.mxu0 %v711
    %963 = vmatmul.bf16.gmra.mxu0 %v231
    %v964 = vpop.f32.mrf.mxu0
    %v965 = vadd.f32 %v952, %v964
    %v966 = vpop.f32.mrf.mxu0
    %967 = vdwg.mxu0
    %968 = vmatpush.bf16.msra.mxu0 %v726
    %969 = vmatpush.bf16.msra.mxu0 %v725
    %970 = vmatpush.bf16.msra.mxu0 %v724
    %971 = vmatpush.bf16.msra.mxu0 %v723
    %972 = vmatpush.bf16.msra.mxu0 %v722
    %973 = vmatpush.bf16.msra.mxu0 %v721
    %974 = vmatpush.bf16.msra.mxu0 %v720
    %975 = vmatpush.bf16.msra.mxu0 %v719
    %976 = vmatmul.bf16.gmra.mxu0 %v232
    %v977 = vpop.f32.mrf.mxu0
    %v978 = vadd.f32 %v965, %v977
    %v979 = vpop.f32.mrf.mxu0
    %980 = vdwg.mxu0
    %981 = vmatpush.bf16.msra.mxu0 %v734
    %982 = vmatpush.bf16.msra.mxu0 %v733
    %983 = vmatpush.bf16.msra.mxu0 %v732
    %984 = vmatpush.bf16.msra.mxu0 %v731
    %985 = vmatpush.bf16.msra.mxu0 %v730
    %986 = vmatpush.bf16.msra.mxu0 %v729
    %987 = vmatpush.bf16.msra.mxu0 %v728
    %988 = vmatpush.bf16.msra.mxu0 %v727
    %989 = vmatmul.bf16.gmra.mxu0 %v233
    %v990 = vpop.f32.mrf.mxu0
    %v991 = vadd.f32 %v978, %v990
    %v992 = vpop.f32.mrf.mxu0
    %993 = vdwg.mxu0
    %994 = vmatpush.bf16.msra.mxu0 0
    %995 = vmatpush.bf16.msra.mxu0 0
    %996 = vmatpush.bf16.msra.mxu0 0
    %997 = vmatpush.bf16.msra.mxu0 0
    %998 = vmatpush.bf16.msra.mxu0 0
    %999 = vmatpush.bf16.msra.mxu0 0
    %1000 = vmatpush.bf16.msra.mxu0 %v736
    %1001 = vmatpush.bf16.msra.mxu0 %v735
    %1002 = vmatmul.bf16.gmra.mxu0 %v836
    %v1003 = vpop.f32.mrf.mxu0
    %v1004 = vadd.f32 %v991, %v1003
    %v1005 = vpop.f32.mrf.mxu0
    %1006 = vdwg.mxu0
    %1007 = vst [vmem:[#allocation2] sm:$0x3] %v1004
    // Predicated region
    $region14: #{convnet_forward.5} parent=1 // pred_check
      _
    $region15: #{convnet_forward.5} parent=1 // pred_check_branch
      %1009 = sbr.rel (0) target = $region17
    $region16: #{convnet_forward.5} parent=1 // pred_region
      %1011 = vsyncadd [#allocation3], 0
      %s1013 = sshll.u32 [#allocation2], 4
      %s1014 = int_to_ptr.vmem [resolvable:$true] %s1013
      %s1015 = sshll.u32 %s3, 4
      %s1016 = int_to_ptr.hbm [resolvable:$true] %s1015
      %1018 = dma.vmem_to_hbm [thread:$0]  %s1014, 32, %s1016, [#allocation3]
    $region17: #{convnet_forward.5} parent=1 // pred_fallthru
      _
    // Predicated region
    $region18: #{convnet_forward.5} parent=1 // pred_check
      _
    $region19: #{convnet_forward.5} parent=1 // pred_check_branch
      %1020 = sbr.rel (0) target = $region21
    $region20: #{convnet_forward.5} parent=1 // pred_region
      %1022 = dma.done [#allocation3], 32
    $region21: #{convnet_forward.5} parent=1 // pred_fallthru
      _
    %1023 = vsyncpa [#allocation3], 1

</llo_original>
